<compile_context>
chip_gen: v6e
topology: v6e:2x2x1
jax: 0.10.0
libtpu: 0.0.40
codegen_flags: <defaults>
</compile_context>

<pallas_src>
import functools

import jax
import jax.numpy as jnp
from jax import lax
from jax.experimental import pallas as pl
from jax.experimental.pallas import tpu as pltpu

EPS = 1e-5
EXPANSION = 4


# --------------------------- one-time capability / hw probes -----------------
@functools.lru_cache(maxsize=1)
def _single_buffer_weights_supported():
    """One-time probe: does this build accept pipeline_mode=pl.Buffered(1)?"""
    try:
        def k(x_ref, o_ref):
            o_ref[...] = x_ref[...] + 1.0

        f = pl.pallas_call(
            k,
            out_shape=jax.ShapeDtypeStruct((8, 128), jnp.float32),
            grid=(1,),
            in_specs=[pl.BlockSpec((8, 128), lambda i: (0, 0),
                                   pipeline_mode=pl.Buffered(1))],
            out_specs=pl.BlockSpec((8, 128), lambda i: (0, 0)),
        )
        jax.block_until_ready(f(jnp.zeros((8, 128), jnp.float32)))
        return True
    except Exception:  # capability probe only; never on the hot path
        return False


@functools.lru_cache(maxsize=1)
def _vmem_capacity_bytes():
    try:
        return int(pltpu.get_tpu_info().vmem_capacity_bytes)
    except Exception:
        return 64 * 1024 * 1024  # conservative: v7x per-TensorCore VMEM


# ----------------------------------- kernel ----------------------------------
def _bottleneck_kernel(x_ref, w1_ref, g1_ref, b1_ref,
                       w2_ref, g2_ref, b2_ref,
                       w3_ref, g3_ref, b3_ref,
                       *rest, H, W, stride, has_shortcut):
    if has_shortcut:
        ws_ref, gs_ref, bs_ref, o_ref, pad_ref = rest
    else:
        o_ref, pad_ref = rest

    Ho, Wo = H // stride, W // stride
    Cin = x_ref.shape[-1]
    P = w1_ref.shape[-1]
    Cexp = w3_ref.shape[-1]
    cdt = x_ref.dtype          # matmul operand dtype (bf16 by default)

    def inorm(t, gamma, beta, relu):
        # Two-pass per-channel stats over M = Ho*Wo (numerically safer than
        # E[x^2]-mean^2); affine folded into one scale/shift; ReLU fused.
        mean = jnp.mean(t, axis=0, keepdims=True)
        var = jnp.mean((t - mean) ** 2, axis=0, keepdims=True)
        scale = gamma * lax.rsqrt(var + EPS)
        shift = beta - mean * scale
        y = t * scale + shift
        return jnp.maximum(y, 0.0) if relu else y

    x = x_ref[0]                                   # (H, W, Cin)
    xf = x.reshape(H * W, Cin)

    # ---- conv1 (1x1) -> instance norm -> relu (stats / accumulation in f32) --
    t1 = jnp.dot(xf, w1_ref[...], preferred_element_type=jnp.float32)
    t1 = inorm(t1, g1_ref[...], b1_ref[...], relu=True)

    # ---- conv2 (3x3, pad=1, stride=s): 9 accumulated matmuls out of a padded
    # VMEM scratch slab.  Zero ONLY the 1-px halo each step (cheap, and safe
    # however the parallel grid axis is split); the interior is overwritten.
    zrow = jnp.zeros((1, W + 2, P), cdt)
    zcol = jnp.zeros((H, 1, P), cdt)
    pad_ref[0:1, :, :] = zrow
    pad_ref[H + 1:H + 2, :, :] = zrow
    pad_ref[1:H + 1, 0:1, :] = zcol
    pad_ref[1:H + 1, W + 1:W + 2, :] = zcol
    pad_ref[1:H + 1, 1:W + 1, :] = t1.reshape(H, W, P).astype(cdt)

    def tap(dy, dx):
        if stride == 1:
            t = pad_ref[dy:dy + H, dx:dx + W, :]
        else:
            # strided reads straight out of the scratch slab (no relayout copy)
            t = pad_ref[pl.ds(dy, Ho, stride=stride),
                        pl.ds(dx, Wo, stride=stride), :]
        return t.reshape(Ho * Wo, P)

    t2 = None
    i = 0
    for dy in range(3):
        for dx in range(3):
            part = jnp.dot(tap(dy, dx), w2_ref[i * P:(i + 1) * P, :],
                           preferred_element_type=jnp.float32)
            t2 = part if t2 is None else t2 + part
            i += 1
    t2 = inorm(t2, g2_ref[...], b2_ref[...], relu=True)

    # ---- conv3 (1x1) -> instance norm ----
    t3 = jnp.dot(t2.astype(cdt), w3_ref[...], preferred_element_type=jnp.float32)
    t3 = inorm(t3, g3_ref[...], b3_ref[...], relu=False)

    # ---- shortcut branch ----
    if has_shortcut:
        if stride == 1:
            xs = xf
        else:
            xs = x_ref[0, pl.ds(0, Ho, stride=stride),
                       pl.ds(0, Wo, stride=stride), :].reshape(Ho * Wo, Cin)
        sc = jnp.dot(xs, ws_ref[...], preferred_element_type=jnp.float32)
        sc = inorm(sc, gs_ref[...], bs_ref[...], relu=False)
    else:
        # Identity shortcut adds the compute-dtype-rounded input (x was cast
        # to bf16 in the wrapper); tiny extra error vs. the f32 reference.
        sc = xf.astype(jnp.float32)

    out = jnp.maximum(t3 + sc, 0.0)
    o_ref[0] = out.reshape(Ho, Wo, Cexp).astype(o_ref.dtype)


# ----------------------------------- wrapper ---------------------------------
def bottleneck_forward(x_nchw, params, *, stride=1,
                       compute_dtype=jnp.bfloat16,
                       out_dtype=None):
    N, Cin, H, W = x_nchw.shape
    P = params["w1"].shape[0]
    Cexp = EXPANSION * P
    if H % stride != 0 or W % stride != 0:
        raise ValueError(f"H ({H}) and W ({W}) must be divisible by "
                         f"stride ({stride}).")
    Ho, Wo = H // stride, W // stride
    has_shortcut = (stride != 1) or (Cin != Cexp)

    cdt = jnp.dtype(compute_dtype)
    odt = jnp.dtype(out_dtype) if out_dtype is not None else cdt
    f32 = jnp.float32

    # NCHW / OIHW (PyTorch) -> NHWC / matmul-ready weights.
    x = jnp.transpose(x_nchw, (0, 2, 3, 1)).astype(cdt)
    w1 = jnp.transpose(params["w1"][:, :, 0, 0], (1, 0)).astype(cdt)             # (Cin, P)
    w2 = jnp.transpose(params["w2"], (2, 3, 1, 0)).reshape(9 * P, P).astype(cdt)  # (9P, P)
    w3 = jnp.transpose(params["w3"][:, :, 0, 0], (1, 0)).astype(cdt)             # (P, Cexp)
    g1 = params["g1"].reshape(1, P).astype(f32)
    b1 = params["b1"].reshape(1, P).astype(f32)
    g2 = params["g2"].reshape(1, P).astype(f32)
    b2 = params["b2"].reshape(1, P).astype(f32)
    g3 = params["g3"].reshape(1, Cexp).astype(f32)
    b3 = params["b3"].reshape(1, Cexp).astype(f32)

    const_inputs = [w1, g1, b1, w2, g2, b2, w3, g3, b3]
    if has_shortcut:
        ws = jnp.transpose(params["ws"][:, :, 0, 0], (1, 0)).astype(cdt)          # (Cin, Cexp)
        gs = params["gs"].reshape(1, Cexp).astype(f32)
        bs = params["bs"].reshape(1, Cexp).astype(f32)
        const_inputs += [ws, gs, bs]

    # ---- advisory cost estimate -------------------------------------------
    flops = 2 * (H * W * Cin * P + Ho * Wo * 9 * P * P + Ho * Wo * P * Cexp)
    if has_shortcut:
        flops += 2 * Ho * Wo * Cin * Cexp
    flops *= N
    weight_bytes = sum(int(a.size) * a.dtype.itemsize for a in const_inputs)
    bytes_accessed = (int(x.size) * x.dtype.itemsize
                      + N * Ho * Wo * Cexp * odt.itemsize + weight_bytes)
    cost = pl.CostEstimate(flops=int(flops),
                           transcendentals=int(N * (2 * P + 2 * Cexp)),
                           bytes_accessed=int(bytes_accessed))

    # ---- generation-aware VMEM budget ---------------------------------------
    single_buffer = _single_buffer_weights_supported()
    wbufs = 1 if single_buffer else 2
    pad_bytes = (H + 2) * (W + 2) * P * cdt.itemsize
    io_bytes = 2 * H * W * Cin * cdt.itemsize + 2 * Ho * Wo * Cexp * odt.itemsize
    live_bytes = 4 * (H * W * P + Ho * Wo * P + 3 * Ho * Wo * Cexp + H * W * Cin)
    need = io_bytes + pad_bytes + wbufs * weight_bytes + live_bytes
    vmem_cap = int(0.85 * _vmem_capacity_bytes())
    vmem_limit = int(min(max(int(1.5 * need), 32 * 1024 * 1024), vmem_cap))

    def const_spec(arr):
        nd = arr.ndim
        if single_buffer:
            # constant index_map => no double-buffering needed for weights.
            return pl.BlockSpec(arr.shape, lambda *_: (0,) * nd,
                                pipeline_mode=pl.Buffered(1))
        return pl.BlockSpec(arr.shape, lambda *_: (0,) * nd)

    kernel = functools.partial(_bottleneck_kernel, H=H, W=W, stride=stride,
                               has_shortcut=has_shortcut)
    grid_spec = pltpu.PrefetchScalarGridSpec(
        num_scalar_prefetch=0,
        grid=(N,),
        in_specs=[pl.BlockSpec((1, H, W, Cin), lambda n: (n, 0, 0, 0))]
                 + [const_spec(a) for a in const_inputs],
        out_specs=pl.BlockSpec((1, Ho, Wo, Cexp), lambda n: (n, 0, 0, 0)),
        scratch_shapes=[pltpu.VMEM((H + 2, W + 2, P), cdt)],
    )
    out_nhwc = pl.pallas_call(
        kernel,
        out_shape=jax.ShapeDtypeStruct((N, Ho, Wo, Cexp), odt),
        grid_spec=grid_spec,
        compiler_params=pltpu.CompilerParams(
            dimension_semantics=("parallel",),
            vmem_limit_bytes=vmem_limit),
        cost_estimate=cost,
    )(x, *const_inputs)

    return jnp.transpose(out_nhwc, (0, 3, 1, 2))    # back to NCHW


# ---------------- pure-JAX reference (for correctness checks) ----------------
def _conv(x, w, s, pad):
    return lax.conv_general_dilated(
        x, w, (s, s), pad, dimension_numbers=("NCHW", "OIHW", "NCHW"),
        precision=lax.Precision.HIGHEST)


def _gn(x, g, b):
    mean = x.mean(axis=(2, 3), keepdims=True)
    var = ((x - mean) ** 2).mean(axis=(2, 3), keepdims=True)
    g = g.reshape(1, -1, 1, 1)
    b = b.reshape(1, -1, 1, 1)
    return (x - mean) * lax.rsqrt(var + EPS) * g + b


def bottleneck_reference(x, p, *, stride=1):
    Cin = x.shape[1]
    Cexp = EXPANSION * p["w1"].shape[0]
    out = jax.nn.relu(_gn(_conv(x, p["w1"], 1, [(0, 0), (0, 0)]), p["g1"], p["b1"]))
    out = jax.nn.relu(_gn(_conv(out, p["w2"], stride, [(1, 1), (1, 1)]), p["g2"], p["b2"]))
    out = _gn(_conv(out, p["w3"], 1, [(0, 0), (0, 0)]), p["g3"], p["b3"])
    if stride != 1 or Cin != Cexp:
        sc = _gn(_conv(x, p["ws"], stride, [(0, 0), (0, 0)]), p["gs"], p["bs"])
    else:
        sc = x
    return jax.nn.relu(out + sc)


if __name__ == "__main__":
    key = jax.random.PRNGKey(0)

    def kaiming(k, shape):
        fan_in = shape[1] * shape[2] * shape[3]
        return jax.random.normal(k, shape, jnp.float32) * jnp.sqrt(2.0 / fan_in)

    def make_params(k, in_planes, planes):
        cexp = EXPANSION * planes
        ks = jax.random.split(k, 8)
        return {
            "w1": kaiming(ks[0], (planes, in_planes, 1, 1)),
            "g1": jnp.ones((planes,), jnp.float32),
            "b1": jnp.zeros((planes,), jnp.float32),
            "w2": kaiming(ks[1], (planes, planes, 3, 3)),
            "g2": 1.0 + 0.1 * jax.random.normal(ks[2], (planes,), jnp.float32),
            "b2": 0.1 * jax.random.normal(ks[3], (planes,), jnp.float32),
            "w3": kaiming(ks[4], (cexp, planes, 1, 1)),
            "g3": 1.0 + 0.1 * jax.random.normal(ks[5], (cexp,), jnp.float32),
            "b3": 0.1 * jax.random.normal(ks[6], (cexp,), jnp.float32),
            "ws": kaiming(ks[7], (cexp, in_planes, 1, 1)),
            "gs": jnp.ones((cexp,), jnp.float32),
            "bs": jnp.zeros((cexp,), jnp.float32),
        }

    k1, k2, k3, k4 = jax.random.split(key, 4)

    # --- Config A: projection shortcut (Cin != 4*planes), stride=1 -----------
    N, Cin, H, W, planes = 2, 4, 16, 16, 4
    params_a = make_params(k1, Cin, planes)
    x_a = jax.random.normal(k2, (N, Cin, H, W), jnp.float32)
    ref_a = jax.block_until_ready(bottleneck_reference(x_a, params_a, stride=1))

    out_bf16 = jax.block_until_ready(bottleneck_forward(x_a, params_a, stride=1))
    assert out_bf16.shape == (N, EXPANSION * planes, H, W), out_bf16.shape
    assert jnp.allclose(out_bf16.astype(jnp.float32), ref_a,
                        atol=1e-1, rtol=5e-2), float(
        jnp.max(jnp.abs(out_bf16.astype(jnp.float32) - ref_a)))

    # Tighter all-f32 validation path; tolerance bounded by the difference
    # between XLA-conv and Mosaic-matmul default MXU precision for f32.
    out_f32 = jax.block_until_ready(
        bottleneck_forward(x_a, params_a, stride=1, compute_dtype=jnp.float32))
    assert jnp.allclose(out_f32, ref_a, atol=2e-2, rtol=2e-2), float(
        jnp.max(jnp.abs(out_f32 - ref_a)))

    # --- Config B: identity shortcut (Cin == 4*planes, stride=1) -------------
    Cin_b = EXPANSION * planes
    params_b = make_params(k3, Cin_b, planes)
    x_b = jax.random.normal(k4, (2, Cin_b, 8, 8), jnp.float32)
    ref_b = jax.block_until_ready(bottleneck_reference(x_b, params_b, stride=1))
    out_b = jax.block_until_ready(bottleneck_forward(x_b, params_b, stride=1))
    assert out_b.shape == ref_b.shape, out_b.shape
    assert jnp.allclose(out_b.astype(jnp.float32), ref_b,
                        atol=1e-1, rtol=5e-2), float(
        jnp.max(jnp.abs(out_b.astype(jnp.float32) - ref_b)))

    print("KERNEL_OK")
</pallas_src>

<mosaic_0001>
module attributes {stable_mosaic.version = 11 : i64} {
  func.func @k(%arg0: i32, %arg1: memref<8x128xf32, #tpu.memory_space<vmem>>, %arg2: memref<8x128xf32, #tpu.memory_space<vmem>>) attributes {dimension_semantics = [#tpu.dimension_semantics<arbitrary>], iteration_bounds = array<i64: 1>, scalar_prefetch = 0 : i64, scratch_operands = 0 : i64, tpu.core_type = #tpu.core_type<tc>, window_params = [{pipeline_mode = #tpu.pipeline_mode<synchronous>, transform_indices = @transform_0, window_bounds = array<i64: 8, 128>}, {pipeline_mode = #tpu.pipeline_mode<synchronous>, transform_indices = @transform_1, window_bounds = array<i64: 8, 128>}]} {
    %c0 = arith.constant 0 : index
    %c0_0 = arith.constant 0 : index
    %0 = vector.load %arg1[%c0, %c0_0] : memref<8x128xf32, #tpu.memory_space<vmem>>, vector<8x128xf32>
    %cst = arith.constant 1.000000e+00 : f32
    %1 = vector.broadcast %cst : f32 to vector<8x128xf32>
    %2 = arith.addf %0, %1 : vector<8x128xf32>
    %c0_1 = arith.constant 0 : index
    %c0_2 = arith.constant 0 : index
    %3 = vector.load %arg2[%c0_1, %c0_2] : memref<8x128xf32, #tpu.memory_space<vmem>>, vector<8x128xf32>
    tpu.vector_store %arg2[%c0_1, %c0_2], %2 {strides = array<i32>} : memref<8x128xf32, #tpu.memory_space<vmem>>, vector<8x128xf32>,
    return
  }
  func.func @transform_0(%arg0: i32) -> (i32, i32) {
    %c0_i32 = arith.constant 0 : i32
    %c0_i32_0 = arith.constant 0 : i32
    %c0_i32_1 = arith.constant 0 : i32
    return %c0_i32, %c0_i32_0 : i32, i32
  }
  func.func @transform_1(%arg0: i32) -> (i32, i32) {
    %c0_i32 = arith.constant 0 : i32
    %c0_i32_0 = arith.constant 0 : i32
    %c0_i32_1 = arith.constant 0 : i32
    return %c0_i32, %c0_i32_0 : i32, i32
  }
}

module attributes {stable_mosaic.version = 11 : i64} {
  func.func @_bottleneck_kernel(%arg0: i32, %arg1: memref<1x16x16x4xbf16, #tpu.memory_space<vmem>>, %arg2: memref<4x4xbf16, #tpu.memory_space<vmem>>, %arg3: memref<1x4xf32, #tpu.memory_space<vmem>>, %arg4: memref<1x4xf32, #tpu.memory_space<vmem>>, %arg5: memref<36x4xbf16, #tpu.memory_space<vmem>>, %arg6: memref<1x4xf32, #tpu.memory_space<vmem>>, %arg7: memref<1x4xf32, #tpu.memory_space<vmem>>, %arg8: memref<4x16xbf16, #tpu.memory_space<vmem>>, %arg9: memref<1x16xf32, #tpu.memory_space<vmem>>, %arg10: memref<1x16xf32, #tpu.memory_space<vmem>>, %arg11: memref<4x16xbf16, #tpu.memory_space<vmem>>, %arg12: memref<1x16xf32, #tpu.memory_space<vmem>>, %arg13: memref<1x16xf32, #tpu.memory_space<vmem>>, %arg14: memref<1x16x16x16xbf16, #tpu.memory_space<vmem>>, %arg15: memref<18x18x4xbf16, #tpu.memory_space<vmem>>) attributes {dimension_semantics = [#tpu.dimension_semantics<parallel>], iteration_bounds = array<i64: 2>, scalar_prefetch = 0 : i64, scratch_operands = 1 : i64, tpu.core_type = #tpu.core_type<tc>, window_params = [{transform_indices = @transform_0, window_bounds = array<i64: 1, 16, 16, 4>}, {pipeline_mode = #tpu.pipeline_mode<synchronous>, transform_indices = @transform_1, window_bounds = array<i64: 4, 4>}, {pipeline_mode = #tpu.pipeline_mode<synchronous>, transform_indices = @transform_2, window_bounds = array<i64: 1, 4>}, {pipeline_mode = #tpu.pipeline_mode<synchronous>, transform_indices = @transform_3, window_bounds = array<i64: 1, 4>}, {pipeline_mode = #tpu.pipeline_mode<synchronous>, transform_indices = @transform_4, window_bounds = array<i64: 36, 4>}, {pipeline_mode = #tpu.pipeline_mode<synchronous>, transform_indices = @transform_5, window_bounds = array<i64: 1, 4>}, {pipeline_mode = #tpu.pipeline_mode<synchronous>, transform_indices = @transform_6, window_bounds = array<i64: 1, 4>}, {pipeline_mode = #tpu.pipeline_mode<synchronous>, transform_indices = @transform_7, window_bounds = array<i64: 4, 16>}, {pipeline_mode = #tpu.pipeline_mode<synchronous>, transform_indices = @transform_8, window_bounds = array<i64: 1, 16>}, {pipeline_mode = #tpu.pipeline_mode<synchronous>, transform_indices = @transform_9, window_bounds = array<i64: 1, 16>}, {pipeline_mode = #tpu.pipeline_mode<synchronous>, transform_indices = @transform_10, window_bounds = array<i64: 4, 16>}, {pipeline_mode = #tpu.pipeline_mode<synchronous>, transform_indices = @transform_11, window_bounds = array<i64: 1, 16>}, {pipeline_mode = #tpu.pipeline_mode<synchronous>, transform_indices = @transform_12, window_bounds = array<i64: 1, 16>}, {transform_indices = @transform_13, window_bounds = array<i64: 1, 16, 16, 16>}]} {
    %c0 = arith.constant 0 : index
    %c0_0 = arith.constant 0 : index
    %c0_1 = arith.constant 0 : index
    %c0_2 = arith.constant 0 : index
    %0 = vector.load %arg1[%c0, %c0_0, %c0_1, %c0_2] : memref<1x16x16x4xbf16, #tpu.memory_space<vmem>>, vector<1x16x16x4xbf16>
    %1 = vector.shape_cast %0 : vector<1x16x16x4xbf16> to vector<16x16x4xbf16>
    %2 = vector.shape_cast %1 : vector<16x16x4xbf16> to vector<256x4xbf16>
    %c0_3 = arith.constant 0 : index
    %c0_4 = arith.constant 0 : index
    %3 = vector.load %arg2[%c0_3, %c0_4] : memref<4x4xbf16, #tpu.memory_space<vmem>>, vector<4x4xbf16>
    %cst = arith.constant dense<0.000000e+00> : vector<256x4xf32>
    %4 = tpu.matmul %2, %3, %cst {dimension_numbers = #tpu.dot_dimension_numbers<[1], [0], [0], [1], [0, 0, 1, 1], [], []>} : vector<256x4xbf16>, vector<4x4xbf16>, vector<256x4xf32> -> vector<256x4xf32>
    %c0_5 = arith.constant 0 : index
    %c0_6 = arith.constant 0 : index
    %5 = vector.load %arg3[%c0_5, %c0_6] : memref<1x4xf32, #tpu.memory_space<vmem>>, vector<1x4xf32>
    %c0_7 = arith.constant 0 : index
    %c0_8 = arith.constant 0 : index
    %6 = vector.load %arg4[%c0_7, %c0_8] : memref<1x4xf32, #tpu.memory_space<vmem>>, vector<1x4xf32>
    %cst_9 = arith.constant dense<0.000000e+00> : vector<4xf32>
    %7 = vector.multi_reduction <add>, %4, %cst_9 [0] : vector<256x4xf32> to vector<4xf32>
    %8 = vector.shape_cast %7 : vector<4xf32> to vector<1x4xf32>
    %cst_10 = arith.constant 2.560000e+02 : f32
    %9 = vector.broadcast %cst_10 : f32 to vector<1x4xf32>
    %10 = arith.divf %8, %9 : vector<1x4xf32>
    %11 = vector.broadcast %10 : vector<1x4xf32> to vector<256x4xf32>
    %12 = arith.subf %4, %11 : vector<256x4xf32>
    %13 = arith.mulf %12, %12 : vector<256x4xf32>
    %cst_11 = arith.constant dense<0.000000e+00> : vector<4xf32>
    %14 = vector.multi_reduction <add>, %13, %cst_11 [0] : vector<256x4xf32> to vector<4xf32>
    %15 = vector.shape_cast %14 : vector<4xf32> to vector<1x4xf32>
    %cst_12 = arith.constant 2.560000e+02 : f32
    %16 = vector.broadcast %cst_12 : f32 to vector<1x4xf32>
    %17 = arith.divf %15, %16 : vector<1x4xf32>
    %cst_13 = arith.constant 9.99999974E-6 : f32
    %18 = vector.broadcast %cst_13 : f32 to vector<1x4xf32>
    %19 = arith.addf %17, %18 : vector<1x4xf32>
    %20 = math.rsqrt %19 : vector<1x4xf32>
    %21 = arith.mulf %5, %20 : vector<1x4xf32>
    %22 = arith.mulf %10, %21 : vector<1x4xf32>
    %23 = arith.subf %6, %22 : vector<1x4xf32>
    %24 = vector.broadcast %21 : vector<1x4xf32> to vector<256x4xf32>
    %25 = arith.mulf %4, %24 : vector<256x4xf32>
    %26 = vector.broadcast %23 : vector<1x4xf32> to vector<256x4xf32>
    %27 = arith.addf %25, %26 : vector<256x4xf32>
    %cst_14 = arith.constant 0.000000e+00 : f32
    %28 = vector.broadcast %cst_14 : f32 to vector<256x4xf32>
    %29 = arith.maximumf %27, %28 : vector<256x4xf32>
    %cst_15 = arith.constant 0.000000e+00 : bf16
    %30 = vector.broadcast %cst_15 : bf16 to vector<1x18x4xbf16>
    %cst_16 = arith.constant 0.000000e+00 : bf16
    %31 = vector.broadcast %cst_16 : bf16 to vector<16x1x4xbf16>
    %c0_17 = arith.constant 0 : index
    %c0_18 = arith.constant 0 : index
    %c0_19 = arith.constant 0 : index
    %32 = vector.load %arg15[%c0_17, %c0_18, %c0_19] : memref<18x18x4xbf16, #tpu.memory_space<vmem>>, vector<1x18x4xbf16>
    tpu.vector_store %arg15[%c0_17, %c0_18, %c0_19], %30 {strides = array<i32>} : memref<18x18x4xbf16, #tpu.memory_space<vmem>>, vector<1x18x4xbf16>,
    %c17 = arith.constant 17 : index
    %c0_20 = arith.constant 0 : index
    %c0_21 = arith.constant 0 : index
    %33 = vector.load %arg15[%c17, %c0_20, %c0_21] : memref<18x18x4xbf16, #tpu.memory_space<vmem>>, vector<1x18x4xbf16>
    tpu.vector_store %arg15[%c17, %c0_20, %c0_21], %30 {strides = array<i32>} : memref<18x18x4xbf16, #tpu.memory_space<vmem>>, vector<1x18x4xbf16>,
    %c1 = arith.constant 1 : index
    %c0_22 = arith.constant 0 : index
    %c0_23 = arith.constant 0 : index
    %34 = vector.load %arg15[%c1, %c0_22, %c0_23] : memref<18x18x4xbf16, #tpu.memory_space<vmem>>, vector<16x1x4xbf16>
    tpu.vector_store %arg15[%c1, %c0_22, %c0_23], %31 {strides = array<i32>} : memref<18x18x4xbf16, #tpu.memory_space<vmem>>, vector<16x1x4xbf16>,
    %c1_24 = arith.constant 1 : index
    %c17_25 = arith.constant 17 : index
    %c0_26 = arith.constant 0 : index
    %35 = vector.load %arg15[%c1_24, %c17_25, %c0_26] : memref<18x18x4xbf16, #tpu.memory_space<vmem>>, vector<16x1x4xbf16>
    tpu.vector_store %arg15[%c1_24, %c17_25, %c0_26], %31 {strides = array<i32>} : memref<18x18x4xbf16, #tpu.memory_space<vmem>>, vector<16x1x4xbf16>,
    %36 = vector.shape_cast %29 : vector<256x4xf32> to vector<16x16x4xf32>
    %37 = arith.truncf %36 : vector<16x16x4xf32> to vector<16x16x4xbf16>
    %c1_27 = arith.constant 1 : index
    %c1_28 = arith.constant 1 : index
    %c0_29 = arith.constant 0 : index
    %38 = vector.load %arg15[%c1_27, %c1_28, %c0_29] : memref<18x18x4xbf16, #tpu.memory_space<vmem>>, vector<16x16x4xbf16>
    tpu.vector_store %arg15[%c1_27, %c1_28, %c0_29], %37 {strides = array<i32>} : memref<18x18x4xbf16, #tpu.memory_space<vmem>>, vector<16x16x4xbf16>,
    %c0_30 = arith.constant 0 : index
    %c0_31 = arith.constant 0 : index
    %c0_32 = arith.constant 0 : index
    %39 = vector.load %arg15[%c0_30, %c0_31, %c0_32] : memref<18x18x4xbf16, #tpu.memory_space<vmem>>, vector<16x16x4xbf16>
    %40 = vector.shape_cast %39 : vector<16x16x4xbf16> to vector<256x4xbf16>
    %c0_33 = arith.constant 0 : index
    %c0_34 = arith.constant 0 : index
    %41 = vector.load %arg5[%c0_33, %c0_34] : memref<36x4xbf16, #tpu.memory_space<vmem>>, vector<4x4xbf16>
    %cst_35 = arith.constant dense<0.000000e+00> : vector<256x4xf32>
    %42 = tpu.matmul %40, %41, %cst_35 {dimension_numbers = #tpu.dot_dimension_numbers<[1], [0], [0], [1], [0, 0, 1, 1], [], []>} : vector<256x4xbf16>, vector<4x4xbf16>, vector<256x4xf32> -> vector<256x4xf32>
    %c0_36 = arith.constant 0 : index
    %c1_37 = arith.constant 1 : index
    %c0_38 = arith.constant 0 : index
    %43 = vector.load %arg15[%c0_36, %c1_37, %c0_38] : memref<18x18x4xbf16, #tpu.memory_space<vmem>>, vector<16x16x4xbf16>
    %44 = vector.shape_cast %43 : vector<16x16x4xbf16> to vector<256x4xbf16>
    %c4 = arith.constant 4 : index
    %c0_39 = arith.constant 0 : index
    %45 = vector.load %arg5[%c4, %c0_39] : memref<36x4xbf16, #tpu.memory_space<vmem>>, vector<4x4xbf16>
    %cst_40 = arith.constant dense<0.000000e+00> : vector<256x4xf32>
    %46 = tpu.matmul %44, %45, %cst_40 {dimension_numbers = #tpu.dot_dimension_numbers<[1], [0], [0], [1], [0, 0, 1, 1], [], []>} : vector<256x4xbf16>, vector<4x4xbf16>, vector<256x4xf32> -> vector<256x4xf32>
    %47 = arith.addf %42, %46 : vector<256x4xf32>
    %c0_41 = arith.constant 0 : index
    %c2 = arith.constant 2 : index
    %c0_42 = arith.constant 0 : index
    %48 = vector.load %arg15[%c0_41, %c2, %c0_42] : memref<18x18x4xbf16, #tpu.memory_space<vmem>>, vector<16x16x4xbf16>
    %49 = vector.shape_cast %48 : vector<16x16x4xbf16> to vector<256x4xbf16>
    %c8 = arith.constant 8 : index
    %c0_43 = arith.constant 0 : index
    %50 = vector.load %arg5[%c8, %c0_43] : memref<36x4xbf16, #tpu.memory_space<vmem>>, vector<4x4xbf16>
    %cst_44 = arith.constant dense<0.000000e+00> : vector<256x4xf32>
    %51 = tpu.matmul %49, %50, %cst_44 {dimension_numbers = #tpu.dot_dimension_numbers<[1], [0], [0], [1], [0, 0, 1, 1], [], []>} : vector<256x4xbf16>, vector<4x4xbf16>, vector<256x4xf32> -> vector<256x4xf32>
    %52 = arith.addf %47, %51 : vector<256x4xf32>
    %c1_45 = arith.constant 1 : index
    %c0_46 = arith.constant 0 : index
    %c0_47 = arith.constant 0 : index
    %53 = vector.load %arg15[%c1_45, %c0_46, %c0_47] : memref<18x18x4xbf16, #tpu.memory_space<vmem>>, vector<16x16x4xbf16>
    %54 = vector.shape_cast %53 : vector<16x16x4xbf16> to vector<256x4xbf16>
    %c12 = arith.constant 12 : index
    %c0_48 = arith.constant 0 : index
    %55 = vector.load %arg5[%c12, %c0_48] : memref<36x4xbf16, #tpu.memory_space<vmem>>, vector<4x4xbf16>
    %cst_49 = arith.constant dense<0.000000e+00> : vector<256x4xf32>
    %56 = tpu.matmul %54, %55, %cst_49 {dimension_numbers = #tpu.dot_dimension_numbers<[1], [0], [0], [1], [0, 0, 1, 1], [], []>} : vector<256x4xbf16>, vector<4x4xbf16>, vector<256x4xf32> -> vector<256x4xf32>
    %57 = arith.addf %52, %56 : vector<256x4xf32>
    %c1_50 = arith.constant 1 : index
    %c1_51 = arith.constant 1 : index
    %c0_52 = arith.constant 0 : index
    %58 = vector.load %arg15[%c1_50, %c1_51, %c0_52] : memref<18x18x4xbf16, #tpu.memory_space<vmem>>, vector<16x16x4xbf16>
    %59 = vector.shape_cast %58 : vector<16x16x4xbf16> to vector<256x4xbf16>
    %c16 = arith.constant 16 : index
    %c0_53 = arith.constant 0 : index
    %60 = vector.load %arg5[%c16, %c0_53] : memref<36x4xbf16, #tpu.memory_space<vmem>>, vector<4x4xbf16>
    %cst_54 = arith.constant dense<0.000000e+00> : vector<256x4xf32>
    %61 = tpu.matmul %59, %60, %cst_54 {dimension_numbers = #tpu.dot_dimension_numbers<[1], [0], [0], [1], [0, 0, 1, 1], [], []>} : vector<256x4xbf16>, vector<4x4xbf16>, vector<256x4xf32> -> vector<256x4xf32>
    %62 = arith.addf %57, %61 : vector<256x4xf32>
    %c1_55 = arith.constant 1 : index
    %c2_56 = arith.constant 2 : index
    %c0_57 = arith.constant 0 : index
    %63 = vector.load %arg15[%c1_55, %c2_56, %c0_57] : memref<18x18x4xbf16, #tpu.memory_space<vmem>>, vector<16x16x4xbf16>
    %64 = vector.shape_cast %63 : vector<16x16x4xbf16> to vector<256x4xbf16>
    %c20 = arith.constant 20 : index
    %c0_58 = arith.constant 0 : index
    %65 = vector.load %arg5[%c20, %c0_58] : memref<36x4xbf16, #tpu.memory_space<vmem>>, vector<4x4xbf16>
    %cst_59 = arith.constant dense<0.000000e+00> : vector<256x4xf32>
    %66 = tpu.matmul %64, %65, %cst_59 {dimension_numbers = #tpu.dot_dimension_numbers<[1], [0], [0], [1], [0, 0, 1, 1], [], []>} : vector<256x4xbf16>, vector<4x4xbf16>, vector<256x4xf32> -> vector<256x4xf32>
    %67 = arith.addf %62, %66 : vector<256x4xf32>
    %c2_60 = arith.constant 2 : index
    %c0_61 = arith.constant 0 : index
    %c0_62 = arith.constant 0 : index
    %68 = vector.load %arg15[%c2_60, %c0_61, %c0_62] : memref<18x18x4xbf16, #tpu.memory_space<vmem>>, vector<16x16x4xbf16>
    %69 = vector.shape_cast %68 : vector<16x16x4xbf16> to vector<256x4xbf16>
    %c24 = arith.constant 24 : index
    %c0_63 = arith.constant 0 : index
    %70 = vector.load %arg5[%c24, %c0_63] : memref<36x4xbf16, #tpu.memory_space<vmem>>, vector<4x4xbf16>
    %cst_64 = arith.constant dense<0.000000e+00> : vector<256x4xf32>
    %71 = tpu.matmul %69, %70, %cst_64 {dimension_numbers = #tpu.dot_dimension_numbers<[1], [0], [0], [1], [0, 0, 1, 1], [], []>} : vector<256x4xbf16>, vector<4x4xbf16>, vector<256x4xf32> -> vector<256x4xf32>
    %72 = arith.addf %67, %71 : vector<256x4xf32>
    %c2_65 = arith.constant 2 : index
    %c1_66 = arith.constant 1 : index
    %c0_67 = arith.constant 0 : index
    %73 = vector.load %arg15[%c2_65, %c1_66, %c0_67] : memref<18x18x4xbf16, #tpu.memory_space<vmem>>, vector<16x16x4xbf16>
    %74 = vector.shape_cast %73 : vector<16x16x4xbf16> to vector<256x4xbf16>
    %c28 = arith.constant 28 : index
    %c0_68 = arith.constant 0 : index
    %75 = vector.load %arg5[%c28, %c0_68] : memref<36x4xbf16, #tpu.memory_space<vmem>>, vector<4x4xbf16>
    %cst_69 = arith.constant dense<0.000000e+00> : vector<256x4xf32>
    %76 = tpu.matmul %74, %75, %cst_69 {dimension_numbers = #tpu.dot_dimension_numbers<[1], [0], [0], [1], [0, 0, 1, 1], [], []>} : vector<256x4xbf16>, vector<4x4xbf16>, vector<256x4xf32> -> vector<256x4xf32>
    %77 = arith.addf %72, %76 : vector<256x4xf32>
    %c2_70 = arith.constant 2 : index
    %c2_71 = arith.constant 2 : index
    %c0_72 = arith.constant 0 : index
    %78 = vector.load %arg15[%c2_70, %c2_71, %c0_72] : memref<18x18x4xbf16, #tpu.memory_space<vmem>>, vector<16x16x4xbf16>
    %79 = vector.shape_cast %78 : vector<16x16x4xbf16> to vector<256x4xbf16>
    %c32 = arith.constant 32 : index
    %c0_73 = arith.constant 0 : index
    %80 = vector.load %arg5[%c32, %c0_73] : memref<36x4xbf16, #tpu.memory_space<vmem>>, vector<4x4xbf16>
    %cst_74 = arith.constant dense<0.000000e+00> : vector<256x4xf32>
    %81 = tpu.matmul %79, %80, %cst_74 {dimension_numbers = #tpu.dot_dimension_numbers<[1], [0], [0], [1], [0, 0, 1, 1], [], []>} : vector<256x4xbf16>, vector<4x4xbf16>, vector<256x4xf32> -> vector<256x4xf32>
    %82 = arith.addf %77, %81 : vector<256x4xf32>
    %c0_75 = arith.constant 0 : index
    %c0_76 = arith.constant 0 : index
    %83 = vector.load %arg6[%c0_75, %c0_76] : memref<1x4xf32, #tpu.memory_space<vmem>>, vector<1x4xf32>
    %c0_77 = arith.constant 0 : index
    %c0_78 = arith.constant 0 : index
    %84 = vector.load %arg7[%c0_77, %c0_78] : memref<1x4xf32, #tpu.memory_space<vmem>>, vector<1x4xf32>
    %cst_79 = arith.constant dense<0.000000e+00> : vector<4xf32>
    %85 = vector.multi_reduction <add>, %82, %cst_79 [0] : vector<256x4xf32> to vector<4xf32>
    %86 = vector.shape_cast %85 : vector<4xf32> to vector<1x4xf32>
    %cst_80 = arith.constant 2.560000e+02 : f32
    %87 = vector.broadcast %cst_80 : f32 to vector<1x4xf32>
    %88 = arith.divf %86, %87 : vector<1x4xf32>
    %89 = vector.broadcast %88 : vector<1x4xf32> to vector<256x4xf32>
    %90 = arith.subf %82, %89 : vector<256x4xf32>
    %91 = arith.mulf %90, %90 : vector<256x4xf32>
    %cst_81 = arith.constant dense<0.000000e+00> : vector<4xf32>
    %92 = vector.multi_reduction <add>, %91, %cst_81 [0] : vector<256x4xf32> to vector<4xf32>
    %93 = vector.shape_cast %92 : vector<4xf32> to vector<1x4xf32>
    %cst_82 = arith.constant 2.560000e+02 : f32
    %94 = vector.broadcast %cst_82 : f32 to vector<1x4xf32>
    %95 = arith.divf %93, %94 : vector<1x4xf32>
    %cst_83 = arith.constant 9.99999974E-6 : f32
    %96 = vector.broadcast %cst_83 : f32 to vector<1x4xf32>
    %97 = arith.addf %95, %96 : vector<1x4xf32>
    %98 = math.rsqrt %97 : vector<1x4xf32>
    %99 = arith.mulf %83, %98 : vector<1x4xf32>
    %100 = arith.mulf %88, %99 : vector<1x4xf32>
    %101 = arith.subf %84, %100 : vector<1x4xf32>
    %102 = vector.broadcast %99 : vector<1x4xf32> to vector<256x4xf32>
    %103 = arith.mulf %82, %102 : vector<256x4xf32>
    %104 = vector.broadcast %101 : vector<1x4xf32> to vector<256x4xf32>
    %105 = arith.addf %103, %104 : vector<256x4xf32>
    %cst_84 = arith.constant 0.000000e+00 : f32
    %106 = vector.broadcast %cst_84 : f32 to vector<256x4xf32>
    %107 = arith.maximumf %105, %106 : vector<256x4xf32>
    %108 = arith.truncf %107 : vector<256x4xf32> to vector<256x4xbf16>
    %c0_85 = arith.constant 0 : index
    %c0_86 = arith.constant 0 : index
    %109 = vector.load %arg8[%c0_85, %c0_86] : memref<4x16xbf16, #tpu.memory_space<vmem>>, vector<4x16xbf16>
    %cst_87 = arith.constant dense<0.000000e+00> : vector<256x16xf32>
    %110 = tpu.matmul %108, %109, %cst_87 {dimension_numbers = #tpu.dot_dimension_numbers<[1], [0], [0], [1], [0, 0, 1, 1], [], []>} : vector<256x4xbf16>, vector<4x16xbf16>, vector<256x16xf32> -> vector<256x16xf32>
    %c0_88 = arith.constant 0 : index
    %c0_89 = arith.constant 0 : index
    %111 = vector.load %arg9[%c0_88, %c0_89] : memref<1x16xf32, #tpu.memory_space<vmem>>, vector<1x16xf32>
    %c0_90 = arith.constant 0 : index
    %c0_91 = arith.constant 0 : index
    %112 = vector.load %arg10[%c0_90, %c0_91] : memref<1x16xf32, #tpu.memory_space<vmem>>, vector<1x16xf32>
    %cst_92 = arith.constant dense<0.000000e+00> : vector<16xf32>
    %113 = vector.multi_reduction <add>, %110, %cst_92 [0] : vector<256x16xf32> to vector<16xf32>
    %114 = vector.shape_cast %113 : vector<16xf32> to vector<1x16xf32>
    %cst_93 = arith.constant 2.560000e+02 : f32
    %115 = vector.broadcast %cst_93 : f32 to vector<1x16xf32>
    %116 = arith.divf %114, %115 : vector<1x16xf32>
    %117 = vector.broadcast %116 : vector<1x16xf32> to vector<256x16xf32>
    %118 = arith.subf %110, %117 : vector<256x16xf32>
    %119 = arith.mulf %118, %118 : vector<256x16xf32>
    %cst_94 = arith.constant dense<0.000000e+00> : vector<16xf32>
    %120 = vector.multi_reduction <add>, %119, %cst_94 [0] : vector<256x16xf32> to vector<16xf32>
    %121 = vector.shape_cast %120 : vector<16xf32> to vector<1x16xf32>
    %cst_95 = arith.constant 2.560000e+02 : f32
    %122 = vector.broadcast %cst_95 : f32 to vector<1x16xf32>
    %123 = arith.divf %121, %122 : vector<1x16xf32>
    %cst_96 = arith.constant 9.99999974E-6 : f32
    %124 = vector.broadcast %cst_96 : f32 to vector<1x16xf32>
    %125 = arith.addf %123, %124 : vector<1x16xf32>
    %126 = math.rsqrt %125 : vector<1x16xf32>
    %127 = arith.mulf %111, %126 : vector<1x16xf32>
    %128 = arith.mulf %116, %127 : vector<1x16xf32>
    %129 = arith.subf %112, %128 : vector<1x16xf32>
    %130 = vector.broadcast %127 : vector<1x16xf32> to vector<256x16xf32>
    %131 = arith.mulf %110, %130 : vector<256x16xf32>
    %132 = vector.broadcast %129 : vector<1x16xf32> to vector<256x16xf32>
    %133 = arith.addf %131, %132 : vector<256x16xf32>
    %c0_97 = arith.constant 0 : index
    %c0_98 = arith.constant 0 : index
    %134 = vector.load %arg11[%c0_97, %c0_98] : memref<4x16xbf16, #tpu.memory_space<vmem>>, vector<4x16xbf16>
    %cst_99 = arith.constant dense<0.000000e+00> : vector<256x16xf32>
    %135 = tpu.matmul %2, %134, %cst_99 {dimension_numbers = #tpu.dot_dimension_numbers<[1], [0], [0], [1], [0, 0, 1, 1], [], []>} : vector<256x4xbf16>, vector<4x16xbf16>, vector<256x16xf32> -> vector<256x16xf32>
    %c0_100 = arith.constant 0 : index
    %c0_101 = arith.constant 0 : index
    %136 = vector.load %arg12[%c0_100, %c0_101] : memref<1x16xf32, #tpu.memory_space<vmem>>, vector<1x16xf32>
    %c0_102 = arith.constant 0 : index
    %c0_103 = arith.constant 0 : index
    %137 = vector.load %arg13[%c0_102, %c0_103] : memref<1x16xf32, #tpu.memory_space<vmem>>, vector<1x16xf32>
    %cst_104 = arith.constant dense<0.000000e+00> : vector<16xf32>
    %138 = vector.multi_reduction <add>, %135, %cst_104 [0] : vector<256x16xf32> to vector<16xf32>
    %139 = vector.shape_cast %138 : vector<16xf32> to vector<1x16xf32>
    %cst_105 = arith.constant 2.560000e+02 : f32
    %140 = vector.broadcast %cst_105 : f32 to vector<1x16xf32>
    %141 = arith.divf %139, %140 : vector<1x16xf32>
    %142 = vector.broadcast %141 : vector<1x16xf32> to vector<256x16xf32>
    %143 = arith.subf %135, %142 : vector<256x16xf32>
    %144 = arith.mulf %143, %143 : vector<256x16xf32>
    %cst_106 = arith.constant dense<0.000000e+00> : vector<16xf32>
    %145 = vector.multi_reduction <add>, %144, %cst_106 [0] : vector<256x16xf32> to vector<16xf32>
    %146 = vector.shape_cast %145 : vector<16xf32> to vector<1x16xf32>
    %cst_107 = arith.constant 2.560000e+02 : f32
    %147 = vector.broadcast %cst_107 : f32 to vector<1x16xf32>
    %148 = arith.divf %146, %147 : vector<1x16xf32>
    %cst_108 = arith.constant 9.99999974E-6 : f32
    %149 = vector.broadcast %cst_108 : f32 to vector<1x16xf32>
    %150 = arith.addf %148, %149 : vector<1x16xf32>
    %151 = math.rsqrt %150 : vector<1x16xf32>
    %152 = arith.mulf %136, %151 : vector<1x16xf32>
    %153 = arith.mulf %141, %152 : vector<1x16xf32>
    %154 = arith.subf %137, %153 : vector<1x16xf32>
    %155 = vector.broadcast %152 : vector<1x16xf32> to vector<256x16xf32>
    %156 = arith.mulf %135, %155 : vector<256x16xf32>
    %157 = vector.broadcast %154 : vector<1x16xf32> to vector<256x16xf32>
    %158 = arith.addf %156, %157 : vector<256x16xf32>
    %159 = arith.addf %133, %158 : vector<256x16xf32>
    %cst_109 = arith.constant 0.000000e+00 : f32
    %160 = vector.broadcast %cst_109 : f32 to vector<256x16xf32>
    %161 = arith.maximumf %159, %160 : vector<256x16xf32>
    %162 = vector.shape_cast %161 : vector<256x16xf32> to vector<16x16x16xf32>
    %163 = arith.truncf %162 : vector<16x16x16xf32> to vector<16x16x16xbf16>
    %c0_110 = arith.constant 0 : index
    %c0_111 = arith.constant 0 : index
    %c0_112 = arith.constant 0 : index
    %c0_113 = arith.constant 0 : index
    %164 = vector.load %arg14[%c0_110, %c0_111, %c0_112, %c0_113] : memref<1x16x16x16xbf16, #tpu.memory_space<vmem>>, vector<1x16x16x16xbf16>
    %165 = vector.shape_cast %164 : vector<1x16x16x16xbf16> to vector<16x16x16xbf16>
    %166 = vector.shape_cast %163 : vector<16x16x16xbf16> to vector<1x16x16x16xbf16>
    tpu.vector_store %arg14[%c0_110, %c0_111, %c0_112, %c0_113], %166 {strides = array<i32>} : memref<1x16x16x16xbf16, #tpu.memory_space<vmem>>, vector<1x16x16x16xbf16>,
    return
  }
  func.func @transform_0(%arg0: i32) -> (i32, i32, i32, i32) {
    %c0_i32 = arith.constant 0 : i32
    %c0_i32_0 = arith.constant 0 : i32
    %c0_i32_1 = arith.constant 0 : i32
    %c0_i32_2 = arith.constant 0 : i32
    return %arg0, %c0_i32, %c0_i32_0, %c0_i32_1 : i32, i32, i32, i32
  }
  func.func @transform_1(%arg0: i32) -> (i32, i32) {
    %c0_i32 = arith.constant 0 : i32
    %c0_i32_0 = arith.constant 0 : i32
    %c0_i32_1 = arith.constant 0 : i32
    return %c0_i32, %c0_i32_0 : i32, i32
  }
  func.func @transform_2(%arg0: i32) -> (i32, i32) {
    %c0_i32 = arith.constant 0 : i32
    %c0_i32_0 = arith.constant 0 : i32
    %c0_i32_1 = arith.constant 0 : i32
    return %c0_i32, %c0_i32_0 : i32, i32
  }
  func.func @transform_3(%arg0: i32) -> (i32, i32) {
    %c0_i32 = arith.constant 0 : i32
    %c0_i32_0 = arith.constant 0 : i32
    %c0_i32_1 = arith.constant 0 : i32
    return %c0_i32, %c0_i32_0 : i32, i32
  }
  func.func @transform_4(%arg0: i32) -> (i32, i32) {
    %c0_i32 = arith.constant 0 : i32
    %c0_i32_0 = arith.constant 0 : i32
    %c0_i32_1 = arith.constant 0 : i32
    return %c0_i32, %c0_i32_0 : i32, i32
  }
  func.func @transform_5(%arg0: i32) -> (i32, i32) {
    %c0_i32 = arith.constant 0 : i32
    %c0_i32_0 = arith.constant 0 : i32
    %c0_i32_1 = arith.constant 0 : i32
    return %c0_i32, %c0_i32_0 : i32, i32
  }
  func.func @transform_6(%arg0: i32) -> (i32, i32) {
    %c0_i32 = arith.constant 0 : i32
    %c0_i32_0 = arith.constant 0 : i32
    %c0_i32_1 = arith.constant 0 : i32
    return %c0_i32, %c0_i32_0 : i32, i32
  }
  func.func @transform_7(%arg0: i32) -> (i32, i32) {
    %c0_i32 = arith.constant 0 : i32
    %c0_i32_0 = arith.constant 0 : i32
    %c0_i32_1 = arith.constant 0 : i32
    return %c0_i32, %c0_i32_0 : i32, i32
  }
  func.func @transform_8(%arg0: i32) -> (i32, i32) {
    %c0_i32 = arith.constant 0 : i32
    %c0_i32_0 = arith.constant 0 : i32
    %c0_i32_1 = arith.constant 0 : i32
    return %c0_i32, %c0_i32_0 : i32, i32
  }
  func.func @transform_9(%arg0: i32) -> (i32, i32) {
    %c0_i32 = arith.constant 0 : i32
    %c0_i32_0 = arith.constant 0 : i32
    %c0_i32_1 = arith.constant 0 : i32
    return %c0_i32, %c0_i32_0 : i32, i32
  }
  func.func @transform_10(%arg0: i32) -> (i32, i32) {
    %c0_i32 = arith.constant 0 : i32
    %c0_i32_0 = arith.constant 0 : i32
    %c0_i32_1 = arith.constant 0 : i32
    return %c0_i32, %c0_i32_0 : i32, i32
  }
  func.func @transform_11(%arg0: i32) -> (i32, i32) {
    %c0_i32 = arith.constant 0 : i32
    %c0_i32_0 = arith.constant 0 : i32
    %c0_i32_1 = arith.constant 0 : i32
    return %c0_i32, %c0_i32_0 : i32, i32
  }
  func.func @transform_12(%arg0: i32) -> (i32, i32) {
    %c0_i32 = arith.constant 0 : i32
    %c0_i32_0 = arith.constant 0 : i32
    %c0_i32_1 = arith.constant 0 : i32
    return %c0_i32, %c0_i32_0 : i32, i32
  }
  func.func @transform_13(%arg0: i32) -> (i32, i32, i32, i32) {
    %c0_i32 = arith.constant 0 : i32
    %c0_i32_0 = arith.constant 0 : i32
    %c0_i32_1 = arith.constant 0 : i32
    %c0_i32_2 = arith.constant 0 : i32
    return %arg0, %c0_i32, %c0_i32_0, %c0_i32_1 : i32, i32, i32, i32
  }
}

</mosaic_0001>

<llo_original>
// kernel: tpu_custom_call.1
$region0: #{tpu_custom_call.1}
  #allocation0 [shape = 'u32[]', space=smem, size = 0x4, offset = 0x4, fixed_abs, tag = 'smem constant byte address 0x4 - core index']
  #allocation1 [shape = 'u32[144,128]{1,0:T(1,128)}', space=vmem, size = 0x12000, scoped, tag = 'internal scratch']
  %s0 = inlined_call_operand.hbm [shape: f32[8,128], index: 0, kind: input, shape index: {}]
  %s1 = inlined_call_operand.hbm [shape: f32[8,128], index: 1, kind: output, shape index: {}]
  %s2 = sld [smem:[#allocation0]]
  $region18: #{tpu_custom_call.1} parent=0
    _
  %s4 = ssub.s32 1, %s2
  %s5 = scalar_select 0, %s4, %s2
  $region1: #{tpu_custom_call.1} parent=0
    #allocation2 [shape = 'u8[4096]{0}', space=vmem, size = 0x1000, scoped, tag = 'input window, operand 0, single buffered']
    #allocation3 [shape = 's32[1]{0}', space=sflag, size = 0x4, scoped, tag = 'scoped memory for tpu_custom_call.1']
    #allocation4 [shape = 's32[1]{0}', space=sflag, size = 0x4, scoped, tag = 'scoped memory for tpu_custom_call.1']
    #allocation5 [shape = 'u8[4096]{0}', space=vmem, size = 0x1000, scoped, tag = 'output window, operand 0, single buffered']
    %6 = vsyncpa [#allocation3], 0
    %7 = vsyncpa [#allocation4], 0
    // Predicated region
    $region2: #{tpu_custom_call.1} parent=1 // pred_check
      _
    $region3: #{tpu_custom_call.1} parent=1 // pred_check_branch
      %9 = sbr.rel (0) target = $region5
    $region4: #{tpu_custom_call.1} parent=1 // pred_region
      %s11 = ssub.s32 128, 128
      %12 = vsyncadd [#allocation3], %s11
      %s14 = sshll.u32 [#allocation2], 4
      %s15 = int_to_ptr.vmem [resolvable:$true] %s14
      %17 = dma.hbm_to_vmem [thread:$0]  %s0, 128, %s15, [#allocation3]
    $region5: #{tpu_custom_call.1} parent=1 // pred_fallthru
      _
    // Predicated region
    $region6: #{tpu_custom_call.1} parent=1 // pred_check
      _
    $region7: #{tpu_custom_call.1} parent=1 // pred_check_branch
      %19 = sbr.rel (0) target = $region9
    $region8: #{tpu_custom_call.1} parent=1 // pred_region
      %20 = dma.done [#allocation3], 128
    $region9: #{tpu_custom_call.1} parent=1 // pred_fallthru
      _
    %v21 = vld [vmem:[#allocation2] sm:$0xff]
    %v22 = vadd.f32 %v21, 1.0
    %23 = vst [vmem:[#allocation5] sm:$0xff] %v22
    // Predicated region
    $region10: #{tpu_custom_call.1} parent=1 // pred_check
      _
    $region11: #{tpu_custom_call.1} parent=1 // pred_check_branch
      %25 = sbr.rel (0) target = $region13
    $region12: #{tpu_custom_call.1} parent=1 // pred_region
      %s27 = ssub.s32 128, 128
      %28 = vsyncadd [#allocation4], %s27
      %s30 = sshll.u32 [#allocation5], 4
      %s31 = int_to_ptr.vmem [resolvable:$true] %s30
      %33 = dma.vmem_to_hbm [thread:$0]  %s31, 128, %s1, [#allocation4]
    $region13: #{tpu_custom_call.1} parent=1 // pred_fallthru
      _
    // Predicated region
    $region14: #{tpu_custom_call.1} parent=1 // pred_check
      _
    $region15: #{tpu_custom_call.1} parent=1 // pred_check_branch
      %35 = sbr.rel (0) target = $region17
    $region16: #{tpu_custom_call.1} parent=1 // pred_region
      %36 = dma.done [#allocation4], 128
    $region17: #{tpu_custom_call.1} parent=1 // pred_fallthru
      _
    %37 = vsyncpa [#allocation3], 1
    %38 = vsyncpa [#allocation4], 1

// kernel: tpu_custom_call.1
$region0: #{tpu_custom_call.1}
  #allocation0 [shape = 'u32[]', space=smem, size = 0x4, offset = 0x4, fixed_abs, tag = 'smem constant byte address 0x4 - core index']
  #allocation1 [shape = 'u32[144,128]{1,0:T(1,128)}', space=vmem, size = 0x12000, scoped, tag = 'internal scratch']
  #allocation2 [shape = 'bf16[18,18,4]{2,1,0:T(8,128)(2,1)}', space=vmem, size = 0x1b000, scoped, tag = 'scratch operand']
  %s0 = inlined_call_operand.vmem [shape: bf16[2,16,16,4], index: 0, kind: input, shape index: {}]
  %s1 = inlined_call_operand.vmem [shape: bf16[4,4], index: 1, kind: input, shape index: {}]
  %s2 = inlined_call_operand.vmem [shape: f32[1,4], index: 2, kind: input, shape index: {}]
  %s3 = inlined_call_operand.vmem [shape: f32[1,4], index: 3, kind: input, shape index: {}]
  %s4 = inlined_call_operand.vmem [shape: bf16[36,4], index: 4, kind: input, shape index: {}]
  %s5 = inlined_call_operand.vmem [shape: f32[1,4], index: 5, kind: input, shape index: {}]
  %s6 = inlined_call_operand.vmem [shape: f32[1,4], index: 6, kind: input, shape index: {}]
  %s7 = inlined_call_operand.vmem [shape: bf16[4,16], index: 7, kind: input, shape index: {}]
  %s8 = inlined_call_operand.vmem [shape: f32[1,16], index: 8, kind: input, shape index: {}]
  %s9 = inlined_call_operand.vmem [shape: f32[1,16], index: 9, kind: input, shape index: {}]
  %s10 = inlined_call_operand.vmem [shape: bf16[4,16], index: 10, kind: input, shape index: {}]
  %s11 = inlined_call_operand.vmem [shape: f32[1,16], index: 11, kind: input, shape index: {}]
  %s12 = inlined_call_operand.vmem [shape: f32[1,16], index: 12, kind: input, shape index: {}]
  %s13 = inlined_call_operand.hbm [shape: bf16[2,16,16,16], index: 13, kind: output, shape index: {}]
  %s14 = sld [smem:[#allocation0]]
  $region85: #{tpu_custom_call.1} parent=0
    _
  %s16 = ssub.s32 1, %s14
  %s17 = scalar_select 0, %s16, %s14
  $region1: #{tpu_custom_call.1} parent=0
    #allocation3 [shape = 'u8[131072]{0}', space=vmem, size = 0x20000, scoped, tag = 'output window, operand 0']
    #allocation4 [shape = 's32[2]{0}', space=sflag, size = 0x8, scoped, tag = 'scoped memory for tpu_custom_call.1']
    %18 = vsyncpa [#allocation4], 0
    %s19 = scalar_lea.sflag [#allocation4], 1
    %20 = vsyncpa %s19, 0
    loop: start=0, step=1, limit=4
    $region2: #{tpu_custom_call.1} parent=1 // loop_pre_header
      _
    $region3: #{tpu_custom_call.1} parent=1 // loop_header
      %s22 = sphi 0, %s26
      %p23 = scmp.ge.s32.totalorder %s22, 4
      %s32 = sphi 0, %s34
      %s35 = sphi 0, %s32
      %s36 = sphi 0, %s35
      %s52 = sphi 0, %s36
      %s56 = sphi 0, %s56
      %s58 = sphi 0, %s56
      %s59 = sphi 0, %s58
      %s73 = sphi 0, %s59
      %s77 = sphi 0, %s77
      %s79 = sphi 0, %s77
      %s80 = sphi 0, %s79
      %s94 = sphi 0, %s80
      %s98 = sphi 0, %s98
      %s100 = sphi 0, %s98
      %s101 = sphi 0, %s100
      %s115 = sphi 0, %s101
      %s119 = sphi 0, %s119
      %s121 = sphi 0, %s119
      %s122 = sphi 0, %s121
      %s136 = sphi 0, %s122
      %s140 = sphi 0, %s140
      %s142 = sphi 0, %s140
      %s143 = sphi 0, %s142
      %s157 = sphi 0, %s143
      %s161 = sphi 0, %s161
      %s163 = sphi 0, %s161
      %s164 = sphi 0, %s163
      %s178 = sphi 0, %s164
      %s182 = sphi 0, %s182
      %s184 = sphi 0, %s182
      %s185 = sphi 0, %s184
      %s199 = sphi 0, %s185
      %s203 = sphi 0, %s203
      %s205 = sphi 0, %s203
      %s206 = sphi 0, %s205
      %s220 = sphi 0, %s206
      %s224 = sphi 0, %s224
      %s226 = sphi 0, %s224
      %s227 = sphi 0, %s226
      %s241 = sphi 0, %s227
      %s245 = sphi 0, %s245
      %s247 = sphi 0, %s245
      %s248 = sphi 0, %s247
      %s262 = sphi 0, %s248
      %s266 = sphi 0, %s266
      %s268 = sphi 0, %s266
      %s269 = sphi 0, %s268
      %s283 = sphi 0, %s269
      %s287 = sphi 0, %s287
      %s289 = sphi 0, %s287
      %s290 = sphi 0, %s289
      %s304 = sphi 0, %s290
      %s310 = sphi 0, %s312
      %s313 = sphi 0, %s310
      %s314 = sphi 0, %s313
      %s330 = sphi 0, %s314
    $region4: #{tpu_custom_call.1} parent=1 // loop_header_branch
      %25 = sbr.rel (%p23) target = $region8
    $region5: #{tpu_custom_call.1} parent=1 // loop_body
      %s27 = ssub.s32 %s22, 1
      %s28 = ssub.s32 %s22, 2
      %s29 = sadd.s32 %s22, 1
      %s30 = ssub.s32 %s22, %s29
      %p31 = scmp.eq.s32.totalorder %s30, 0
      %s33 = sadd.s32 %s32, 1
      %s34 = scalar_select %p31, %s32, %s33
      %p37 = pneg %p31
      %p38 = scmp.eq.s32.totalorder %s22, 1
      %p39 = por %p37, %p38
      %p40 = scmp.ne.s32.totalorder %s32, %s35
      %p41 = scmp.eq.s32.totalorder %s22, 0
      %p42 = por %p40, %p41
      %p43 = scmp.ne.s32.totalorder %s32, %s35
      %p44 = scmp.eq.s32.totalorder %s27, 1
      %p45 = por %p43, %p44
      %p46 = scmp.ne.s32.totalorder %s35, %s36
      %p47 = scmp.eq.s32.totalorder %s27, 0
      %p48 = por %p46, %p47
      %p49 = scmp.ne.s32.totalorder %s35, %s36
      %p50 = scmp.eq.s32.totalorder %s28, 1
      %p51 = por %p49, %p50
      %p53 = scmp.ne.s32.totalorder %s36, %s52
      %p54 = scmp.eq.s32.totalorder %s28, 0
      %p55 = por %p53, %p54
      %s57 = sadd.s32 %s56, 1
      %p60 = scmp.eq.s32.totalorder %s22, 1
      %p61 = scmp.ne.s32.totalorder %s56, %s58
      %p62 = scmp.eq.s32.totalorder %s22, 0
      %p63 = por %p61, %p62
      %p64 = scmp.ne.s32.totalorder %s56, %s58
      %p65 = scmp.eq.s32.totalorder %s27, 1
      %p66 = por %p64, %p65
      %p67 = scmp.ne.s32.totalorder %s58, %s59
      %p68 = scmp.eq.s32.totalorder %s27, 0
      %p69 = por %p67, %p68
      %p70 = scmp.ne.s32.totalorder %s58, %s59
      %p71 = scmp.eq.s32.totalorder %s28, 1
      %p72 = por %p70, %p71
      %p74 = scmp.ne.s32.totalorder %s59, %s73
      %p75 = scmp.eq.s32.totalorder %s28, 0
      %p76 = por %p74, %p75
      %s78 = sadd.s32 %s77, 1
      %p81 = scmp.eq.s32.totalorder %s22, 1
      %p82 = scmp.ne.s32.totalorder %s77, %s79
      %p83 = scmp.eq.s32.totalorder %s22, 0
      %p84 = por %p82, %p83
      %p85 = scmp.ne.s32.totalorder %s77, %s79
      %p86 = scmp.eq.s32.totalorder %s27, 1
      %p87 = por %p85, %p86
      %p88 = scmp.ne.s32.totalorder %s79, %s80
      %p89 = scmp.eq.s32.totalorder %s27, 0
      %p90 = por %p88, %p89
      %p91 = scmp.ne.s32.totalorder %s79, %s80
      %p92 = scmp.eq.s32.totalorder %s28, 1
      %p93 = por %p91, %p92
      %p95 = scmp.ne.s32.totalorder %s80, %s94
      %p96 = scmp.eq.s32.totalorder %s28, 0
      %p97 = por %p95, %p96
      %s99 = sadd.s32 %s98, 1
      %p102 = scmp.eq.s32.totalorder %s22, 1
      %p103 = scmp.ne.s32.totalorder %s98, %s100
      %p104 = scmp.eq.s32.totalorder %s22, 0
      %p105 = por %p103, %p104
      %p106 = scmp.ne.s32.totalorder %s98, %s100
      %p107 = scmp.eq.s32.totalorder %s27, 1
      %p108 = por %p106, %p107
      %p109 = scmp.ne.s32.totalorder %s100, %s101
      %p110 = scmp.eq.s32.totalorder %s27, 0
      %p111 = por %p109, %p110
      %p112 = scmp.ne.s32.totalorder %s100, %s101
      %p113 = scmp.eq.s32.totalorder %s28, 1
      %p114 = por %p112, %p113
      %p116 = scmp.ne.s32.totalorder %s101, %s115
      %p117 = scmp.eq.s32.totalorder %s28, 0
      %p118 = por %p116, %p117
      %s120 = sadd.s32 %s119, 1
      %p123 = scmp.eq.s32.totalorder %s22, 1
      %p124 = scmp.ne.s32.totalorder %s119, %s121
      %p125 = scmp.eq.s32.totalorder %s22, 0
      %p126 = por %p124, %p125
      %p127 = scmp.ne.s32.totalorder %s119, %s121
      %p128 = scmp.eq.s32.totalorder %s27, 1
      %p129 = por %p127, %p128
      %p130 = scmp.ne.s32.totalorder %s121, %s122
      %p131 = scmp.eq.s32.totalorder %s27, 0
      %p132 = por %p130, %p131
      %p133 = scmp.ne.s32.totalorder %s121, %s122
      %p134 = scmp.eq.s32.totalorder %s28, 1
      %p135 = por %p133, %p134
      %p137 = scmp.ne.s32.totalorder %s122, %s136
      %p138 = scmp.eq.s32.totalorder %s28, 0
      %p139 = por %p137, %p138
      %s141 = sadd.s32 %s140, 1
      %p144 = scmp.eq.s32.totalorder %s22, 1
      %p145 = scmp.ne.s32.totalorder %s140, %s142
      %p146 = scmp.eq.s32.totalorder %s22, 0
      %p147 = por %p145, %p146
      %p148 = scmp.ne.s32.totalorder %s140, %s142
      %p149 = scmp.eq.s32.totalorder %s27, 1
      %p150 = por %p148, %p149
      %p151 = scmp.ne.s32.totalorder %s142, %s143
      %p152 = scmp.eq.s32.totalorder %s27, 0
      %p153 = por %p151, %p152
      %p154 = scmp.ne.s32.totalorder %s142, %s143
      %p155 = scmp.eq.s32.totalorder %s28, 1
      %p156 = por %p154, %p155
      %p158 = scmp.ne.s32.totalorder %s143, %s157
      %p159 = scmp.eq.s32.totalorder %s28, 0
      %p160 = por %p158, %p159
      %s162 = sadd.s32 %s161, 1
      %p165 = scmp.eq.s32.totalorder %s22, 1
      %p166 = scmp.ne.s32.totalorder %s161, %s163
      %p167 = scmp.eq.s32.totalorder %s22, 0
      %p168 = por %p166, %p167
      %p169 = scmp.ne.s32.totalorder %s161, %s163
      %p170 = scmp.eq.s32.totalorder %s27, 1
      %p171 = por %p169, %p170
      %p172 = scmp.ne.s32.totalorder %s163, %s164
      %p173 = scmp.eq.s32.totalorder %s27, 0
      %p174 = por %p172, %p173
      %p175 = scmp.ne.s32.totalorder %s163, %s164
      %p176 = scmp.eq.s32.totalorder %s28, 1
      %p177 = por %p175, %p176
      %p179 = scmp.ne.s32.totalorder %s164, %s178
      %p180 = scmp.eq.s32.totalorder %s28, 0
      %p181 = por %p179, %p180
      %s183 = sadd.s32 %s182, 1
      %p186 = scmp.eq.s32.totalorder %s22, 1
      %p187 = scmp.ne.s32.totalorder %s182, %s184
      %p188 = scmp.eq.s32.totalorder %s22, 0
      %p189 = por %p187, %p188
      %p190 = scmp.ne.s32.totalorder %s182, %s184
      %p191 = scmp.eq.s32.totalorder %s27, 1
      %p192 = por %p190, %p191
      %p193 = scmp.ne.s32.totalorder %s184, %s185
      %p194 = scmp.eq.s32.totalorder %s27, 0
      %p195 = por %p193, %p194
      %p196 = scmp.ne.s32.totalorder %s184, %s185
      %p197 = scmp.eq.s32.totalorder %s28, 1
      %p198 = por %p196, %p197
      %p200 = scmp.ne.s32.totalorder %s185, %s199
      %p201 = scmp.eq.s32.totalorder %s28, 0
      %p202 = por %p200, %p201
      %s204 = sadd.s32 %s203, 1
      %p207 = scmp.eq.s32.totalorder %s22, 1
      %p208 = scmp.ne.s32.totalorder %s203, %s205
      %p209 = scmp.eq.s32.totalorder %s22, 0
      %p210 = por %p208, %p209
      %p211 = scmp.ne.s32.totalorder %s203, %s205
      %p212 = scmp.eq.s32.totalorder %s27, 1
      %p213 = por %p211, %p212
      %p214 = scmp.ne.s32.totalorder %s205, %s206
      %p215 = scmp.eq.s32.totalorder %s27, 0
      %p216 = por %p214, %p215
      %p217 = scmp.ne.s32.totalorder %s205, %s206
      %p218 = scmp.eq.s32.totalorder %s28, 1
      %p219 = por %p217, %p218
      %p221 = scmp.ne.s32.totalorder %s206, %s220
      %p222 = scmp.eq.s32.totalorder %s28, 0
      %p223 = por %p221, %p222
      %s225 = sadd.s32 %s224, 1
      %p228 = scmp.eq.s32.totalorder %s22, 1
      %p229 = scmp.ne.s32.totalorder %s224, %s226
      %p230 = scmp.eq.s32.totalorder %s22, 0
      %p231 = por %p229, %p230
      %p232 = scmp.ne.s32.totalorder %s224, %s226
      %p233 = scmp.eq.s32.totalorder %s27, 1
      %p234 = por %p232, %p233
      %p235 = scmp.ne.s32.totalorder %s226, %s227
      %p236 = scmp.eq.s32.totalorder %s27, 0
      %p237 = por %p235, %p236
      %p238 = scmp.ne.s32.totalorder %s226, %s227
      %p239 = scmp.eq.s32.totalorder %s28, 1
      %p240 = por %p238, %p239
      %p242 = scmp.ne.s32.totalorder %s227, %s241
      %p243 = scmp.eq.s32.totalorder %s28, 0
      %p244 = por %p242, %p243
      %s246 = sadd.s32 %s245, 1
      %p249 = scmp.eq.s32.totalorder %s22, 1
      %p250 = scmp.ne.s32.totalorder %s245, %s247
      %p251 = scmp.eq.s32.totalorder %s22, 0
      %p252 = por %p250, %p251
      %p253 = scmp.ne.s32.totalorder %s245, %s247
      %p254 = scmp.eq.s32.totalorder %s27, 1
      %p255 = por %p253, %p254
      %p256 = scmp.ne.s32.totalorder %s247, %s248
      %p257 = scmp.eq.s32.totalorder %s27, 0
      %p258 = por %p256, %p257
      %p259 = scmp.ne.s32.totalorder %s247, %s248
      %p260 = scmp.eq.s32.totalorder %s28, 1
      %p261 = por %p259, %p260
      %p263 = scmp.ne.s32.totalorder %s248, %s262
      %p264 = scmp.eq.s32.totalorder %s28, 0
      %p265 = por %p263, %p264
      %s267 = sadd.s32 %s266, 1
      %p270 = scmp.eq.s32.totalorder %s22, 1
      %p271 = scmp.ne.s32.totalorder %s266, %s268
      %p272 = scmp.eq.s32.totalorder %s22, 0
      %p273 = por %p271, %p272
      %p274 = scmp.ne.s32.totalorder %s266, %s268
      %p275 = scmp.eq.s32.totalorder %s27, 1
      %p276 = por %p274, %p275
      %p277 = scmp.ne.s32.totalorder %s268, %s269
      %p278 = scmp.eq.s32.totalorder %s27, 0
      %p279 = por %p277, %p278
      %p280 = scmp.ne.s32.totalorder %s268, %s269
      %p281 = scmp.eq.s32.totalorder %s28, 1
      %p282 = por %p280, %p281
      %p284 = scmp.ne.s32.totalorder %s269, %s283
      %p285 = scmp.eq.s32.totalorder %s28, 0
      %p286 = por %p284, %p285
      %s288 = sadd.s32 %s287, 1
      %p291 = scmp.eq.s32.totalorder %s22, 1
      %p292 = scmp.ne.s32.totalorder %s287, %s289
      %p293 = scmp.eq.s32.totalorder %s22, 0
      %p294 = por %p292, %p293
      %p295 = scmp.ne.s32.totalorder %s287, %s289
      %p296 = scmp.eq.s32.totalorder %s27, 1
      %p297 = por %p295, %p296
      %p298 = scmp.ne.s32.totalorder %s289, %s290
      %p299 = scmp.eq.s32.totalorder %s27, 0
      %p300 = por %p298, %p299
      %p301 = scmp.ne.s32.totalorder %s289, %s290
      %p302 = scmp.eq.s32.totalorder %s28, 1
      %p303 = por %p301, %p302
      %p305 = scmp.ne.s32.totalorder %s290, %s304
      %p306 = scmp.eq.s32.totalorder %s28, 0
      %p307 = por %p305, %p306
      %s308 = ssub.s32 %s22, %s29
      %p309 = scmp.eq.s32.totalorder %s308, 0
      %s311 = sadd.s32 %s310, 1
      %s312 = scalar_select %p309, %s310, %s311
      %p315 = pneg %p309
      %p316 = scmp.eq.s32.totalorder %s22, 1
      %p317 = por %p315, %p316
      %p318 = scmp.ne.s32.totalorder %s310, %s313
      %p319 = scmp.eq.s32.totalorder %s22, 0
      %p320 = por %p318, %p319
      %p321 = scmp.ne.s32.totalorder %s310, %s313
      %p322 = scmp.eq.s32.totalorder %s27, 1
      %p323 = por %p321, %p322
      %p324 = scmp.ne.s32.totalorder %s313, %s314
      %p325 = scmp.eq.s32.totalorder %s27, 0
      %p326 = por %p324, %p325
      %p327 = scmp.ne.s32.totalorder %s313, %s314
      %p328 = scmp.eq.s32.totalorder %s28, 1
      %p329 = por %p327, %p328
      %p331 = scmp.ne.s32.totalorder %s314, %s330
      %p332 = scmp.eq.s32.totalorder %s28, 0
      %p333 = por %p331, %p332
      %p334 = scmp.le.s32.totalorder 1, %s22
      %p335 = scmp.lt.s32.totalorder %s22, 3
      %p336 = pnand %p334, %p335
      %p337 = pneg %p336
      // Predicated region
      $region9: #{tpu_custom_call.1} parent=5 // pred_check
        _
      $region10: #{tpu_custom_call.1} parent=5 // pred_check_branch
        %339 = sbr.rel (%p336) target = $region12
      $region11: #{tpu_custom_call.1} parent=5 // pred_region
        %s340 = ssub.s32 %s22, 1
        // Predicated region
        $region13: #{tpu_custom_call.1} parent=11 // pred_check
          %p341 = pneg %p69
        $region14: #{tpu_custom_call.1} parent=11 // pred_check_branch
          %343 = sbr.rel (%p341) target = $region16
        $region15: #{tpu_custom_call.1} parent=11 // pred_region
          _
        $region16: #{tpu_custom_call.1} parent=11 // pred_fallthru
          _
        // Predicated region
        $region17: #{tpu_custom_call.1} parent=11 // pred_check
          %p344 = pneg %p90
        $region18: #{tpu_custom_call.1} parent=11 // pred_check_branch
          %346 = sbr.rel (%p344) target = $region20
        $region19: #{tpu_custom_call.1} parent=11 // pred_region
          _
        $region20: #{tpu_custom_call.1} parent=11 // pred_fallthru
          _
        // Predicated region
        $region21: #{tpu_custom_call.1} parent=11 // pred_check
          %p347 = pneg %p111
        $region22: #{tpu_custom_call.1} parent=11 // pred_check_branch
          %349 = sbr.rel (%p347) target = $region24
        $region23: #{tpu_custom_call.1} parent=11 // pred_region
          _
        $region24: #{tpu_custom_call.1} parent=11 // pred_fallthru
          _
        // Predicated region
        $region25: #{tpu_custom_call.1} parent=11 // pred_check
          %p350 = pneg %p132
        $region26: #{tpu_custom_call.1} parent=11 // pred_check_branch
          %352 = sbr.rel (%p350) target = $region28
        $region27: #{tpu_custom_call.1} parent=11 // pred_region
          _
        $region28: #{tpu_custom_call.1} parent=11 // pred_fallthru
          _
        // Predicated region
        $region29: #{tpu_custom_call.1} parent=11 // pred_check
          %p353 = pneg %p153
        $region30: #{tpu_custom_call.1} parent=11 // pred_check_branch
          %355 = sbr.rel (%p353) target = $region32
        $region31: #{tpu_custom_call.1} parent=11 // pred_region
          _
        $region32: #{tpu_custom_call.1} parent=11 // pred_fallthru
          _
        // Predicated region
        $region33: #{tpu_custom_call.1} parent=11 // pred_check
          %p356 = pneg %p174
        $region34: #{tpu_custom_call.1} parent=11 // pred_check_branch
          %358 = sbr.rel (%p356) target = $region36
        $region35: #{tpu_custom_call.1} parent=11 // pred_region
          _
        $region36: #{tpu_custom_call.1} parent=11 // pred_fallthru
          _
        // Predicated region
        $region37: #{tpu_custom_call.1} parent=11 // pred_check
          %p359 = pneg %p195
        $region38: #{tpu_custom_call.1} parent=11 // pred_check_branch
          %361 = sbr.rel (%p359) target = $region40
        $region39: #{tpu_custom_call.1} parent=11 // pred_region
          _
        $region40: #{tpu_custom_call.1} parent=11 // pred_fallthru
          _
        // Predicated region
        $region41: #{tpu_custom_call.1} parent=11 // pred_check
          %p362 = pneg %p216
        $region42: #{tpu_custom_call.1} parent=11 // pred_check_branch
          %364 = sbr.rel (%p362) target = $region44
        $region43: #{tpu_custom_call.1} parent=11 // pred_region
          _
        $region44: #{tpu_custom_call.1} parent=11 // pred_fallthru
          _
        // Predicated region
        $region45: #{tpu_custom_call.1} parent=11 // pred_check
          %p365 = pneg %p237
        $region46: #{tpu_custom_call.1} parent=11 // pred_check_branch
          %367 = sbr.rel (%p365) target = $region48
        $region47: #{tpu_custom_call.1} parent=11 // pred_region
          _
        $region48: #{tpu_custom_call.1} parent=11 // pred_fallthru
          _
        // Predicated region
        $region49: #{tpu_custom_call.1} parent=11 // pred_check
          %p368 = pneg %p258
        $region50: #{tpu_custom_call.1} parent=11 // pred_check_branch
          %370 = sbr.rel (%p368) target = $region52
        $region51: #{tpu_custom_call.1} parent=11 // pred_region
          _
        $region52: #{tpu_custom_call.1} parent=11 // pred_fallthru
          _
        // Predicated region
        $region53: #{tpu_custom_call.1} parent=11 // pred_check
          %p371 = pneg %p279
        $region54: #{tpu_custom_call.1} parent=11 // pred_check_branch
          %373 = sbr.rel (%p371) target = $region56
        $region55: #{tpu_custom_call.1} parent=11 // pred_region
          _
        $region56: #{tpu_custom_call.1} parent=11 // pred_fallthru
          _
        // Predicated region
        $region57: #{tpu_custom_call.1} parent=11 // pred_check
          %p374 = pneg %p300
        $region58: #{tpu_custom_call.1} parent=11 // pred_check_branch
          %376 = sbr.rel (%p374) target = $region60
        $region59: #{tpu_custom_call.1} parent=11 // pred_region
          _
        $region60: #{tpu_custom_call.1} parent=11 // pred_fallthru
          _
      $region12: #{tpu_custom_call.1} parent=5 // pred_fallthru
        _
      %p377 = scmp.lt.s32.totalorder %s22, 2
      // Predicated region
      $region61: #{tpu_custom_call.1} parent=5 // pred_check
        %p378 = pneg %p377
      $region62: #{tpu_custom_call.1} parent=5 // pred_check_branch
        %380 = sbr.rel (%p378) target = $region64
      $region63: #{tpu_custom_call.1} parent=5 // pred_region
        // Predicated region
        $region65: #{tpu_custom_call.1} parent=63 // pred_check
          %p381 = pneg %p42
        $region66: #{tpu_custom_call.1} parent=63 // pred_check_branch
          %383 = sbr.rel (%p381) target = $region68
        $region67: #{tpu_custom_call.1} parent=63 // pred_region
          %p384 = scmp.lt.s32.totalorder %s22, 1
          %s385 = scalar_select %p384, %s22, 1
          %s386 = smul.addr %s385, 32
          %s387 = smul.addr %s386, 4
          %s388 = scalar_lea.vmem %s0, %s387
        $region68: #{tpu_custom_call.1} parent=63 // pred_fallthru
          _
      $region64: #{tpu_custom_call.1} parent=5 // pred_fallthru
        _
      %p389 = scmp.le.s32.totalorder 1, %s22
      %p390 = scmp.lt.s32.totalorder %s22, 3
      %p391 = pnand %p389, %p390
      %p392 = pneg %p391
      // Predicated region
      $region69: #{tpu_custom_call.1} parent=5 // pred_check
        _
      $region70: #{tpu_custom_call.1} parent=5 // pred_check_branch
        %394 = sbr.rel (%p391) target = $region72
      $region71: #{tpu_custom_call.1} parent=5 // pred_region
        %s395 = ssub.s32 %s22, 1
        %p396 = scmp.lt.s32.totalorder %s27, 1
        %s397 = scalar_select %p396, %s27, 1
        %s398 = smul.addr %s397, 32
        %s399 = smul.addr %s398, 4
        %s400 = scalar_lea.vmem %s0, %s399
        %p401 = pneg %p48
        %p402 = pneg %p45
        %p403 = pneg %p69
        %p404 = pneg %p66
        %p405 = pneg %p90
        %p406 = pneg %p87
        %p407 = pneg %p111
        %p408 = pneg %p108
        %p409 = pneg %p132
        %p410 = pneg %p129
        %p411 = pneg %p153
        %p412 = pneg %p150
        %p413 = pneg %p174
        %p414 = pneg %p171
        %p415 = pneg %p195
        %p416 = pneg %p192
        %p417 = pneg %p216
        %p418 = pneg %p213
        %p419 = pneg %p237
        %p420 = pneg %p234
        %p421 = pneg %p258
        %p422 = pneg %p255
        %p423 = pneg %p279
        %p424 = pneg %p276
        %p425 = pneg %p300
        %p426 = pneg %p297
        %p427 = pneg %p326
        %p428 = pneg %p323
        %s429 = sand.u32 %s313, 1
        %s430 = scalar_lea.sflag [#allocation4], %s429
        %s431 = sand.u32 %s313, 1
        %s432 = smul.addr %s431, 128
        %s433 = scalar_lea.vmem [#allocation3], %s432
        %p434 = scmp.lt.s32.totalorder %s27, 1
        %s435 = scalar_select %p434, %s27, 1
        %s436 = smul.addr %s435, 32
        %s437 = smul.addr %s436, 4
        %s438 = scalar_lea.vmem %s0, %s437
        %v440 = vld [vmem:[%s438] sm:$0xf]
        %v441 = vld [vmem:[%s438 + $0x4] sm:$0xf]
        %v442 = vld [vmem:[%s438 + $0x8] sm:$0xf]
        %v443 = vld [vmem:[%s438 + $0xc] sm:$0xf]
        %v444 = vld [vmem:[%s438 + $0x10] sm:$0xf]
        %v445 = vld [vmem:[%s438 + $0x14] sm:$0xf]
        %v446 = vld [vmem:[%s438 + $0x18] sm:$0xf]
        %v447 = vld [vmem:[%s438 + $0x1c] sm:$0xf]
        %v448 = vld [vmem:[%s438 + $0x20] sm:$0xf]
        %v449 = vld [vmem:[%s438 + $0x24] sm:$0xf]
        %v450 = vld [vmem:[%s438 + $0x28] sm:$0xf]
        %v451 = vld [vmem:[%s438 + $0x2c] sm:$0xf]
        %v452 = vld [vmem:[%s438 + $0x30] sm:$0xf]
        %v453 = vld [vmem:[%s438 + $0x34] sm:$0xf]
        %v454 = vld [vmem:[%s438 + $0x38] sm:$0xf]
        %v455 = vld [vmem:[%s438 + $0x3c] sm:$0xf]
        %v456 = vld [vmem:[%s438 + $0x40] sm:$0xf]
        %v457 = vld [vmem:[%s438 + $0x44] sm:$0xf]
        %v458 = vld [vmem:[%s438 + $0x48] sm:$0xf]
        %v459 = vld [vmem:[%s438 + $0x4c] sm:$0xf]
        %v460 = vld [vmem:[%s438 + $0x50] sm:$0xf]
        %v461 = vld [vmem:[%s438 + $0x54] sm:$0xf]
        %v462 = vld [vmem:[%s438 + $0x58] sm:$0xf]
        %v463 = vld [vmem:[%s438 + $0x5c] sm:$0xf]
        %v464 = vld [vmem:[%s438 + $0x60] sm:$0xf]
        %v465 = vld [vmem:[%s438 + $0x64] sm:$0xf]
        %v466 = vld [vmem:[%s438 + $0x68] sm:$0xf]
        %v467 = vld [vmem:[%s438 + $0x6c] sm:$0xf]
        %v468 = vld [vmem:[%s438 + $0x70] sm:$0xf]
        %v469 = vld [vmem:[%s438 + $0x74] sm:$0xf]
        %v470 = vld [vmem:[%s438 + $0x78] sm:$0xf]
        %v471 = vld [vmem:[%s438 + $0x7c] sm:$0xf]
        %v472 = vld [vmem:[%s1] sm:$0x3]
        %v505 = vunpack.c.l.b16 %v440
        %v506 = vunpack.c.l.b16 %v441
        %v507 = vunpack.c.l.b16 %v442
        %v508 = vunpack.c.l.b16 %v443
        %v509 = vunpack.c.l.b16 %v444
        %v510 = vunpack.c.l.b16 %v445
        %v511 = vunpack.c.l.b16 %v446
        %v512 = vunpack.c.l.b16 %v447
        %v513 = vunpack.c.l.b16 %v448
        %v514 = vunpack.c.l.b16 %v449
        %v515 = vunpack.c.l.b16 %v450
        %v516 = vunpack.c.l.b16 %v451
        %v517 = vunpack.c.l.b16 %v452
        %v518 = vunpack.c.l.b16 %v453
        %v519 = vunpack.c.l.b16 %v454
        %v520 = vunpack.c.l.b16 %v455
        %v521 = vunpack.c.l.b16 %v456
        %v522 = vunpack.c.l.b16 %v457
        %v523 = vunpack.c.l.b16 %v458
        %v524 = vunpack.c.l.b16 %v459
        %v525 = vunpack.c.l.b16 %v460
        %v526 = vunpack.c.l.b16 %v461
        %v527 = vunpack.c.l.b16 %v462
        %v528 = vunpack.c.l.b16 %v463
        %v529 = vunpack.c.l.b16 %v464
        %v530 = vunpack.c.l.b16 %v465
        %v531 = vunpack.c.l.b16 %v466
        %v532 = vunpack.c.l.b16 %v467
        %v533 = vunpack.c.l.b16 %v468
        %v534 = vunpack.c.l.b16 %v469
        %v535 = vunpack.c.l.b16 %v470
        %v536 = vunpack.c.l.b16 %v471
        %v537 = vpack.c.b16 %v506, %v505
        %v538 = vpack.c.b16 %v508, %v507
        %v539 = vpack.c.b16 %v510, %v509
        %v540 = vpack.c.b16 %v512, %v511
        %v541 = vpack.c.b16 %v514, %v513
        %v542 = vpack.c.b16 %v516, %v515
        %v543 = vpack.c.b16 %v518, %v517
        %v544 = vpack.c.b16 %v520, %v519
        %v545 = vpack.c.b16 %v522, %v521
        %v546 = vpack.c.b16 %v524, %v523
        %v547 = vpack.c.b16 %v526, %v525
        %v548 = vpack.c.b16 %v528, %v527
        %v549 = vpack.c.b16 %v530, %v529
        %v550 = vpack.c.b16 %v532, %v531
        %v551 = vpack.c.b16 %v534, %v533
        %v552 = vpack.c.b16 %v536, %v535
        %vm553 = vcmask 31744
        %v555 = vsel %vm553, %v537, 0
        %v558 = vsel %vm553, %v538, 0
        %v561 = vsel %vm553, %v539, 0
        %v564 = vsel %vm553, %v540, 0
        %v567 = vsel %vm553, %v541, 0
        %v570 = vsel %vm553, %v542, 0
        %v573 = vsel %vm553, %v543, 0
        %v576 = vsel %vm553, %v544, 0
        %v579 = vsel %vm553, %v545, 0
        %v582 = vsel %vm553, %v546, 0
        %v585 = vsel %vm553, %v547, 0
        %v588 = vsel %vm553, %v548, 0
        %v591 = vsel %vm553, %v549, 0
        %v594 = vsel %vm553, %v550, 0
        %v597 = vsel %vm553, %v551, 0
        %v600 = vsel %vm553, %v552, 0
        %vm602 = vcmask 1041408
        %v604 = vsel %vm602, %v472, 0
        %606 = vmatprep.subr.bf16.mxu0 0
        %607 = vmatpush1.bf16.msra.mxu0 0
        %608 = vmatprep.subr.bf16.mxu0 0
        %609 = vmatpush1.bf16.msra.mxu0 0
        %610 = vmatprep.subr.bf16.mxu0 0
        %611 = vmatpush1.bf16.msra.mxu0 0
        %612 = vmatprep.subr.bf16.mxu0 0
        %613 = vmatpush1.bf16.msra.mxu0 0
        %614 = vmatprep.subr.bf16.mxu0 0
        %615 = vmatpush1.bf16.msra.mxu0 0
        %616 = vmatprep.subr.bf16.mxu0 0
        %617 = vmatpush1.bf16.msra.mxu0 0
        %618 = vmatprep.subr.bf16.mxu0 0
        %619 = vmatpush1.bf16.msra.mxu0 0
        %620 = vmatprep.subr.bf16.mxu0 0
        %621 = vmatpush1.bf16.msra.mxu0 %v604
        %622 = vmatprep.subr.bf16.mxu0 0
        %623 = vmatpush2.bf16.msra.mxu0 0
        %624 = vmatprep.subr.bf16.mxu0 0
        %625 = vmatpush2.bf16.msra.mxu0 0
        %626 = vmatprep.subr.bf16.mxu0 0
        %627 = vmatpush2.bf16.msra.mxu0 0
        %628 = vmatprep.subr.bf16.mxu0 0
        %629 = vmatpush2.bf16.msra.mxu0 0
        %630 = vmatprep.subr.bf16.mxu0 0
        %631 = vmatpush2.bf16.msra.mxu0 0
        %632 = vmatprep.subr.bf16.mxu0 0
        %633 = vmatpush2.bf16.msra.mxu0 0
        %634 = vmatprep.subr.bf16.mxu0 0
        %635 = vmatpush2.bf16.msra.mxu0 0
        %636 = vmatprep.subr.bf16.mxu0 0
        %637 = vmatpush2.bf16.msra.mxu0 0
        %638 = vmatprep.mubr.bf16.mxu0 0
        %639 = vmatmul.mubr.bf16.gmra.mxu0 %v555
        %v640 = vpop.f32.mrf.mxu0
        %v641 = vadd.f32 0.0, %v640
        %v642 = vpop.f32.mrf.mxu0
        %v643 = vpop.f32.mrf.mxu0
        %v644 = vadd.f32 0.0, %v643
        %v645 = vpop.f32.mrf.mxu0
        %646 = vmatprep.mubr.bf16.mxu0 0
        %647 = vmatmul.mubr.bf16.gmra.mxu0 %v558
        %v648 = vpop.f32.mrf.mxu0
        %v649 = vadd.f32 0.0, %v648
        %v650 = vpop.f32.mrf.mxu0
        %v651 = vpop.f32.mrf.mxu0
        %v652 = vadd.f32 0.0, %v651
        %v653 = vpop.f32.mrf.mxu0
        %654 = vmatprep.mubr.bf16.mxu0 0
        %655 = vmatmul.mubr.bf16.gmra.mxu0 %v561
        %v656 = vpop.f32.mrf.mxu0
        %v657 = vadd.f32 0.0, %v656
        %v658 = vpop.f32.mrf.mxu0
        %v659 = vpop.f32.mrf.mxu0
        %v660 = vadd.f32 0.0, %v659
        %v661 = vpop.f32.mrf.mxu0
        %662 = vmatprep.mubr.bf16.mxu0 0
        %663 = vmatmul.mubr.bf16.gmra.mxu0 %v564
        %v664 = vpop.f32.mrf.mxu0
        %v665 = vadd.f32 0.0, %v664
        %v666 = vpop.f32.mrf.mxu0
        %v667 = vpop.f32.mrf.mxu0
        %v668 = vadd.f32 0.0, %v667
        %v669 = vpop.f32.mrf.mxu0
        %670 = vmatprep.mubr.bf16.mxu0 0
        %671 = vmatmul.mubr.bf16.gmra.mxu0 %v567
        %v672 = vpop.f32.mrf.mxu0
        %v673 = vadd.f32 0.0, %v672
        %v674 = vpop.f32.mrf.mxu0
        %v675 = vpop.f32.mrf.mxu0
        %v676 = vadd.f32 0.0, %v675
        %v677 = vpop.f32.mrf.mxu0
        %678 = vmatprep.mubr.bf16.mxu0 0
        %679 = vmatmul.mubr.bf16.gmra.mxu0 %v570
        %v680 = vpop.f32.mrf.mxu0
        %v681 = vadd.f32 0.0, %v680
        %v682 = vpop.f32.mrf.mxu0
        %v683 = vpop.f32.mrf.mxu0
        %v684 = vadd.f32 0.0, %v683
        %v685 = vpop.f32.mrf.mxu0
        %686 = vmatprep.mubr.bf16.mxu0 0
        %687 = vmatmul.mubr.bf16.gmra.mxu0 %v573
        %v688 = vpop.f32.mrf.mxu0
        %v689 = vadd.f32 0.0, %v688
        %v690 = vpop.f32.mrf.mxu0
        %v691 = vpop.f32.mrf.mxu0
        %v692 = vadd.f32 0.0, %v691
        %v693 = vpop.f32.mrf.mxu0
        %694 = vmatprep.mubr.bf16.mxu0 0
        %695 = vmatmul.mubr.bf16.gmra.mxu0 %v576
        %v696 = vpop.f32.mrf.mxu0
        %v697 = vadd.f32 0.0, %v696
        %v698 = vpop.f32.mrf.mxu0
        %v699 = vpop.f32.mrf.mxu0
        %v700 = vadd.f32 0.0, %v699
        %v701 = vpop.f32.mrf.mxu0
        %702 = vmatprep.mubr.bf16.mxu0 0
        %703 = vmatmul.mubr.bf16.gmra.mxu0 %v579
        %v704 = vpop.f32.mrf.mxu0
        %v705 = vadd.f32 0.0, %v704
        %v706 = vpop.f32.mrf.mxu0
        %v707 = vpop.f32.mrf.mxu0
        %v708 = vadd.f32 0.0, %v707
        %v709 = vpop.f32.mrf.mxu0
        %710 = vmatprep.mubr.bf16.mxu0 0
        %711 = vmatmul.mubr.bf16.gmra.mxu0 %v582
        %v712 = vpop.f32.mrf.mxu0
        %v713 = vadd.f32 0.0, %v712
        %v714 = vpop.f32.mrf.mxu0
        %v715 = vpop.f32.mrf.mxu0
        %v716 = vadd.f32 0.0, %v715
        %v717 = vpop.f32.mrf.mxu0
        %718 = vmatprep.mubr.bf16.mxu0 0
        %719 = vmatmul.mubr.bf16.gmra.mxu0 %v585
        %v720 = vpop.f32.mrf.mxu0
        %v721 = vadd.f32 0.0, %v720
        %v722 = vpop.f32.mrf.mxu0
        %v723 = vpop.f32.mrf.mxu0
        %v724 = vadd.f32 0.0, %v723
        %v725 = vpop.f32.mrf.mxu0
        %726 = vmatprep.mubr.bf16.mxu0 0
        %727 = vmatmul.mubr.bf16.gmra.mxu0 %v588
        %v728 = vpop.f32.mrf.mxu0
        %v729 = vadd.f32 0.0, %v728
        %v730 = vpop.f32.mrf.mxu0
        %v731 = vpop.f32.mrf.mxu0
        %v732 = vadd.f32 0.0, %v731
        %v733 = vpop.f32.mrf.mxu0
        %734 = vmatprep.mubr.bf16.mxu0 0
        %735 = vmatmul.mubr.bf16.gmra.mxu0 %v591
        %v736 = vpop.f32.mrf.mxu0
        %v737 = vadd.f32 0.0, %v736
        %v738 = vpop.f32.mrf.mxu0
        %v739 = vpop.f32.mrf.mxu0
        %v740 = vadd.f32 0.0, %v739
        %v741 = vpop.f32.mrf.mxu0
        %742 = vmatprep.mubr.bf16.mxu0 0
        %743 = vmatmul.mubr.bf16.gmra.mxu0 %v594
        %v744 = vpop.f32.mrf.mxu0
        %v745 = vadd.f32 0.0, %v744
        %v746 = vpop.f32.mrf.mxu0
        %v747 = vpop.f32.mrf.mxu0
        %v748 = vadd.f32 0.0, %v747
        %v749 = vpop.f32.mrf.mxu0
        %750 = vmatprep.mubr.bf16.mxu0 0
        %751 = vmatmul.mubr.bf16.gmra.mxu0 %v597
        %v752 = vpop.f32.mrf.mxu0
        %v753 = vadd.f32 0.0, %v752
        %v754 = vpop.f32.mrf.mxu0
        %v755 = vpop.f32.mrf.mxu0
        %v756 = vadd.f32 0.0, %v755
        %v757 = vpop.f32.mrf.mxu0
        %758 = vmatprep.mubr.bf16.mxu0 0
        %759 = vmatmul.mubr.bf16.gmra.mxu0 %v600
        %v760 = vpop.f32.mrf.mxu0
        %v761 = vadd.f32 0.0, %v760
        %v762 = vpop.f32.mrf.mxu0
        %v763 = vpop.f32.mrf.mxu0
        %v764 = vadd.f32 0.0, %v763
        %v765 = vpop.f32.mrf.mxu0
        %766 = vdwg.mxu0
        %v767 = vld [vmem:[%s2] sm:$0x1]
        %v768 = vld [vmem:[%s3] sm:$0x1]
        %v769 = vsel %vm553, %v641, 0.0
        %v770 = vsel %vm553, %v644, 0.0
        %v771 = vadd.f32 %v769, %v770
        %v772 = vsel %vm553, %v649, 0.0
        %v773 = vadd.f32 %v771, %v772
        %v774 = vsel %vm553, %v652, 0.0
        %v775 = vadd.f32 %v773, %v774
        %v776 = vsel %vm553, %v657, 0.0
        %v777 = vadd.f32 %v775, %v776
        %v778 = vsel %vm553, %v660, 0.0
        %v779 = vadd.f32 %v777, %v778
        %v780 = vsel %vm553, %v665, 0.0
        %v781 = vadd.f32 %v779, %v780
        %v782 = vsel %vm553, %v668, 0.0
        %v783 = vadd.f32 %v781, %v782
        %v784 = vsel %vm553, %v673, 0.0
        %v785 = vadd.f32 %v783, %v784
        %v786 = vsel %vm553, %v676, 0.0
        %v787 = vadd.f32 %v785, %v786
        %v788 = vsel %vm553, %v681, 0.0
        %v789 = vadd.f32 %v787, %v788
        %v790 = vsel %vm553, %v684, 0.0
        %v791 = vadd.f32 %v789, %v790
        %v792 = vsel %vm553, %v689, 0.0
        %v793 = vadd.f32 %v791, %v792
        %v794 = vsel %vm553, %v692, 0.0
        %v795 = vadd.f32 %v793, %v794
        %v796 = vsel %vm553, %v697, 0.0
        %v797 = vadd.f32 %v795, %v796
        %v798 = vsel %vm553, %v700, 0.0
        %v799 = vadd.f32 %v797, %v798
        %v800 = vsel %vm553, %v705, 0.0
        %v801 = vadd.f32 %v799, %v800
        %v802 = vsel %vm553, %v708, 0.0
        %v803 = vadd.f32 %v801, %v802
        %v804 = vsel %vm553, %v713, 0.0
        %v805 = vadd.f32 %v803, %v804
        %v806 = vsel %vm553, %v716, 0.0
        %v807 = vadd.f32 %v805, %v806
        %v808 = vsel %vm553, %v721, 0.0
        %v809 = vadd.f32 %v807, %v808
        %v810 = vsel %vm553, %v724, 0.0
        %v811 = vadd.f32 %v809, %v810
        %v812 = vsel %vm553, %v729, 0.0
        %v813 = vadd.f32 %v811, %v812
        %v814 = vsel %vm553, %v732, 0.0
        %v815 = vadd.f32 %v813, %v814
        %v816 = vsel %vm553, %v737, 0.0
        %v817 = vadd.f32 %v815, %v816
        %v818 = vsel %vm553, %v740, 0.0
        %v819 = vadd.f32 %v817, %v818
        %v820 = vsel %vm553, %v745, 0.0
        %v821 = vadd.f32 %v819, %v820
        %v822 = vsel %vm553, %v748, 0.0
        %v823 = vadd.f32 %v821, %v822
        %v824 = vsel %vm553, %v753, 0.0
        %v825 = vadd.f32 %v823, %v824
        %v826 = vsel %vm553, %v756, 0.0
        %v827 = vadd.f32 %v825, %v826
        %v828 = vsel %vm553, %v761, 0.0
        %v829 = vadd.f32 %v827, %v828
        %v830 = vsel %vm553, %v764, 0.0
        %v831 = vadd.f32 %v829, %v830
        %v832 = vrot.slane %v831, 4
        %v833 = vadd.f32 %v831, %v832
        %v834 = vrot.slane %v833, 2
        %v835 = vadd.f32 %v833, %v834
        %v836 = vrot.slane %v835, 1
        %v837 = vadd.f32 %v835, %v836
        %v838 = vrcp.pop 256.0
        %v839 = vmul.f32 %v837, %v838
        %v840 = vsub.f32 %v641, %v839
        %v841 = vsub.f32 %v644, %v839
        %v842 = vsub.f32 %v649, %v839
        %v843 = vsub.f32 %v652, %v839
        %v844 = vsub.f32 %v657, %v839
        %v845 = vsub.f32 %v660, %v839
        %v846 = vsub.f32 %v665, %v839
        %v847 = vsub.f32 %v668, %v839
        %v848 = vsub.f32 %v673, %v839
        %v849 = vsub.f32 %v676, %v839
        %v850 = vsub.f32 %v681, %v839
        %v851 = vsub.f32 %v684, %v839
        %v852 = vsub.f32 %v689, %v839
        %v853 = vsub.f32 %v692, %v839
        %v854 = vsub.f32 %v697, %v839
        %v855 = vsub.f32 %v700, %v839
        %v856 = vsub.f32 %v705, %v839
        %v857 = vsub.f32 %v708, %v839
        %v858 = vsub.f32 %v713, %v839
        %v859 = vsub.f32 %v716, %v839
        %v860 = vsub.f32 %v721, %v839
        %v861 = vsub.f32 %v724, %v839
        %v862 = vsub.f32 %v729, %v839
        %v863 = vsub.f32 %v732, %v839
        %v864 = vsub.f32 %v737, %v839
        %v865 = vsub.f32 %v740, %v839
        %v866 = vsub.f32 %v745, %v839
        %v867 = vsub.f32 %v748, %v839
        %v868 = vsub.f32 %v753, %v839
        %v869 = vsub.f32 %v756, %v839
        %v870 = vsub.f32 %v761, %v839
        %v871 = vsub.f32 %v764, %v839
        %v872 = vmul.f32 %v840, %v840
        %v873 = vmul.f32 %v841, %v841
        %v874 = vmul.f32 %v842, %v842
        %v875 = vmul.f32 %v843, %v843
        %v876 = vmul.f32 %v844, %v844
        %v877 = vmul.f32 %v845, %v845
        %v878 = vmul.f32 %v846, %v846
        %v879 = vmul.f32 %v847, %v847
        %v880 = vmul.f32 %v848, %v848
        %v881 = vmul.f32 %v849, %v849
        %v882 = vmul.f32 %v850, %v850
        %v883 = vmul.f32 %v851, %v851
        %v884 = vmul.f32 %v852, %v852
        %v885 = vmul.f32 %v853, %v853
        %v886 = vmul.f32 %v854, %v854
        %v887 = vmul.f32 %v855, %v855
        %v888 = vmul.f32 %v856, %v856
        %v889 = vmul.f32 %v857, %v857
        %v890 = vmul.f32 %v858, %v858
        %v891 = vmul.f32 %v859, %v859
        %v892 = vmul.f32 %v860, %v860
        %v893 = vmul.f32 %v861, %v861
        %v894 = vmul.f32 %v862, %v862
        %v895 = vmul.f32 %v863, %v863
        %v896 = vmul.f32 %v864, %v864
        %v897 = vmul.f32 %v865, %v865
        %v898 = vmul.f32 %v866, %v866
        %v899 = vmul.f32 %v867, %v867
        %v900 = vmul.f32 %v868, %v868
        %v901 = vmul.f32 %v869, %v869
        %v902 = vmul.f32 %v870, %v870
        %v903 = vmul.f32 %v871, %v871
        %v904 = vsel %vm553, %v872, 0.0
        %v905 = vsel %vm553, %v873, 0.0
        %v906 = vadd.f32 %v904, %v905
        %v907 = vsel %vm553, %v874, 0.0
        %v908 = vadd.f32 %v906, %v907
        %v909 = vsel %vm553, %v875, 0.0
        %v910 = vadd.f32 %v908, %v909
        %v911 = vsel %vm553, %v876, 0.0
        %v912 = vadd.f32 %v910, %v911
        %v913 = vsel %vm553, %v877, 0.0
        %v914 = vadd.f32 %v912, %v913
        %v915 = vsel %vm553, %v878, 0.0
        %v916 = vadd.f32 %v914, %v915
        %v917 = vsel %vm553, %v879, 0.0
        %v918 = vadd.f32 %v916, %v917
        %v919 = vsel %vm553, %v880, 0.0
        %v920 = vadd.f32 %v918, %v919
        %v921 = vsel %vm553, %v881, 0.0
        %v922 = vadd.f32 %v920, %v921
        %v923 = vsel %vm553, %v882, 0.0
        %v924 = vadd.f32 %v922, %v923
        %v925 = vsel %vm553, %v883, 0.0
        %v926 = vadd.f32 %v924, %v925
        %v927 = vsel %vm553, %v884, 0.0
        %v928 = vadd.f32 %v926, %v927
        %v929 = vsel %vm553, %v885, 0.0
        %v930 = vadd.f32 %v928, %v929
        %v931 = vsel %vm553, %v886, 0.0
        %v932 = vadd.f32 %v930, %v931
        %v933 = vsel %vm553, %v887, 0.0
        %v934 = vadd.f32 %v932, %v933
        %v935 = vsel %vm553, %v888, 0.0
        %v936 = vadd.f32 %v934, %v935
        %v937 = vsel %vm553, %v889, 0.0
        %v938 = vadd.f32 %v936, %v937
        %v939 = vsel %vm553, %v890, 0.0
        %v940 = vadd.f32 %v938, %v939
        %v941 = vsel %vm553, %v891, 0.0
        %v942 = vadd.f32 %v940, %v941
        %v943 = vsel %vm553, %v892, 0.0
        %v944 = vadd.f32 %v942, %v943
        %v945 = vsel %vm553, %v893, 0.0
        %v946 = vadd.f32 %v944, %v945
        %v947 = vsel %vm553, %v894, 0.0
        %v948 = vadd.f32 %v946, %v947
        %v949 = vsel %vm553, %v895, 0.0
        %v950 = vadd.f32 %v948, %v949
        %v951 = vsel %vm553, %v896, 0.0
        %v952 = vadd.f32 %v950, %v951
        %v953 = vsel %vm553, %v897, 0.0
        %v954 = vadd.f32 %v952, %v953
        %v955 = vsel %vm553, %v898, 0.0
        %v956 = vadd.f32 %v954, %v955
        %v957 = vsel %vm553, %v899, 0.0
        %v958 = vadd.f32 %v956, %v957
        %v959 = vsel %vm553, %v900, 0.0
        %v960 = vadd.f32 %v958, %v959
        %v961 = vsel %vm553, %v901, 0.0
        %v962 = vadd.f32 %v960, %v961
        %v963 = vsel %vm553, %v902, 0.0
        %v964 = vadd.f32 %v962, %v963
        %v965 = vsel %vm553, %v903, 0.0
        %v966 = vadd.f32 %v964, %v965
        %v967 = vrot.slane %v966, 4
        %v968 = vadd.f32 %v966, %v967
        %v969 = vrot.slane %v968, 2
        %v970 = vadd.f32 %v968, %v969
        %v971 = vrot.slane %v970, 1
        %v972 = vadd.f32 %v970, %v971
        %v973 = vmul.f32 %v972, %v838
        %v974 = vadd.f32 %v973, 1e-05
        %v975 = vrsqrt.pop %v974
        %v976 = vmul.f32 %v767, %v975
        %v977 = vmul.f32 %v839, %v976
        %v978 = vsub.f32 %v768, %v977
        %v980 = vlaneseq
        %v981 = vshrl.u32 %v980, 7
        %v982 = vsub.s32 0, %v981
        %v983 = vrot.slane %v976, %v982
        %v985 = vmul.f32 %v641, %v983
        %v986 = vmul.f32 %v644, %v983
        %v987 = vmul.f32 %v649, %v983
        %v988 = vmul.f32 %v652, %v983
        %v989 = vmul.f32 %v657, %v983
        %v990 = vmul.f32 %v660, %v983
        %v991 = vmul.f32 %v665, %v983
        %v992 = vmul.f32 %v668, %v983
        %v993 = vmul.f32 %v673, %v983
        %v994 = vmul.f32 %v676, %v983
        %v995 = vmul.f32 %v681, %v983
        %v996 = vmul.f32 %v684, %v983
        %v997 = vmul.f32 %v689, %v983
        %v998 = vmul.f32 %v692, %v983
        %v999 = vmul.f32 %v697, %v983
        %v1000 = vmul.f32 %v700, %v983
        %v1001 = vmul.f32 %v705, %v983
        %v1002 = vmul.f32 %v708, %v983
        %v1003 = vmul.f32 %v713, %v983
        %v1004 = vmul.f32 %v716, %v983
        %v1005 = vmul.f32 %v721, %v983
        %v1006 = vmul.f32 %v724, %v983
        %v1007 = vmul.f32 %v729, %v983
        %v1008 = vmul.f32 %v732, %v983
        %v1009 = vmul.f32 %v737, %v983
        %v1010 = vmul.f32 %v740, %v983
        %v1011 = vmul.f32 %v745, %v983
        %v1012 = vmul.f32 %v748, %v983
        %v1013 = vmul.f32 %v753, %v983
        %v1014 = vmul.f32 %v756, %v983
        %v1015 = vmul.f32 %v761, %v983
        %v1016 = vmul.f32 %v764, %v983
        %v1018 = vlaneseq
        %v1019 = vshrl.u32 %v1018, 7
        %v1020 = vsub.s32 0, %v1019
        %v1021 = vrot.slane %v978, %v1020
        %v1023 = vadd.f32 %v985, %v1021
        %v1024 = vadd.f32 %v986, %v1021
        %v1025 = vadd.f32 %v987, %v1021
        %v1026 = vadd.f32 %v988, %v1021
        %v1027 = vadd.f32 %v989, %v1021
        %v1028 = vadd.f32 %v990, %v1021
        %v1029 = vadd.f32 %v991, %v1021
        %v1030 = vadd.f32 %v992, %v1021
        %v1031 = vadd.f32 %v993, %v1021
        %v1032 = vadd.f32 %v994, %v1021
        %v1033 = vadd.f32 %v995, %v1021
        %v1034 = vadd.f32 %v996, %v1021
        %v1035 = vadd.f32 %v997, %v1021
        %v1036 = vadd.f32 %v998, %v1021
        %v1037 = vadd.f32 %v999, %v1021
        %v1038 = vadd.f32 %v1000, %v1021
        %v1039 = vadd.f32 %v1001, %v1021
        %v1040 = vadd.f32 %v1002, %v1021
        %v1041 = vadd.f32 %v1003, %v1021
        %v1042 = vadd.f32 %v1004, %v1021
        %v1043 = vadd.f32 %v1005, %v1021
        %v1044 = vadd.f32 %v1006, %v1021
        %v1045 = vadd.f32 %v1007, %v1021
        %v1046 = vadd.f32 %v1008, %v1021
        %v1047 = vadd.f32 %v1009, %v1021
        %v1048 = vadd.f32 %v1010, %v1021
        %v1049 = vadd.f32 %v1011, %v1021
        %v1050 = vadd.f32 %v1012, %v1021
        %v1051 = vadd.f32 %v1013, %v1021
        %v1052 = vadd.f32 %v1014, %v1021
        %v1053 = vadd.f32 %v1015, %v1021
        %v1054 = vadd.f32 %v1016, %v1021
        %v1055 = vmax.f32 %v1023, 0.0
        %v1056 = vmax.f32 %v1024, 0.0
        %v1057 = vmax.f32 %v1025, 0.0
        %v1058 = vmax.f32 %v1026, 0.0
        %v1059 = vmax.f32 %v1027, 0.0
        %v1060 = vmax.f32 %v1028, 0.0
        %v1061 = vmax.f32 %v1029, 0.0
        %v1062 = vmax.f32 %v1030, 0.0
        %v1063 = vmax.f32 %v1031, 0.0
        %v1064 = vmax.f32 %v1032, 0.0
        %v1065 = vmax.f32 %v1033, 0.0
        %v1066 = vmax.f32 %v1034, 0.0
        %v1067 = vmax.f32 %v1035, 0.0
        %v1068 = vmax.f32 %v1036, 0.0
        %v1069 = vmax.f32 %v1037, 0.0
        %v1070 = vmax.f32 %v1038, 0.0
        %v1071 = vmax.f32 %v1039, 0.0
        %v1072 = vmax.f32 %v1040, 0.0
        %v1073 = vmax.f32 %v1041, 0.0
        %v1074 = vmax.f32 %v1042, 0.0
        %v1075 = vmax.f32 %v1043, 0.0
        %v1076 = vmax.f32 %v1044, 0.0
        %v1077 = vmax.f32 %v1045, 0.0
        %v1078 = vmax.f32 %v1046, 0.0
        %v1079 = vmax.f32 %v1047, 0.0
        %v1080 = vmax.f32 %v1048, 0.0
        %v1081 = vmax.f32 %v1049, 0.0
        %v1082 = vmax.f32 %v1050, 0.0
        %v1083 = vmax.f32 %v1051, 0.0
        %v1084 = vmax.f32 %v1052, 0.0
        %v1085 = vmax.f32 %v1053, 0.0
        %v1086 = vmax.f32 %v1054, 0.0
        %vm1087 = vcmask 27648
        %1088 = vst.msk [vmem:[#allocation2] sm:$0xf] %vm1087, 0
        %1089 = vst.msk [vmem:[#allocation2 + $0x4] sm:$0xf] %vm1087, 0
        %vm1090 = vcmask 24576
        %1091 = vst.msk [vmem:[#allocation2 + $0x8] sm:$0x1] %vm1090, 0
        %s1092 = scalar_lea.vmem [#allocation2], 204
        %1093 = vst.msk [vmem:[%s1092] sm:$0xf] %vm1087, 0
        %1094 = vst.msk [vmem:[%s1092 + $0x4] sm:$0xf] %vm1087, 0
        %1095 = vst.msk [vmem:[%s1092 + $0x8] sm:$0x1] %vm1090, 0
        %s1096 = scalar_lea.vmem [#allocation2], 12
        %vm1097 = vcmask 24576
        %vm1098 = vsmask.f32 256
        %vm1099 = vmand %vm1097, %vm1098
        %v1100 = vld [vmem:[%s1096] sm:$0x1]
        %v1101 = vsel %vm1099, 0, %v1100
        %1102 = vst [vmem:[%s1096] sm:$0x1] %v1101
        %v1103 = vld [vmem:[%s1096 + $0xc] sm:$0x1]
        %v1104 = vsel %vm1099, 0, %v1103
        %1105 = vst [vmem:[%s1096 + $0xc] sm:$0x1] %v1104
        %v1106 = vld [vmem:[%s1096 + $0x18] sm:$0x1]
        %v1107 = vsel %vm1099, 0, %v1106
        %1108 = vst [vmem:[%s1096 + $0x18] sm:$0x1] %v1107
        %v1109 = vld [vmem:[%s1096 + $0x24] sm:$0x1]
        %v1110 = vsel %vm1099, 0, %v1109
        %1111 = vst [vmem:[%s1096 + $0x24] sm:$0x1] %v1110
        %v1112 = vld [vmem:[%s1096 + $0x30] sm:$0x1]
        %v1113 = vsel %vm1099, 0, %v1112
        %1114 = vst [vmem:[%s1096 + $0x30] sm:$0x1] %v1113
        %v1115 = vld [vmem:[%s1096 + $0x3c] sm:$0x1]
        %v1116 = vsel %vm1099, 0, %v1115
        %1117 = vst [vmem:[%s1096 + $0x3c] sm:$0x1] %v1116
        %v1118 = vld [vmem:[%s1096 + $0x48] sm:$0x1]
        %v1119 = vsel %vm1099, 0, %v1118
        %1120 = vst [vmem:[%s1096 + $0x48] sm:$0x1] %v1119
        %v1121 = vld [vmem:[%s1096 + $0x54] sm:$0x1]
        %v1122 = vsel %vm1099, 0, %v1121
        %1123 = vst [vmem:[%s1096 + $0x54] sm:$0x1] %v1122
        %v1124 = vld [vmem:[%s1096 + $0x60] sm:$0x1]
        %v1125 = vsel %vm1099, 0, %v1124
        %1126 = vst [vmem:[%s1096 + $0x60] sm:$0x1] %v1125
        %v1127 = vld [vmem:[%s1096 + $0x6c] sm:$0x1]
        %v1128 = vsel %vm1099, 0, %v1127
        %1129 = vst [vmem:[%s1096 + $0x6c] sm:$0x1] %v1128
        %v1130 = vld [vmem:[%s1096 + $0x78] sm:$0x1]
        %v1131 = vsel %vm1099, 0, %v1130
        %1132 = vst [vmem:[%s1096 + $0x78] sm:$0x1] %v1131
        %v1133 = vld [vmem:[%s1096 + $0x84] sm:$0x1]
        %v1134 = vsel %vm1099, 0, %v1133
        %1135 = vst [vmem:[%s1096 + $0x84] sm:$0x1] %v1134
        %v1136 = vld [vmem:[%s1096 + $0x90] sm:$0x1]
        %v1137 = vsel %vm1099, 0, %v1136
        %1138 = vst [vmem:[%s1096 + $0x90] sm:$0x1] %v1137
        %v1139 = vld [vmem:[%s1096 + $0x9c] sm:$0x1]
        %v1140 = vsel %vm1099, 0, %v1139
        %1141 = vst [vmem:[%s1096 + $0x9c] sm:$0x1] %v1140
        %v1142 = vld [vmem:[%s1096 + $0xa8] sm:$0x1]
        %v1143 = vsel %vm1099, 0, %v1142
        %1144 = vst [vmem:[%s1096 + $0xa8] sm:$0x1] %v1143
        %v1145 = vld [vmem:[%s1096 + $0xb4] sm:$0x1]
        %v1146 = vsel %vm1099, 0, %v1145
        %1147 = vst [vmem:[%s1096 + $0xb4] sm:$0x1] %v1146
        %vm1148 = vsmask.f32 7938
        %vm1149 = vmand %vm1097, %vm1148
        %v1150 = vld [vmem:[%s1096 + $0x8] sm:$0x1]
        %v1151 = vsel %vm1149, 0, %v1150
        %1152 = vst [vmem:[%s1096 + $0x8] sm:$0x1] %v1151
        %v1153 = vld [vmem:[%s1096 + $0x14] sm:$0x1]
        %v1154 = vsel %vm1149, 0, %v1153
        %1155 = vst [vmem:[%s1096 + $0x14] sm:$0x1] %v1154
        %v1156 = vld [vmem:[%s1096 + $0x20] sm:$0x1]
        %v1157 = vsel %vm1149, 0, %v1156
        %1158 = vst [vmem:[%s1096 + $0x20] sm:$0x1] %v1157
        %v1159 = vld [vmem:[%s1096 + $0x2c] sm:$0x1]
        %v1160 = vsel %vm1149, 0, %v1159
        %1161 = vst [vmem:[%s1096 + $0x2c] sm:$0x1] %v1160
        %v1162 = vld [vmem:[%s1096 + $0x38] sm:$0x1]
        %v1163 = vsel %vm1149, 0, %v1162
        %1164 = vst [vmem:[%s1096 + $0x38] sm:$0x1] %v1163
        %v1165 = vld [vmem:[%s1096 + $0x44] sm:$0x1]
        %v1166 = vsel %vm1149, 0, %v1165
        %1167 = vst [vmem:[%s1096 + $0x44] sm:$0x1] %v1166
        %v1168 = vld [vmem:[%s1096 + $0x50] sm:$0x1]
        %v1169 = vsel %vm1149, 0, %v1168
        %1170 = vst [vmem:[%s1096 + $0x50] sm:$0x1] %v1169
        %v1171 = vld [vmem:[%s1096 + $0x5c] sm:$0x1]
        %v1172 = vsel %vm1149, 0, %v1171
        %1173 = vst [vmem:[%s1096 + $0x5c] sm:$0x1] %v1172
        %v1174 = vld [vmem:[%s1096 + $0x68] sm:$0x1]
        %v1175 = vsel %vm1149, 0, %v1174
        %1176 = vst [vmem:[%s1096 + $0x68] sm:$0x1] %v1175
        %v1177 = vld [vmem:[%s1096 + $0x74] sm:$0x1]
        %v1178 = vsel %vm1149, 0, %v1177
        %1179 = vst [vmem:[%s1096 + $0x74] sm:$0x1] %v1178
        %v1180 = vld [vmem:[%s1096 + $0x80] sm:$0x1]
        %v1181 = vsel %vm1149, 0, %v1180
        %1182 = vst [vmem:[%s1096 + $0x80] sm:$0x1] %v1181
        %v1183 = vld [vmem:[%s1096 + $0x8c] sm:$0x1]
        %v1184 = vsel %vm1149, 0, %v1183
        %1185 = vst [vmem:[%s1096 + $0x8c] sm:$0x1] %v1184
        %v1186 = vld [vmem:[%s1096 + $0x98] sm:$0x1]
        %v1187 = vsel %vm1149, 0, %v1186
        %1188 = vst [vmem:[%s1096 + $0x98] sm:$0x1] %v1187
        %v1189 = vld [vmem:[%s1096 + $0xa4] sm:$0x1]
        %v1190 = vsel %vm1149, 0, %v1189
        %1191 = vst [vmem:[%s1096 + $0xa4] sm:$0x1] %v1190
        %v1192 = vld [vmem:[%s1096 + $0xb0] sm:$0x1]
        %v1193 = vsel %vm1149, 0, %v1192
        %1194 = vst [vmem:[%s1096 + $0xb0] sm:$0x1] %v1193
        %v1195 = vld [vmem:[%s1096 + $0xbc] sm:$0x1]
        %v1196 = vsel %vm1149, 0, %v1195
        %1197 = vst [vmem:[%s1096 + $0xbc] sm:$0x1] %v1196
        %v1198 = vpack.c.bf16 %v1056, %v1055
        %v1199 = vpack.c.bf16 %v1058, %v1057
        %v1200 = vpack.c.bf16 %v1060, %v1059
        %v1201 = vpack.c.bf16 %v1062, %v1061
        %v1202 = vpack.c.bf16 %v1064, %v1063
        %v1203 = vpack.c.bf16 %v1066, %v1065
        %v1204 = vpack.c.bf16 %v1068, %v1067
        %v1205 = vpack.c.bf16 %v1070, %v1069
        %v1206 = vpack.c.bf16 %v1072, %v1071
        %v1207 = vpack.c.bf16 %v1074, %v1073
        %v1208 = vpack.c.bf16 %v1076, %v1075
        %v1209 = vpack.c.bf16 %v1078, %v1077
        %v1210 = vpack.c.bf16 %v1080, %v1079
        %v1211 = vpack.c.bf16 %v1082, %v1081
        %v1212 = vpack.c.bf16 %v1084, %v1083
        %v1213 = vpack.c.bf16 %v1086, %v1085
        %v1230 = vunpack.c.l.b16 %v1198
        %v1231 = vunpack.c.h.b16 %v1198
        %v1232 = vunpack.c.l.b16 %v1199
        %v1233 = vunpack.c.h.b16 %v1199
        %v1234 = vunpack.c.l.b16 %v1200
        %v1235 = vunpack.c.h.b16 %v1200
        %v1236 = vunpack.c.l.b16 %v1201
        %v1237 = vunpack.c.h.b16 %v1201
        %v1238 = vunpack.c.l.b16 %v1202
        %v1239 = vunpack.c.h.b16 %v1202
        %v1240 = vunpack.c.l.b16 %v1203
        %v1241 = vunpack.c.h.b16 %v1203
        %v1242 = vunpack.c.l.b16 %v1204
        %v1243 = vunpack.c.h.b16 %v1204
        %v1244 = vunpack.c.l.b16 %v1205
        %v1245 = vunpack.c.h.b16 %v1205
        %v1246 = vunpack.c.l.b16 %v1206
        %v1247 = vunpack.c.h.b16 %v1206
        %v1248 = vunpack.c.l.b16 %v1207
        %v1249 = vunpack.c.h.b16 %v1207
        %v1250 = vunpack.c.l.b16 %v1208
        %v1251 = vunpack.c.h.b16 %v1208
        %v1252 = vunpack.c.l.b16 %v1209
        %v1253 = vunpack.c.h.b16 %v1209
        %v1254 = vunpack.c.l.b16 %v1210
        %v1255 = vunpack.c.h.b16 %v1210
        %v1256 = vunpack.c.l.b16 %v1211
        %v1257 = vunpack.c.h.b16 %v1211
        %v1258 = vunpack.c.l.b16 %v1212
        %v1259 = vunpack.c.h.b16 %v1212
        %v1260 = vunpack.c.l.b16 %v1213
        %v1261 = vunpack.c.h.b16 %v1213
        %v1262 = vpack.c.b16 %v1230, %v1230
        %v1263 = vpack.c.b16 %v1231, %v1231
        %v1264 = vpack.c.b16 %v1232, %v1232
        %v1265 = vpack.c.b16 %v1233, %v1233
        %v1266 = vpack.c.b16 %v1234, %v1234
        %v1267 = vpack.c.b16 %v1235, %v1235
        %v1268 = vpack.c.b16 %v1236, %v1236
        %v1269 = vpack.c.b16 %v1237, %v1237
        %v1270 = vpack.c.b16 %v1238, %v1238
        %v1271 = vpack.c.b16 %v1239, %v1239
        %v1272 = vpack.c.b16 %v1240, %v1240
        %v1273 = vpack.c.b16 %v1241, %v1241
        %v1274 = vpack.c.b16 %v1242, %v1242
        %v1275 = vpack.c.b16 %v1243, %v1243
        %v1276 = vpack.c.b16 %v1244, %v1244
        %v1277 = vpack.c.b16 %v1245, %v1245
        %v1278 = vpack.c.b16 %v1246, %v1246
        %v1279 = vpack.c.b16 %v1247, %v1247
        %v1280 = vpack.c.b16 %v1248, %v1248
        %v1281 = vpack.c.b16 %v1249, %v1249
        %v1282 = vpack.c.b16 %v1250, %v1250
        %v1283 = vpack.c.b16 %v1251, %v1251
        %v1284 = vpack.c.b16 %v1252, %v1252
        %v1285 = vpack.c.b16 %v1253, %v1253
        %v1286 = vpack.c.b16 %v1254, %v1254
        %v1287 = vpack.c.b16 %v1255, %v1255
        %v1288 = vpack.c.b16 %v1256, %v1256
        %v1289 = vpack.c.b16 %v1257, %v1257
        %v1290 = vpack.c.b16 %v1258, %v1258
        %v1291 = vpack.c.b16 %v1259, %v1259
        %v1292 = vpack.c.b16 %v1260, %v1260
        %v1293 = vpack.c.b16 %v1261, %v1261
        %vm1294 = vsmask.f32 4368
        %vm1295 = vmor %vm1098, %vm1294
        %v1297 = vshrl.u32 %v1262, 16
        %v1299 = vrot.slane %v1297, 7
        %v1300 = vshll.u32 %v1262, 16
        %v1302 = vor.u32 %v1299, %v1300
        %v1303 = vrot.slane %v1299, 4
        %v1305 = vshrl.u32 %v1263, 16
        %v1307 = vrot.slane %v1305, 7
        %v1308 = vshll.u32 %v1263, 16
        %v1310 = vor.u32 %v1307, %v1308
        %v1311 = vsel %vm1295, %v1303, %v1310
        %v1312 = vrot.slane %v1307, 4
        %v1314 = vshrl.u32 %v1264, 16
        %v1316 = vrot.slane %v1314, 7
        %v1317 = vshll.u32 %v1264, 16
        %v1319 = vor.u32 %v1316, %v1317
        %v1320 = vrot.slane %v1316, 4
        %v1322 = vshrl.u32 %v1265, 16
        %v1324 = vrot.slane %v1322, 7
        %v1325 = vshll.u32 %v1265, 16
        %v1327 = vor.u32 %v1324, %v1325
        %v1328 = vsel %vm1295, %v1320, %v1327
        %v1329 = vrot.slane %v1324, 4
        %v1331 = vshrl.u32 %v1266, 16
        %v1333 = vrot.slane %v1331, 7
        %v1334 = vshll.u32 %v1266, 16
        %v1336 = vor.u32 %v1333, %v1334
        %v1337 = vrot.slane %v1333, 4
        %v1339 = vshrl.u32 %v1267, 16
        %v1341 = vrot.slane %v1339, 7
        %v1342 = vshll.u32 %v1267, 16
        %v1344 = vor.u32 %v1341, %v1342
        %v1345 = vsel %vm1295, %v1337, %v1344
        %v1346 = vrot.slane %v1341, 4
        %v1348 = vshrl.u32 %v1268, 16
        %v1350 = vrot.slane %v1348, 7
        %v1351 = vshll.u32 %v1268, 16
        %v1353 = vor.u32 %v1350, %v1351
        %v1354 = vrot.slane %v1350, 4
        %v1356 = vshrl.u32 %v1269, 16
        %v1358 = vrot.slane %v1356, 7
        %v1359 = vshll.u32 %v1269, 16
        %v1361 = vor.u32 %v1358, %v1359
        %v1362 = vsel %vm1295, %v1354, %v1361
        %v1363 = vrot.slane %v1358, 4
        %v1365 = vshrl.u32 %v1270, 16
        %v1367 = vrot.slane %v1365, 7
        %v1368 = vshll.u32 %v1270, 16
        %v1370 = vor.u32 %v1367, %v1368
        %v1371 = vrot.slane %v1367, 4
        %v1373 = vshrl.u32 %v1271, 16
        %v1375 = vrot.slane %v1373, 7
        %v1376 = vshll.u32 %v1271, 16
        %v1378 = vor.u32 %v1375, %v1376
        %v1379 = vsel %vm1295, %v1371, %v1378
        %v1380 = vrot.slane %v1375, 4
        %v1382 = vshrl.u32 %v1272, 16
        %v1384 = vrot.slane %v1382, 7
        %v1385 = vshll.u32 %v1272, 16
        %v1387 = vor.u32 %v1384, %v1385
        %v1388 = vrot.slane %v1384, 4
        %v1390 = vshrl.u32 %v1273, 16
        %v1392 = vrot.slane %v1390, 7
        %v1393 = vshll.u32 %v1273, 16
        %v1395 = vor.u32 %v1392, %v1393
        %v1396 = vsel %vm1295, %v1388, %v1395
        %v1397 = vrot.slane %v1392, 4
        %v1399 = vshrl.u32 %v1274, 16
        %v1401 = vrot.slane %v1399, 7
        %v1402 = vshll.u32 %v1274, 16
        %v1404 = vor.u32 %v1401, %v1402
        %v1405 = vrot.slane %v1401, 4
        %v1407 = vshrl.u32 %v1275, 16
        %v1409 = vrot.slane %v1407, 7
        %v1410 = vshll.u32 %v1275, 16
        %v1412 = vor.u32 %v1409, %v1410
        %v1413 = vsel %vm1295, %v1405, %v1412
        %v1414 = vrot.slane %v1409, 4
        %v1416 = vshrl.u32 %v1276, 16
        %v1418 = vrot.slane %v1416, 7
        %v1419 = vshll.u32 %v1276, 16
        %v1421 = vor.u32 %v1418, %v1419
        %v1422 = vrot.slane %v1418, 4
        %v1424 = vshrl.u32 %v1277, 16
        %v1426 = vrot.slane %v1424, 7
        %v1427 = vshll.u32 %v1277, 16
        %v1429 = vor.u32 %v1426, %v1427
        %v1430 = vsel %vm1295, %v1422, %v1429
        %v1431 = vrot.slane %v1426, 4
        %v1433 = vshrl.u32 %v1278, 16
        %v1435 = vrot.slane %v1433, 7
        %v1436 = vshll.u32 %v1278, 16
        %v1438 = vor.u32 %v1435, %v1436
        %v1439 = vrot.slane %v1435, 4
        %v1441 = vshrl.u32 %v1279, 16
        %v1443 = vrot.slane %v1441, 7
        %v1444 = vshll.u32 %v1279, 16
        %v1446 = vor.u32 %v1443, %v1444
        %v1447 = vsel %vm1295, %v1439, %v1446
        %v1448 = vrot.slane %v1443, 4
        %v1450 = vshrl.u32 %v1280, 16
        %v1452 = vrot.slane %v1450, 7
        %v1453 = vshll.u32 %v1280, 16
        %v1455 = vor.u32 %v1452, %v1453
        %v1456 = vrot.slane %v1452, 4
        %v1458 = vshrl.u32 %v1281, 16
        %v1460 = vrot.slane %v1458, 7
        %v1461 = vshll.u32 %v1281, 16
        %v1463 = vor.u32 %v1460, %v1461
        %v1464 = vsel %vm1295, %v1456, %v1463
        %v1465 = vrot.slane %v1460, 4
        %v1467 = vshrl.u32 %v1282, 16
        %v1469 = vrot.slane %v1467, 7
        %v1470 = vshll.u32 %v1282, 16
        %v1472 = vor.u32 %v1469, %v1470
        %v1473 = vrot.slane %v1469, 4
        %v1475 = vshrl.u32 %v1283, 16
        %v1477 = vrot.slane %v1475, 7
        %v1478 = vshll.u32 %v1283, 16
        %v1480 = vor.u32 %v1477, %v1478
        %v1481 = vsel %vm1295, %v1473, %v1480
        %v1482 = vrot.slane %v1477, 4
        %v1484 = vshrl.u32 %v1284, 16
        %v1486 = vrot.slane %v1484, 7
        %v1487 = vshll.u32 %v1284, 16
        %v1489 = vor.u32 %v1486, %v1487
        %v1490 = vrot.slane %v1486, 4
        %v1492 = vshrl.u32 %v1285, 16
        %v1494 = vrot.slane %v1492, 7
        %v1495 = vshll.u32 %v1285, 16
        %v1497 = vor.u32 %v1494, %v1495
        %v1498 = vsel %vm1295, %v1490, %v1497
        %v1499 = vrot.slane %v1494, 4
        %v1501 = vshrl.u32 %v1286, 16
        %v1503 = vrot.slane %v1501, 7
        %v1504 = vshll.u32 %v1286, 16
        %v1506 = vor.u32 %v1503, %v1504
        %v1507 = vrot.slane %v1503, 4
        %v1509 = vshrl.u32 %v1287, 16
        %v1511 = vrot.slane %v1509, 7
        %v1512 = vshll.u32 %v1287, 16
        %v1514 = vor.u32 %v1511, %v1512
        %v1515 = vsel %vm1295, %v1507, %v1514
        %v1516 = vrot.slane %v1511, 4
        %v1518 = vshrl.u32 %v1288, 16
        %v1520 = vrot.slane %v1518, 7
        %v1521 = vshll.u32 %v1288, 16
        %v1523 = vor.u32 %v1520, %v1521
        %v1524 = vrot.slane %v1520, 4
        %v1526 = vshrl.u32 %v1289, 16
        %v1528 = vrot.slane %v1526, 7
        %v1529 = vshll.u32 %v1289, 16
        %v1531 = vor.u32 %v1528, %v1529
        %v1532 = vsel %vm1295, %v1524, %v1531
        %v1533 = vrot.slane %v1528, 4
        %v1535 = vshrl.u32 %v1290, 16
        %v1537 = vrot.slane %v1535, 7
        %v1538 = vshll.u32 %v1290, 16
        %v1540 = vor.u32 %v1537, %v1538
        %v1541 = vrot.slane %v1537, 4
        %v1543 = vshrl.u32 %v1291, 16
        %v1545 = vrot.slane %v1543, 7
        %v1546 = vshll.u32 %v1291, 16
        %v1548 = vor.u32 %v1545, %v1546
        %v1549 = vsel %vm1295, %v1541, %v1548
        %v1550 = vrot.slane %v1545, 4
        %v1552 = vshrl.u32 %v1292, 16
        %v1554 = vrot.slane %v1552, 7
        %v1555 = vshll.u32 %v1292, 16
        %v1557 = vor.u32 %v1554, %v1555
        %v1558 = vrot.slane %v1554, 4
        %v1560 = vshrl.u32 %v1293, 16
        %v1562 = vrot.slane %v1560, 7
        %v1563 = vshll.u32 %v1293, 16
        %v1565 = vor.u32 %v1562, %v1563
        %v1566 = vsel %vm1295, %v1558, %v1565
        %v1567 = vrot.slane %v1562, 4
        %vm1616 = vcmask 27648
        %vm1617 = vmand %vm1616, %vm1148
        %v1618 = vld [vmem:[%s1096] sm:$0xf]
        %v1619 = vsel %vm1617, %v1302, %v1618
        %1620 = vst [vmem:[%s1096] sm:$0xf] %v1619
        %1621 = vst.msk [vmem:[%s1096 + $0x4] sm:$0xf] %vm1087, %v1311
        %v1622 = vld [vmem:[%s1096 + $0x8] sm:$0x1]
        %v1623 = vsel %vm1099, %v1312, %v1622
        %1624 = vst [vmem:[%s1096 + $0x8] sm:$0x1] %v1623
        %v1625 = vld [vmem:[%s1096 + $0xc] sm:$0xf]
        %v1626 = vsel %vm1617, %v1319, %v1625
        %1627 = vst [vmem:[%s1096 + $0xc] sm:$0xf] %v1626
        %1628 = vst.msk [vmem:[%s1096 + $0x10] sm:$0xf] %vm1087, %v1328
        %v1629 = vld [vmem:[%s1096 + $0x14] sm:$0x1]
        %v1630 = vsel %vm1099, %v1329, %v1629
        %1631 = vst [vmem:[%s1096 + $0x14] sm:$0x1] %v1630
        %v1632 = vld [vmem:[%s1096 + $0x18] sm:$0xf]
        %v1633 = vsel %vm1617, %v1336, %v1632
        %1634 = vst [vmem:[%s1096 + $0x18] sm:$0xf] %v1633
        %1635 = vst.msk [vmem:[%s1096 + $0x1c] sm:$0xf] %vm1087, %v1345
        %v1636 = vld [vmem:[%s1096 + $0x20] sm:$0x1]
        %v1637 = vsel %vm1099, %v1346, %v1636
        %1638 = vst [vmem:[%s1096 + $0x20] sm:$0x1] %v1637
        %v1639 = vld [vmem:[%s1096 + $0x24] sm:$0xf]
        %v1640 = vsel %vm1617, %v1353, %v1639
        %1641 = vst [vmem:[%s1096 + $0x24] sm:$0xf] %v1640
        %1642 = vst.msk [vmem:[%s1096 + $0x28] sm:$0xf] %vm1087, %v1362
        %v1643 = vld [vmem:[%s1096 + $0x2c] sm:$0x1]
        %v1644 = vsel %vm1099, %v1363, %v1643
        %1645 = vst [vmem:[%s1096 + $0x2c] sm:$0x1] %v1644
        %v1646 = vld [vmem:[%s1096 + $0x30] sm:$0xf]
        %v1647 = vsel %vm1617, %v1370, %v1646
        %1648 = vst [vmem:[%s1096 + $0x30] sm:$0xf] %v1647
        %1649 = vst.msk [vmem:[%s1096 + $0x34] sm:$0xf] %vm1087, %v1379
        %v1650 = vld [vmem:[%s1096 + $0x38] sm:$0x1]
        %v1651 = vsel %vm1099, %v1380, %v1650
        %1652 = vst [vmem:[%s1096 + $0x38] sm:$0x1] %v1651
        %v1653 = vld [vmem:[%s1096 + $0x3c] sm:$0xf]
        %v1654 = vsel %vm1617, %v1387, %v1653
        %1655 = vst [vmem:[%s1096 + $0x3c] sm:$0xf] %v1654
        %1656 = vst.msk [vmem:[%s1096 + $0x40] sm:$0xf] %vm1087, %v1396
        %v1657 = vld [vmem:[%s1096 + $0x44] sm:$0x1]
        %v1658 = vsel %vm1099, %v1397, %v1657
        %1659 = vst [vmem:[%s1096 + $0x44] sm:$0x1] %v1658
        %v1660 = vld [vmem:[%s1096 + $0x48] sm:$0xf]
        %v1661 = vsel %vm1617, %v1404, %v1660
        %1662 = vst [vmem:[%s1096 + $0x48] sm:$0xf] %v1661
        %1663 = vst.msk [vmem:[%s1096 + $0x4c] sm:$0xf] %vm1087, %v1413
        %v1664 = vld [vmem:[%s1096 + $0x50] sm:$0x1]
        %v1665 = vsel %vm1099, %v1414, %v1664
        %1666 = vst [vmem:[%s1096 + $0x50] sm:$0x1] %v1665
        %v1667 = vld [vmem:[%s1096 + $0x54] sm:$0xf]
        %v1668 = vsel %vm1617, %v1421, %v1667
        %1669 = vst [vmem:[%s1096 + $0x54] sm:$0xf] %v1668
        %1670 = vst.msk [vmem:[%s1096 + $0x58] sm:$0xf] %vm1087, %v1430
        %v1671 = vld [vmem:[%s1096 + $0x5c] sm:$0x1]
        %v1672 = vsel %vm1099, %v1431, %v1671
        %1673 = vst [vmem:[%s1096 + $0x5c] sm:$0x1] %v1672
        %v1674 = vld [vmem:[%s1096 + $0x60] sm:$0xf]
        %v1675 = vsel %vm1617, %v1438, %v1674
        %1676 = vst [vmem:[%s1096 + $0x60] sm:$0xf] %v1675
        %1677 = vst.msk [vmem:[%s1096 + $0x64] sm:$0xf] %vm1087, %v1447
        %v1678 = vld [vmem:[%s1096 + $0x68] sm:$0x1]
        %v1679 = vsel %vm1099, %v1448, %v1678
        %1680 = vst [vmem:[%s1096 + $0x68] sm:$0x1] %v1679
        %v1681 = vld [vmem:[%s1096 + $0x6c] sm:$0xf]
        %v1682 = vsel %vm1617, %v1455, %v1681
        %1683 = vst [vmem:[%s1096 + $0x6c] sm:$0xf] %v1682
        %1684 = vst.msk [vmem:[%s1096 + $0x70] sm:$0xf] %vm1087, %v1464
        %v1685 = vld [vmem:[%s1096 + $0x74] sm:$0x1]
        %v1686 = vsel %vm1099, %v1465, %v1685
        %1687 = vst [vmem:[%s1096 + $0x74] sm:$0x1] %v1686
        %v1688 = vld [vmem:[%s1096 + $0x78] sm:$0xf]
        %v1689 = vsel %vm1617, %v1472, %v1688
        %1690 = vst [vmem:[%s1096 + $0x78] sm:$0xf] %v1689
        %1691 = vst.msk [vmem:[%s1096 + $0x7c] sm:$0xf] %vm1087, %v1481
        %v1692 = vld [vmem:[%s1096 + $0x80] sm:$0x1]
        %v1693 = vsel %vm1099, %v1482, %v1692
        %1694 = vst [vmem:[%s1096 + $0x80] sm:$0x1] %v1693
        %v1695 = vld [vmem:[%s1096 + $0x84] sm:$0xf]
        %v1696 = vsel %vm1617, %v1489, %v1695
        %1697 = vst [vmem:[%s1096 + $0x84] sm:$0xf] %v1696
        %1698 = vst.msk [vmem:[%s1096 + $0x88] sm:$0xf] %vm1087, %v1498
        %v1699 = vld [vmem:[%s1096 + $0x8c] sm:$0x1]
        %v1700 = vsel %vm1099, %v1499, %v1699
        %1701 = vst [vmem:[%s1096 + $0x8c] sm:$0x1] %v1700
        %v1702 = vld [vmem:[%s1096 + $0x90] sm:$0xf]
        %v1703 = vsel %vm1617, %v1506, %v1702
        %1704 = vst [vmem:[%s1096 + $0x90] sm:$0xf] %v1703
        %1705 = vst.msk [vmem:[%s1096 + $0x94] sm:$0xf] %vm1087, %v1515
        %v1706 = vld [vmem:[%s1096 + $0x98] sm:$0x1]
        %v1707 = vsel %vm1099, %v1516, %v1706
        %1708 = vst [vmem:[%s1096 + $0x98] sm:$0x1] %v1707
        %v1709 = vld [vmem:[%s1096 + $0x9c] sm:$0xf]
        %v1710 = vsel %vm1617, %v1523, %v1709
        %1711 = vst [vmem:[%s1096 + $0x9c] sm:$0xf] %v1710
        %1712 = vst.msk [vmem:[%s1096 + $0xa0] sm:$0xf] %vm1087, %v1532
        %v1713 = vld [vmem:[%s1096 + $0xa4] sm:$0x1]
        %v1714 = vsel %vm1099, %v1533, %v1713
        %1715 = vst [vmem:[%s1096 + $0xa4] sm:$0x1] %v1714
        %v1716 = vld [vmem:[%s1096 + $0xa8] sm:$0xf]
        %v1717 = vsel %vm1617, %v1540, %v1716
        %1718 = vst [vmem:[%s1096 + $0xa8] sm:$0xf] %v1717
        %1719 = vst.msk [vmem:[%s1096 + $0xac] sm:$0xf] %vm1087, %v1549
        %v1720 = vld [vmem:[%s1096 + $0xb0] sm:$0x1]
        %v1721 = vsel %vm1099, %v1550, %v1720
        %1722 = vst [vmem:[%s1096 + $0xb0] sm:$0x1] %v1721
        %v1723 = vld [vmem:[%s1096 + $0xb4] sm:$0xf]
        %v1724 = vsel %vm1617, %v1557, %v1723
        %1725 = vst [vmem:[%s1096 + $0xb4] sm:$0xf] %v1724
        %1726 = vst.msk [vmem:[%s1096 + $0xb8] sm:$0xf] %vm1087, %v1566
        %v1727 = vld [vmem:[%s1096 + $0xbc] sm:$0x1]
        %v1728 = vsel %vm1099, %v1567, %v1727
        %1729 = vst [vmem:[%s1096 + $0xbc] sm:$0x1] %v1728
        %v1730 = vld [vmem:[#allocation2] sm:$0xf]
        %v1731 = vld [vmem:[#allocation2 + $0x4] sm:$0xf]
        %v1732 = vld [vmem:[#allocation2 + $0xc] sm:$0xf]
        %v1733 = vld [vmem:[#allocation2 + $0x10] sm:$0xf]
        %v1734 = vld [vmem:[#allocation2 + $0x18] sm:$0xf]
        %v1735 = vld [vmem:[#allocation2 + $0x1c] sm:$0xf]
        %v1736 = vld [vmem:[#allocation2 + $0x24] sm:$0xf]
        %v1737 = vld [vmem:[#allocation2 + $0x28] sm:$0xf]
        %v1738 = vld [vmem:[#allocation2 + $0x30] sm:$0xf]
        %v1739 = vld [vmem:[#allocation2 + $0x34] sm:$0xf]
        %v1740 = vld [vmem:[#allocation2 + $0x3c] sm:$0xf]
        %v1741 = vld [vmem:[#allocation2 + $0x40] sm:$0xf]
        %v1742 = vld [vmem:[#allocation2 + $0x48] sm:$0xf]
        %v1743 = vld [vmem:[#allocation2 + $0x4c] sm:$0xf]
        %v1744 = vld [vmem:[#allocation2 + $0x54] sm:$0xf]
        %v1745 = vld [vmem:[#allocation2 + $0x58] sm:$0xf]
        %v1746 = vld [vmem:[#allocation2 + $0x60] sm:$0xf]
        %v1747 = vld [vmem:[#allocation2 + $0x64] sm:$0xf]
        %v1748 = vld [vmem:[#allocation2 + $0x6c] sm:$0xf]
        %v1749 = vld [vmem:[#allocation2 + $0x70] sm:$0xf]
        %v1750 = vld [vmem:[#allocation2 + $0x78] sm:$0xf]
        %v1751 = vld [vmem:[#allocation2 + $0x7c] sm:$0xf]
        %v1752 = vld [vmem:[#allocation2 + $0x84] sm:$0xf]
        %v1753 = vld [vmem:[#allocation2 + $0x88] sm:$0xf]
        %v1754 = vld [vmem:[#allocation2 + $0x90] sm:$0xf]
        %v1755 = vld [vmem:[#allocation2 + $0x94] sm:$0xf]
        %v1756 = vld [vmem:[#allocation2 + $0x9c] sm:$0xf]
        %v1757 = vld [vmem:[#allocation2 + $0xa0] sm:$0xf]
        %v1758 = vld [vmem:[#allocation2 + $0xa8] sm:$0xf]
        %v1759 = vld [vmem:[#allocation2 + $0xac] sm:$0xf]
        %v1760 = vld [vmem:[#allocation2 + $0xb4] sm:$0xf]
        %v1761 = vld [vmem:[#allocation2 + $0xb8] sm:$0xf]
        %v1762 = vld [vmem:[%s4] sm:$0x3]
        %v1763 = vld [vmem:[#allocation2 + $0x8] sm:$0x1]
        %v1764 = vld [vmem:[#allocation2 + $0x14] sm:$0x1]
        %v1765 = vld [vmem:[#allocation2 + $0x20] sm:$0x1]
        %v1766 = vld [vmem:[#allocation2 + $0x2c] sm:$0x1]
        %v1767 = vld [vmem:[#allocation2 + $0x38] sm:$0x1]
        %v1768 = vld [vmem:[#allocation2 + $0x44] sm:$0x1]
        %v1769 = vld [vmem:[#allocation2 + $0x50] sm:$0x1]
        %v1770 = vld [vmem:[#allocation2 + $0x5c] sm:$0x1]
        %v1771 = vld [vmem:[#allocation2 + $0x68] sm:$0x1]
        %v1772 = vld [vmem:[#allocation2 + $0x74] sm:$0x1]
        %v1773 = vld [vmem:[#allocation2 + $0x80] sm:$0x1]
        %v1774 = vld [vmem:[#allocation2 + $0x8c] sm:$0x1]
        %v1775 = vld [vmem:[#allocation2 + $0x98] sm:$0x1]
        %v1776 = vld [vmem:[#allocation2 + $0xa4] sm:$0x1]
        %v1777 = vld [vmem:[#allocation2 + $0xb0] sm:$0x1]
        %v1778 = vld [vmem:[#allocation2 + $0xbc] sm:$0x1]
        %vm1779 = vsmask.f32 3328
        %vm1780 = vsmask.f32 7440
        %vm1781 = vmor %vm1779, %vm1780
        %v1783 = vshrl.u32 %v1730, 16
        %v1785 = vrot.slane %v1783, 4
        %v1786 = vshll.u32 %v1730, 16
        %v1788 = vrot.slane %v1786, 5
        %v1789 = vor.u32 %v1785, %v1788
        %v1790 = vrot.slane %v1789, 4
        %v1792 = vshll.u32 %v1731, 16
        %v1794 = vrot.slane %v1792, 5
        %v1795 = vsel %vm1781, %v1790, %v1794
        %v1796 = vshrl.u32 %v1731, 16
        %v1798 = vrot.slane %v1796, 4
        %v1799 = vor.u32 %v1798, %v1794
        %v1800 = vrot.slane %v1799, 4
        %v1802 = vshll.u32 %v1763, 16
        %v1804 = vrot.slane %v1802, 5
        %v1805 = vsel %vm1781, %v1800, %v1804
        %v1807 = vshrl.u32 %v1732, 16
        %v1809 = vrot.slane %v1807, 4
        %v1810 = vshll.u32 %v1732, 16
        %v1812 = vrot.slane %v1810, 5
        %v1813 = vor.u32 %v1809, %v1812
        %v1814 = vrot.slane %v1813, 4
        %v1816 = vshll.u32 %v1733, 16
        %v1818 = vrot.slane %v1816, 5
        %v1819 = vsel %vm1781, %v1814, %v1818
        %v1820 = vshrl.u32 %v1733, 16
        %v1822 = vrot.slane %v1820, 4
        %v1823 = vor.u32 %v1822, %v1818
        %v1824 = vrot.slane %v1823, 4
        %v1826 = vshll.u32 %v1764, 16
        %v1828 = vrot.slane %v1826, 5
        %v1829 = vsel %vm1781, %v1824, %v1828
        %v1831 = vshrl.u32 %v1734, 16
        %v1833 = vrot.slane %v1831, 4
        %v1834 = vshll.u32 %v1734, 16
        %v1836 = vrot.slane %v1834, 5
        %v1837 = vor.u32 %v1833, %v1836
        %v1838 = vrot.slane %v1837, 4
        %v1840 = vshll.u32 %v1735, 16
        %v1842 = vrot.slane %v1840, 5
        %v1843 = vsel %vm1781, %v1838, %v1842
        %v1844 = vshrl.u32 %v1735, 16
        %v1846 = vrot.slane %v1844, 4
        %v1847 = vor.u32 %v1846, %v1842
        %v1848 = vrot.slane %v1847, 4
        %v1850 = vshll.u32 %v1765, 16
        %v1852 = vrot.slane %v1850, 5
        %v1853 = vsel %vm1781, %v1848, %v1852
        %v1855 = vshrl.u32 %v1736, 16
        %v1857 = vrot.slane %v1855, 4
        %v1858 = vshll.u32 %v1736, 16
        %v1860 = vrot.slane %v1858, 5
        %v1861 = vor.u32 %v1857, %v1860
        %v1862 = vrot.slane %v1861, 4
        %v1864 = vshll.u32 %v1737, 16
        %v1866 = vrot.slane %v1864, 5
        %v1867 = vsel %vm1781, %v1862, %v1866
        %v1868 = vshrl.u32 %v1737, 16
        %v1870 = vrot.slane %v1868, 4
        %v1871 = vor.u32 %v1870, %v1866
        %v1872 = vrot.slane %v1871, 4
        %v1874 = vshll.u32 %v1766, 16
        %v1876 = vrot.slane %v1874, 5
        %v1877 = vsel %vm1781, %v1872, %v1876
        %v1879 = vshrl.u32 %v1738, 16
        %v1881 = vrot.slane %v1879, 4
        %v1882 = vshll.u32 %v1738, 16
        %v1884 = vrot.slane %v1882, 5
        %v1885 = vor.u32 %v1881, %v1884
        %v1886 = vrot.slane %v1885, 4
        %v1888 = vshll.u32 %v1739, 16
        %v1890 = vrot.slane %v1888, 5
        %v1891 = vsel %vm1781, %v1886, %v1890
        %v1892 = vshrl.u32 %v1739, 16
        %v1894 = vrot.slane %v1892, 4
        %v1895 = vor.u32 %v1894, %v1890
        %v1896 = vrot.slane %v1895, 4
        %v1898 = vshll.u32 %v1767, 16
        %v1900 = vrot.slane %v1898, 5
        %v1901 = vsel %vm1781, %v1896, %v1900
        %v1903 = vshrl.u32 %v1740, 16
        %v1905 = vrot.slane %v1903, 4
        %v1906 = vshll.u32 %v1740, 16
        %v1908 = vrot.slane %v1906, 5
        %v1909 = vor.u32 %v1905, %v1908
        %v1910 = vrot.slane %v1909, 4
        %v1912 = vshll.u32 %v1741, 16
        %v1914 = vrot.slane %v1912, 5
        %v1915 = vsel %vm1781, %v1910, %v1914
        %v1916 = vshrl.u32 %v1741, 16
        %v1918 = vrot.slane %v1916, 4
        %v1919 = vor.u32 %v1918, %v1914
        %v1920 = vrot.slane %v1919, 4
        %v1922 = vshll.u32 %v1768, 16
        %v1924 = vrot.slane %v1922, 5
        %v1925 = vsel %vm1781, %v1920, %v1924
        %v1927 = vshrl.u32 %v1742, 16
        %v1929 = vrot.slane %v1927, 4
        %v1930 = vshll.u32 %v1742, 16
        %v1932 = vrot.slane %v1930, 5
        %v1933 = vor.u32 %v1929, %v1932
        %v1934 = vrot.slane %v1933, 4
        %v1936 = vshll.u32 %v1743, 16
        %v1938 = vrot.slane %v1936, 5
        %v1939 = vsel %vm1781, %v1934, %v1938
        %v1940 = vshrl.u32 %v1743, 16
        %v1942 = vrot.slane %v1940, 4
        %v1943 = vor.u32 %v1942, %v1938
        %v1944 = vrot.slane %v1943, 4
        %v1946 = vshll.u32 %v1769, 16
        %v1948 = vrot.slane %v1946, 5
        %v1949 = vsel %vm1781, %v1944, %v1948
        %v1951 = vshrl.u32 %v1744, 16
        %v1953 = vrot.slane %v1951, 4
        %v1954 = vshll.u32 %v1744, 16
        %v1956 = vrot.slane %v1954, 5
        %v1957 = vor.u32 %v1953, %v1956
        %v1958 = vrot.slane %v1957, 4
        %v1960 = vshll.u32 %v1745, 16
        %v1962 = vrot.slane %v1960, 5
        %v1963 = vsel %vm1781, %v1958, %v1962
        %v1964 = vshrl.u32 %v1745, 16
        %v1966 = vrot.slane %v1964, 4
        %v1967 = vor.u32 %v1966, %v1962
        %v1968 = vrot.slane %v1967, 4
        %v1970 = vshll.u32 %v1770, 16
        %v1972 = vrot.slane %v1970, 5
        %v1973 = vsel %vm1781, %v1968, %v1972
        %v1975 = vshrl.u32 %v1746, 16
        %v1977 = vrot.slane %v1975, 4
        %v1978 = vshll.u32 %v1746, 16
        %v1980 = vrot.slane %v1978, 5
        %v1981 = vor.u32 %v1977, %v1980
        %v1982 = vrot.slane %v1981, 4
        %v1984 = vshll.u32 %v1747, 16
        %v1986 = vrot.slane %v1984, 5
        %v1987 = vsel %vm1781, %v1982, %v1986
        %v1988 = vshrl.u32 %v1747, 16
        %v1990 = vrot.slane %v1988, 4
        %v1991 = vor.u32 %v1990, %v1986
        %v1992 = vrot.slane %v1991, 4
        %v1994 = vshll.u32 %v1771, 16
        %v1996 = vrot.slane %v1994, 5
        %v1997 = vsel %vm1781, %v1992, %v1996
        %v1999 = vshrl.u32 %v1748, 16
        %v2001 = vrot.slane %v1999, 4
        %v2002 = vshll.u32 %v1748, 16
        %v2004 = vrot.slane %v2002, 5
        %v2005 = vor.u32 %v2001, %v2004
        %v2006 = vrot.slane %v2005, 4
        %v2008 = vshll.u32 %v1749, 16
        %v2010 = vrot.slane %v2008, 5
        %v2011 = vsel %vm1781, %v2006, %v2010
        %v2012 = vshrl.u32 %v1749, 16
        %v2014 = vrot.slane %v2012, 4
        %v2015 = vor.u32 %v2014, %v2010
        %v2016 = vrot.slane %v2015, 4
        %v2018 = vshll.u32 %v1772, 16
        %v2020 = vrot.slane %v2018, 5
        %v2021 = vsel %vm1781, %v2016, %v2020
        %v2023 = vshrl.u32 %v1750, 16
        %v2025 = vrot.slane %v2023, 4
        %v2026 = vshll.u32 %v1750, 16
        %v2028 = vrot.slane %v2026, 5
        %v2029 = vor.u32 %v2025, %v2028
        %v2030 = vrot.slane %v2029, 4
        %v2032 = vshll.u32 %v1751, 16
        %v2034 = vrot.slane %v2032, 5
        %v2035 = vsel %vm1781, %v2030, %v2034
        %v2036 = vshrl.u32 %v1751, 16
        %v2038 = vrot.slane %v2036, 4
        %v2039 = vor.u32 %v2038, %v2034
        %v2040 = vrot.slane %v2039, 4
        %v2042 = vshll.u32 %v1773, 16
        %v2044 = vrot.slane %v2042, 5
        %v2045 = vsel %vm1781, %v2040, %v2044
        %v2047 = vshrl.u32 %v1752, 16
        %v2049 = vrot.slane %v2047, 4
        %v2050 = vshll.u32 %v1752, 16
        %v2052 = vrot.slane %v2050, 5
        %v2053 = vor.u32 %v2049, %v2052
        %v2054 = vrot.slane %v2053, 4
        %v2056 = vshll.u32 %v1753, 16
        %v2058 = vrot.slane %v2056, 5
        %v2059 = vsel %vm1781, %v2054, %v2058
        %v2060 = vshrl.u32 %v1753, 16
        %v2062 = vrot.slane %v2060, 4
        %v2063 = vor.u32 %v2062, %v2058
        %v2064 = vrot.slane %v2063, 4
        %v2066 = vshll.u32 %v1774, 16
        %v2068 = vrot.slane %v2066, 5
        %v2069 = vsel %vm1781, %v2064, %v2068
        %v2071 = vshrl.u32 %v1754, 16
        %v2073 = vrot.slane %v2071, 4
        %v2074 = vshll.u32 %v1754, 16
        %v2076 = vrot.slane %v2074, 5
        %v2077 = vor.u32 %v2073, %v2076
        %v2078 = vrot.slane %v2077, 4
        %v2080 = vshll.u32 %v1755, 16
        %v2082 = vrot.slane %v2080, 5
        %v2083 = vsel %vm1781, %v2078, %v2082
        %v2084 = vshrl.u32 %v1755, 16
        %v2086 = vrot.slane %v2084, 4
        %v2087 = vor.u32 %v2086, %v2082
        %v2088 = vrot.slane %v2087, 4
        %v2090 = vshll.u32 %v1775, 16
        %v2092 = vrot.slane %v2090, 5
        %v2093 = vsel %vm1781, %v2088, %v2092
        %v2095 = vshrl.u32 %v1756, 16
        %v2097 = vrot.slane %v2095, 4
        %v2098 = vshll.u32 %v1756, 16
        %v2100 = vrot.slane %v2098, 5
        %v2101 = vor.u32 %v2097, %v2100
        %v2102 = vrot.slane %v2101, 4
        %v2104 = vshll.u32 %v1757, 16
        %v2106 = vrot.slane %v2104, 5
        %v2107 = vsel %vm1781, %v2102, %v2106
        %v2108 = vshrl.u32 %v1757, 16
        %v2110 = vrot.slane %v2108, 4
        %v2111 = vor.u32 %v2110, %v2106
        %v2112 = vrot.slane %v2111, 4
        %v2114 = vshll.u32 %v1776, 16
        %v2116 = vrot.slane %v2114, 5
        %v2117 = vsel %vm1781, %v2112, %v2116
        %v2119 = vshrl.u32 %v1758, 16
        %v2121 = vrot.slane %v2119, 4
        %v2122 = vshll.u32 %v1758, 16
        %v2124 = vrot.slane %v2122, 5
        %v2125 = vor.u32 %v2121, %v2124
        %v2126 = vrot.slane %v2125, 4
        %v2128 = vshll.u32 %v1759, 16
        %v2130 = vrot.slane %v2128, 5
        %v2131 = vsel %vm1781, %v2126, %v2130
        %v2132 = vshrl.u32 %v1759, 16
        %v2134 = vrot.slane %v2132, 4
        %v2135 = vor.u32 %v2134, %v2130
        %v2136 = vrot.slane %v2135, 4
        %v2138 = vshll.u32 %v1777, 16
        %v2140 = vrot.slane %v2138, 5
        %v2141 = vsel %vm1781, %v2136, %v2140
        %v2143 = vshrl.u32 %v1760, 16
        %v2145 = vrot.slane %v2143, 4
        %v2146 = vshll.u32 %v1760, 16
        %v2148 = vrot.slane %v2146, 5
        %v2149 = vor.u32 %v2145, %v2148
        %v2150 = vrot.slane %v2149, 4
        %v2152 = vshll.u32 %v1761, 16
        %v2154 = vrot.slane %v2152, 5
        %v2155 = vsel %vm1781, %v2150, %v2154
        %v2156 = vshrl.u32 %v1761, 16
        %v2158 = vrot.slane %v2156, 4
        %v2159 = vor.u32 %v2158, %v2154
        %v2160 = vrot.slane %v2159, 4
        %v2162 = vshll.u32 %v1778, 16
        %v2164 = vrot.slane %v2162, 5
        %v2165 = vsel %vm1781, %v2160, %v2164
        %v2166 = vld [vmem:[%s4] sm:$0xc]
        %v2167 = vunpack.c.l.b16 %v1795
        %v2168 = vunpack.c.l.b16 %v1805
        %v2169 = vunpack.c.l.b16 %v1819
        %v2170 = vunpack.c.l.b16 %v1829
        %v2171 = vunpack.c.l.b16 %v1843
        %v2172 = vunpack.c.l.b16 %v1853
        %v2173 = vunpack.c.l.b16 %v1867
        %v2174 = vunpack.c.l.b16 %v1877
        %v2175 = vunpack.c.l.b16 %v1891
        %v2176 = vunpack.c.l.b16 %v1901
        %v2177 = vunpack.c.l.b16 %v1915
        %v2178 = vunpack.c.l.b16 %v1925
        %v2179 = vunpack.c.l.b16 %v1939
        %v2180 = vunpack.c.l.b16 %v1949
        %v2181 = vunpack.c.l.b16 %v1963
        %v2182 = vunpack.c.l.b16 %v1973
        %v2183 = vunpack.c.l.b16 %v1987
        %v2184 = vunpack.c.l.b16 %v1997
        %v2185 = vunpack.c.l.b16 %v2011
        %v2186 = vunpack.c.l.b16 %v2021
        %v2187 = vunpack.c.l.b16 %v2035
        %v2188 = vunpack.c.l.b16 %v2045
        %v2189 = vunpack.c.l.b16 %v2059
        %v2190 = vunpack.c.l.b16 %v2069
        %v2191 = vunpack.c.l.b16 %v2083
        %v2192 = vunpack.c.l.b16 %v2093
        %v2193 = vunpack.c.l.b16 %v2107
        %v2194 = vunpack.c.l.b16 %v2117
        %v2195 = vunpack.c.l.b16 %v2131
        %v2196 = vunpack.c.l.b16 %v2141
        %v2197 = vunpack.c.l.b16 %v2155
        %v2198 = vunpack.c.l.b16 %v2165
        %v2199 = vpack.c.b16 %v2168, %v2167
        %v2200 = vpack.c.b16 %v2170, %v2169
        %v2201 = vpack.c.b16 %v2172, %v2171
        %v2202 = vpack.c.b16 %v2174, %v2173
        %v2203 = vpack.c.b16 %v2176, %v2175
        %v2204 = vpack.c.b16 %v2178, %v2177
        %v2205 = vpack.c.b16 %v2180, %v2179
        %v2206 = vpack.c.b16 %v2182, %v2181
        %v2207 = vpack.c.b16 %v2184, %v2183
        %v2208 = vpack.c.b16 %v2186, %v2185
        %v2209 = vpack.c.b16 %v2188, %v2187
        %v2210 = vpack.c.b16 %v2190, %v2189
        %v2211 = vpack.c.b16 %v2192, %v2191
        %v2212 = vpack.c.b16 %v2194, %v2193
        %v2213 = vpack.c.b16 %v2196, %v2195
        %v2214 = vpack.c.b16 %v2198, %v2197
        %v2216 = vunpack.c.l.b16 %v2166
        %v2217 = vpack.c.b16 %v2216, %v2216
        %v2218 = vrot.slane %v2217, 2
        %v2220 = vsel %vm553, %v2199, 0
        %v2223 = vsel %vm553, %v2200, 0
        %v2226 = vsel %vm553, %v2201, 0
        %v2229 = vsel %vm553, %v2202, 0
        %v2232 = vsel %vm553, %v2203, 0
        %v2235 = vsel %vm553, %v2204, 0
        %v2238 = vsel %vm553, %v2205, 0
        %v2241 = vsel %vm553, %v2206, 0
        %v2244 = vsel %vm553, %v2207, 0
        %v2247 = vsel %vm553, %v2208, 0
        %v2250 = vsel %vm553, %v2209, 0
        %v2253 = vsel %vm553, %v2210, 0
        %v2256 = vsel %vm553, %v2211, 0
        %v2259 = vsel %vm553, %v2212, 0
        %v2262 = vsel %vm553, %v2213, 0
        %v2265 = vsel %vm553, %v2214, 0
        %v2268 = vsel %vm602, %v2218, 0
        %2270 = vmatprep.subr.bf16.mxu0 0
        %2271 = vmatpush1.bf16.msra.mxu0 0
        %2272 = vmatprep.subr.bf16.mxu0 0
        %2273 = vmatpush1.bf16.msra.mxu0 0
        %2274 = vmatprep.subr.bf16.mxu0 0
        %2275 = vmatpush1.bf16.msra.mxu0 0
        %2276 = vmatprep.subr.bf16.mxu0 0
        %2277 = vmatpush1.bf16.msra.mxu0 0
        %2278 = vmatprep.subr.bf16.mxu0 0
        %2279 = vmatpush1.bf16.msra.mxu0 0
        %2280 = vmatprep.subr.bf16.mxu0 0
        %2281 = vmatpush1.bf16.msra.mxu0 0
        %2282 = vmatprep.subr.bf16.mxu0 0
        %2283 = vmatpush1.bf16.msra.mxu0 0
        %2284 = vmatprep.subr.bf16.mxu0 0
        %2285 = vmatpush1.bf16.msra.mxu0 %v2268
        %2286 = vmatprep.subr.bf16.mxu0 0
        %2287 = vmatpush2.bf16.msra.mxu0 0
        %2288 = vmatprep.subr.bf16.mxu0 0
        %2289 = vmatpush2.bf16.msra.mxu0 0
        %2290 = vmatprep.subr.bf16.mxu0 0
        %2291 = vmatpush2.bf16.msra.mxu0 0
        %2292 = vmatprep.subr.bf16.mxu0 0
        %2293 = vmatpush2.bf16.msra.mxu0 0
        %2294 = vmatprep.subr.bf16.mxu0 0
        %2295 = vmatpush2.bf16.msra.mxu0 0
        %2296 = vmatprep.subr.bf16.mxu0 0
        %2297 = vmatpush2.bf16.msra.mxu0 0
        %2298 = vmatprep.subr.bf16.mxu0 0
        %2299 = vmatpush2.bf16.msra.mxu0 0
        %2300 = vmatprep.subr.bf16.mxu0 0
        %2301 = vmatpush2.bf16.msra.mxu0 0
        %2302 = vmatprep.mubr.bf16.mxu0 0
        %2303 = vmatmul.mubr.bf16.gmra.mxu0 %v2220
        %v2304 = vpop.f32.mrf.mxu0
        %v2305 = vadd.f32 0.0, %v2304
        %v2306 = vpop.f32.mrf.mxu0
        %v2307 = vpop.f32.mrf.mxu0
        %v2308 = vadd.f32 0.0, %v2307
        %v2309 = vpop.f32.mrf.mxu0
        %2310 = vmatprep.mubr.bf16.mxu0 0
        %2311 = vmatmul.mubr.bf16.gmra.mxu0 %v2223
        %v2312 = vpop.f32.mrf.mxu0
        %v2313 = vadd.f32 0.0, %v2312
        %v2314 = vpop.f32.mrf.mxu0
        %v2315 = vpop.f32.mrf.mxu0
        %v2316 = vadd.f32 0.0, %v2315
        %v2317 = vpop.f32.mrf.mxu0
        %2318 = vmatprep.mubr.bf16.mxu0 0
        %2319 = vmatmul.mubr.bf16.gmra.mxu0 %v2226
        %v2320 = vpop.f32.mrf.mxu0
        %v2321 = vadd.f32 0.0, %v2320
        %v2322 = vpop.f32.mrf.mxu0
        %v2323 = vpop.f32.mrf.mxu0
        %v2324 = vadd.f32 0.0, %v2323
        %v2325 = vpop.f32.mrf.mxu0
        %2326 = vmatprep.mubr.bf16.mxu0 0
        %2327 = vmatmul.mubr.bf16.gmra.mxu0 %v2229
        %v2328 = vpop.f32.mrf.mxu0
        %v2329 = vadd.f32 0.0, %v2328
        %v2330 = vpop.f32.mrf.mxu0
        %v2331 = vpop.f32.mrf.mxu0
        %v2332 = vadd.f32 0.0, %v2331
        %v2333 = vpop.f32.mrf.mxu0
        %2334 = vmatprep.mubr.bf16.mxu0 0
        %2335 = vmatmul.mubr.bf16.gmra.mxu0 %v2232
        %v2336 = vpop.f32.mrf.mxu0
        %v2337 = vadd.f32 0.0, %v2336
        %v2338 = vpop.f32.mrf.mxu0
        %v2339 = vpop.f32.mrf.mxu0
        %v2340 = vadd.f32 0.0, %v2339
        %v2341 = vpop.f32.mrf.mxu0
        %2342 = vmatprep.mubr.bf16.mxu0 0
        %2343 = vmatmul.mubr.bf16.gmra.mxu0 %v2235
        %v2344 = vpop.f32.mrf.mxu0
        %v2345 = vadd.f32 0.0, %v2344
        %v2346 = vpop.f32.mrf.mxu0
        %v2347 = vpop.f32.mrf.mxu0
        %v2348 = vadd.f32 0.0, %v2347
        %v2349 = vpop.f32.mrf.mxu0
        %2350 = vmatprep.mubr.bf16.mxu0 0
        %2351 = vmatmul.mubr.bf16.gmra.mxu0 %v2238
        %v2352 = vpop.f32.mrf.mxu0
        %v2353 = vadd.f32 0.0, %v2352
        %v2354 = vpop.f32.mrf.mxu0
        %v2355 = vpop.f32.mrf.mxu0
        %v2356 = vadd.f32 0.0, %v2355
        %v2357 = vpop.f32.mrf.mxu0
        %2358 = vmatprep.mubr.bf16.mxu0 0
        %2359 = vmatmul.mubr.bf16.gmra.mxu0 %v2241
        %v2360 = vpop.f32.mrf.mxu0
        %v2361 = vadd.f32 0.0, %v2360
        %v2362 = vpop.f32.mrf.mxu0
        %v2363 = vpop.f32.mrf.mxu0
        %v2364 = vadd.f32 0.0, %v2363
        %v2365 = vpop.f32.mrf.mxu0
        %2366 = vmatprep.mubr.bf16.mxu0 0
        %2367 = vmatmul.mubr.bf16.gmra.mxu0 %v2244
        %v2368 = vpop.f32.mrf.mxu0
        %v2369 = vadd.f32 0.0, %v2368
        %v2370 = vpop.f32.mrf.mxu0
        %v2371 = vpop.f32.mrf.mxu0
        %v2372 = vadd.f32 0.0, %v2371
        %v2373 = vpop.f32.mrf.mxu0
        %2374 = vmatprep.mubr.bf16.mxu0 0
        %2375 = vmatmul.mubr.bf16.gmra.mxu0 %v2247
        %v2376 = vpop.f32.mrf.mxu0
        %v2377 = vadd.f32 0.0, %v2376
        %v2378 = vpop.f32.mrf.mxu0
        %v2379 = vpop.f32.mrf.mxu0
        %v2380 = vadd.f32 0.0, %v2379
        %v2381 = vpop.f32.mrf.mxu0
        %2382 = vmatprep.mubr.bf16.mxu0 0
        %2383 = vmatmul.mubr.bf16.gmra.mxu0 %v2250
        %v2384 = vpop.f32.mrf.mxu0
        %v2385 = vadd.f32 0.0, %v2384
        %v2386 = vpop.f32.mrf.mxu0
        %v2387 = vpop.f32.mrf.mxu0
        %v2388 = vadd.f32 0.0, %v2387
        %v2389 = vpop.f32.mrf.mxu0
        %2390 = vmatprep.mubr.bf16.mxu0 0
        %2391 = vmatmul.mubr.bf16.gmra.mxu0 %v2253
        %v2392 = vpop.f32.mrf.mxu0
        %v2393 = vadd.f32 0.0, %v2392
        %v2394 = vpop.f32.mrf.mxu0
        %v2395 = vpop.f32.mrf.mxu0
        %v2396 = vadd.f32 0.0, %v2395
        %v2397 = vpop.f32.mrf.mxu0
        %2398 = vmatprep.mubr.bf16.mxu0 0
        %2399 = vmatmul.mubr.bf16.gmra.mxu0 %v2256
        %v2400 = vpop.f32.mrf.mxu0
        %v2401 = vadd.f32 0.0, %v2400
        %v2402 = vpop.f32.mrf.mxu0
        %v2403 = vpop.f32.mrf.mxu0
        %v2404 = vadd.f32 0.0, %v2403
        %v2405 = vpop.f32.mrf.mxu0
        %2406 = vmatprep.mubr.bf16.mxu0 0
        %2407 = vmatmul.mubr.bf16.gmra.mxu0 %v2259
        %v2408 = vpop.f32.mrf.mxu0
        %v2409 = vadd.f32 0.0, %v2408
        %v2410 = vpop.f32.mrf.mxu0
        %v2411 = vpop.f32.mrf.mxu0
        %v2412 = vadd.f32 0.0, %v2411
        %v2413 = vpop.f32.mrf.mxu0
        %2414 = vmatprep.mubr.bf16.mxu0 0
        %2415 = vmatmul.mubr.bf16.gmra.mxu0 %v2262
        %v2416 = vpop.f32.mrf.mxu0
        %v2417 = vadd.f32 0.0, %v2416
        %v2418 = vpop.f32.mrf.mxu0
        %v2419 = vpop.f32.mrf.mxu0
        %v2420 = vadd.f32 0.0, %v2419
        %v2421 = vpop.f32.mrf.mxu0
        %2422 = vmatprep.mubr.bf16.mxu0 0
        %2423 = vmatmul.mubr.bf16.gmra.mxu0 %v2265
        %v2424 = vpop.f32.mrf.mxu0
        %v2425 = vadd.f32 0.0, %v2424
        %v2426 = vpop.f32.mrf.mxu0
        %v2427 = vpop.f32.mrf.mxu0
        %v2428 = vadd.f32 0.0, %v2427
        %v2429 = vpop.f32.mrf.mxu0
        %2430 = vdwg.mxu0
        %v2463 = vunpack.c.l.b16 %v1730
        %v2464 = vunpack.c.l.b16 %v1731
        %v2465 = vunpack.c.l.b16 %v1732
        %v2466 = vunpack.c.l.b16 %v1733
        %v2467 = vunpack.c.l.b16 %v1734
        %v2468 = vunpack.c.l.b16 %v1735
        %v2469 = vunpack.c.l.b16 %v1736
        %v2470 = vunpack.c.l.b16 %v1737
        %v2471 = vunpack.c.l.b16 %v1738
        %v2472 = vunpack.c.l.b16 %v1739
        %v2473 = vunpack.c.l.b16 %v1740
        %v2474 = vunpack.c.l.b16 %v1741
        %v2475 = vunpack.c.l.b16 %v1742
        %v2476 = vunpack.c.l.b16 %v1743
        %v2477 = vunpack.c.l.b16 %v1744
        %v2478 = vunpack.c.l.b16 %v1745
        %v2479 = vunpack.c.l.b16 %v1746
        %v2480 = vunpack.c.l.b16 %v1747
        %v2481 = vunpack.c.l.b16 %v1748
        %v2482 = vunpack.c.l.b16 %v1749
        %v2483 = vunpack.c.l.b16 %v1750
        %v2484 = vunpack.c.l.b16 %v1751
        %v2485 = vunpack.c.l.b16 %v1752
        %v2486 = vunpack.c.l.b16 %v1753
        %v2487 = vunpack.c.l.b16 %v1754
        %v2488 = vunpack.c.l.b16 %v1755
        %v2489 = vunpack.c.l.b16 %v1756
        %v2490 = vunpack.c.l.b16 %v1757
        %v2491 = vunpack.c.l.b16 %v1758
        %v2492 = vunpack.c.l.b16 %v1759
        %v2493 = vunpack.c.l.b16 %v1760
        %v2494 = vunpack.c.l.b16 %v1761
        %v2495 = vpack.c.b16 %v2464, %v2463
        %v2496 = vpack.c.b16 %v2466, %v2465
        %v2497 = vpack.c.b16 %v2468, %v2467
        %v2498 = vpack.c.b16 %v2470, %v2469
        %v2499 = vpack.c.b16 %v2472, %v2471
        %v2500 = vpack.c.b16 %v2474, %v2473
        %v2501 = vpack.c.b16 %v2476, %v2475
        %v2502 = vpack.c.b16 %v2478, %v2477
        %v2503 = vpack.c.b16 %v2480, %v2479
        %v2504 = vpack.c.b16 %v2482, %v2481
        %v2505 = vpack.c.b16 %v2484, %v2483
        %v2506 = vpack.c.b16 %v2486, %v2485
        %v2507 = vpack.c.b16 %v2488, %v2487
        %v2508 = vpack.c.b16 %v2490, %v2489
        %v2509 = vpack.c.b16 %v2492, %v2491
        %v2510 = vpack.c.b16 %v2494, %v2493
        %v2512 = vsel %vm553, %v2495, 0
        %v2515 = vsel %vm553, %v2496, 0
        %v2518 = vsel %vm553, %v2497, 0
        %v2521 = vsel %vm553, %v2498, 0
        %v2524 = vsel %vm553, %v2499, 0
        %v2527 = vsel %vm553, %v2500, 0
        %v2530 = vsel %vm553, %v2501, 0
        %v2533 = vsel %vm553, %v2502, 0
        %v2536 = vsel %vm553, %v2503, 0
        %v2539 = vsel %vm553, %v2504, 0
        %v2542 = vsel %vm553, %v2505, 0
        %v2545 = vsel %vm553, %v2506, 0
        %v2548 = vsel %vm553, %v2507, 0
        %v2551 = vsel %vm553, %v2508, 0
        %v2554 = vsel %vm553, %v2509, 0
        %v2557 = vsel %vm553, %v2510, 0
        %v2560 = vsel %vm602, %v1762, 0
        %2562 = vmatprep.subr.bf16.mxu0 0
        %2563 = vmatpush1.bf16.msra.mxu0 0
        %2564 = vmatprep.subr.bf16.mxu0 0
        %2565 = vmatpush1.bf16.msra.mxu0 0
        %2566 = vmatprep.subr.bf16.mxu0 0
        %2567 = vmatpush1.bf16.msra.mxu0 0
        %2568 = vmatprep.subr.bf16.mxu0 0
        %2569 = vmatpush1.bf16.msra.mxu0 0
        %2570 = vmatprep.subr.bf16.mxu0 0
        %2571 = vmatpush1.bf16.msra.mxu0 0
        %2572 = vmatprep.subr.bf16.mxu0 0
        %2573 = vmatpush1.bf16.msra.mxu0 0
        %2574 = vmatprep.subr.bf16.mxu0 0
        %2575 = vmatpush1.bf16.msra.mxu0 0
        %2576 = vmatprep.subr.bf16.mxu0 0
        %2577 = vmatpush1.bf16.msra.mxu0 %v2560
        %2578 = vmatprep.subr.bf16.mxu0 0
        %2579 = vmatpush2.bf16.msra.mxu0 0
        %2580 = vmatprep.subr.bf16.mxu0 0
        %2581 = vmatpush2.bf16.msra.mxu0 0
        %2582 = vmatprep.subr.bf16.mxu0 0
        %2583 = vmatpush2.bf16.msra.mxu0 0
        %2584 = vmatprep.subr.bf16.mxu0 0
        %2585 = vmatpush2.bf16.msra.mxu0 0
        %2586 = vmatprep.subr.bf16.mxu0 0
        %2587 = vmatpush2.bf16.msra.mxu0 0
        %2588 = vmatprep.subr.bf16.mxu0 0
        %2589 = vmatpush2.bf16.msra.mxu0 0
        %2590 = vmatprep.subr.bf16.mxu0 0
        %2591 = vmatpush2.bf16.msra.mxu0 0
        %2592 = vmatprep.subr.bf16.mxu0 0
        %2593 = vmatpush2.bf16.msra.mxu0 0
        %2594 = vmatprep.mubr.bf16.mxu0 0
        %2595 = vmatmul.mubr.bf16.gmra.mxu0 %v2512
        %v2596 = vpop.f32.mrf.mxu0
        %v2597 = vadd.f32 %v2305, %v2596
        %v2598 = vpop.f32.mrf.mxu0
        %v2599 = vpop.f32.mrf.mxu0
        %v2600 = vadd.f32 %v2308, %v2599
        %v2601 = vpop.f32.mrf.mxu0
        %2602 = vmatprep.mubr.bf16.mxu0 0
        %2603 = vmatmul.mubr.bf16.gmra.mxu0 %v2515
        %v2604 = vpop.f32.mrf.mxu0
        %v2605 = vadd.f32 %v2313, %v2604
        %v2606 = vpop.f32.mrf.mxu0
        %v2607 = vpop.f32.mrf.mxu0
        %v2608 = vadd.f32 %v2316, %v2607
        %v2609 = vpop.f32.mrf.mxu0
        %2610 = vmatprep.mubr.bf16.mxu0 0
        %2611 = vmatmul.mubr.bf16.gmra.mxu0 %v2518
        %v2612 = vpop.f32.mrf.mxu0
        %v2613 = vadd.f32 %v2321, %v2612
        %v2614 = vpop.f32.mrf.mxu0
        %v2615 = vpop.f32.mrf.mxu0
        %v2616 = vadd.f32 %v2324, %v2615
        %v2617 = vpop.f32.mrf.mxu0
        %2618 = vmatprep.mubr.bf16.mxu0 0
        %2619 = vmatmul.mubr.bf16.gmra.mxu0 %v2521
        %v2620 = vpop.f32.mrf.mxu0
        %v2621 = vadd.f32 %v2329, %v2620
        %v2622 = vpop.f32.mrf.mxu0
        %v2623 = vpop.f32.mrf.mxu0
        %v2624 = vadd.f32 %v2332, %v2623
        %v2625 = vpop.f32.mrf.mxu0
        %2626 = vmatprep.mubr.bf16.mxu0 0
        %2627 = vmatmul.mubr.bf16.gmra.mxu0 %v2524
        %v2628 = vpop.f32.mrf.mxu0
        %v2629 = vadd.f32 %v2337, %v2628
        %v2630 = vpop.f32.mrf.mxu0
        %v2631 = vpop.f32.mrf.mxu0
        %v2632 = vadd.f32 %v2340, %v2631
        %v2633 = vpop.f32.mrf.mxu0
        %2634 = vmatprep.mubr.bf16.mxu0 0
        %2635 = vmatmul.mubr.bf16.gmra.mxu0 %v2527
        %v2636 = vpop.f32.mrf.mxu0
        %v2637 = vadd.f32 %v2345, %v2636
        %v2638 = vpop.f32.mrf.mxu0
        %v2639 = vpop.f32.mrf.mxu0
        %v2640 = vadd.f32 %v2348, %v2639
        %v2641 = vpop.f32.mrf.mxu0
        %2642 = vmatprep.mubr.bf16.mxu0 0
        %2643 = vmatmul.mubr.bf16.gmra.mxu0 %v2530
        %v2644 = vpop.f32.mrf.mxu0
        %v2645 = vadd.f32 %v2353, %v2644
        %v2646 = vpop.f32.mrf.mxu0
        %v2647 = vpop.f32.mrf.mxu0
        %v2648 = vadd.f32 %v2356, %v2647
        %v2649 = vpop.f32.mrf.mxu0
        %2650 = vmatprep.mubr.bf16.mxu0 0
        %2651 = vmatmul.mubr.bf16.gmra.mxu0 %v2533
        %v2652 = vpop.f32.mrf.mxu0
        %v2653 = vadd.f32 %v2361, %v2652
        %v2654 = vpop.f32.mrf.mxu0
        %v2655 = vpop.f32.mrf.mxu0
        %v2656 = vadd.f32 %v2364, %v2655
        %v2657 = vpop.f32.mrf.mxu0
        %2658 = vmatprep.mubr.bf16.mxu0 0
        %2659 = vmatmul.mubr.bf16.gmra.mxu0 %v2536
        %v2660 = vpop.f32.mrf.mxu0
        %v2661 = vadd.f32 %v2369, %v2660
        %v2662 = vpop.f32.mrf.mxu0
        %v2663 = vpop.f32.mrf.mxu0
        %v2664 = vadd.f32 %v2372, %v2663
        %v2665 = vpop.f32.mrf.mxu0
        %2666 = vmatprep.mubr.bf16.mxu0 0
        %2667 = vmatmul.mubr.bf16.gmra.mxu0 %v2539
        %v2668 = vpop.f32.mrf.mxu0
        %v2669 = vadd.f32 %v2377, %v2668
        %v2670 = vpop.f32.mrf.mxu0
        %v2671 = vpop.f32.mrf.mxu0
        %v2672 = vadd.f32 %v2380, %v2671
        %v2673 = vpop.f32.mrf.mxu0
        %2674 = vmatprep.mubr.bf16.mxu0 0
        %2675 = vmatmul.mubr.bf16.gmra.mxu0 %v2542
        %v2676 = vpop.f32.mrf.mxu0
        %v2677 = vadd.f32 %v2385, %v2676
        %v2678 = vpop.f32.mrf.mxu0
        %v2679 = vpop.f32.mrf.mxu0
        %v2680 = vadd.f32 %v2388, %v2679
        %v2681 = vpop.f32.mrf.mxu0
        %2682 = vmatprep.mubr.bf16.mxu0 0
        %2683 = vmatmul.mubr.bf16.gmra.mxu0 %v2545
        %v2684 = vpop.f32.mrf.mxu0
        %v2685 = vadd.f32 %v2393, %v2684
        %v2686 = vpop.f32.mrf.mxu0
        %v2687 = vpop.f32.mrf.mxu0
        %v2688 = vadd.f32 %v2396, %v2687
        %v2689 = vpop.f32.mrf.mxu0
        %2690 = vmatprep.mubr.bf16.mxu0 0
        %2691 = vmatmul.mubr.bf16.gmra.mxu0 %v2548
        %v2692 = vpop.f32.mrf.mxu0
        %v2693 = vadd.f32 %v2401, %v2692
        %v2694 = vpop.f32.mrf.mxu0
        %v2695 = vpop.f32.mrf.mxu0
        %v2696 = vadd.f32 %v2404, %v2695
        %v2697 = vpop.f32.mrf.mxu0
        %2698 = vmatprep.mubr.bf16.mxu0 0
        %2699 = vmatmul.mubr.bf16.gmra.mxu0 %v2551
        %v2700 = vpop.f32.mrf.mxu0
        %v2701 = vadd.f32 %v2409, %v2700
        %v2702 = vpop.f32.mrf.mxu0
        %v2703 = vpop.f32.mrf.mxu0
        %v2704 = vadd.f32 %v2412, %v2703
        %v2705 = vpop.f32.mrf.mxu0
        %2706 = vmatprep.mubr.bf16.mxu0 0
        %2707 = vmatmul.mubr.bf16.gmra.mxu0 %v2554
        %v2708 = vpop.f32.mrf.mxu0
        %v2709 = vadd.f32 %v2417, %v2708
        %v2710 = vpop.f32.mrf.mxu0
        %v2711 = vpop.f32.mrf.mxu0
        %v2712 = vadd.f32 %v2420, %v2711
        %v2713 = vpop.f32.mrf.mxu0
        %2714 = vmatprep.mubr.bf16.mxu0 0
        %2715 = vmatmul.mubr.bf16.gmra.mxu0 %v2557
        %v2716 = vpop.f32.mrf.mxu0
        %v2717 = vadd.f32 %v2425, %v2716
        %v2718 = vpop.f32.mrf.mxu0
        %v2719 = vpop.f32.mrf.mxu0
        %v2720 = vadd.f32 %v2428, %v2719
        %v2721 = vpop.f32.mrf.mxu0
        %2722 = vdwg.mxu0
        %v2723 = vld [vmem:[#allocation2] sm:$0xe]
        %v2724 = vld [vmem:[#allocation2 + $0xc] sm:$0xe]
        %v2725 = vld [vmem:[#allocation2 + $0x18] sm:$0xe]
        %v2726 = vld [vmem:[#allocation2 + $0x24] sm:$0xe]
        %v2727 = vld [vmem:[#allocation2 + $0x30] sm:$0xe]
        %v2728 = vld [vmem:[#allocation2 + $0x3c] sm:$0xe]
        %v2729 = vld [vmem:[#allocation2 + $0x48] sm:$0xe]
        %v2730 = vld [vmem:[#allocation2 + $0x54] sm:$0xe]
        %v2731 = vld [vmem:[#allocation2 + $0x60] sm:$0xe]
        %v2732 = vld [vmem:[#allocation2 + $0x6c] sm:$0xe]
        %v2733 = vld [vmem:[#allocation2 + $0x78] sm:$0xe]
        %v2734 = vld [vmem:[#allocation2 + $0x84] sm:$0xe]
        %v2735 = vld [vmem:[#allocation2 + $0x90] sm:$0xe]
        %v2736 = vld [vmem:[#allocation2 + $0x9c] sm:$0xe]
        %v2737 = vld [vmem:[#allocation2 + $0xa8] sm:$0xe]
        %v2738 = vld [vmem:[#allocation2 + $0xb4] sm:$0xe]
        %vm2771 = vcmask 1042432
        %vm2772 = vcmask 1046532
        %vm2773 = vmor %vm2771, %vm2772
        %v2774 = vrot.slane %v2723, 5
        %v2775 = vrot.slane %v2774, 4
        %v2776 = vrot.slane %v1731, 5
        %v2777 = vsel %vm2773, %v2775, %v2776
        %v2778 = vrot.slane %v2776, 4
        %v2779 = vrot.slane %v1763, 5
        %v2780 = vsel %vm2773, %v2778, %v2779
        %v2781 = vrot.slane %v2724, 5
        %v2782 = vrot.slane %v2781, 4
        %v2783 = vrot.slane %v1733, 5
        %v2784 = vsel %vm2773, %v2782, %v2783
        %v2785 = vrot.slane %v2783, 4
        %v2786 = vrot.slane %v1764, 5
        %v2787 = vsel %vm2773, %v2785, %v2786
        %v2788 = vrot.slane %v2725, 5
        %v2789 = vrot.slane %v2788, 4
        %v2790 = vrot.slane %v1735, 5
        %v2791 = vsel %vm2773, %v2789, %v2790
        %v2792 = vrot.slane %v2790, 4
        %v2793 = vrot.slane %v1765, 5
        %v2794 = vsel %vm2773, %v2792, %v2793
        %v2795 = vrot.slane %v2726, 5
        %v2796 = vrot.slane %v2795, 4
        %v2797 = vrot.slane %v1737, 5
        %v2798 = vsel %vm2773, %v2796, %v2797
        %v2799 = vrot.slane %v2797, 4
        %v2800 = vrot.slane %v1766, 5
        %v2801 = vsel %vm2773, %v2799, %v2800
        %v2802 = vrot.slane %v2727, 5
        %v2803 = vrot.slane %v2802, 4
        %v2804 = vrot.slane %v1739, 5
        %v2805 = vsel %vm2773, %v2803, %v2804
        %v2806 = vrot.slane %v2804, 4
        %v2807 = vrot.slane %v1767, 5
        %v2808 = vsel %vm2773, %v2806, %v2807
        %v2809 = vrot.slane %v2728, 5
        %v2810 = vrot.slane %v2809, 4
        %v2811 = vrot.slane %v1741, 5
        %v2812 = vsel %vm2773, %v2810, %v2811
        %v2813 = vrot.slane %v2811, 4
        %v2814 = vrot.slane %v1768, 5
        %v2815 = vsel %vm2773, %v2813, %v2814
        %v2816 = vrot.slane %v2729, 5
        %v2817 = vrot.slane %v2816, 4
        %v2818 = vrot.slane %v1743, 5
        %v2819 = vsel %vm2773, %v2817, %v2818
        %v2820 = vrot.slane %v2818, 4
        %v2821 = vrot.slane %v1769, 5
        %v2822 = vsel %vm2773, %v2820, %v2821
        %v2823 = vrot.slane %v2730, 5
        %v2824 = vrot.slane %v2823, 4
        %v2825 = vrot.slane %v1745, 5
        %v2826 = vsel %vm2773, %v2824, %v2825
        %v2827 = vrot.slane %v2825, 4
        %v2828 = vrot.slane %v1770, 5
        %v2829 = vsel %vm2773, %v2827, %v2828
        %v2830 = vrot.slane %v2731, 5
        %v2831 = vrot.slane %v2830, 4
        %v2832 = vrot.slane %v1747, 5
        %v2833 = vsel %vm2773, %v2831, %v2832
        %v2834 = vrot.slane %v2832, 4
        %v2835 = vrot.slane %v1771, 5
        %v2836 = vsel %vm2773, %v2834, %v2835
        %v2837 = vrot.slane %v2732, 5
        %v2838 = vrot.slane %v2837, 4
        %v2839 = vrot.slane %v1749, 5
        %v2840 = vsel %vm2773, %v2838, %v2839
        %v2841 = vrot.slane %v2839, 4
        %v2842 = vrot.slane %v1772, 5
        %v2843 = vsel %vm2773, %v2841, %v2842
        %v2844 = vrot.slane %v2733, 5
        %v2845 = vrot.slane %v2844, 4
        %v2846 = vrot.slane %v1751, 5
        %v2847 = vsel %vm2773, %v2845, %v2846
        %v2848 = vrot.slane %v2846, 4
        %v2849 = vrot.slane %v1773, 5
        %v2850 = vsel %vm2773, %v2848, %v2849
        %v2851 = vrot.slane %v2734, 5
        %v2852 = vrot.slane %v2851, 4
        %v2853 = vrot.slane %v1753, 5
        %v2854 = vsel %vm2773, %v2852, %v2853
        %v2855 = vrot.slane %v2853, 4
        %v2856 = vrot.slane %v1774, 5
        %v2857 = vsel %vm2773, %v2855, %v2856
        %v2858 = vrot.slane %v2735, 5
        %v2859 = vrot.slane %v2858, 4
        %v2860 = vrot.slane %v1755, 5
        %v2861 = vsel %vm2773, %v2859, %v2860
        %v2862 = vrot.slane %v2860, 4
        %v2863 = vrot.slane %v1775, 5
        %v2864 = vsel %vm2773, %v2862, %v2863
        %v2865 = vrot.slane %v2736, 5
        %v2866 = vrot.slane %v2865, 4
        %v2867 = vrot.slane %v1757, 5
        %v2868 = vsel %vm2773, %v2866, %v2867
        %v2869 = vrot.slane %v2867, 4
        %v2870 = vrot.slane %v1776, 5
        %v2871 = vsel %vm2773, %v2869, %v2870
        %v2872 = vrot.slane %v2737, 5
        %v2873 = vrot.slane %v2872, 4
        %v2874 = vrot.slane %v1759, 5
        %v2875 = vsel %vm2773, %v2873, %v2874
        %v2876 = vrot.slane %v2874, 4
        %v2877 = vrot.slane %v1777, 5
        %v2878 = vsel %vm2773, %v2876, %v2877
        %v2879 = vrot.slane %v2738, 5
        %v2880 = vrot.slane %v2879, 4
        %v2881 = vrot.slane %v1761, 5
        %v2882 = vsel %vm2773, %v2880, %v2881
        %v2883 = vrot.slane %v2881, 4
        %v2884 = vrot.slane %v1778, 5
        %v2885 = vsel %vm2773, %v2883, %v2884
        %v2886 = vld [vmem:[%s4 + $0x4] sm:$0x3]
        %v2887 = vunpack.c.l.b16 %v2777
        %v2888 = vunpack.c.l.b16 %v2780
        %v2889 = vunpack.c.l.b16 %v2784
        %v2890 = vunpack.c.l.b16 %v2787
        %v2891 = vunpack.c.l.b16 %v2791
        %v2892 = vunpack.c.l.b16 %v2794
        %v2893 = vunpack.c.l.b16 %v2798
        %v2894 = vunpack.c.l.b16 %v2801
        %v2895 = vunpack.c.l.b16 %v2805
        %v2896 = vunpack.c.l.b16 %v2808
        %v2897 = vunpack.c.l.b16 %v2812
        %v2898 = vunpack.c.l.b16 %v2815
        %v2899 = vunpack.c.l.b16 %v2819
        %v2900 = vunpack.c.l.b16 %v2822
        %v2901 = vunpack.c.l.b16 %v2826
        %v2902 = vunpack.c.l.b16 %v2829
        %v2903 = vunpack.c.l.b16 %v2833
        %v2904 = vunpack.c.l.b16 %v2836
        %v2905 = vunpack.c.l.b16 %v2840
        %v2906 = vunpack.c.l.b16 %v2843
        %v2907 = vunpack.c.l.b16 %v2847
        %v2908 = vunpack.c.l.b16 %v2850
        %v2909 = vunpack.c.l.b16 %v2854
        %v2910 = vunpack.c.l.b16 %v2857
        %v2911 = vunpack.c.l.b16 %v2861
        %v2912 = vunpack.c.l.b16 %v2864
        %v2913 = vunpack.c.l.b16 %v2868
        %v2914 = vunpack.c.l.b16 %v2871
        %v2915 = vunpack.c.l.b16 %v2875
        %v2916 = vunpack.c.l.b16 %v2878
        %v2917 = vunpack.c.l.b16 %v2882
        %v2918 = vunpack.c.l.b16 %v2885
        %v2919 = vpack.c.b16 %v2888, %v2887
        %v2920 = vpack.c.b16 %v2890, %v2889
        %v2921 = vpack.c.b16 %v2892, %v2891
        %v2922 = vpack.c.b16 %v2894, %v2893
        %v2923 = vpack.c.b16 %v2896, %v2895
        %v2924 = vpack.c.b16 %v2898, %v2897
        %v2925 = vpack.c.b16 %v2900, %v2899
        %v2926 = vpack.c.b16 %v2902, %v2901
        %v2927 = vpack.c.b16 %v2904, %v2903
        %v2928 = vpack.c.b16 %v2906, %v2905
        %v2929 = vpack.c.b16 %v2908, %v2907
        %v2930 = vpack.c.b16 %v2910, %v2909
        %v2931 = vpack.c.b16 %v2912, %v2911
        %v2932 = vpack.c.b16 %v2914, %v2913
        %v2933 = vpack.c.b16 %v2916, %v2915
        %v2934 = vpack.c.b16 %v2918, %v2917
        %v2936 = vsel %vm553, %v2919, 0
        %v2939 = vsel %vm553, %v2920, 0
        %v2942 = vsel %vm553, %v2921, 0
        %v2945 = vsel %vm553, %v2922, 0
        %v2948 = vsel %vm553, %v2923, 0
        %v2951 = vsel %vm553, %v2924, 0
        %v2954 = vsel %vm553, %v2925, 0
        %v2957 = vsel %vm553, %v2926, 0
        %v2960 = vsel %vm553, %v2927, 0
        %v2963 = vsel %vm553, %v2928, 0
        %v2966 = vsel %vm553, %v2929, 0
        %v2969 = vsel %vm553, %v2930, 0
        %v2972 = vsel %vm553, %v2931, 0
        %v2975 = vsel %vm553, %v2932, 0
        %v2978 = vsel %vm553, %v2933, 0
        %v2981 = vsel %vm553, %v2934, 0
        %v2984 = vsel %vm602, %v2886, 0
        %2986 = vmatprep.subr.bf16.mxu0 0
        %2987 = vmatpush1.bf16.msra.mxu0 0
        %2988 = vmatprep.subr.bf16.mxu0 0
        %2989 = vmatpush1.bf16.msra.mxu0 0
        %2990 = vmatprep.subr.bf16.mxu0 0
        %2991 = vmatpush1.bf16.msra.mxu0 0
        %2992 = vmatprep.subr.bf16.mxu0 0
        %2993 = vmatpush1.bf16.msra.mxu0 0
        %2994 = vmatprep.subr.bf16.mxu0 0
        %2995 = vmatpush1.bf16.msra.mxu0 0
        %2996 = vmatprep.subr.bf16.mxu0 0
        %2997 = vmatpush1.bf16.msra.mxu0 0
        %2998 = vmatprep.subr.bf16.mxu0 0
        %2999 = vmatpush1.bf16.msra.mxu0 0
        %3000 = vmatprep.subr.bf16.mxu0 0
        %3001 = vmatpush1.bf16.msra.mxu0 %v2984
        %3002 = vmatprep.subr.bf16.mxu0 0
        %3003 = vmatpush2.bf16.msra.mxu0 0
        %3004 = vmatprep.subr.bf16.mxu0 0
        %3005 = vmatpush2.bf16.msra.mxu0 0
        %3006 = vmatprep.subr.bf16.mxu0 0
        %3007 = vmatpush2.bf16.msra.mxu0 0
        %3008 = vmatprep.subr.bf16.mxu0 0
        %3009 = vmatpush2.bf16.msra.mxu0 0
        %3010 = vmatprep.subr.bf16.mxu0 0
        %3011 = vmatpush2.bf16.msra.mxu0 0
        %3012 = vmatprep.subr.bf16.mxu0 0
        %3013 = vmatpush2.bf16.msra.mxu0 0
        %3014 = vmatprep.subr.bf16.mxu0 0
        %3015 = vmatpush2.bf16.msra.mxu0 0
        %3016 = vmatprep.subr.bf16.mxu0 0
        %3017 = vmatpush2.bf16.msra.mxu0 0
        %3018 = vmatprep.mubr.bf16.mxu0 0
        %3019 = vmatmul.mubr.bf16.gmra.mxu0 %v2936
        %v3020 = vpop.f32.mrf.mxu0
        %v3021 = vadd.f32 0.0, %v3020
        %v3022 = vpop.f32.mrf.mxu0
        %v3023 = vpop.f32.mrf.mxu0
        %v3024 = vadd.f32 0.0, %v3023
        %v3025 = vpop.f32.mrf.mxu0
        %3026 = vmatprep.mubr.bf16.mxu0 0
        %3027 = vmatmul.mubr.bf16.gmra.mxu0 %v2939
        %v3028 = vpop.f32.mrf.mxu0
        %v3029 = vadd.f32 0.0, %v3028
        %v3030 = vpop.f32.mrf.mxu0
        %v3031 = vpop.f32.mrf.mxu0
        %v3032 = vadd.f32 0.0, %v3031
        %v3033 = vpop.f32.mrf.mxu0
        %3034 = vmatprep.mubr.bf16.mxu0 0
        %3035 = vmatmul.mubr.bf16.gmra.mxu0 %v2942
        %v3036 = vpop.f32.mrf.mxu0
        %v3037 = vadd.f32 0.0, %v3036
        %v3038 = vpop.f32.mrf.mxu0
        %v3039 = vpop.f32.mrf.mxu0
        %v3040 = vadd.f32 0.0, %v3039
        %v3041 = vpop.f32.mrf.mxu0
        %3042 = vmatprep.mubr.bf16.mxu0 0
        %3043 = vmatmul.mubr.bf16.gmra.mxu0 %v2945
        %v3044 = vpop.f32.mrf.mxu0
        %v3045 = vadd.f32 0.0, %v3044
        %v3046 = vpop.f32.mrf.mxu0
        %v3047 = vpop.f32.mrf.mxu0
        %v3048 = vadd.f32 0.0, %v3047
        %v3049 = vpop.f32.mrf.mxu0
        %3050 = vmatprep.mubr.bf16.mxu0 0
        %3051 = vmatmul.mubr.bf16.gmra.mxu0 %v2948
        %v3052 = vpop.f32.mrf.mxu0
        %v3053 = vadd.f32 0.0, %v3052
        %v3054 = vpop.f32.mrf.mxu0
        %v3055 = vpop.f32.mrf.mxu0
        %v3056 = vadd.f32 0.0, %v3055
        %v3057 = vpop.f32.mrf.mxu0
        %3058 = vmatprep.mubr.bf16.mxu0 0
        %3059 = vmatmul.mubr.bf16.gmra.mxu0 %v2951
        %v3060 = vpop.f32.mrf.mxu0
        %v3061 = vadd.f32 0.0, %v3060
        %v3062 = vpop.f32.mrf.mxu0
        %v3063 = vpop.f32.mrf.mxu0
        %v3064 = vadd.f32 0.0, %v3063
        %v3065 = vpop.f32.mrf.mxu0
        %3066 = vmatprep.mubr.bf16.mxu0 0
        %3067 = vmatmul.mubr.bf16.gmra.mxu0 %v2954
        %v3068 = vpop.f32.mrf.mxu0
        %v3069 = vadd.f32 0.0, %v3068
        %v3070 = vpop.f32.mrf.mxu0
        %v3071 = vpop.f32.mrf.mxu0
        %v3072 = vadd.f32 0.0, %v3071
        %v3073 = vpop.f32.mrf.mxu0
        %3074 = vmatprep.mubr.bf16.mxu0 0
        %3075 = vmatmul.mubr.bf16.gmra.mxu0 %v2957
        %v3076 = vpop.f32.mrf.mxu0
        %v3077 = vadd.f32 0.0, %v3076
        %v3078 = vpop.f32.mrf.mxu0
        %v3079 = vpop.f32.mrf.mxu0
        %v3080 = vadd.f32 0.0, %v3079
        %v3081 = vpop.f32.mrf.mxu0
        %3082 = vmatprep.mubr.bf16.mxu0 0
        %3083 = vmatmul.mubr.bf16.gmra.mxu0 %v2960
        %v3084 = vpop.f32.mrf.mxu0
        %v3085 = vadd.f32 0.0, %v3084
        %v3086 = vpop.f32.mrf.mxu0
        %v3087 = vpop.f32.mrf.mxu0
        %v3088 = vadd.f32 0.0, %v3087
        %v3089 = vpop.f32.mrf.mxu0
        %3090 = vmatprep.mubr.bf16.mxu0 0
        %3091 = vmatmul.mubr.bf16.gmra.mxu0 %v2963
        %v3092 = vpop.f32.mrf.mxu0
        %v3093 = vadd.f32 0.0, %v3092
        %v3094 = vpop.f32.mrf.mxu0
        %v3095 = vpop.f32.mrf.mxu0
        %v3096 = vadd.f32 0.0, %v3095
        %v3097 = vpop.f32.mrf.mxu0
        %3098 = vmatprep.mubr.bf16.mxu0 0
        %3099 = vmatmul.mubr.bf16.gmra.mxu0 %v2966
        %v3100 = vpop.f32.mrf.mxu0
        %v3101 = vadd.f32 0.0, %v3100
        %v3102 = vpop.f32.mrf.mxu0
        %v3103 = vpop.f32.mrf.mxu0
        %v3104 = vadd.f32 0.0, %v3103
        %v3105 = vpop.f32.mrf.mxu0
        %3106 = vmatprep.mubr.bf16.mxu0 0
        %3107 = vmatmul.mubr.bf16.gmra.mxu0 %v2969
        %v3108 = vpop.f32.mrf.mxu0
        %v3109 = vadd.f32 0.0, %v3108
        %v3110 = vpop.f32.mrf.mxu0
        %v3111 = vpop.f32.mrf.mxu0
        %v3112 = vadd.f32 0.0, %v3111
        %v3113 = vpop.f32.mrf.mxu0
        %3114 = vmatprep.mubr.bf16.mxu0 0
        %3115 = vmatmul.mubr.bf16.gmra.mxu0 %v2972
        %v3116 = vpop.f32.mrf.mxu0
        %v3117 = vadd.f32 0.0, %v3116
        %v3118 = vpop.f32.mrf.mxu0
        %v3119 = vpop.f32.mrf.mxu0
        %v3120 = vadd.f32 0.0, %v3119
        %v3121 = vpop.f32.mrf.mxu0
        %3122 = vmatprep.mubr.bf16.mxu0 0
        %3123 = vmatmul.mubr.bf16.gmra.mxu0 %v2975
        %v3124 = vpop.f32.mrf.mxu0
        %v3125 = vadd.f32 0.0, %v3124
        %v3126 = vpop.f32.mrf.mxu0
        %v3127 = vpop.f32.mrf.mxu0
        %v3128 = vadd.f32 0.0, %v3127
        %v3129 = vpop.f32.mrf.mxu0
        %3130 = vmatprep.mubr.bf16.mxu0 0
        %3131 = vmatmul.mubr.bf16.gmra.mxu0 %v2978
        %v3132 = vpop.f32.mrf.mxu0
        %v3133 = vadd.f32 0.0, %v3132
        %v3134 = vpop.f32.mrf.mxu0
        %v3135 = vpop.f32.mrf.mxu0
        %v3136 = vadd.f32 0.0, %v3135
        %v3137 = vpop.f32.mrf.mxu0
        %3138 = vmatprep.mubr.bf16.mxu0 0
        %3139 = vmatmul.mubr.bf16.gmra.mxu0 %v2981
        %v3140 = vpop.f32.mrf.mxu0
        %v3141 = vadd.f32 0.0, %v3140
        %v3142 = vpop.f32.mrf.mxu0
        %v3143 = vpop.f32.mrf.mxu0
        %v3144 = vadd.f32 0.0, %v3143
        %v3145 = vpop.f32.mrf.mxu0
        %3146 = vdwg.mxu0
        %v3147 = vadd.f32 %v2597, %v3021
        %v3148 = vadd.f32 %v2600, %v3024
        %v3149 = vadd.f32 %v2605, %v3029
        %v3150 = vadd.f32 %v2608, %v3032
        %v3151 = vadd.f32 %v2613, %v3037
        %v3152 = vadd.f32 %v2616, %v3040
        %v3153 = vadd.f32 %v2621, %v3045
        %v3154 = vadd.f32 %v2624, %v3048
        %v3155 = vadd.f32 %v2629, %v3053
        %v3156 = vadd.f32 %v2632, %v3056
        %v3157 = vadd.f32 %v2637, %v3061
        %v3158 = vadd.f32 %v2640, %v3064
        %v3159 = vadd.f32 %v2645, %v3069
        %v3160 = vadd.f32 %v2648, %v3072
        %v3161 = vadd.f32 %v2653, %v3077
        %v3162 = vadd.f32 %v2656, %v3080
        %v3163 = vadd.f32 %v2661, %v3085
        %v3164 = vadd.f32 %v2664, %v3088
        %v3165 = vadd.f32 %v2669, %v3093
        %v3166 = vadd.f32 %v2672, %v3096
        %v3167 = vadd.f32 %v2677, %v3101
        %v3168 = vadd.f32 %v2680, %v3104
        %v3169 = vadd.f32 %v2685, %v3109
        %v3170 = vadd.f32 %v2688, %v3112
        %v3171 = vadd.f32 %v2693, %v3117
        %v3172 = vadd.f32 %v2696, %v3120
        %v3173 = vadd.f32 %v2701, %v3125
        %v3174 = vadd.f32 %v2704, %v3128
        %v3175 = vadd.f32 %v2709, %v3133
        %v3176 = vadd.f32 %v2712, %v3136
        %v3177 = vadd.f32 %v2717, %v3141
        %v3178 = vadd.f32 %v2720, %v3144
        %v3179 = vld [vmem:[%s1096] sm:$0xf]
        %v3180 = vld [vmem:[%s1096 + $0x4] sm:$0xf]
        %v3181 = vld [vmem:[%s1096 + $0xc] sm:$0xf]
        %v3182 = vld [vmem:[%s1096 + $0x10] sm:$0xf]
        %v3183 = vld [vmem:[%s1096 + $0x18] sm:$0xf]
        %v3184 = vld [vmem:[%s1096 + $0x1c] sm:$0xf]
        %v3185 = vld [vmem:[%s1096 + $0x24] sm:$0xf]
        %v3186 = vld [vmem:[%s1096 + $0x28] sm:$0xf]
        %v3187 = vld [vmem:[%s1096 + $0x30] sm:$0xf]
        %v3188 = vld [vmem:[%s1096 + $0x34] sm:$0xf]
        %v3189 = vld [vmem:[%s1096 + $0x3c] sm:$0xf]
        %v3190 = vld [vmem:[%s1096 + $0x40] sm:$0xf]
        %v3191 = vld [vmem:[%s1096 + $0x48] sm:$0xf]
        %v3192 = vld [vmem:[%s1096 + $0x4c] sm:$0xf]
        %v3193 = vld [vmem:[%s1096 + $0x54] sm:$0xf]
        %v3194 = vld [vmem:[%s1096 + $0x58] sm:$0xf]
        %v3195 = vld [vmem:[%s1096 + $0x60] sm:$0xf]
        %v3196 = vld [vmem:[%s1096 + $0x64] sm:$0xf]
        %v3197 = vld [vmem:[%s1096 + $0x6c] sm:$0xf]
        %v3198 = vld [vmem:[%s1096 + $0x70] sm:$0xf]
        %v3199 = vld [vmem:[%s1096 + $0x78] sm:$0xf]
        %v3200 = vld [vmem:[%s1096 + $0x7c] sm:$0xf]
        %v3201 = vld [vmem:[%s1096 + $0x84] sm:$0xf]
        %v3202 = vld [vmem:[%s1096 + $0x88] sm:$0xf]
        %v3203 = vld [vmem:[%s1096 + $0x90] sm:$0xf]
        %v3204 = vld [vmem:[%s1096 + $0x94] sm:$0xf]
        %v3205 = vld [vmem:[%s1096 + $0x9c] sm:$0xf]
        %v3206 = vld [vmem:[%s1096 + $0xa0] sm:$0xf]
        %v3207 = vld [vmem:[%s1096 + $0xa8] sm:$0xf]
        %v3208 = vld [vmem:[%s1096 + $0xac] sm:$0xf]
        %v3209 = vld [vmem:[%s1096 + $0xb4] sm:$0xf]
        %v3210 = vld [vmem:[%s1096 + $0xb8] sm:$0xf]
        %v3211 = vld [vmem:[%s4 + $0x4] sm:$0xc]
        %v3244 = vunpack.c.l.b16 %v3179
        %v3245 = vunpack.c.l.b16 %v3180
        %v3246 = vunpack.c.l.b16 %v3181
        %v3247 = vunpack.c.l.b16 %v3182
        %v3248 = vunpack.c.l.b16 %v3183
        %v3249 = vunpack.c.l.b16 %v3184
        %v3250 = vunpack.c.l.b16 %v3185
        %v3251 = vunpack.c.l.b16 %v3186
        %v3252 = vunpack.c.l.b16 %v3187
        %v3253 = vunpack.c.l.b16 %v3188
        %v3254 = vunpack.c.l.b16 %v3189
        %v3255 = vunpack.c.l.b16 %v3190
        %v3256 = vunpack.c.l.b16 %v3191
        %v3257 = vunpack.c.l.b16 %v3192
        %v3258 = vunpack.c.l.b16 %v3193
        %v3259 = vunpack.c.l.b16 %v3194
        %v3260 = vunpack.c.l.b16 %v3195
        %v3261 = vunpack.c.l.b16 %v3196
        %v3262 = vunpack.c.l.b16 %v3197
        %v3263 = vunpack.c.l.b16 %v3198
        %v3264 = vunpack.c.l.b16 %v3199
        %v3265 = vunpack.c.l.b16 %v3200
        %v3266 = vunpack.c.l.b16 %v3201
        %v3267 = vunpack.c.l.b16 %v3202
        %v3268 = vunpack.c.l.b16 %v3203
        %v3269 = vunpack.c.l.b16 %v3204
        %v3270 = vunpack.c.l.b16 %v3205
        %v3271 = vunpack.c.l.b16 %v3206
        %v3272 = vunpack.c.l.b16 %v3207
        %v3273 = vunpack.c.l.b16 %v3208
        %v3274 = vunpack.c.l.b16 %v3209
        %v3275 = vunpack.c.l.b16 %v3210
        %v3276 = vpack.c.b16 %v3245, %v3244
        %v3277 = vpack.c.b16 %v3247, %v3246
        %v3278 = vpack.c.b16 %v3249, %v3248
        %v3279 = vpack.c.b16 %v3251, %v3250
        %v3280 = vpack.c.b16 %v3253, %v3252
        %v3281 = vpack.c.b16 %v3255, %v3254
        %v3282 = vpack.c.b16 %v3257, %v3256
        %v3283 = vpack.c.b16 %v3259, %v3258
        %v3284 = vpack.c.b16 %v3261, %v3260
        %v3285 = vpack.c.b16 %v3263, %v3262
        %v3286 = vpack.c.b16 %v3265, %v3264
        %v3287 = vpack.c.b16 %v3267, %v3266
        %v3288 = vpack.c.b16 %v3269, %v3268
        %v3289 = vpack.c.b16 %v3271, %v3270
        %v3290 = vpack.c.b16 %v3273, %v3272
        %v3291 = vpack.c.b16 %v3275, %v3274
        %v3293 = vunpack.c.l.b16 %v3211
        %v3294 = vpack.c.b16 %v3293, %v3293
        %v3295 = vrot.slane %v3294, 2
        %v3297 = vsel %vm553, %v3276, 0
        %v3300 = vsel %vm553, %v3277, 0
        %v3303 = vsel %vm553, %v3278, 0
        %v3306 = vsel %vm553, %v3279, 0
        %v3309 = vsel %vm553, %v3280, 0
        %v3312 = vsel %vm553, %v3281, 0
        %v3315 = vsel %vm553, %v3282, 0
        %v3318 = vsel %vm553, %v3283, 0
        %v3321 = vsel %vm553, %v3284, 0
        %v3324 = vsel %vm553, %v3285, 0
        %v3327 = vsel %vm553, %v3286, 0
        %v3330 = vsel %vm553, %v3287, 0
        %v3333 = vsel %vm553, %v3288, 0
        %v3336 = vsel %vm553, %v3289, 0
        %v3339 = vsel %vm553, %v3290, 0
        %v3342 = vsel %vm553, %v3291, 0
        %v3345 = vsel %vm602, %v3295, 0
        %3347 = vmatprep.subr.bf16.mxu0 0
        %3348 = vmatpush1.bf16.msra.mxu0 0
        %3349 = vmatprep.subr.bf16.mxu0 0
        %3350 = vmatpush1.bf16.msra.mxu0 0
        %3351 = vmatprep.subr.bf16.mxu0 0
        %3352 = vmatpush1.bf16.msra.mxu0 0
        %3353 = vmatprep.subr.bf16.mxu0 0
        %3354 = vmatpush1.bf16.msra.mxu0 0
        %3355 = vmatprep.subr.bf16.mxu0 0
        %3356 = vmatpush1.bf16.msra.mxu0 0
        %3357 = vmatprep.subr.bf16.mxu0 0
        %3358 = vmatpush1.bf16.msra.mxu0 0
        %3359 = vmatprep.subr.bf16.mxu0 0
        %3360 = vmatpush1.bf16.msra.mxu0 0
        %3361 = vmatprep.subr.bf16.mxu0 0
        %3362 = vmatpush1.bf16.msra.mxu0 %v3345
        %3363 = vmatprep.subr.bf16.mxu0 0
        %3364 = vmatpush2.bf16.msra.mxu0 0
        %3365 = vmatprep.subr.bf16.mxu0 0
        %3366 = vmatpush2.bf16.msra.mxu0 0
        %3367 = vmatprep.subr.bf16.mxu0 0
        %3368 = vmatpush2.bf16.msra.mxu0 0
        %3369 = vmatprep.subr.bf16.mxu0 0
        %3370 = vmatpush2.bf16.msra.mxu0 0
        %3371 = vmatprep.subr.bf16.mxu0 0
        %3372 = vmatpush2.bf16.msra.mxu0 0
        %3373 = vmatprep.subr.bf16.mxu0 0
        %3374 = vmatpush2.bf16.msra.mxu0 0
        %3375 = vmatprep.subr.bf16.mxu0 0
        %3376 = vmatpush2.bf16.msra.mxu0 0
        %3377 = vmatprep.subr.bf16.mxu0 0
        %3378 = vmatpush2.bf16.msra.mxu0 0
        %3379 = vmatprep.mubr.bf16.mxu0 0
        %3380 = vmatmul.mubr.bf16.gmra.mxu0 %v3297
        %v3381 = vpop.f32.mrf.mxu0
        %v3382 = vadd.f32 0.0, %v3381
        %v3383 = vpop.f32.mrf.mxu0
        %v3384 = vpop.f32.mrf.mxu0
        %v3385 = vadd.f32 0.0, %v3384
        %v3386 = vpop.f32.mrf.mxu0
        %3387 = vmatprep.mubr.bf16.mxu0 0
        %3388 = vmatmul.mubr.bf16.gmra.mxu0 %v3300
        %v3389 = vpop.f32.mrf.mxu0
        %v3390 = vadd.f32 0.0, %v3389
        %v3391 = vpop.f32.mrf.mxu0
        %v3392 = vpop.f32.mrf.mxu0
        %v3393 = vadd.f32 0.0, %v3392
        %v3394 = vpop.f32.mrf.mxu0
        %3395 = vmatprep.mubr.bf16.mxu0 0
        %3396 = vmatmul.mubr.bf16.gmra.mxu0 %v3303
        %v3397 = vpop.f32.mrf.mxu0
        %v3398 = vadd.f32 0.0, %v3397
        %v3399 = vpop.f32.mrf.mxu0
        %v3400 = vpop.f32.mrf.mxu0
        %v3401 = vadd.f32 0.0, %v3400
        %v3402 = vpop.f32.mrf.mxu0
        %3403 = vmatprep.mubr.bf16.mxu0 0
        %3404 = vmatmul.mubr.bf16.gmra.mxu0 %v3306
        %v3405 = vpop.f32.mrf.mxu0
        %v3406 = vadd.f32 0.0, %v3405
        %v3407 = vpop.f32.mrf.mxu0
        %v3408 = vpop.f32.mrf.mxu0
        %v3409 = vadd.f32 0.0, %v3408
        %v3410 = vpop.f32.mrf.mxu0
        %3411 = vmatprep.mubr.bf16.mxu0 0
        %3412 = vmatmul.mubr.bf16.gmra.mxu0 %v3309
        %v3413 = vpop.f32.mrf.mxu0
        %v3414 = vadd.f32 0.0, %v3413
        %v3415 = vpop.f32.mrf.mxu0
        %v3416 = vpop.f32.mrf.mxu0
        %v3417 = vadd.f32 0.0, %v3416
        %v3418 = vpop.f32.mrf.mxu0
        %3419 = vmatprep.mubr.bf16.mxu0 0
        %3420 = vmatmul.mubr.bf16.gmra.mxu0 %v3312
        %v3421 = vpop.f32.mrf.mxu0
        %v3422 = vadd.f32 0.0, %v3421
        %v3423 = vpop.f32.mrf.mxu0
        %v3424 = vpop.f32.mrf.mxu0
        %v3425 = vadd.f32 0.0, %v3424
        %v3426 = vpop.f32.mrf.mxu0
        %3427 = vmatprep.mubr.bf16.mxu0 0
        %3428 = vmatmul.mubr.bf16.gmra.mxu0 %v3315
        %v3429 = vpop.f32.mrf.mxu0
        %v3430 = vadd.f32 0.0, %v3429
        %v3431 = vpop.f32.mrf.mxu0
        %v3432 = vpop.f32.mrf.mxu0
        %v3433 = vadd.f32 0.0, %v3432
        %v3434 = vpop.f32.mrf.mxu0
        %3435 = vmatprep.mubr.bf16.mxu0 0
        %3436 = vmatmul.mubr.bf16.gmra.mxu0 %v3318
        %v3437 = vpop.f32.mrf.mxu0
        %v3438 = vadd.f32 0.0, %v3437
        %v3439 = vpop.f32.mrf.mxu0
        %v3440 = vpop.f32.mrf.mxu0
        %v3441 = vadd.f32 0.0, %v3440
        %v3442 = vpop.f32.mrf.mxu0
        %3443 = vmatprep.mubr.bf16.mxu0 0
        %3444 = vmatmul.mubr.bf16.gmra.mxu0 %v3321
        %v3445 = vpop.f32.mrf.mxu0
        %v3446 = vadd.f32 0.0, %v3445
        %v3447 = vpop.f32.mrf.mxu0
        %v3448 = vpop.f32.mrf.mxu0
        %v3449 = vadd.f32 0.0, %v3448
        %v3450 = vpop.f32.mrf.mxu0
        %3451 = vmatprep.mubr.bf16.mxu0 0
        %3452 = vmatmul.mubr.bf16.gmra.mxu0 %v3324
        %v3453 = vpop.f32.mrf.mxu0
        %v3454 = vadd.f32 0.0, %v3453
        %v3455 = vpop.f32.mrf.mxu0
        %v3456 = vpop.f32.mrf.mxu0
        %v3457 = vadd.f32 0.0, %v3456
        %v3458 = vpop.f32.mrf.mxu0
        %3459 = vmatprep.mubr.bf16.mxu0 0
        %3460 = vmatmul.mubr.bf16.gmra.mxu0 %v3327
        %v3461 = vpop.f32.mrf.mxu0
        %v3462 = vadd.f32 0.0, %v3461
        %v3463 = vpop.f32.mrf.mxu0
        %v3464 = vpop.f32.mrf.mxu0
        %v3465 = vadd.f32 0.0, %v3464
        %v3466 = vpop.f32.mrf.mxu0
        %3467 = vmatprep.mubr.bf16.mxu0 0
        %3468 = vmatmul.mubr.bf16.gmra.mxu0 %v3330
        %v3469 = vpop.f32.mrf.mxu0
        %v3470 = vadd.f32 0.0, %v3469
        %v3471 = vpop.f32.mrf.mxu0
        %v3472 = vpop.f32.mrf.mxu0
        %v3473 = vadd.f32 0.0, %v3472
        %v3474 = vpop.f32.mrf.mxu0
        %3475 = vmatprep.mubr.bf16.mxu0 0
        %3476 = vmatmul.mubr.bf16.gmra.mxu0 %v3333
        %v3477 = vpop.f32.mrf.mxu0
        %v3478 = vadd.f32 0.0, %v3477
        %v3479 = vpop.f32.mrf.mxu0
        %v3480 = vpop.f32.mrf.mxu0
        %v3481 = vadd.f32 0.0, %v3480
        %v3482 = vpop.f32.mrf.mxu0
        %3483 = vmatprep.mubr.bf16.mxu0 0
        %3484 = vmatmul.mubr.bf16.gmra.mxu0 %v3336
        %v3485 = vpop.f32.mrf.mxu0
        %v3486 = vadd.f32 0.0, %v3485
        %v3487 = vpop.f32.mrf.mxu0
        %v3488 = vpop.f32.mrf.mxu0
        %v3489 = vadd.f32 0.0, %v3488
        %v3490 = vpop.f32.mrf.mxu0
        %3491 = vmatprep.mubr.bf16.mxu0 0
        %3492 = vmatmul.mubr.bf16.gmra.mxu0 %v3339
        %v3493 = vpop.f32.mrf.mxu0
        %v3494 = vadd.f32 0.0, %v3493
        %v3495 = vpop.f32.mrf.mxu0
        %v3496 = vpop.f32.mrf.mxu0
        %v3497 = vadd.f32 0.0, %v3496
        %v3498 = vpop.f32.mrf.mxu0
        %3499 = vmatprep.mubr.bf16.mxu0 0
        %3500 = vmatmul.mubr.bf16.gmra.mxu0 %v3342
        %v3501 = vpop.f32.mrf.mxu0
        %v3502 = vadd.f32 0.0, %v3501
        %v3503 = vpop.f32.mrf.mxu0
        %v3504 = vpop.f32.mrf.mxu0
        %v3505 = vadd.f32 0.0, %v3504
        %v3506 = vpop.f32.mrf.mxu0
        %3507 = vdwg.mxu0
        %v3508 = vadd.f32 %v3147, %v3382
        %v3509 = vadd.f32 %v3148, %v3385
        %v3510 = vadd.f32 %v3149, %v3390
        %v3511 = vadd.f32 %v3150, %v3393
        %v3512 = vadd.f32 %v3151, %v3398
        %v3513 = vadd.f32 %v3152, %v3401
        %v3514 = vadd.f32 %v3153, %v3406
        %v3515 = vadd.f32 %v3154, %v3409
        %v3516 = vadd.f32 %v3155, %v3414
        %v3517 = vadd.f32 %v3156, %v3417
        %v3518 = vadd.f32 %v3157, %v3422
        %v3519 = vadd.f32 %v3158, %v3425
        %v3520 = vadd.f32 %v3159, %v3430
        %v3521 = vadd.f32 %v3160, %v3433
        %v3522 = vadd.f32 %v3161, %v3438
        %v3523 = vadd.f32 %v3162, %v3441
        %v3524 = vadd.f32 %v3163, %v3446
        %v3525 = vadd.f32 %v3164, %v3449
        %v3526 = vadd.f32 %v3165, %v3454
        %v3527 = vadd.f32 %v3166, %v3457
        %v3528 = vadd.f32 %v3167, %v3462
        %v3529 = vadd.f32 %v3168, %v3465
        %v3530 = vadd.f32 %v3169, %v3470
        %v3531 = vadd.f32 %v3170, %v3473
        %v3532 = vadd.f32 %v3171, %v3478
        %v3533 = vadd.f32 %v3172, %v3481
        %v3534 = vadd.f32 %v3173, %v3486
        %v3535 = vadd.f32 %v3174, %v3489
        %v3536 = vadd.f32 %v3175, %v3494
        %v3537 = vadd.f32 %v3176, %v3497
        %v3538 = vadd.f32 %v3177, %v3502
        %v3539 = vadd.f32 %v3178, %v3505
        %v3540 = vld [vmem:[%s1096] sm:$0xf]
        %v3541 = vld [vmem:[%s1096 + $0x4] sm:$0xf]
        %v3542 = vld [vmem:[%s1096 + $0x8] sm:$0x1]
        %v3543 = vld [vmem:[%s1096 + $0xc] sm:$0xf]
        %v3544 = vld [vmem:[%s1096 + $0x10] sm:$0xf]
        %v3545 = vld [vmem:[%s1096 + $0x14] sm:$0x1]
        %v3546 = vld [vmem:[%s1096 + $0x18] sm:$0xf]
        %v3547 = vld [vmem:[%s1096 + $0x1c] sm:$0xf]
        %v3548 = vld [vmem:[%s1096 + $0x20] sm:$0x1]
        %v3549 = vld [vmem:[%s1096 + $0x24] sm:$0xf]
        %v3550 = vld [vmem:[%s1096 + $0x28] sm:$0xf]
        %v3551 = vld [vmem:[%s1096 + $0x2c] sm:$0x1]
        %v3552 = vld [vmem:[%s1096 + $0x30] sm:$0xf]
        %v3553 = vld [vmem:[%s1096 + $0x34] sm:$0xf]
        %v3554 = vld [vmem:[%s1096 + $0x38] sm:$0x1]
        %v3555 = vld [vmem:[%s1096 + $0x3c] sm:$0xf]
        %v3556 = vld [vmem:[%s1096 + $0x40] sm:$0xf]
        %v3557 = vld [vmem:[%s1096 + $0x44] sm:$0x1]
        %v3558 = vld [vmem:[%s1096 + $0x48] sm:$0xf]
        %v3559 = vld [vmem:[%s1096 + $0x4c] sm:$0xf]
        %v3560 = vld [vmem:[%s1096 + $0x50] sm:$0x1]
        %v3561 = vld [vmem:[%s1096 + $0x54] sm:$0xf]
        %v3562 = vld [vmem:[%s1096 + $0x58] sm:$0xf]
        %v3563 = vld [vmem:[%s1096 + $0x5c] sm:$0x1]
        %v3564 = vld [vmem:[%s1096 + $0x60] sm:$0xf]
        %v3565 = vld [vmem:[%s1096 + $0x64] sm:$0xf]
        %v3566 = vld [vmem:[%s1096 + $0x68] sm:$0x1]
        %v3567 = vld [vmem:[%s1096 + $0x6c] sm:$0xf]
        %v3568 = vld [vmem:[%s1096 + $0x70] sm:$0xf]
        %v3569 = vld [vmem:[%s1096 + $0x74] sm:$0x1]
        %v3570 = vld [vmem:[%s1096 + $0x78] sm:$0xf]
        %v3571 = vld [vmem:[%s1096 + $0x7c] sm:$0xf]
        %v3572 = vld [vmem:[%s1096 + $0x80] sm:$0x1]
        %v3573 = vld [vmem:[%s1096 + $0x84] sm:$0xf]
        %v3574 = vld [vmem:[%s1096 + $0x88] sm:$0xf]
        %v3575 = vld [vmem:[%s1096 + $0x8c] sm:$0x1]
        %v3576 = vld [vmem:[%s1096 + $0x90] sm:$0xf]
        %v3577 = vld [vmem:[%s1096 + $0x94] sm:$0xf]
        %v3578 = vld [vmem:[%s1096 + $0x98] sm:$0x1]
        %v3579 = vld [vmem:[%s1096 + $0x9c] sm:$0xf]
        %v3580 = vld [vmem:[%s1096 + $0xa0] sm:$0xf]
        %v3581 = vld [vmem:[%s1096 + $0xa4] sm:$0x1]
        %v3582 = vld [vmem:[%s1096 + $0xa8] sm:$0xf]
        %v3583 = vld [vmem:[%s1096 + $0xac] sm:$0xf]
        %v3584 = vld [vmem:[%s1096 + $0xb0] sm:$0x1]
        %v3585 = vld [vmem:[%s1096 + $0xb4] sm:$0xf]
        %v3586 = vld [vmem:[%s1096 + $0xb8] sm:$0xf]
        %v3587 = vld [vmem:[%s1096 + $0xbc] sm:$0x1]
        %v3589 = vshrl.u32 %v3540, 16
        %v3591 = vrot.slane %v3589, 4
        %v3592 = vshll.u32 %v3540, 16
        %v3594 = vrot.slane %v3592, 5
        %v3595 = vor.u32 %v3591, %v3594
        %v3596 = vrot.slane %v3595, 4
        %v3598 = vshll.u32 %v3541, 16
        %v3600 = vrot.slane %v3598, 5
        %v3601 = vsel %vm1781, %v3596, %v3600
        %v3602 = vshrl.u32 %v3541, 16
        %v3604 = vrot.slane %v3602, 4
        %v3605 = vor.u32 %v3604, %v3600
        %v3606 = vrot.slane %v3605, 4
        %v3608 = vshll.u32 %v3542, 16
        %v3610 = vrot.slane %v3608, 5
        %v3611 = vsel %vm1781, %v3606, %v3610
        %v3613 = vshrl.u32 %v3543, 16
        %v3615 = vrot.slane %v3613, 4
        %v3616 = vshll.u32 %v3543, 16
        %v3618 = vrot.slane %v3616, 5
        %v3619 = vor.u32 %v3615, %v3618
        %v3620 = vrot.slane %v3619, 4
        %v3622 = vshll.u32 %v3544, 16
        %v3624 = vrot.slane %v3622, 5
        %v3625 = vsel %vm1781, %v3620, %v3624
        %v3626 = vshrl.u32 %v3544, 16
        %v3628 = vrot.slane %v3626, 4
        %v3629 = vor.u32 %v3628, %v3624
        %v3630 = vrot.slane %v3629, 4
        %v3632 = vshll.u32 %v3545, 16
        %v3634 = vrot.slane %v3632, 5
        %v3635 = vsel %vm1781, %v3630, %v3634
        %v3637 = vshrl.u32 %v3546, 16
        %v3639 = vrot.slane %v3637, 4
        %v3640 = vshll.u32 %v3546, 16
        %v3642 = vrot.slane %v3640, 5
        %v3643 = vor.u32 %v3639, %v3642
        %v3644 = vrot.slane %v3643, 4
        %v3646 = vshll.u32 %v3547, 16
        %v3648 = vrot.slane %v3646, 5
        %v3649 = vsel %vm1781, %v3644, %v3648
        %v3650 = vshrl.u32 %v3547, 16
        %v3652 = vrot.slane %v3650, 4
        %v3653 = vor.u32 %v3652, %v3648
        %v3654 = vrot.slane %v3653, 4
        %v3656 = vshll.u32 %v3548, 16
        %v3658 = vrot.slane %v3656, 5
        %v3659 = vsel %vm1781, %v3654, %v3658
        %v3661 = vshrl.u32 %v3549, 16
        %v3663 = vrot.slane %v3661, 4
        %v3664 = vshll.u32 %v3549, 16
        %v3666 = vrot.slane %v3664, 5
        %v3667 = vor.u32 %v3663, %v3666
        %v3668 = vrot.slane %v3667, 4
        %v3670 = vshll.u32 %v3550, 16
        %v3672 = vrot.slane %v3670, 5
        %v3673 = vsel %vm1781, %v3668, %v3672
        %v3674 = vshrl.u32 %v3550, 16
        %v3676 = vrot.slane %v3674, 4
        %v3677 = vor.u32 %v3676, %v3672
        %v3678 = vrot.slane %v3677, 4
        %v3680 = vshll.u32 %v3551, 16
        %v3682 = vrot.slane %v3680, 5
        %v3683 = vsel %vm1781, %v3678, %v3682
        %v3685 = vshrl.u32 %v3552, 16
        %v3687 = vrot.slane %v3685, 4
        %v3688 = vshll.u32 %v3552, 16
        %v3690 = vrot.slane %v3688, 5
        %v3691 = vor.u32 %v3687, %v3690
        %v3692 = vrot.slane %v3691, 4
        %v3694 = vshll.u32 %v3553, 16
        %v3696 = vrot.slane %v3694, 5
        %v3697 = vsel %vm1781, %v3692, %v3696
        %v3698 = vshrl.u32 %v3553, 16
        %v3700 = vrot.slane %v3698, 4
        %v3701 = vor.u32 %v3700, %v3696
        %v3702 = vrot.slane %v3701, 4
        %v3704 = vshll.u32 %v3554, 16
        %v3706 = vrot.slane %v3704, 5
        %v3707 = vsel %vm1781, %v3702, %v3706
        %v3709 = vshrl.u32 %v3555, 16
        %v3711 = vrot.slane %v3709, 4
        %v3712 = vshll.u32 %v3555, 16
        %v3714 = vrot.slane %v3712, 5
        %v3715 = vor.u32 %v3711, %v3714
        %v3716 = vrot.slane %v3715, 4
        %v3718 = vshll.u32 %v3556, 16
        %v3720 = vrot.slane %v3718, 5
        %v3721 = vsel %vm1781, %v3716, %v3720
        %v3722 = vshrl.u32 %v3556, 16
        %v3724 = vrot.slane %v3722, 4
        %v3725 = vor.u32 %v3724, %v3720
        %v3726 = vrot.slane %v3725, 4
        %v3728 = vshll.u32 %v3557, 16
        %v3730 = vrot.slane %v3728, 5
        %v3731 = vsel %vm1781, %v3726, %v3730
        %v3733 = vshrl.u32 %v3558, 16
        %v3735 = vrot.slane %v3733, 4
        %v3736 = vshll.u32 %v3558, 16
        %v3738 = vrot.slane %v3736, 5
        %v3739 = vor.u32 %v3735, %v3738
        %v3740 = vrot.slane %v3739, 4
        %v3742 = vshll.u32 %v3559, 16
        %v3744 = vrot.slane %v3742, 5
        %v3745 = vsel %vm1781, %v3740, %v3744
        %v3746 = vshrl.u32 %v3559, 16
        %v3748 = vrot.slane %v3746, 4
        %v3749 = vor.u32 %v3748, %v3744
        %v3750 = vrot.slane %v3749, 4
        %v3752 = vshll.u32 %v3560, 16
        %v3754 = vrot.slane %v3752, 5
        %v3755 = vsel %vm1781, %v3750, %v3754
        %v3757 = vshrl.u32 %v3561, 16
        %v3759 = vrot.slane %v3757, 4
        %v3760 = vshll.u32 %v3561, 16
        %v3762 = vrot.slane %v3760, 5
        %v3763 = vor.u32 %v3759, %v3762
        %v3764 = vrot.slane %v3763, 4
        %v3766 = vshll.u32 %v3562, 16
        %v3768 = vrot.slane %v3766, 5
        %v3769 = vsel %vm1781, %v3764, %v3768
        %v3770 = vshrl.u32 %v3562, 16
        %v3772 = vrot.slane %v3770, 4
        %v3773 = vor.u32 %v3772, %v3768
        %v3774 = vrot.slane %v3773, 4
        %v3776 = vshll.u32 %v3563, 16
        %v3778 = vrot.slane %v3776, 5
        %v3779 = vsel %vm1781, %v3774, %v3778
        %v3781 = vshrl.u32 %v3564, 16
        %v3783 = vrot.slane %v3781, 4
        %v3784 = vshll.u32 %v3564, 16
        %v3786 = vrot.slane %v3784, 5
        %v3787 = vor.u32 %v3783, %v3786
        %v3788 = vrot.slane %v3787, 4
        %v3790 = vshll.u32 %v3565, 16
        %v3792 = vrot.slane %v3790, 5
        %v3793 = vsel %vm1781, %v3788, %v3792
        %v3794 = vshrl.u32 %v3565, 16
        %v3796 = vrot.slane %v3794, 4
        %v3797 = vor.u32 %v3796, %v3792
        %v3798 = vrot.slane %v3797, 4
        %v3800 = vshll.u32 %v3566, 16
        %v3802 = vrot.slane %v3800, 5
        %v3803 = vsel %vm1781, %v3798, %v3802
        %v3805 = vshrl.u32 %v3567, 16
        %v3807 = vrot.slane %v3805, 4
        %v3808 = vshll.u32 %v3567, 16
        %v3810 = vrot.slane %v3808, 5
        %v3811 = vor.u32 %v3807, %v3810
        %v3812 = vrot.slane %v3811, 4
        %v3814 = vshll.u32 %v3568, 16
        %v3816 = vrot.slane %v3814, 5
        %v3817 = vsel %vm1781, %v3812, %v3816
        %v3818 = vshrl.u32 %v3568, 16
        %v3820 = vrot.slane %v3818, 4
        %v3821 = vor.u32 %v3820, %v3816
        %v3822 = vrot.slane %v3821, 4
        %v3824 = vshll.u32 %v3569, 16
        %v3826 = vrot.slane %v3824, 5
        %v3827 = vsel %vm1781, %v3822, %v3826
        %v3829 = vshrl.u32 %v3570, 16
        %v3831 = vrot.slane %v3829, 4
        %v3832 = vshll.u32 %v3570, 16
        %v3834 = vrot.slane %v3832, 5
        %v3835 = vor.u32 %v3831, %v3834
        %v3836 = vrot.slane %v3835, 4
        %v3838 = vshll.u32 %v3571, 16
        %v3840 = vrot.slane %v3838, 5
        %v3841 = vsel %vm1781, %v3836, %v3840
        %v3842 = vshrl.u32 %v3571, 16
        %v3844 = vrot.slane %v3842, 4
        %v3845 = vor.u32 %v3844, %v3840
        %v3846 = vrot.slane %v3845, 4
        %v3848 = vshll.u32 %v3572, 16
        %v3850 = vrot.slane %v3848, 5
        %v3851 = vsel %vm1781, %v3846, %v3850
        %v3853 = vshrl.u32 %v3573, 16
        %v3855 = vrot.slane %v3853, 4
        %v3856 = vshll.u32 %v3573, 16
        %v3858 = vrot.slane %v3856, 5
        %v3859 = vor.u32 %v3855, %v3858
        %v3860 = vrot.slane %v3859, 4
        %v3862 = vshll.u32 %v3574, 16
        %v3864 = vrot.slane %v3862, 5
        %v3865 = vsel %vm1781, %v3860, %v3864
        %v3866 = vshrl.u32 %v3574, 16
        %v3868 = vrot.slane %v3866, 4
        %v3869 = vor.u32 %v3868, %v3864
        %v3870 = vrot.slane %v3869, 4
        %v3872 = vshll.u32 %v3575, 16
        %v3874 = vrot.slane %v3872, 5
        %v3875 = vsel %vm1781, %v3870, %v3874
        %v3877 = vshrl.u32 %v3576, 16
        %v3879 = vrot.slane %v3877, 4
        %v3880 = vshll.u32 %v3576, 16
        %v3882 = vrot.slane %v3880, 5
        %v3883 = vor.u32 %v3879, %v3882
        %v3884 = vrot.slane %v3883, 4
        %v3886 = vshll.u32 %v3577, 16
        %v3888 = vrot.slane %v3886, 5
        %v3889 = vsel %vm1781, %v3884, %v3888
        %v3890 = vshrl.u32 %v3577, 16
        %v3892 = vrot.slane %v3890, 4
        %v3893 = vor.u32 %v3892, %v3888
        %v3894 = vrot.slane %v3893, 4
        %v3896 = vshll.u32 %v3578, 16
        %v3898 = vrot.slane %v3896, 5
        %v3899 = vsel %vm1781, %v3894, %v3898
        %v3901 = vshrl.u32 %v3579, 16
        %v3903 = vrot.slane %v3901, 4
        %v3904 = vshll.u32 %v3579, 16
        %v3906 = vrot.slane %v3904, 5
        %v3907 = vor.u32 %v3903, %v3906
        %v3908 = vrot.slane %v3907, 4
        %v3910 = vshll.u32 %v3580, 16
        %v3912 = vrot.slane %v3910, 5
        %v3913 = vsel %vm1781, %v3908, %v3912
        %v3914 = vshrl.u32 %v3580, 16
        %v3916 = vrot.slane %v3914, 4
        %v3917 = vor.u32 %v3916, %v3912
        %v3918 = vrot.slane %v3917, 4
        %v3920 = vshll.u32 %v3581, 16
        %v3922 = vrot.slane %v3920, 5
        %v3923 = vsel %vm1781, %v3918, %v3922
        %v3925 = vshrl.u32 %v3582, 16
        %v3927 = vrot.slane %v3925, 4
        %v3928 = vshll.u32 %v3582, 16
        %v3930 = vrot.slane %v3928, 5
        %v3931 = vor.u32 %v3927, %v3930
        %v3932 = vrot.slane %v3931, 4
        %v3934 = vshll.u32 %v3583, 16
        %v3936 = vrot.slane %v3934, 5
        %v3937 = vsel %vm1781, %v3932, %v3936
        %v3938 = vshrl.u32 %v3583, 16
        %v3940 = vrot.slane %v3938, 4
        %v3941 = vor.u32 %v3940, %v3936
        %v3942 = vrot.slane %v3941, 4
        %v3944 = vshll.u32 %v3584, 16
        %v3946 = vrot.slane %v3944, 5
        %v3947 = vsel %vm1781, %v3942, %v3946
        %v3949 = vshrl.u32 %v3585, 16
        %v3951 = vrot.slane %v3949, 4
        %v3952 = vshll.u32 %v3585, 16
        %v3954 = vrot.slane %v3952, 5
        %v3955 = vor.u32 %v3951, %v3954
        %v3956 = vrot.slane %v3955, 4
        %v3958 = vshll.u32 %v3586, 16
        %v3960 = vrot.slane %v3958, 5
        %v3961 = vsel %vm1781, %v3956, %v3960
        %v3962 = vshrl.u32 %v3586, 16
        %v3964 = vrot.slane %v3962, 4
        %v3965 = vor.u32 %v3964, %v3960
        %v3966 = vrot.slane %v3965, 4
        %v3968 = vshll.u32 %v3587, 16
        %v3970 = vrot.slane %v3968, 5
        %v3971 = vsel %vm1781, %v3966, %v3970
        %v3972 = vld [vmem:[%s4 + $0x8] sm:$0x3]
        %v3973 = vunpack.c.l.b16 %v3601
        %v3974 = vunpack.c.l.b16 %v3611
        %v3975 = vunpack.c.l.b16 %v3625
        %v3976 = vunpack.c.l.b16 %v3635
        %v3977 = vunpack.c.l.b16 %v3649
        %v3978 = vunpack.c.l.b16 %v3659
        %v3979 = vunpack.c.l.b16 %v3673
        %v3980 = vunpack.c.l.b16 %v3683
        %v3981 = vunpack.c.l.b16 %v3697
        %v3982 = vunpack.c.l.b16 %v3707
        %v3983 = vunpack.c.l.b16 %v3721
        %v3984 = vunpack.c.l.b16 %v3731
        %v3985 = vunpack.c.l.b16 %v3745
        %v3986 = vunpack.c.l.b16 %v3755
        %v3987 = vunpack.c.l.b16 %v3769
        %v3988 = vunpack.c.l.b16 %v3779
        %v3989 = vunpack.c.l.b16 %v3793
        %v3990 = vunpack.c.l.b16 %v3803
        %v3991 = vunpack.c.l.b16 %v3817
        %v3992 = vunpack.c.l.b16 %v3827
        %v3993 = vunpack.c.l.b16 %v3841
        %v3994 = vunpack.c.l.b16 %v3851
        %v3995 = vunpack.c.l.b16 %v3865
        %v3996 = vunpack.c.l.b16 %v3875
        %v3997 = vunpack.c.l.b16 %v3889
        %v3998 = vunpack.c.l.b16 %v3899
        %v3999 = vunpack.c.l.b16 %v3913
        %v4000 = vunpack.c.l.b16 %v3923
        %v4001 = vunpack.c.l.b16 %v3937
        %v4002 = vunpack.c.l.b16 %v3947
        %v4003 = vunpack.c.l.b16 %v3961
        %v4004 = vunpack.c.l.b16 %v3971
        %v4005 = vpack.c.b16 %v3974, %v3973
        %v4006 = vpack.c.b16 %v3976, %v3975
        %v4007 = vpack.c.b16 %v3978, %v3977
        %v4008 = vpack.c.b16 %v3980, %v3979
        %v4009 = vpack.c.b16 %v3982, %v3981
        %v4010 = vpack.c.b16 %v3984, %v3983
        %v4011 = vpack.c.b16 %v3986, %v3985
        %v4012 = vpack.c.b16 %v3988, %v3987
        %v4013 = vpack.c.b16 %v3990, %v3989
        %v4014 = vpack.c.b16 %v3992, %v3991
        %v4015 = vpack.c.b16 %v3994, %v3993
        %v4016 = vpack.c.b16 %v3996, %v3995
        %v4017 = vpack.c.b16 %v3998, %v3997
        %v4018 = vpack.c.b16 %v4000, %v3999
        %v4019 = vpack.c.b16 %v4002, %v4001
        %v4020 = vpack.c.b16 %v4004, %v4003
        %v4022 = vsel %vm553, %v4005, 0
        %v4025 = vsel %vm553, %v4006, 0
        %v4028 = vsel %vm553, %v4007, 0
        %v4031 = vsel %vm553, %v4008, 0
        %v4034 = vsel %vm553, %v4009, 0
        %v4037 = vsel %vm553, %v4010, 0
        %v4040 = vsel %vm553, %v4011, 0
        %v4043 = vsel %vm553, %v4012, 0
        %v4046 = vsel %vm553, %v4013, 0
        %v4049 = vsel %vm553, %v4014, 0
        %v4052 = vsel %vm553, %v4015, 0
        %v4055 = vsel %vm553, %v4016, 0
        %v4058 = vsel %vm553, %v4017, 0
        %v4061 = vsel %vm553, %v4018, 0
        %v4064 = vsel %vm553, %v4019, 0
        %v4067 = vsel %vm553, %v4020, 0
        %v4070 = vsel %vm602, %v3972, 0
        %4072 = vmatprep.subr.bf16.mxu0 0
        %4073 = vmatpush1.bf16.msra.mxu0 0
        %4074 = vmatprep.subr.bf16.mxu0 0
        %4075 = vmatpush1.bf16.msra.mxu0 0
        %4076 = vmatprep.subr.bf16.mxu0 0
        %4077 = vmatpush1.bf16.msra.mxu0 0
        %4078 = vmatprep.subr.bf16.mxu0 0
        %4079 = vmatpush1.bf16.msra.mxu0 0
        %4080 = vmatprep.subr.bf16.mxu0 0
        %4081 = vmatpush1.bf16.msra.mxu0 0
        %4082 = vmatprep.subr.bf16.mxu0 0
        %4083 = vmatpush1.bf16.msra.mxu0 0
        %4084 = vmatprep.subr.bf16.mxu0 0
        %4085 = vmatpush1.bf16.msra.mxu0 0
        %4086 = vmatprep.subr.bf16.mxu0 0
        %4087 = vmatpush1.bf16.msra.mxu0 %v4070
        %4088 = vmatprep.subr.bf16.mxu0 0
        %4089 = vmatpush2.bf16.msra.mxu0 0
        %4090 = vmatprep.subr.bf16.mxu0 0
        %4091 = vmatpush2.bf16.msra.mxu0 0
        %4092 = vmatprep.subr.bf16.mxu0 0
        %4093 = vmatpush2.bf16.msra.mxu0 0
        %4094 = vmatprep.subr.bf16.mxu0 0
        %4095 = vmatpush2.bf16.msra.mxu0 0
        %4096 = vmatprep.subr.bf16.mxu0 0
        %4097 = vmatpush2.bf16.msra.mxu0 0
        %4098 = vmatprep.subr.bf16.mxu0 0
        %4099 = vmatpush2.bf16.msra.mxu0 0
        %4100 = vmatprep.subr.bf16.mxu0 0
        %4101 = vmatpush2.bf16.msra.mxu0 0
        %4102 = vmatprep.subr.bf16.mxu0 0
        %4103 = vmatpush2.bf16.msra.mxu0 0
        %4104 = vmatprep.mubr.bf16.mxu0 0
        %4105 = vmatmul.mubr.bf16.gmra.mxu0 %v4022
        %v4106 = vpop.f32.mrf.mxu0
        %v4107 = vadd.f32 0.0, %v4106
        %v4108 = vpop.f32.mrf.mxu0
        %v4109 = vpop.f32.mrf.mxu0
        %v4110 = vadd.f32 0.0, %v4109
        %v4111 = vpop.f32.mrf.mxu0
        %4112 = vmatprep.mubr.bf16.mxu0 0
        %4113 = vmatmul.mubr.bf16.gmra.mxu0 %v4025
        %v4114 = vpop.f32.mrf.mxu0
        %v4115 = vadd.f32 0.0, %v4114
        %v4116 = vpop.f32.mrf.mxu0
        %v4117 = vpop.f32.mrf.mxu0
        %v4118 = vadd.f32 0.0, %v4117
        %v4119 = vpop.f32.mrf.mxu0
        %4120 = vmatprep.mubr.bf16.mxu0 0
        %4121 = vmatmul.mubr.bf16.gmra.mxu0 %v4028
        %v4122 = vpop.f32.mrf.mxu0
        %v4123 = vadd.f32 0.0, %v4122
        %v4124 = vpop.f32.mrf.mxu0
        %v4125 = vpop.f32.mrf.mxu0
        %v4126 = vadd.f32 0.0, %v4125
        %v4127 = vpop.f32.mrf.mxu0
        %4128 = vmatprep.mubr.bf16.mxu0 0
        %4129 = vmatmul.mubr.bf16.gmra.mxu0 %v4031
        %v4130 = vpop.f32.mrf.mxu0
        %v4131 = vadd.f32 0.0, %v4130
        %v4132 = vpop.f32.mrf.mxu0
        %v4133 = vpop.f32.mrf.mxu0
        %v4134 = vadd.f32 0.0, %v4133
        %v4135 = vpop.f32.mrf.mxu0
        %4136 = vmatprep.mubr.bf16.mxu0 0
        %4137 = vmatmul.mubr.bf16.gmra.mxu0 %v4034
        %v4138 = vpop.f32.mrf.mxu0
        %v4139 = vadd.f32 0.0, %v4138
        %v4140 = vpop.f32.mrf.mxu0
        %v4141 = vpop.f32.mrf.mxu0
        %v4142 = vadd.f32 0.0, %v4141
        %v4143 = vpop.f32.mrf.mxu0
        %4144 = vmatprep.mubr.bf16.mxu0 0
        %4145 = vmatmul.mubr.bf16.gmra.mxu0 %v4037
        %v4146 = vpop.f32.mrf.mxu0
        %v4147 = vadd.f32 0.0, %v4146
        %v4148 = vpop.f32.mrf.mxu0
        %v4149 = vpop.f32.mrf.mxu0
        %v4150 = vadd.f32 0.0, %v4149
        %v4151 = vpop.f32.mrf.mxu0
        %4152 = vmatprep.mubr.bf16.mxu0 0
        %4153 = vmatmul.mubr.bf16.gmra.mxu0 %v4040
        %v4154 = vpop.f32.mrf.mxu0
        %v4155 = vadd.f32 0.0, %v4154
        %v4156 = vpop.f32.mrf.mxu0
        %v4157 = vpop.f32.mrf.mxu0
        %v4158 = vadd.f32 0.0, %v4157
        %v4159 = vpop.f32.mrf.mxu0
        %4160 = vmatprep.mubr.bf16.mxu0 0
        %4161 = vmatmul.mubr.bf16.gmra.mxu0 %v4043
        %v4162 = vpop.f32.mrf.mxu0
        %v4163 = vadd.f32 0.0, %v4162
        %v4164 = vpop.f32.mrf.mxu0
        %v4165 = vpop.f32.mrf.mxu0
        %v4166 = vadd.f32 0.0, %v4165
        %v4167 = vpop.f32.mrf.mxu0
        %4168 = vmatprep.mubr.bf16.mxu0 0
        %4169 = vmatmul.mubr.bf16.gmra.mxu0 %v4046
        %v4170 = vpop.f32.mrf.mxu0
        %v4171 = vadd.f32 0.0, %v4170
        %v4172 = vpop.f32.mrf.mxu0
        %v4173 = vpop.f32.mrf.mxu0
        %v4174 = vadd.f32 0.0, %v4173
        %v4175 = vpop.f32.mrf.mxu0
        %4176 = vmatprep.mubr.bf16.mxu0 0
        %4177 = vmatmul.mubr.bf16.gmra.mxu0 %v4049
        %v4178 = vpop.f32.mrf.mxu0
        %v4179 = vadd.f32 0.0, %v4178
        %v4180 = vpop.f32.mrf.mxu0
        %v4181 = vpop.f32.mrf.mxu0
        %v4182 = vadd.f32 0.0, %v4181
        %v4183 = vpop.f32.mrf.mxu0
        %4184 = vmatprep.mubr.bf16.mxu0 0
        %4185 = vmatmul.mubr.bf16.gmra.mxu0 %v4052
        %v4186 = vpop.f32.mrf.mxu0
        %v4187 = vadd.f32 0.0, %v4186
        %v4188 = vpop.f32.mrf.mxu0
        %v4189 = vpop.f32.mrf.mxu0
        %v4190 = vadd.f32 0.0, %v4189
        %v4191 = vpop.f32.mrf.mxu0
        %4192 = vmatprep.mubr.bf16.mxu0 0
        %4193 = vmatmul.mubr.bf16.gmra.mxu0 %v4055
        %v4194 = vpop.f32.mrf.mxu0
        %v4195 = vadd.f32 0.0, %v4194
        %v4196 = vpop.f32.mrf.mxu0
        %v4197 = vpop.f32.mrf.mxu0
        %v4198 = vadd.f32 0.0, %v4197
        %v4199 = vpop.f32.mrf.mxu0
        %4200 = vmatprep.mubr.bf16.mxu0 0
        %4201 = vmatmul.mubr.bf16.gmra.mxu0 %v4058
        %v4202 = vpop.f32.mrf.mxu0
        %v4203 = vadd.f32 0.0, %v4202
        %v4204 = vpop.f32.mrf.mxu0
        %v4205 = vpop.f32.mrf.mxu0
        %v4206 = vadd.f32 0.0, %v4205
        %v4207 = vpop.f32.mrf.mxu0
        %4208 = vmatprep.mubr.bf16.mxu0 0
        %4209 = vmatmul.mubr.bf16.gmra.mxu0 %v4061
        %v4210 = vpop.f32.mrf.mxu0
        %v4211 = vadd.f32 0.0, %v4210
        %v4212 = vpop.f32.mrf.mxu0
        %v4213 = vpop.f32.mrf.mxu0
        %v4214 = vadd.f32 0.0, %v4213
        %v4215 = vpop.f32.mrf.mxu0
        %4216 = vmatprep.mubr.bf16.mxu0 0
        %4217 = vmatmul.mubr.bf16.gmra.mxu0 %v4064
        %v4218 = vpop.f32.mrf.mxu0
        %v4219 = vadd.f32 0.0, %v4218
        %v4220 = vpop.f32.mrf.mxu0
        %v4221 = vpop.f32.mrf.mxu0
        %v4222 = vadd.f32 0.0, %v4221
        %v4223 = vpop.f32.mrf.mxu0
        %4224 = vmatprep.mubr.bf16.mxu0 0
        %4225 = vmatmul.mubr.bf16.gmra.mxu0 %v4067
        %v4226 = vpop.f32.mrf.mxu0
        %v4227 = vadd.f32 0.0, %v4226
        %v4228 = vpop.f32.mrf.mxu0
        %v4229 = vpop.f32.mrf.mxu0
        %v4230 = vadd.f32 0.0, %v4229
        %v4231 = vpop.f32.mrf.mxu0
        %4232 = vdwg.mxu0
        %v4233 = vadd.f32 %v3508, %v4107
        %v4234 = vadd.f32 %v3509, %v4110
        %v4235 = vadd.f32 %v3510, %v4115
        %v4236 = vadd.f32 %v3511, %v4118
        %v4237 = vadd.f32 %v3512, %v4123
        %v4238 = vadd.f32 %v3513, %v4126
        %v4239 = vadd.f32 %v3514, %v4131
        %v4240 = vadd.f32 %v3515, %v4134
        %v4241 = vadd.f32 %v3516, %v4139
        %v4242 = vadd.f32 %v3517, %v4142
        %v4243 = vadd.f32 %v3518, %v4147
        %v4244 = vadd.f32 %v3519, %v4150
        %v4245 = vadd.f32 %v3520, %v4155
        %v4246 = vadd.f32 %v3521, %v4158
        %v4247 = vadd.f32 %v3522, %v4163
        %v4248 = vadd.f32 %v3523, %v4166
        %v4249 = vadd.f32 %v3524, %v4171
        %v4250 = vadd.f32 %v3525, %v4174
        %v4251 = vadd.f32 %v3526, %v4179
        %v4252 = vadd.f32 %v3527, %v4182
        %v4253 = vadd.f32 %v3528, %v4187
        %v4254 = vadd.f32 %v3529, %v4190
        %v4255 = vadd.f32 %v3530, %v4195
        %v4256 = vadd.f32 %v3531, %v4198
        %v4257 = vadd.f32 %v3532, %v4203
        %v4258 = vadd.f32 %v3533, %v4206
        %v4259 = vadd.f32 %v3534, %v4211
        %v4260 = vadd.f32 %v3535, %v4214
        %v4261 = vadd.f32 %v3536, %v4219
        %v4262 = vadd.f32 %v3537, %v4222
        %v4263 = vadd.f32 %v3538, %v4227
        %v4264 = vadd.f32 %v3539, %v4230
        %v4265 = vld [vmem:[%s1096] sm:$0xe]
        %v4266 = vld [vmem:[%s1096 + $0xc] sm:$0xe]
        %v4267 = vld [vmem:[%s1096 + $0x18] sm:$0xe]
        %v4268 = vld [vmem:[%s1096 + $0x24] sm:$0xe]
        %v4269 = vld [vmem:[%s1096 + $0x30] sm:$0xe]
        %v4270 = vld [vmem:[%s1096 + $0x3c] sm:$0xe]
        %v4271 = vld [vmem:[%s1096 + $0x48] sm:$0xe]
        %v4272 = vld [vmem:[%s1096 + $0x54] sm:$0xe]
        %v4273 = vld [vmem:[%s1096 + $0x60] sm:$0xe]
        %v4274 = vld [vmem:[%s1096 + $0x6c] sm:$0xe]
        %v4275 = vld [vmem:[%s1096 + $0x78] sm:$0xe]
        %v4276 = vld [vmem:[%s1096 + $0x84] sm:$0xe]
        %v4277 = vld [vmem:[%s1096 + $0x90] sm:$0xe]
        %v4278 = vld [vmem:[%s1096 + $0x9c] sm:$0xe]
        %v4279 = vld [vmem:[%s1096 + $0xa8] sm:$0xe]
        %v4280 = vld [vmem:[%s1096 + $0xb4] sm:$0xe]
        %v4329 = vrot.slane %v4265, 5
        %v4330 = vrot.slane %v4329, 4
        %v4331 = vrot.slane %v3541, 5
        %v4332 = vsel %vm2773, %v4330, %v4331
        %v4333 = vrot.slane %v4331, 4
        %v4334 = vrot.slane %v3542, 5
        %v4335 = vsel %vm2773, %v4333, %v4334
        %v4336 = vrot.slane %v4266, 5
        %v4337 = vrot.slane %v4336, 4
        %v4338 = vrot.slane %v3544, 5
        %v4339 = vsel %vm2773, %v4337, %v4338
        %v4340 = vrot.slane %v4338, 4
        %v4341 = vrot.slane %v3545, 5
        %v4342 = vsel %vm2773, %v4340, %v4341
        %v4343 = vrot.slane %v4267, 5
        %v4344 = vrot.slane %v4343, 4
        %v4345 = vrot.slane %v3547, 5
        %v4346 = vsel %vm2773, %v4344, %v4345
        %v4347 = vrot.slane %v4345, 4
        %v4348 = vrot.slane %v3548, 5
        %v4349 = vsel %vm2773, %v4347, %v4348
        %v4350 = vrot.slane %v4268, 5
        %v4351 = vrot.slane %v4350, 4
        %v4352 = vrot.slane %v3550, 5
        %v4353 = vsel %vm2773, %v4351, %v4352
        %v4354 = vrot.slane %v4352, 4
        %v4355 = vrot.slane %v3551, 5
        %v4356 = vsel %vm2773, %v4354, %v4355
        %v4357 = vrot.slane %v4269, 5
        %v4358 = vrot.slane %v4357, 4
        %v4359 = vrot.slane %v3553, 5
        %v4360 = vsel %vm2773, %v4358, %v4359
        %v4361 = vrot.slane %v4359, 4
        %v4362 = vrot.slane %v3554, 5
        %v4363 = vsel %vm2773, %v4361, %v4362
        %v4364 = vrot.slane %v4270, 5
        %v4365 = vrot.slane %v4364, 4
        %v4366 = vrot.slane %v3556, 5
        %v4367 = vsel %vm2773, %v4365, %v4366
        %v4368 = vrot.slane %v4366, 4
        %v4369 = vrot.slane %v3557, 5
        %v4370 = vsel %vm2773, %v4368, %v4369
        %v4371 = vrot.slane %v4271, 5
        %v4372 = vrot.slane %v4371, 4
        %v4373 = vrot.slane %v3559, 5
        %v4374 = vsel %vm2773, %v4372, %v4373
        %v4375 = vrot.slane %v4373, 4
        %v4376 = vrot.slane %v3560, 5
        %v4377 = vsel %vm2773, %v4375, %v4376
        %v4378 = vrot.slane %v4272, 5
        %v4379 = vrot.slane %v4378, 4
        %v4380 = vrot.slane %v3562, 5
        %v4381 = vsel %vm2773, %v4379, %v4380
        %v4382 = vrot.slane %v4380, 4
        %v4383 = vrot.slane %v3563, 5
        %v4384 = vsel %vm2773, %v4382, %v4383
        %v4385 = vrot.slane %v4273, 5
        %v4386 = vrot.slane %v4385, 4
        %v4387 = vrot.slane %v3565, 5
        %v4388 = vsel %vm2773, %v4386, %v4387
        %v4389 = vrot.slane %v4387, 4
        %v4390 = vrot.slane %v3566, 5
        %v4391 = vsel %vm2773, %v4389, %v4390
        %v4392 = vrot.slane %v4274, 5
        %v4393 = vrot.slane %v4392, 4
        %v4394 = vrot.slane %v3568, 5
        %v4395 = vsel %vm2773, %v4393, %v4394
        %v4396 = vrot.slane %v4394, 4
        %v4397 = vrot.slane %v3569, 5
        %v4398 = vsel %vm2773, %v4396, %v4397
        %v4399 = vrot.slane %v4275, 5
        %v4400 = vrot.slane %v4399, 4
        %v4401 = vrot.slane %v3571, 5
        %v4402 = vsel %vm2773, %v4400, %v4401
        %v4403 = vrot.slane %v4401, 4
        %v4404 = vrot.slane %v3572, 5
        %v4405 = vsel %vm2773, %v4403, %v4404
        %v4406 = vrot.slane %v4276, 5
        %v4407 = vrot.slane %v4406, 4
        %v4408 = vrot.slane %v3574, 5
        %v4409 = vsel %vm2773, %v4407, %v4408
        %v4410 = vrot.slane %v4408, 4
        %v4411 = vrot.slane %v3575, 5
        %v4412 = vsel %vm2773, %v4410, %v4411
        %v4413 = vrot.slane %v4277, 5
        %v4414 = vrot.slane %v4413, 4
        %v4415 = vrot.slane %v3577, 5
        %v4416 = vsel %vm2773, %v4414, %v4415
        %v4417 = vrot.slane %v4415, 4
        %v4418 = vrot.slane %v3578, 5
        %v4419 = vsel %vm2773, %v4417, %v4418
        %v4420 = vrot.slane %v4278, 5
        %v4421 = vrot.slane %v4420, 4
        %v4422 = vrot.slane %v3580, 5
        %v4423 = vsel %vm2773, %v4421, %v4422
        %v4424 = vrot.slane %v4422, 4
        %v4425 = vrot.slane %v3581, 5
        %v4426 = vsel %vm2773, %v4424, %v4425
        %v4427 = vrot.slane %v4279, 5
        %v4428 = vrot.slane %v4427, 4
        %v4429 = vrot.slane %v3583, 5
        %v4430 = vsel %vm2773, %v4428, %v4429
        %v4431 = vrot.slane %v4429, 4
        %v4432 = vrot.slane %v3584, 5
        %v4433 = vsel %vm2773, %v4431, %v4432
        %v4434 = vrot.slane %v4280, 5
        %v4435 = vrot.slane %v4434, 4
        %v4436 = vrot.slane %v3586, 5
        %v4437 = vsel %vm2773, %v4435, %v4436
        %v4438 = vrot.slane %v4436, 4
        %v4439 = vrot.slane %v3587, 5
        %v4440 = vsel %vm2773, %v4438, %v4439
        %v4441 = vld [vmem:[%s4 + $0x8] sm:$0xc]
        %v4442 = vunpack.c.l.b16 %v4332
        %v4443 = vunpack.c.l.b16 %v4335
        %v4444 = vunpack.c.l.b16 %v4339
        %v4445 = vunpack.c.l.b16 %v4342
        %v4446 = vunpack.c.l.b16 %v4346
        %v4447 = vunpack.c.l.b16 %v4349
        %v4448 = vunpack.c.l.b16 %v4353
        %v4449 = vunpack.c.l.b16 %v4356
        %v4450 = vunpack.c.l.b16 %v4360
        %v4451 = vunpack.c.l.b16 %v4363
        %v4452 = vunpack.c.l.b16 %v4367
        %v4453 = vunpack.c.l.b16 %v4370
        %v4454 = vunpack.c.l.b16 %v4374
        %v4455 = vunpack.c.l.b16 %v4377
        %v4456 = vunpack.c.l.b16 %v4381
        %v4457 = vunpack.c.l.b16 %v4384
        %v4458 = vunpack.c.l.b16 %v4388
        %v4459 = vunpack.c.l.b16 %v4391
        %v4460 = vunpack.c.l.b16 %v4395
        %v4461 = vunpack.c.l.b16 %v4398
        %v4462 = vunpack.c.l.b16 %v4402
        %v4463 = vunpack.c.l.b16 %v4405
        %v4464 = vunpack.c.l.b16 %v4409
        %v4465 = vunpack.c.l.b16 %v4412
        %v4466 = vunpack.c.l.b16 %v4416
        %v4467 = vunpack.c.l.b16 %v4419
        %v4468 = vunpack.c.l.b16 %v4423
        %v4469 = vunpack.c.l.b16 %v4426
        %v4470 = vunpack.c.l.b16 %v4430
        %v4471 = vunpack.c.l.b16 %v4433
        %v4472 = vunpack.c.l.b16 %v4437
        %v4473 = vunpack.c.l.b16 %v4440
        %v4474 = vpack.c.b16 %v4443, %v4442
        %v4475 = vpack.c.b16 %v4445, %v4444
        %v4476 = vpack.c.b16 %v4447, %v4446
        %v4477 = vpack.c.b16 %v4449, %v4448
        %v4478 = vpack.c.b16 %v4451, %v4450
        %v4479 = vpack.c.b16 %v4453, %v4452
        %v4480 = vpack.c.b16 %v4455, %v4454
        %v4481 = vpack.c.b16 %v4457, %v4456
        %v4482 = vpack.c.b16 %v4459, %v4458
        %v4483 = vpack.c.b16 %v4461, %v4460
        %v4484 = vpack.c.b16 %v4463, %v4462
        %v4485 = vpack.c.b16 %v4465, %v4464
        %v4486 = vpack.c.b16 %v4467, %v4466
        %v4487 = vpack.c.b16 %v4469, %v4468
        %v4488 = vpack.c.b16 %v4471, %v4470
        %v4489 = vpack.c.b16 %v4473, %v4472
        %v4491 = vunpack.c.l.b16 %v4441
        %v4492 = vpack.c.b16 %v4491, %v4491
        %v4493 = vrot.slane %v4492, 2
        %v4495 = vsel %vm553, %v4474, 0
        %v4498 = vsel %vm553, %v4475, 0
        %v4501 = vsel %vm553, %v4476, 0
        %v4504 = vsel %vm553, %v4477, 0
        %v4507 = vsel %vm553, %v4478, 0
        %v4510 = vsel %vm553, %v4479, 0
        %v4513 = vsel %vm553, %v4480, 0
        %v4516 = vsel %vm553, %v4481, 0
        %v4519 = vsel %vm553, %v4482, 0
        %v4522 = vsel %vm553, %v4483, 0
        %v4525 = vsel %vm553, %v4484, 0
        %v4528 = vsel %vm553, %v4485, 0
        %v4531 = vsel %vm553, %v4486, 0
        %v4534 = vsel %vm553, %v4487, 0
        %v4537 = vsel %vm553, %v4488, 0
        %v4540 = vsel %vm553, %v4489, 0
        %v4543 = vsel %vm602, %v4493, 0
        %4545 = vmatprep.subr.bf16.mxu0 0
        %4546 = vmatpush1.bf16.msra.mxu0 0
        %4547 = vmatprep.subr.bf16.mxu0 0
        %4548 = vmatpush1.bf16.msra.mxu0 0
        %4549 = vmatprep.subr.bf16.mxu0 0
        %4550 = vmatpush1.bf16.msra.mxu0 0
        %4551 = vmatprep.subr.bf16.mxu0 0
        %4552 = vmatpush1.bf16.msra.mxu0 0
        %4553 = vmatprep.subr.bf16.mxu0 0
        %4554 = vmatpush1.bf16.msra.mxu0 0
        %4555 = vmatprep.subr.bf16.mxu0 0
        %4556 = vmatpush1.bf16.msra.mxu0 0
        %4557 = vmatprep.subr.bf16.mxu0 0
        %4558 = vmatpush1.bf16.msra.mxu0 0
        %4559 = vmatprep.subr.bf16.mxu0 0
        %4560 = vmatpush1.bf16.msra.mxu0 %v4543
        %4561 = vmatprep.subr.bf16.mxu0 0
        %4562 = vmatpush2.bf16.msra.mxu0 0
        %4563 = vmatprep.subr.bf16.mxu0 0
        %4564 = vmatpush2.bf16.msra.mxu0 0
        %4565 = vmatprep.subr.bf16.mxu0 0
        %4566 = vmatpush2.bf16.msra.mxu0 0
        %4567 = vmatprep.subr.bf16.mxu0 0
        %4568 = vmatpush2.bf16.msra.mxu0 0
        %4569 = vmatprep.subr.bf16.mxu0 0
        %4570 = vmatpush2.bf16.msra.mxu0 0
        %4571 = vmatprep.subr.bf16.mxu0 0
        %4572 = vmatpush2.bf16.msra.mxu0 0
        %4573 = vmatprep.subr.bf16.mxu0 0
        %4574 = vmatpush2.bf16.msra.mxu0 0
        %4575 = vmatprep.subr.bf16.mxu0 0
        %4576 = vmatpush2.bf16.msra.mxu0 0
        %4577 = vmatprep.mubr.bf16.mxu0 0
        %4578 = vmatmul.mubr.bf16.gmra.mxu0 %v4495
        %v4579 = vpop.f32.mrf.mxu0
        %v4580 = vadd.f32 0.0, %v4579
        %v4581 = vpop.f32.mrf.mxu0
        %v4582 = vpop.f32.mrf.mxu0
        %v4583 = vadd.f32 0.0, %v4582
        %v4584 = vpop.f32.mrf.mxu0
        %4585 = vmatprep.mubr.bf16.mxu0 0
        %4586 = vmatmul.mubr.bf16.gmra.mxu0 %v4498
        %v4587 = vpop.f32.mrf.mxu0
        %v4588 = vadd.f32 0.0, %v4587
        %v4589 = vpop.f32.mrf.mxu0
        %v4590 = vpop.f32.mrf.mxu0
        %v4591 = vadd.f32 0.0, %v4590
        %v4592 = vpop.f32.mrf.mxu0
        %4593 = vmatprep.mubr.bf16.mxu0 0
        %4594 = vmatmul.mubr.bf16.gmra.mxu0 %v4501
        %v4595 = vpop.f32.mrf.mxu0
        %v4596 = vadd.f32 0.0, %v4595
        %v4597 = vpop.f32.mrf.mxu0
        %v4598 = vpop.f32.mrf.mxu0
        %v4599 = vadd.f32 0.0, %v4598
        %v4600 = vpop.f32.mrf.mxu0
        %4601 = vmatprep.mubr.bf16.mxu0 0
        %4602 = vmatmul.mubr.bf16.gmra.mxu0 %v4504
        %v4603 = vpop.f32.mrf.mxu0
        %v4604 = vadd.f32 0.0, %v4603
        %v4605 = vpop.f32.mrf.mxu0
        %v4606 = vpop.f32.mrf.mxu0
        %v4607 = vadd.f32 0.0, %v4606
        %v4608 = vpop.f32.mrf.mxu0
        %4609 = vmatprep.mubr.bf16.mxu0 0
        %4610 = vmatmul.mubr.bf16.gmra.mxu0 %v4507
        %v4611 = vpop.f32.mrf.mxu0
        %v4612 = vadd.f32 0.0, %v4611
        %v4613 = vpop.f32.mrf.mxu0
        %v4614 = vpop.f32.mrf.mxu0
        %v4615 = vadd.f32 0.0, %v4614
        %v4616 = vpop.f32.mrf.mxu0
        %4617 = vmatprep.mubr.bf16.mxu0 0
        %4618 = vmatmul.mubr.bf16.gmra.mxu0 %v4510
        %v4619 = vpop.f32.mrf.mxu0
        %v4620 = vadd.f32 0.0, %v4619
        %v4621 = vpop.f32.mrf.mxu0
        %v4622 = vpop.f32.mrf.mxu0
        %v4623 = vadd.f32 0.0, %v4622
        %v4624 = vpop.f32.mrf.mxu0
        %4625 = vmatprep.mubr.bf16.mxu0 0
        %4626 = vmatmul.mubr.bf16.gmra.mxu0 %v4513
        %v4627 = vpop.f32.mrf.mxu0
        %v4628 = vadd.f32 0.0, %v4627
        %v4629 = vpop.f32.mrf.mxu0
        %v4630 = vpop.f32.mrf.mxu0
        %v4631 = vadd.f32 0.0, %v4630
        %v4632 = vpop.f32.mrf.mxu0
        %4633 = vmatprep.mubr.bf16.mxu0 0
        %4634 = vmatmul.mubr.bf16.gmra.mxu0 %v4516
        %v4635 = vpop.f32.mrf.mxu0
        %v4636 = vadd.f32 0.0, %v4635
        %v4637 = vpop.f32.mrf.mxu0
        %v4638 = vpop.f32.mrf.mxu0
        %v4639 = vadd.f32 0.0, %v4638
        %v4640 = vpop.f32.mrf.mxu0
        %4641 = vmatprep.mubr.bf16.mxu0 0
        %4642 = vmatmul.mubr.bf16.gmra.mxu0 %v4519
        %v4643 = vpop.f32.mrf.mxu0
        %v4644 = vadd.f32 0.0, %v4643
        %v4645 = vpop.f32.mrf.mxu0
        %v4646 = vpop.f32.mrf.mxu0
        %v4647 = vadd.f32 0.0, %v4646
        %v4648 = vpop.f32.mrf.mxu0
        %4649 = vmatprep.mubr.bf16.mxu0 0
        %4650 = vmatmul.mubr.bf16.gmra.mxu0 %v4522
        %v4651 = vpop.f32.mrf.mxu0
        %v4652 = vadd.f32 0.0, %v4651
        %v4653 = vpop.f32.mrf.mxu0
        %v4654 = vpop.f32.mrf.mxu0
        %v4655 = vadd.f32 0.0, %v4654
        %v4656 = vpop.f32.mrf.mxu0
        %4657 = vmatprep.mubr.bf16.mxu0 0
        %4658 = vmatmul.mubr.bf16.gmra.mxu0 %v4525
        %v4659 = vpop.f32.mrf.mxu0
        %v4660 = vadd.f32 0.0, %v4659
        %v4661 = vpop.f32.mrf.mxu0
        %v4662 = vpop.f32.mrf.mxu0
        %v4663 = vadd.f32 0.0, %v4662
        %v4664 = vpop.f32.mrf.mxu0
        %4665 = vmatprep.mubr.bf16.mxu0 0
        %4666 = vmatmul.mubr.bf16.gmra.mxu0 %v4528
        %v4667 = vpop.f32.mrf.mxu0
        %v4668 = vadd.f32 0.0, %v4667
        %v4669 = vpop.f32.mrf.mxu0
        %v4670 = vpop.f32.mrf.mxu0
        %v4671 = vadd.f32 0.0, %v4670
        %v4672 = vpop.f32.mrf.mxu0
        %4673 = vmatprep.mubr.bf16.mxu0 0
        %4674 = vmatmul.mubr.bf16.gmra.mxu0 %v4531
        %v4675 = vpop.f32.mrf.mxu0
        %v4676 = vadd.f32 0.0, %v4675
        %v4677 = vpop.f32.mrf.mxu0
        %v4678 = vpop.f32.mrf.mxu0
        %v4679 = vadd.f32 0.0, %v4678
        %v4680 = vpop.f32.mrf.mxu0
        %4681 = vmatprep.mubr.bf16.mxu0 0
        %4682 = vmatmul.mubr.bf16.gmra.mxu0 %v4534
        %v4683 = vpop.f32.mrf.mxu0
        %v4684 = vadd.f32 0.0, %v4683
        %v4685 = vpop.f32.mrf.mxu0
        %v4686 = vpop.f32.mrf.mxu0
        %v4687 = vadd.f32 0.0, %v4686
        %v4688 = vpop.f32.mrf.mxu0
        %4689 = vmatprep.mubr.bf16.mxu0 0
        %4690 = vmatmul.mubr.bf16.gmra.mxu0 %v4537
        %v4691 = vpop.f32.mrf.mxu0
        %v4692 = vadd.f32 0.0, %v4691
        %v4693 = vpop.f32.mrf.mxu0
        %v4694 = vpop.f32.mrf.mxu0
        %v4695 = vadd.f32 0.0, %v4694
        %v4696 = vpop.f32.mrf.mxu0
        %4697 = vmatprep.mubr.bf16.mxu0 0
        %4698 = vmatmul.mubr.bf16.gmra.mxu0 %v4540
        %v4699 = vpop.f32.mrf.mxu0
        %v4700 = vadd.f32 0.0, %v4699
        %v4701 = vpop.f32.mrf.mxu0
        %v4702 = vpop.f32.mrf.mxu0
        %v4703 = vadd.f32 0.0, %v4702
        %v4704 = vpop.f32.mrf.mxu0
        %4705 = vdwg.mxu0
        %v4706 = vadd.f32 %v4233, %v4580
        %v4707 = vadd.f32 %v4234, %v4583
        %v4708 = vadd.f32 %v4235, %v4588
        %v4709 = vadd.f32 %v4236, %v4591
        %v4710 = vadd.f32 %v4237, %v4596
        %v4711 = vadd.f32 %v4238, %v4599
        %v4712 = vadd.f32 %v4239, %v4604
        %v4713 = vadd.f32 %v4240, %v4607
        %v4714 = vadd.f32 %v4241, %v4612
        %v4715 = vadd.f32 %v4242, %v4615
        %v4716 = vadd.f32 %v4243, %v4620
        %v4717 = vadd.f32 %v4244, %v4623
        %v4718 = vadd.f32 %v4245, %v4628
        %v4719 = vadd.f32 %v4246, %v4631
        %v4720 = vadd.f32 %v4247, %v4636
        %v4721 = vadd.f32 %v4248, %v4639
        %v4722 = vadd.f32 %v4249, %v4644
        %v4723 = vadd.f32 %v4250, %v4647
        %v4724 = vadd.f32 %v4251, %v4652
        %v4725 = vadd.f32 %v4252, %v4655
        %v4726 = vadd.f32 %v4253, %v4660
        %v4727 = vadd.f32 %v4254, %v4663
        %v4728 = vadd.f32 %v4255, %v4668
        %v4729 = vadd.f32 %v4256, %v4671
        %v4730 = vadd.f32 %v4257, %v4676
        %v4731 = vadd.f32 %v4258, %v4679
        %v4732 = vadd.f32 %v4259, %v4684
        %v4733 = vadd.f32 %v4260, %v4687
        %v4734 = vadd.f32 %v4261, %v4692
        %v4735 = vadd.f32 %v4262, %v4695
        %v4736 = vadd.f32 %v4263, %v4700
        %v4737 = vadd.f32 %v4264, %v4703
        %s4738 = scalar_lea.vmem [#allocation2], 24
        %v4739 = vld [vmem:[%s4738] sm:$0xf]
        %v4740 = vld [vmem:[%s4738 + $0x4] sm:$0xf]
        %v4741 = vld [vmem:[%s4738 + $0xc] sm:$0xf]
        %v4742 = vld [vmem:[%s4738 + $0x10] sm:$0xf]
        %v4743 = vld [vmem:[%s4738 + $0x18] sm:$0xf]
        %v4744 = vld [vmem:[%s4738 + $0x1c] sm:$0xf]
        %v4745 = vld [vmem:[%s4738 + $0x24] sm:$0xf]
        %v4746 = vld [vmem:[%s4738 + $0x28] sm:$0xf]
        %v4747 = vld [vmem:[%s4738 + $0x30] sm:$0xf]
        %v4748 = vld [vmem:[%s4738 + $0x34] sm:$0xf]
        %v4749 = vld [vmem:[%s4738 + $0x3c] sm:$0xf]
        %v4750 = vld [vmem:[%s4738 + $0x40] sm:$0xf]
        %v4751 = vld [vmem:[%s4738 + $0x48] sm:$0xf]
        %v4752 = vld [vmem:[%s4738 + $0x4c] sm:$0xf]
        %v4753 = vld [vmem:[%s4738 + $0x54] sm:$0xf]
        %v4754 = vld [vmem:[%s4738 + $0x58] sm:$0xf]
        %v4755 = vld [vmem:[%s4738 + $0x60] sm:$0xf]
        %v4756 = vld [vmem:[%s4738 + $0x64] sm:$0xf]
        %v4757 = vld [vmem:[%s4738 + $0x6c] sm:$0xf]
        %v4758 = vld [vmem:[%s4738 + $0x70] sm:$0xf]
        %v4759 = vld [vmem:[%s4738 + $0x78] sm:$0xf]
        %v4760 = vld [vmem:[%s4738 + $0x7c] sm:$0xf]
        %v4761 = vld [vmem:[%s4738 + $0x84] sm:$0xf]
        %v4762 = vld [vmem:[%s4738 + $0x88] sm:$0xf]
        %v4763 = vld [vmem:[%s4738 + $0x90] sm:$0xf]
        %v4764 = vld [vmem:[%s4738 + $0x94] sm:$0xf]
        %v4765 = vld [vmem:[%s4738 + $0x9c] sm:$0xf]
        %v4766 = vld [vmem:[%s4738 + $0xa0] sm:$0xf]
        %v4767 = vld [vmem:[%s4738 + $0xa8] sm:$0xf]
        %v4768 = vld [vmem:[%s4738 + $0xac] sm:$0xf]
        %v4769 = vld [vmem:[%s4738 + $0xb4] sm:$0xf]
        %v4770 = vld [vmem:[%s4738 + $0xb8] sm:$0xf]
        %v4771 = vld [vmem:[%s4 + $0xc] sm:$0x3]
        %v4804 = vunpack.c.l.b16 %v4739
        %v4805 = vunpack.c.l.b16 %v4740
        %v4806 = vunpack.c.l.b16 %v4741
        %v4807 = vunpack.c.l.b16 %v4742
        %v4808 = vunpack.c.l.b16 %v4743
        %v4809 = vunpack.c.l.b16 %v4744
        %v4810 = vunpack.c.l.b16 %v4745
        %v4811 = vunpack.c.l.b16 %v4746
        %v4812 = vunpack.c.l.b16 %v4747
        %v4813 = vunpack.c.l.b16 %v4748
        %v4814 = vunpack.c.l.b16 %v4749
        %v4815 = vunpack.c.l.b16 %v4750
        %v4816 = vunpack.c.l.b16 %v4751
        %v4817 = vunpack.c.l.b16 %v4752
        %v4818 = vunpack.c.l.b16 %v4753
        %v4819 = vunpack.c.l.b16 %v4754
        %v4820 = vunpack.c.l.b16 %v4755
        %v4821 = vunpack.c.l.b16 %v4756
        %v4822 = vunpack.c.l.b16 %v4757
        %v4823 = vunpack.c.l.b16 %v4758
        %v4824 = vunpack.c.l.b16 %v4759
        %v4825 = vunpack.c.l.b16 %v4760
        %v4826 = vunpack.c.l.b16 %v4761
        %v4827 = vunpack.c.l.b16 %v4762
        %v4828 = vunpack.c.l.b16 %v4763
        %v4829 = vunpack.c.l.b16 %v4764
        %v4830 = vunpack.c.l.b16 %v4765
        %v4831 = vunpack.c.l.b16 %v4766
        %v4832 = vunpack.c.l.b16 %v4767
        %v4833 = vunpack.c.l.b16 %v4768
        %v4834 = vunpack.c.l.b16 %v4769
        %v4835 = vunpack.c.l.b16 %v4770
        %v4836 = vpack.c.b16 %v4805, %v4804
        %v4837 = vpack.c.b16 %v4807, %v4806
        %v4838 = vpack.c.b16 %v4809, %v4808
        %v4839 = vpack.c.b16 %v4811, %v4810
        %v4840 = vpack.c.b16 %v4813, %v4812
        %v4841 = vpack.c.b16 %v4815, %v4814
        %v4842 = vpack.c.b16 %v4817, %v4816
        %v4843 = vpack.c.b16 %v4819, %v4818
        %v4844 = vpack.c.b16 %v4821, %v4820
        %v4845 = vpack.c.b16 %v4823, %v4822
        %v4846 = vpack.c.b16 %v4825, %v4824
        %v4847 = vpack.c.b16 %v4827, %v4826
        %v4848 = vpack.c.b16 %v4829, %v4828
        %v4849 = vpack.c.b16 %v4831, %v4830
        %v4850 = vpack.c.b16 %v4833, %v4832
        %v4851 = vpack.c.b16 %v4835, %v4834
        %v4853 = vsel %vm553, %v4836, 0
        %v4856 = vsel %vm553, %v4837, 0
        %v4859 = vsel %vm553, %v4838, 0
        %v4862 = vsel %vm553, %v4839, 0
        %v4865 = vsel %vm553, %v4840, 0
        %v4868 = vsel %vm553, %v4841, 0
        %v4871 = vsel %vm553, %v4842, 0
        %v4874 = vsel %vm553, %v4843, 0
        %v4877 = vsel %vm553, %v4844, 0
        %v4880 = vsel %vm553, %v4845, 0
        %v4883 = vsel %vm553, %v4846, 0
        %v4886 = vsel %vm553, %v4847, 0
        %v4889 = vsel %vm553, %v4848, 0
        %v4892 = vsel %vm553, %v4849, 0
        %v4895 = vsel %vm553, %v4850, 0
        %v4898 = vsel %vm553, %v4851, 0
        %v4901 = vsel %vm602, %v4771, 0
        %4903 = vmatprep.subr.bf16.mxu0 0
        %4904 = vmatpush1.bf16.msra.mxu0 0
        %4905 = vmatprep.subr.bf16.mxu0 0
        %4906 = vmatpush1.bf16.msra.mxu0 0
        %4907 = vmatprep.subr.bf16.mxu0 0
        %4908 = vmatpush1.bf16.msra.mxu0 0
        %4909 = vmatprep.subr.bf16.mxu0 0
        %4910 = vmatpush1.bf16.msra.mxu0 0
        %4911 = vmatprep.subr.bf16.mxu0 0
        %4912 = vmatpush1.bf16.msra.mxu0 0
        %4913 = vmatprep.subr.bf16.mxu0 0
        %4914 = vmatpush1.bf16.msra.mxu0 0
        %4915 = vmatprep.subr.bf16.mxu0 0
        %4916 = vmatpush1.bf16.msra.mxu0 0
        %4917 = vmatprep.subr.bf16.mxu0 0
        %4918 = vmatpush1.bf16.msra.mxu0 %v4901
        %4919 = vmatprep.subr.bf16.mxu0 0
        %4920 = vmatpush2.bf16.msra.mxu0 0
        %4921 = vmatprep.subr.bf16.mxu0 0
        %4922 = vmatpush2.bf16.msra.mxu0 0
        %4923 = vmatprep.subr.bf16.mxu0 0
        %4924 = vmatpush2.bf16.msra.mxu0 0
        %4925 = vmatprep.subr.bf16.mxu0 0
        %4926 = vmatpush2.bf16.msra.mxu0 0
        %4927 = vmatprep.subr.bf16.mxu0 0
        %4928 = vmatpush2.bf16.msra.mxu0 0
        %4929 = vmatprep.subr.bf16.mxu0 0
        %4930 = vmatpush2.bf16.msra.mxu0 0
        %4931 = vmatprep.subr.bf16.mxu0 0
        %4932 = vmatpush2.bf16.msra.mxu0 0
        %4933 = vmatprep.subr.bf16.mxu0 0
        %4934 = vmatpush2.bf16.msra.mxu0 0
        %4935 = vmatprep.mubr.bf16.mxu0 0
        %4936 = vmatmul.mubr.bf16.gmra.mxu0 %v4853
        %v4937 = vpop.f32.mrf.mxu0
        %v4938 = vadd.f32 0.0, %v4937
        %v4939 = vpop.f32.mrf.mxu0
        %v4940 = vpop.f32.mrf.mxu0
        %v4941 = vadd.f32 0.0, %v4940
        %v4942 = vpop.f32.mrf.mxu0
        %4943 = vmatprep.mubr.bf16.mxu0 0
        %4944 = vmatmul.mubr.bf16.gmra.mxu0 %v4856
        %v4945 = vpop.f32.mrf.mxu0
        %v4946 = vadd.f32 0.0, %v4945
        %v4947 = vpop.f32.mrf.mxu0
        %v4948 = vpop.f32.mrf.mxu0
        %v4949 = vadd.f32 0.0, %v4948
        %v4950 = vpop.f32.mrf.mxu0
        %4951 = vmatprep.mubr.bf16.mxu0 0
        %4952 = vmatmul.mubr.bf16.gmra.mxu0 %v4859
        %v4953 = vpop.f32.mrf.mxu0
        %v4954 = vadd.f32 0.0, %v4953
        %v4955 = vpop.f32.mrf.mxu0
        %v4956 = vpop.f32.mrf.mxu0
        %v4957 = vadd.f32 0.0, %v4956
        %v4958 = vpop.f32.mrf.mxu0
        %4959 = vmatprep.mubr.bf16.mxu0 0
        %4960 = vmatmul.mubr.bf16.gmra.mxu0 %v4862
        %v4961 = vpop.f32.mrf.mxu0
        %v4962 = vadd.f32 0.0, %v4961
        %v4963 = vpop.f32.mrf.mxu0
        %v4964 = vpop.f32.mrf.mxu0
        %v4965 = vadd.f32 0.0, %v4964
        %v4966 = vpop.f32.mrf.mxu0
        %4967 = vmatprep.mubr.bf16.mxu0 0
        %4968 = vmatmul.mubr.bf16.gmra.mxu0 %v4865
        %v4969 = vpop.f32.mrf.mxu0
        %v4970 = vadd.f32 0.0, %v4969
        %v4971 = vpop.f32.mrf.mxu0
        %v4972 = vpop.f32.mrf.mxu0
        %v4973 = vadd.f32 0.0, %v4972
        %v4974 = vpop.f32.mrf.mxu0
        %4975 = vmatprep.mubr.bf16.mxu0 0
        %4976 = vmatmul.mubr.bf16.gmra.mxu0 %v4868
        %v4977 = vpop.f32.mrf.mxu0
        %v4978 = vadd.f32 0.0, %v4977
        %v4979 = vpop.f32.mrf.mxu0
        %v4980 = vpop.f32.mrf.mxu0
        %v4981 = vadd.f32 0.0, %v4980
        %v4982 = vpop.f32.mrf.mxu0
        %4983 = vmatprep.mubr.bf16.mxu0 0
        %4984 = vmatmul.mubr.bf16.gmra.mxu0 %v4871
        %v4985 = vpop.f32.mrf.mxu0
        %v4986 = vadd.f32 0.0, %v4985
        %v4987 = vpop.f32.mrf.mxu0
        %v4988 = vpop.f32.mrf.mxu0
        %v4989 = vadd.f32 0.0, %v4988
        %v4990 = vpop.f32.mrf.mxu0
        %4991 = vmatprep.mubr.bf16.mxu0 0
        %4992 = vmatmul.mubr.bf16.gmra.mxu0 %v4874
        %v4993 = vpop.f32.mrf.mxu0
        %v4994 = vadd.f32 0.0, %v4993
        %v4995 = vpop.f32.mrf.mxu0
        %v4996 = vpop.f32.mrf.mxu0
        %v4997 = vadd.f32 0.0, %v4996
        %v4998 = vpop.f32.mrf.mxu0
        %4999 = vmatprep.mubr.bf16.mxu0 0
        %5000 = vmatmul.mubr.bf16.gmra.mxu0 %v4877
        %v5001 = vpop.f32.mrf.mxu0
        %v5002 = vadd.f32 0.0, %v5001
        %v5003 = vpop.f32.mrf.mxu0
        %v5004 = vpop.f32.mrf.mxu0
        %v5005 = vadd.f32 0.0, %v5004
        %v5006 = vpop.f32.mrf.mxu0
        %5007 = vmatprep.mubr.bf16.mxu0 0
        %5008 = vmatmul.mubr.bf16.gmra.mxu0 %v4880
        %v5009 = vpop.f32.mrf.mxu0
        %v5010 = vadd.f32 0.0, %v5009
        %v5011 = vpop.f32.mrf.mxu0
        %v5012 = vpop.f32.mrf.mxu0
        %v5013 = vadd.f32 0.0, %v5012
        %v5014 = vpop.f32.mrf.mxu0
        %5015 = vmatprep.mubr.bf16.mxu0 0
        %5016 = vmatmul.mubr.bf16.gmra.mxu0 %v4883
        %v5017 = vpop.f32.mrf.mxu0
        %v5018 = vadd.f32 0.0, %v5017
        %v5019 = vpop.f32.mrf.mxu0
        %v5020 = vpop.f32.mrf.mxu0
        %v5021 = vadd.f32 0.0, %v5020
        %v5022 = vpop.f32.mrf.mxu0
        %5023 = vmatprep.mubr.bf16.mxu0 0
        %5024 = vmatmul.mubr.bf16.gmra.mxu0 %v4886
        %v5025 = vpop.f32.mrf.mxu0
        %v5026 = vadd.f32 0.0, %v5025
        %v5027 = vpop.f32.mrf.mxu0
        %v5028 = vpop.f32.mrf.mxu0
        %v5029 = vadd.f32 0.0, %v5028
        %v5030 = vpop.f32.mrf.mxu0
        %5031 = vmatprep.mubr.bf16.mxu0 0
        %5032 = vmatmul.mubr.bf16.gmra.mxu0 %v4889
        %v5033 = vpop.f32.mrf.mxu0
        %v5034 = vadd.f32 0.0, %v5033
        %v5035 = vpop.f32.mrf.mxu0
        %v5036 = vpop.f32.mrf.mxu0
        %v5037 = vadd.f32 0.0, %v5036
        %v5038 = vpop.f32.mrf.mxu0
        %5039 = vmatprep.mubr.bf16.mxu0 0
        %5040 = vmatmul.mubr.bf16.gmra.mxu0 %v4892
        %v5041 = vpop.f32.mrf.mxu0
        %v5042 = vadd.f32 0.0, %v5041
        %v5043 = vpop.f32.mrf.mxu0
        %v5044 = vpop.f32.mrf.mxu0
        %v5045 = vadd.f32 0.0, %v5044
        %v5046 = vpop.f32.mrf.mxu0
        %5047 = vmatprep.mubr.bf16.mxu0 0
        %5048 = vmatmul.mubr.bf16.gmra.mxu0 %v4895
        %v5049 = vpop.f32.mrf.mxu0
        %v5050 = vadd.f32 0.0, %v5049
        %v5051 = vpop.f32.mrf.mxu0
        %v5052 = vpop.f32.mrf.mxu0
        %v5053 = vadd.f32 0.0, %v5052
        %v5054 = vpop.f32.mrf.mxu0
        %5055 = vmatprep.mubr.bf16.mxu0 0
        %5056 = vmatmul.mubr.bf16.gmra.mxu0 %v4898
        %v5057 = vpop.f32.mrf.mxu0
        %v5058 = vadd.f32 0.0, %v5057
        %v5059 = vpop.f32.mrf.mxu0
        %v5060 = vpop.f32.mrf.mxu0
        %v5061 = vadd.f32 0.0, %v5060
        %v5062 = vpop.f32.mrf.mxu0
        %5063 = vdwg.mxu0
        %v5064 = vadd.f32 %v4706, %v4938
        %v5065 = vadd.f32 %v4707, %v4941
        %v5066 = vadd.f32 %v4708, %v4946
        %v5067 = vadd.f32 %v4709, %v4949
        %v5068 = vadd.f32 %v4710, %v4954
        %v5069 = vadd.f32 %v4711, %v4957
        %v5070 = vadd.f32 %v4712, %v4962
        %v5071 = vadd.f32 %v4713, %v4965
        %v5072 = vadd.f32 %v4714, %v4970
        %v5073 = vadd.f32 %v4715, %v4973
        %v5074 = vadd.f32 %v4716, %v4978
        %v5075 = vadd.f32 %v4717, %v4981
        %v5076 = vadd.f32 %v4718, %v4986
        %v5077 = vadd.f32 %v4719, %v4989
        %v5078 = vadd.f32 %v4720, %v4994
        %v5079 = vadd.f32 %v4721, %v4997
        %v5080 = vadd.f32 %v4722, %v5002
        %v5081 = vadd.f32 %v4723, %v5005
        %v5082 = vadd.f32 %v4724, %v5010
        %v5083 = vadd.f32 %v4725, %v5013
        %v5084 = vadd.f32 %v4726, %v5018
        %v5085 = vadd.f32 %v4727, %v5021
        %v5086 = vadd.f32 %v4728, %v5026
        %v5087 = vadd.f32 %v4729, %v5029
        %v5088 = vadd.f32 %v4730, %v5034
        %v5089 = vadd.f32 %v4731, %v5037
        %v5090 = vadd.f32 %v4732, %v5042
        %v5091 = vadd.f32 %v4733, %v5045
        %v5092 = vadd.f32 %v4734, %v5050
        %v5093 = vadd.f32 %v4735, %v5053
        %v5094 = vadd.f32 %v4736, %v5058
        %v5095 = vadd.f32 %v4737, %v5061
        %v5096 = vld [vmem:[%s4738] sm:$0xf]
        %v5097 = vld [vmem:[%s4738 + $0x4] sm:$0xf]
        %v5098 = vld [vmem:[%s4738 + $0x8] sm:$0x1]
        %v5099 = vld [vmem:[%s4738 + $0xc] sm:$0xf]
        %v5100 = vld [vmem:[%s4738 + $0x10] sm:$0xf]
        %v5101 = vld [vmem:[%s4738 + $0x14] sm:$0x1]
        %v5102 = vld [vmem:[%s4738 + $0x18] sm:$0xf]
        %v5103 = vld [vmem:[%s4738 + $0x1c] sm:$0xf]
        %v5104 = vld [vmem:[%s4738 + $0x20] sm:$0x1]
        %v5105 = vld [vmem:[%s4738 + $0x24] sm:$0xf]
        %v5106 = vld [vmem:[%s4738 + $0x28] sm:$0xf]
        %v5107 = vld [vmem:[%s4738 + $0x2c] sm:$0x1]
        %v5108 = vld [vmem:[%s4738 + $0x30] sm:$0xf]
        %v5109 = vld [vmem:[%s4738 + $0x34] sm:$0xf]
        %v5110 = vld [vmem:[%s4738 + $0x38] sm:$0x1]
        %v5111 = vld [vmem:[%s4738 + $0x3c] sm:$0xf]
        %v5112 = vld [vmem:[%s4738 + $0x40] sm:$0xf]
        %v5113 = vld [vmem:[%s4738 + $0x44] sm:$0x1]
        %v5114 = vld [vmem:[%s4738 + $0x48] sm:$0xf]
        %v5115 = vld [vmem:[%s4738 + $0x4c] sm:$0xf]
        %v5116 = vld [vmem:[%s4738 + $0x50] sm:$0x1]
        %v5117 = vld [vmem:[%s4738 + $0x54] sm:$0xf]
        %v5118 = vld [vmem:[%s4738 + $0x58] sm:$0xf]
        %v5119 = vld [vmem:[%s4738 + $0x5c] sm:$0x1]
        %v5120 = vld [vmem:[%s4738 + $0x60] sm:$0xf]
        %v5121 = vld [vmem:[%s4738 + $0x64] sm:$0xf]
        %v5122 = vld [vmem:[%s4738 + $0x68] sm:$0x1]
        %v5123 = vld [vmem:[%s4738 + $0x6c] sm:$0xf]
        %v5124 = vld [vmem:[%s4738 + $0x70] sm:$0xf]
        %v5125 = vld [vmem:[%s4738 + $0x74] sm:$0x1]
        %v5126 = vld [vmem:[%s4738 + $0x78] sm:$0xf]
        %v5127 = vld [vmem:[%s4738 + $0x7c] sm:$0xf]
        %v5128 = vld [vmem:[%s4738 + $0x80] sm:$0x1]
        %v5129 = vld [vmem:[%s4738 + $0x84] sm:$0xf]
        %v5130 = vld [vmem:[%s4738 + $0x88] sm:$0xf]
        %v5131 = vld [vmem:[%s4738 + $0x8c] sm:$0x1]
        %v5132 = vld [vmem:[%s4738 + $0x90] sm:$0xf]
        %v5133 = vld [vmem:[%s4738 + $0x94] sm:$0xf]
        %v5134 = vld [vmem:[%s4738 + $0x98] sm:$0x1]
        %v5135 = vld [vmem:[%s4738 + $0x9c] sm:$0xf]
        %v5136 = vld [vmem:[%s4738 + $0xa0] sm:$0xf]
        %v5137 = vld [vmem:[%s4738 + $0xa4] sm:$0x1]
        %v5138 = vld [vmem:[%s4738 + $0xa8] sm:$0xf]
        %v5139 = vld [vmem:[%s4738 + $0xac] sm:$0xf]
        %v5140 = vld [vmem:[%s4738 + $0xb0] sm:$0x1]
        %v5141 = vld [vmem:[%s4738 + $0xb4] sm:$0xf]
        %v5142 = vld [vmem:[%s4738 + $0xb8] sm:$0xf]
        %v5143 = vld [vmem:[%s4738 + $0xbc] sm:$0x1]
        %v5145 = vshrl.u32 %v5096, 16
        %v5147 = vrot.slane %v5145, 4
        %v5148 = vshll.u32 %v5096, 16
        %v5150 = vrot.slane %v5148, 5
        %v5151 = vor.u32 %v5147, %v5150
        %v5152 = vrot.slane %v5151, 4
        %v5154 = vshll.u32 %v5097, 16
        %v5156 = vrot.slane %v5154, 5
        %v5157 = vsel %vm1781, %v5152, %v5156
        %v5158 = vshrl.u32 %v5097, 16
        %v5160 = vrot.slane %v5158, 4
        %v5161 = vor.u32 %v5160, %v5156
        %v5162 = vrot.slane %v5161, 4
        %v5164 = vshll.u32 %v5098, 16
        %v5166 = vrot.slane %v5164, 5
        %v5167 = vsel %vm1781, %v5162, %v5166
        %v5169 = vshrl.u32 %v5099, 16
        %v5171 = vrot.slane %v5169, 4
        %v5172 = vshll.u32 %v5099, 16
        %v5174 = vrot.slane %v5172, 5
        %v5175 = vor.u32 %v5171, %v5174
        %v5176 = vrot.slane %v5175, 4
        %v5178 = vshll.u32 %v5100, 16
        %v5180 = vrot.slane %v5178, 5
        %v5181 = vsel %vm1781, %v5176, %v5180
        %v5182 = vshrl.u32 %v5100, 16
        %v5184 = vrot.slane %v5182, 4
        %v5185 = vor.u32 %v5184, %v5180
        %v5186 = vrot.slane %v5185, 4
        %v5188 = vshll.u32 %v5101, 16
        %v5190 = vrot.slane %v5188, 5
        %v5191 = vsel %vm1781, %v5186, %v5190
        %v5193 = vshrl.u32 %v5102, 16
        %v5195 = vrot.slane %v5193, 4
        %v5196 = vshll.u32 %v5102, 16
        %v5198 = vrot.slane %v5196, 5
        %v5199 = vor.u32 %v5195, %v5198
        %v5200 = vrot.slane %v5199, 4
        %v5202 = vshll.u32 %v5103, 16
        %v5204 = vrot.slane %v5202, 5
        %v5205 = vsel %vm1781, %v5200, %v5204
        %v5206 = vshrl.u32 %v5103, 16
        %v5208 = vrot.slane %v5206, 4
        %v5209 = vor.u32 %v5208, %v5204
        %v5210 = vrot.slane %v5209, 4
        %v5212 = vshll.u32 %v5104, 16
        %v5214 = vrot.slane %v5212, 5
        %v5215 = vsel %vm1781, %v5210, %v5214
        %v5217 = vshrl.u32 %v5105, 16
        %v5219 = vrot.slane %v5217, 4
        %v5220 = vshll.u32 %v5105, 16
        %v5222 = vrot.slane %v5220, 5
        %v5223 = vor.u32 %v5219, %v5222
        %v5224 = vrot.slane %v5223, 4
        %v5226 = vshll.u32 %v5106, 16
        %v5228 = vrot.slane %v5226, 5
        %v5229 = vsel %vm1781, %v5224, %v5228
        %v5230 = vshrl.u32 %v5106, 16
        %v5232 = vrot.slane %v5230, 4
        %v5233 = vor.u32 %v5232, %v5228
        %v5234 = vrot.slane %v5233, 4
        %v5236 = vshll.u32 %v5107, 16
        %v5238 = vrot.slane %v5236, 5
        %v5239 = vsel %vm1781, %v5234, %v5238
        %v5241 = vshrl.u32 %v5108, 16
        %v5243 = vrot.slane %v5241, 4
        %v5244 = vshll.u32 %v5108, 16
        %v5246 = vrot.slane %v5244, 5
        %v5247 = vor.u32 %v5243, %v5246
        %v5248 = vrot.slane %v5247, 4
        %v5250 = vshll.u32 %v5109, 16
        %v5252 = vrot.slane %v5250, 5
        %v5253 = vsel %vm1781, %v5248, %v5252
        %v5254 = vshrl.u32 %v5109, 16
        %v5256 = vrot.slane %v5254, 4
        %v5257 = vor.u32 %v5256, %v5252
        %v5258 = vrot.slane %v5257, 4
        %v5260 = vshll.u32 %v5110, 16
        %v5262 = vrot.slane %v5260, 5
        %v5263 = vsel %vm1781, %v5258, %v5262
        %v5265 = vshrl.u32 %v5111, 16
        %v5267 = vrot.slane %v5265, 4
        %v5268 = vshll.u32 %v5111, 16
        %v5270 = vrot.slane %v5268, 5
        %v5271 = vor.u32 %v5267, %v5270
        %v5272 = vrot.slane %v5271, 4
        %v5274 = vshll.u32 %v5112, 16
        %v5276 = vrot.slane %v5274, 5
        %v5277 = vsel %vm1781, %v5272, %v5276
        %v5278 = vshrl.u32 %v5112, 16
        %v5280 = vrot.slane %v5278, 4
        %v5281 = vor.u32 %v5280, %v5276
        %v5282 = vrot.slane %v5281, 4
        %v5284 = vshll.u32 %v5113, 16
        %v5286 = vrot.slane %v5284, 5
        %v5287 = vsel %vm1781, %v5282, %v5286
        %v5289 = vshrl.u32 %v5114, 16
        %v5291 = vrot.slane %v5289, 4
        %v5292 = vshll.u32 %v5114, 16
        %v5294 = vrot.slane %v5292, 5
        %v5295 = vor.u32 %v5291, %v5294
        %v5296 = vrot.slane %v5295, 4
        %v5298 = vshll.u32 %v5115, 16
        %v5300 = vrot.slane %v5298, 5
        %v5301 = vsel %vm1781, %v5296, %v5300
        %v5302 = vshrl.u32 %v5115, 16
        %v5304 = vrot.slane %v5302, 4
        %v5305 = vor.u32 %v5304, %v5300
        %v5306 = vrot.slane %v5305, 4
        %v5308 = vshll.u32 %v5116, 16
        %v5310 = vrot.slane %v5308, 5
        %v5311 = vsel %vm1781, %v5306, %v5310
        %v5313 = vshrl.u32 %v5117, 16
        %v5315 = vrot.slane %v5313, 4
        %v5316 = vshll.u32 %v5117, 16
        %v5318 = vrot.slane %v5316, 5
        %v5319 = vor.u32 %v5315, %v5318
        %v5320 = vrot.slane %v5319, 4
        %v5322 = vshll.u32 %v5118, 16
        %v5324 = vrot.slane %v5322, 5
        %v5325 = vsel %vm1781, %v5320, %v5324
        %v5326 = vshrl.u32 %v5118, 16
        %v5328 = vrot.slane %v5326, 4
        %v5329 = vor.u32 %v5328, %v5324
        %v5330 = vrot.slane %v5329, 4
        %v5332 = vshll.u32 %v5119, 16
        %v5334 = vrot.slane %v5332, 5
        %v5335 = vsel %vm1781, %v5330, %v5334
        %v5337 = vshrl.u32 %v5120, 16
        %v5339 = vrot.slane %v5337, 4
        %v5340 = vshll.u32 %v5120, 16
        %v5342 = vrot.slane %v5340, 5
        %v5343 = vor.u32 %v5339, %v5342
        %v5344 = vrot.slane %v5343, 4
        %v5346 = vshll.u32 %v5121, 16
        %v5348 = vrot.slane %v5346, 5
        %v5349 = vsel %vm1781, %v5344, %v5348
        %v5350 = vshrl.u32 %v5121, 16
        %v5352 = vrot.slane %v5350, 4
        %v5353 = vor.u32 %v5352, %v5348
        %v5354 = vrot.slane %v5353, 4
        %v5356 = vshll.u32 %v5122, 16
        %v5358 = vrot.slane %v5356, 5
        %v5359 = vsel %vm1781, %v5354, %v5358
        %v5361 = vshrl.u32 %v5123, 16
        %v5363 = vrot.slane %v5361, 4
        %v5364 = vshll.u32 %v5123, 16
        %v5366 = vrot.slane %v5364, 5
        %v5367 = vor.u32 %v5363, %v5366
        %v5368 = vrot.slane %v5367, 4
        %v5370 = vshll.u32 %v5124, 16
        %v5372 = vrot.slane %v5370, 5
        %v5373 = vsel %vm1781, %v5368, %v5372
        %v5374 = vshrl.u32 %v5124, 16
        %v5376 = vrot.slane %v5374, 4
        %v5377 = vor.u32 %v5376, %v5372
        %v5378 = vrot.slane %v5377, 4
        %v5380 = vshll.u32 %v5125, 16
        %v5382 = vrot.slane %v5380, 5
        %v5383 = vsel %vm1781, %v5378, %v5382
        %v5385 = vshrl.u32 %v5126, 16
        %v5387 = vrot.slane %v5385, 4
        %v5388 = vshll.u32 %v5126, 16
        %v5390 = vrot.slane %v5388, 5
        %v5391 = vor.u32 %v5387, %v5390
        %v5392 = vrot.slane %v5391, 4
        %v5394 = vshll.u32 %v5127, 16
        %v5396 = vrot.slane %v5394, 5
        %v5397 = vsel %vm1781, %v5392, %v5396
        %v5398 = vshrl.u32 %v5127, 16
        %v5400 = vrot.slane %v5398, 4
        %v5401 = vor.u32 %v5400, %v5396
        %v5402 = vrot.slane %v5401, 4
        %v5404 = vshll.u32 %v5128, 16
        %v5406 = vrot.slane %v5404, 5
        %v5407 = vsel %vm1781, %v5402, %v5406
        %v5409 = vshrl.u32 %v5129, 16
        %v5411 = vrot.slane %v5409, 4
        %v5412 = vshll.u32 %v5129, 16
        %v5414 = vrot.slane %v5412, 5
        %v5415 = vor.u32 %v5411, %v5414
        %v5416 = vrot.slane %v5415, 4
        %v5418 = vshll.u32 %v5130, 16
        %v5420 = vrot.slane %v5418, 5
        %v5421 = vsel %vm1781, %v5416, %v5420
        %v5422 = vshrl.u32 %v5130, 16
        %v5424 = vrot.slane %v5422, 4
        %v5425 = vor.u32 %v5424, %v5420
        %v5426 = vrot.slane %v5425, 4
        %v5428 = vshll.u32 %v5131, 16
        %v5430 = vrot.slane %v5428, 5
        %v5431 = vsel %vm1781, %v5426, %v5430
        %v5433 = vshrl.u32 %v5132, 16
        %v5435 = vrot.slane %v5433, 4
        %v5436 = vshll.u32 %v5132, 16
        %v5438 = vrot.slane %v5436, 5
        %v5439 = vor.u32 %v5435, %v5438
        %v5440 = vrot.slane %v5439, 4
        %v5442 = vshll.u32 %v5133, 16
        %v5444 = vrot.slane %v5442, 5
        %v5445 = vsel %vm1781, %v5440, %v5444
        %v5446 = vshrl.u32 %v5133, 16
        %v5448 = vrot.slane %v5446, 4
        %v5449 = vor.u32 %v5448, %v5444
        %v5450 = vrot.slane %v5449, 4
        %v5452 = vshll.u32 %v5134, 16
        %v5454 = vrot.slane %v5452, 5
        %v5455 = vsel %vm1781, %v5450, %v5454
        %v5457 = vshrl.u32 %v5135, 16
        %v5459 = vrot.slane %v5457, 4
        %v5460 = vshll.u32 %v5135, 16
        %v5462 = vrot.slane %v5460, 5
        %v5463 = vor.u32 %v5459, %v5462
        %v5464 = vrot.slane %v5463, 4
        %v5466 = vshll.u32 %v5136, 16
        %v5468 = vrot.slane %v5466, 5
        %v5469 = vsel %vm1781, %v5464, %v5468
        %v5470 = vshrl.u32 %v5136, 16
        %v5472 = vrot.slane %v5470, 4
        %v5473 = vor.u32 %v5472, %v5468
        %v5474 = vrot.slane %v5473, 4
        %v5476 = vshll.u32 %v5137, 16
        %v5478 = vrot.slane %v5476, 5
        %v5479 = vsel %vm1781, %v5474, %v5478
        %v5481 = vshrl.u32 %v5138, 16
        %v5483 = vrot.slane %v5481, 4
        %v5484 = vshll.u32 %v5138, 16
        %v5486 = vrot.slane %v5484, 5
        %v5487 = vor.u32 %v5483, %v5486
        %v5488 = vrot.slane %v5487, 4
        %v5490 = vshll.u32 %v5139, 16
        %v5492 = vrot.slane %v5490, 5
        %v5493 = vsel %vm1781, %v5488, %v5492
        %v5494 = vshrl.u32 %v5139, 16
        %v5496 = vrot.slane %v5494, 4
        %v5497 = vor.u32 %v5496, %v5492
        %v5498 = vrot.slane %v5497, 4
        %v5500 = vshll.u32 %v5140, 16
        %v5502 = vrot.slane %v5500, 5
        %v5503 = vsel %vm1781, %v5498, %v5502
        %v5505 = vshrl.u32 %v5141, 16
        %v5507 = vrot.slane %v5505, 4
        %v5508 = vshll.u32 %v5141, 16
        %v5510 = vrot.slane %v5508, 5
        %v5511 = vor.u32 %v5507, %v5510
        %v5512 = vrot.slane %v5511, 4
        %v5514 = vshll.u32 %v5142, 16
        %v5516 = vrot.slane %v5514, 5
        %v5517 = vsel %vm1781, %v5512, %v5516
        %v5518 = vshrl.u32 %v5142, 16
        %v5520 = vrot.slane %v5518, 4
        %v5521 = vor.u32 %v5520, %v5516
        %v5522 = vrot.slane %v5521, 4
        %v5524 = vshll.u32 %v5143, 16
        %v5526 = vrot.slane %v5524, 5
        %v5527 = vsel %vm1781, %v5522, %v5526
        %v5528 = vld [vmem:[%s4 + $0xc] sm:$0xc]
        %v5529 = vunpack.c.l.b16 %v5157
        %v5530 = vunpack.c.l.b16 %v5167
        %v5531 = vunpack.c.l.b16 %v5181
        %v5532 = vunpack.c.l.b16 %v5191
        %v5533 = vunpack.c.l.b16 %v5205
        %v5534 = vunpack.c.l.b16 %v5215
        %v5535 = vunpack.c.l.b16 %v5229
        %v5536 = vunpack.c.l.b16 %v5239
        %v5537 = vunpack.c.l.b16 %v5253
        %v5538 = vunpack.c.l.b16 %v5263
        %v5539 = vunpack.c.l.b16 %v5277
        %v5540 = vunpack.c.l.b16 %v5287
        %v5541 = vunpack.c.l.b16 %v5301
        %v5542 = vunpack.c.l.b16 %v5311
        %v5543 = vunpack.c.l.b16 %v5325
        %v5544 = vunpack.c.l.b16 %v5335
        %v5545 = vunpack.c.l.b16 %v5349
        %v5546 = vunpack.c.l.b16 %v5359
        %v5547 = vunpack.c.l.b16 %v5373
        %v5548 = vunpack.c.l.b16 %v5383
        %v5549 = vunpack.c.l.b16 %v5397
        %v5550 = vunpack.c.l.b16 %v5407
        %v5551 = vunpack.c.l.b16 %v5421
        %v5552 = vunpack.c.l.b16 %v5431
        %v5553 = vunpack.c.l.b16 %v5445
        %v5554 = vunpack.c.l.b16 %v5455
        %v5555 = vunpack.c.l.b16 %v5469
        %v5556 = vunpack.c.l.b16 %v5479
        %v5557 = vunpack.c.l.b16 %v5493
        %v5558 = vunpack.c.l.b16 %v5503
        %v5559 = vunpack.c.l.b16 %v5517
        %v5560 = vunpack.c.l.b16 %v5527
        %v5561 = vpack.c.b16 %v5530, %v5529
        %v5562 = vpack.c.b16 %v5532, %v5531
        %v5563 = vpack.c.b16 %v5534, %v5533
        %v5564 = vpack.c.b16 %v5536, %v5535
        %v5565 = vpack.c.b16 %v5538, %v5537
        %v5566 = vpack.c.b16 %v5540, %v5539
        %v5567 = vpack.c.b16 %v5542, %v5541
        %v5568 = vpack.c.b16 %v5544, %v5543
        %v5569 = vpack.c.b16 %v5546, %v5545
        %v5570 = vpack.c.b16 %v5548, %v5547
        %v5571 = vpack.c.b16 %v5550, %v5549
        %v5572 = vpack.c.b16 %v5552, %v5551
        %v5573 = vpack.c.b16 %v5554, %v5553
        %v5574 = vpack.c.b16 %v5556, %v5555
        %v5575 = vpack.c.b16 %v5558, %v5557
        %v5576 = vpack.c.b16 %v5560, %v5559
        %v5578 = vunpack.c.l.b16 %v5528
        %v5579 = vpack.c.b16 %v5578, %v5578
        %v5580 = vrot.slane %v5579, 2
        %v5582 = vsel %vm553, %v5561, 0
        %v5585 = vsel %vm553, %v5562, 0
        %v5588 = vsel %vm553, %v5563, 0
        %v5591 = vsel %vm553, %v5564, 0
        %v5594 = vsel %vm553, %v5565, 0
        %v5597 = vsel %vm553, %v5566, 0
        %v5600 = vsel %vm553, %v5567, 0
        %v5603 = vsel %vm553, %v5568, 0
        %v5606 = vsel %vm553, %v5569, 0
        %v5609 = vsel %vm553, %v5570, 0
        %v5612 = vsel %vm553, %v5571, 0
        %v5615 = vsel %vm553, %v5572, 0
        %v5618 = vsel %vm553, %v5573, 0
        %v5621 = vsel %vm553, %v5574, 0
        %v5624 = vsel %vm553, %v5575, 0
        %v5627 = vsel %vm553, %v5576, 0
        %v5630 = vsel %vm602, %v5580, 0
        %5632 = vmatprep.subr.bf16.mxu0 0
        %5633 = vmatpush1.bf16.msra.mxu0 0
        %5634 = vmatprep.subr.bf16.mxu0 0
        %5635 = vmatpush1.bf16.msra.mxu0 0
        %5636 = vmatprep.subr.bf16.mxu0 0
        %5637 = vmatpush1.bf16.msra.mxu0 0
        %5638 = vmatprep.subr.bf16.mxu0 0
        %5639 = vmatpush1.bf16.msra.mxu0 0
        %5640 = vmatprep.subr.bf16.mxu0 0
        %5641 = vmatpush1.bf16.msra.mxu0 0
        %5642 = vmatprep.subr.bf16.mxu0 0
        %5643 = vmatpush1.bf16.msra.mxu0 0
        %5644 = vmatprep.subr.bf16.mxu0 0
        %5645 = vmatpush1.bf16.msra.mxu0 0
        %5646 = vmatprep.subr.bf16.mxu0 0
        %5647 = vmatpush1.bf16.msra.mxu0 %v5630
        %5648 = vmatprep.subr.bf16.mxu0 0
        %5649 = vmatpush2.bf16.msra.mxu0 0
        %5650 = vmatprep.subr.bf16.mxu0 0
        %5651 = vmatpush2.bf16.msra.mxu0 0
        %5652 = vmatprep.subr.bf16.mxu0 0
        %5653 = vmatpush2.bf16.msra.mxu0 0
        %5654 = vmatprep.subr.bf16.mxu0 0
        %5655 = vmatpush2.bf16.msra.mxu0 0
        %5656 = vmatprep.subr.bf16.mxu0 0
        %5657 = vmatpush2.bf16.msra.mxu0 0
        %5658 = vmatprep.subr.bf16.mxu0 0
        %5659 = vmatpush2.bf16.msra.mxu0 0
        %5660 = vmatprep.subr.bf16.mxu0 0
        %5661 = vmatpush2.bf16.msra.mxu0 0
        %5662 = vmatprep.subr.bf16.mxu0 0
        %5663 = vmatpush2.bf16.msra.mxu0 0
        %5664 = vmatprep.mubr.bf16.mxu0 0
        %5665 = vmatmul.mubr.bf16.gmra.mxu0 %v5582
        %v5666 = vpop.f32.mrf.mxu0
        %v5667 = vadd.f32 0.0, %v5666
        %v5668 = vpop.f32.mrf.mxu0
        %v5669 = vpop.f32.mrf.mxu0
        %v5670 = vadd.f32 0.0, %v5669
        %v5671 = vpop.f32.mrf.mxu0
        %5672 = vmatprep.mubr.bf16.mxu0 0
        %5673 = vmatmul.mubr.bf16.gmra.mxu0 %v5585
        %v5674 = vpop.f32.mrf.mxu0
        %v5675 = vadd.f32 0.0, %v5674
        %v5676 = vpop.f32.mrf.mxu0
        %v5677 = vpop.f32.mrf.mxu0
        %v5678 = vadd.f32 0.0, %v5677
        %v5679 = vpop.f32.mrf.mxu0
        %5680 = vmatprep.mubr.bf16.mxu0 0
        %5681 = vmatmul.mubr.bf16.gmra.mxu0 %v5588
        %v5682 = vpop.f32.mrf.mxu0
        %v5683 = vadd.f32 0.0, %v5682
        %v5684 = vpop.f32.mrf.mxu0
        %v5685 = vpop.f32.mrf.mxu0
        %v5686 = vadd.f32 0.0, %v5685
        %v5687 = vpop.f32.mrf.mxu0
        %5688 = vmatprep.mubr.bf16.mxu0 0
        %5689 = vmatmul.mubr.bf16.gmra.mxu0 %v5591
        %v5690 = vpop.f32.mrf.mxu0
        %v5691 = vadd.f32 0.0, %v5690
        %v5692 = vpop.f32.mrf.mxu0
        %v5693 = vpop.f32.mrf.mxu0
        %v5694 = vadd.f32 0.0, %v5693
        %v5695 = vpop.f32.mrf.mxu0
        %5696 = vmatprep.mubr.bf16.mxu0 0
        %5697 = vmatmul.mubr.bf16.gmra.mxu0 %v5594
        %v5698 = vpop.f32.mrf.mxu0
        %v5699 = vadd.f32 0.0, %v5698
        %v5700 = vpop.f32.mrf.mxu0
        %v5701 = vpop.f32.mrf.mxu0
        %v5702 = vadd.f32 0.0, %v5701
        %v5703 = vpop.f32.mrf.mxu0
        %5704 = vmatprep.mubr.bf16.mxu0 0
        %5705 = vmatmul.mubr.bf16.gmra.mxu0 %v5597
        %v5706 = vpop.f32.mrf.mxu0
        %v5707 = vadd.f32 0.0, %v5706
        %v5708 = vpop.f32.mrf.mxu0
        %v5709 = vpop.f32.mrf.mxu0
        %v5710 = vadd.f32 0.0, %v5709
        %v5711 = vpop.f32.mrf.mxu0
        %5712 = vmatprep.mubr.bf16.mxu0 0
        %5713 = vmatmul.mubr.bf16.gmra.mxu0 %v5600
        %v5714 = vpop.f32.mrf.mxu0
        %v5715 = vadd.f32 0.0, %v5714
        %v5716 = vpop.f32.mrf.mxu0
        %v5717 = vpop.f32.mrf.mxu0
        %v5718 = vadd.f32 0.0, %v5717
        %v5719 = vpop.f32.mrf.mxu0
        %5720 = vmatprep.mubr.bf16.mxu0 0
        %5721 = vmatmul.mubr.bf16.gmra.mxu0 %v5603
        %v5722 = vpop.f32.mrf.mxu0
        %v5723 = vadd.f32 0.0, %v5722
        %v5724 = vpop.f32.mrf.mxu0
        %v5725 = vpop.f32.mrf.mxu0
        %v5726 = vadd.f32 0.0, %v5725
        %v5727 = vpop.f32.mrf.mxu0
        %5728 = vmatprep.mubr.bf16.mxu0 0
        %5729 = vmatmul.mubr.bf16.gmra.mxu0 %v5606
        %v5730 = vpop.f32.mrf.mxu0
        %v5731 = vadd.f32 0.0, %v5730
        %v5732 = vpop.f32.mrf.mxu0
        %v5733 = vpop.f32.mrf.mxu0
        %v5734 = vadd.f32 0.0, %v5733
        %v5735 = vpop.f32.mrf.mxu0
        %5736 = vmatprep.mubr.bf16.mxu0 0
        %5737 = vmatmul.mubr.bf16.gmra.mxu0 %v5609
        %v5738 = vpop.f32.mrf.mxu0
        %v5739 = vadd.f32 0.0, %v5738
        %v5740 = vpop.f32.mrf.mxu0
        %v5741 = vpop.f32.mrf.mxu0
        %v5742 = vadd.f32 0.0, %v5741
        %v5743 = vpop.f32.mrf.mxu0
        %5744 = vmatprep.mubr.bf16.mxu0 0
        %5745 = vmatmul.mubr.bf16.gmra.mxu0 %v5612
        %v5746 = vpop.f32.mrf.mxu0
        %v5747 = vadd.f32 0.0, %v5746
        %v5748 = vpop.f32.mrf.mxu0
        %v5749 = vpop.f32.mrf.mxu0
        %v5750 = vadd.f32 0.0, %v5749
        %v5751 = vpop.f32.mrf.mxu0
        %5752 = vmatprep.mubr.bf16.mxu0 0
        %5753 = vmatmul.mubr.bf16.gmra.mxu0 %v5615
        %v5754 = vpop.f32.mrf.mxu0
        %v5755 = vadd.f32 0.0, %v5754
        %v5756 = vpop.f32.mrf.mxu0
        %v5757 = vpop.f32.mrf.mxu0
        %v5758 = vadd.f32 0.0, %v5757
        %v5759 = vpop.f32.mrf.mxu0
        %5760 = vmatprep.mubr.bf16.mxu0 0
        %5761 = vmatmul.mubr.bf16.gmra.mxu0 %v5618
        %v5762 = vpop.f32.mrf.mxu0
        %v5763 = vadd.f32 0.0, %v5762
        %v5764 = vpop.f32.mrf.mxu0
        %v5765 = vpop.f32.mrf.mxu0
        %v5766 = vadd.f32 0.0, %v5765
        %v5767 = vpop.f32.mrf.mxu0
        %5768 = vmatprep.mubr.bf16.mxu0 0
        %5769 = vmatmul.mubr.bf16.gmra.mxu0 %v5621
        %v5770 = vpop.f32.mrf.mxu0
        %v5771 = vadd.f32 0.0, %v5770
        %v5772 = vpop.f32.mrf.mxu0
        %v5773 = vpop.f32.mrf.mxu0
        %v5774 = vadd.f32 0.0, %v5773
        %v5775 = vpop.f32.mrf.mxu0
        %5776 = vmatprep.mubr.bf16.mxu0 0
        %5777 = vmatmul.mubr.bf16.gmra.mxu0 %v5624
        %v5778 = vpop.f32.mrf.mxu0
        %v5779 = vadd.f32 0.0, %v5778
        %v5780 = vpop.f32.mrf.mxu0
        %v5781 = vpop.f32.mrf.mxu0
        %v5782 = vadd.f32 0.0, %v5781
        %v5783 = vpop.f32.mrf.mxu0
        %5784 = vmatprep.mubr.bf16.mxu0 0
        %5785 = vmatmul.mubr.bf16.gmra.mxu0 %v5627
        %v5786 = vpop.f32.mrf.mxu0
        %v5787 = vadd.f32 0.0, %v5786
        %v5788 = vpop.f32.mrf.mxu0
        %v5789 = vpop.f32.mrf.mxu0
        %v5790 = vadd.f32 0.0, %v5789
        %v5791 = vpop.f32.mrf.mxu0
        %5792 = vdwg.mxu0
        %v5793 = vadd.f32 %v5064, %v5667
        %v5794 = vadd.f32 %v5065, %v5670
        %v5795 = vadd.f32 %v5066, %v5675
        %v5796 = vadd.f32 %v5067, %v5678
        %v5797 = vadd.f32 %v5068, %v5683
        %v5798 = vadd.f32 %v5069, %v5686
        %v5799 = vadd.f32 %v5070, %v5691
        %v5800 = vadd.f32 %v5071, %v5694
        %v5801 = vadd.f32 %v5072, %v5699
        %v5802 = vadd.f32 %v5073, %v5702
        %v5803 = vadd.f32 %v5074, %v5707
        %v5804 = vadd.f32 %v5075, %v5710
        %v5805 = vadd.f32 %v5076, %v5715
        %v5806 = vadd.f32 %v5077, %v5718
        %v5807 = vadd.f32 %v5078, %v5723
        %v5808 = vadd.f32 %v5079, %v5726
        %v5809 = vadd.f32 %v5080, %v5731
        %v5810 = vadd.f32 %v5081, %v5734
        %v5811 = vadd.f32 %v5082, %v5739
        %v5812 = vadd.f32 %v5083, %v5742
        %v5813 = vadd.f32 %v5084, %v5747
        %v5814 = vadd.f32 %v5085, %v5750
        %v5815 = vadd.f32 %v5086, %v5755
        %v5816 = vadd.f32 %v5087, %v5758
        %v5817 = vadd.f32 %v5088, %v5763
        %v5818 = vadd.f32 %v5089, %v5766
        %v5819 = vadd.f32 %v5090, %v5771
        %v5820 = vadd.f32 %v5091, %v5774
        %v5821 = vadd.f32 %v5092, %v5779
        %v5822 = vadd.f32 %v5093, %v5782
        %v5823 = vadd.f32 %v5094, %v5787
        %v5824 = vadd.f32 %v5095, %v5790
        %v5825 = vld [vmem:[%s4738] sm:$0xe]
        %v5826 = vld [vmem:[%s4738 + $0xc] sm:$0xe]
        %v5827 = vld [vmem:[%s4738 + $0x18] sm:$0xe]
        %v5828 = vld [vmem:[%s4738 + $0x24] sm:$0xe]
        %v5829 = vld [vmem:[%s4738 + $0x30] sm:$0xe]
        %v5830 = vld [vmem:[%s4738 + $0x3c] sm:$0xe]
        %v5831 = vld [vmem:[%s4738 + $0x48] sm:$0xe]
        %v5832 = vld [vmem:[%s4738 + $0x54] sm:$0xe]
        %v5833 = vld [vmem:[%s4738 + $0x60] sm:$0xe]
        %v5834 = vld [vmem:[%s4738 + $0x6c] sm:$0xe]
        %v5835 = vld [vmem:[%s4738 + $0x78] sm:$0xe]
        %v5836 = vld [vmem:[%s4738 + $0x84] sm:$0xe]
        %v5837 = vld [vmem:[%s4738 + $0x90] sm:$0xe]
        %v5838 = vld [vmem:[%s4738 + $0x9c] sm:$0xe]
        %v5839 = vld [vmem:[%s4738 + $0xa8] sm:$0xe]
        %v5840 = vld [vmem:[%s4738 + $0xb4] sm:$0xe]
        %v5889 = vrot.slane %v5825, 5
        %v5890 = vrot.slane %v5889, 4
        %v5891 = vrot.slane %v5097, 5
        %v5892 = vsel %vm2773, %v5890, %v5891
        %v5893 = vrot.slane %v5891, 4
        %v5894 = vrot.slane %v5098, 5
        %v5895 = vsel %vm2773, %v5893, %v5894
        %v5896 = vrot.slane %v5826, 5
        %v5897 = vrot.slane %v5896, 4
        %v5898 = vrot.slane %v5100, 5
        %v5899 = vsel %vm2773, %v5897, %v5898
        %v5900 = vrot.slane %v5898, 4
        %v5901 = vrot.slane %v5101, 5
        %v5902 = vsel %vm2773, %v5900, %v5901
        %v5903 = vrot.slane %v5827, 5
        %v5904 = vrot.slane %v5903, 4
        %v5905 = vrot.slane %v5103, 5
        %v5906 = vsel %vm2773, %v5904, %v5905
        %v5907 = vrot.slane %v5905, 4
        %v5908 = vrot.slane %v5104, 5
        %v5909 = vsel %vm2773, %v5907, %v5908
        %v5910 = vrot.slane %v5828, 5
        %v5911 = vrot.slane %v5910, 4
        %v5912 = vrot.slane %v5106, 5
        %v5913 = vsel %vm2773, %v5911, %v5912
        %v5914 = vrot.slane %v5912, 4
        %v5915 = vrot.slane %v5107, 5
        %v5916 = vsel %vm2773, %v5914, %v5915
        %v5917 = vrot.slane %v5829, 5
        %v5918 = vrot.slane %v5917, 4
        %v5919 = vrot.slane %v5109, 5
        %v5920 = vsel %vm2773, %v5918, %v5919
        %v5921 = vrot.slane %v5919, 4
        %v5922 = vrot.slane %v5110, 5
        %v5923 = vsel %vm2773, %v5921, %v5922
        %v5924 = vrot.slane %v5830, 5
        %v5925 = vrot.slane %v5924, 4
        %v5926 = vrot.slane %v5112, 5
        %v5927 = vsel %vm2773, %v5925, %v5926
        %v5928 = vrot.slane %v5926, 4
        %v5929 = vrot.slane %v5113, 5
        %v5930 = vsel %vm2773, %v5928, %v5929
        %v5931 = vrot.slane %v5831, 5
        %v5932 = vrot.slane %v5931, 4
        %v5933 = vrot.slane %v5115, 5
        %v5934 = vsel %vm2773, %v5932, %v5933
        %v5935 = vrot.slane %v5933, 4
        %v5936 = vrot.slane %v5116, 5
        %v5937 = vsel %vm2773, %v5935, %v5936
        %v5938 = vrot.slane %v5832, 5
        %v5939 = vrot.slane %v5938, 4
        %v5940 = vrot.slane %v5118, 5
        %v5941 = vsel %vm2773, %v5939, %v5940
        %v5942 = vrot.slane %v5940, 4
        %v5943 = vrot.slane %v5119, 5
        %v5944 = vsel %vm2773, %v5942, %v5943
        %v5945 = vrot.slane %v5833, 5
        %v5946 = vrot.slane %v5945, 4
        %v5947 = vrot.slane %v5121, 5
        %v5948 = vsel %vm2773, %v5946, %v5947
        %v5949 = vrot.slane %v5947, 4
        %v5950 = vrot.slane %v5122, 5
        %v5951 = vsel %vm2773, %v5949, %v5950
        %v5952 = vrot.slane %v5834, 5
        %v5953 = vrot.slane %v5952, 4
        %v5954 = vrot.slane %v5124, 5
        %v5955 = vsel %vm2773, %v5953, %v5954
        %v5956 = vrot.slane %v5954, 4
        %v5957 = vrot.slane %v5125, 5
        %v5958 = vsel %vm2773, %v5956, %v5957
        %v5959 = vrot.slane %v5835, 5
        %v5960 = vrot.slane %v5959, 4
        %v5961 = vrot.slane %v5127, 5
        %v5962 = vsel %vm2773, %v5960, %v5961
        %v5963 = vrot.slane %v5961, 4
        %v5964 = vrot.slane %v5128, 5
        %v5965 = vsel %vm2773, %v5963, %v5964
        %v5966 = vrot.slane %v5836, 5
        %v5967 = vrot.slane %v5966, 4
        %v5968 = vrot.slane %v5130, 5
        %v5969 = vsel %vm2773, %v5967, %v5968
        %v5970 = vrot.slane %v5968, 4
        %v5971 = vrot.slane %v5131, 5
        %v5972 = vsel %vm2773, %v5970, %v5971
        %v5973 = vrot.slane %v5837, 5
        %v5974 = vrot.slane %v5973, 4
        %v5975 = vrot.slane %v5133, 5
        %v5976 = vsel %vm2773, %v5974, %v5975
        %v5977 = vrot.slane %v5975, 4
        %v5978 = vrot.slane %v5134, 5
        %v5979 = vsel %vm2773, %v5977, %v5978
        %v5980 = vrot.slane %v5838, 5
        %v5981 = vrot.slane %v5980, 4
        %v5982 = vrot.slane %v5136, 5
        %v5983 = vsel %vm2773, %v5981, %v5982
        %v5984 = vrot.slane %v5982, 4
        %v5985 = vrot.slane %v5137, 5
        %v5986 = vsel %vm2773, %v5984, %v5985
        %v5987 = vrot.slane %v5839, 5
        %v5988 = vrot.slane %v5987, 4
        %v5989 = vrot.slane %v5139, 5
        %v5990 = vsel %vm2773, %v5988, %v5989
        %v5991 = vrot.slane %v5989, 4
        %v5992 = vrot.slane %v5140, 5
        %v5993 = vsel %vm2773, %v5991, %v5992
        %v5994 = vrot.slane %v5840, 5
        %v5995 = vrot.slane %v5994, 4
        %v5996 = vrot.slane %v5142, 5
        %v5997 = vsel %vm2773, %v5995, %v5996
        %v5998 = vrot.slane %v5996, 4
        %v5999 = vrot.slane %v5143, 5
        %v6000 = vsel %vm2773, %v5998, %v5999
        %v6001 = vld [vmem:[%s4 + $0x10] sm:$0x3]
        %v6002 = vunpack.c.l.b16 %v5892
        %v6003 = vunpack.c.l.b16 %v5895
        %v6004 = vunpack.c.l.b16 %v5899
        %v6005 = vunpack.c.l.b16 %v5902
        %v6006 = vunpack.c.l.b16 %v5906
        %v6007 = vunpack.c.l.b16 %v5909
        %v6008 = vunpack.c.l.b16 %v5913
        %v6009 = vunpack.c.l.b16 %v5916
        %v6010 = vunpack.c.l.b16 %v5920
        %v6011 = vunpack.c.l.b16 %v5923
        %v6012 = vunpack.c.l.b16 %v5927
        %v6013 = vunpack.c.l.b16 %v5930
        %v6014 = vunpack.c.l.b16 %v5934
        %v6015 = vunpack.c.l.b16 %v5937
        %v6016 = vunpack.c.l.b16 %v5941
        %v6017 = vunpack.c.l.b16 %v5944
        %v6018 = vunpack.c.l.b16 %v5948
        %v6019 = vunpack.c.l.b16 %v5951
        %v6020 = vunpack.c.l.b16 %v5955
        %v6021 = vunpack.c.l.b16 %v5958
        %v6022 = vunpack.c.l.b16 %v5962
        %v6023 = vunpack.c.l.b16 %v5965
        %v6024 = vunpack.c.l.b16 %v5969
        %v6025 = vunpack.c.l.b16 %v5972
        %v6026 = vunpack.c.l.b16 %v5976
        %v6027 = vunpack.c.l.b16 %v5979
        %v6028 = vunpack.c.l.b16 %v5983
        %v6029 = vunpack.c.l.b16 %v5986
        %v6030 = vunpack.c.l.b16 %v5990
        %v6031 = vunpack.c.l.b16 %v5993
        %v6032 = vunpack.c.l.b16 %v5997
        %v6033 = vunpack.c.l.b16 %v6000
        %v6034 = vpack.c.b16 %v6003, %v6002
        %v6035 = vpack.c.b16 %v6005, %v6004
        %v6036 = vpack.c.b16 %v6007, %v6006
        %v6037 = vpack.c.b16 %v6009, %v6008
        %v6038 = vpack.c.b16 %v6011, %v6010
        %v6039 = vpack.c.b16 %v6013, %v6012
        %v6040 = vpack.c.b16 %v6015, %v6014
        %v6041 = vpack.c.b16 %v6017, %v6016
        %v6042 = vpack.c.b16 %v6019, %v6018
        %v6043 = vpack.c.b16 %v6021, %v6020
        %v6044 = vpack.c.b16 %v6023, %v6022
        %v6045 = vpack.c.b16 %v6025, %v6024
        %v6046 = vpack.c.b16 %v6027, %v6026
        %v6047 = vpack.c.b16 %v6029, %v6028
        %v6048 = vpack.c.b16 %v6031, %v6030
        %v6049 = vpack.c.b16 %v6033, %v6032
        %v6051 = vsel %vm553, %v6034, 0
        %v6054 = vsel %vm553, %v6035, 0
        %v6057 = vsel %vm553, %v6036, 0
        %v6060 = vsel %vm553, %v6037, 0
        %v6063 = vsel %vm553, %v6038, 0
        %v6066 = vsel %vm553, %v6039, 0
        %v6069 = vsel %vm553, %v6040, 0
        %v6072 = vsel %vm553, %v6041, 0
        %v6075 = vsel %vm553, %v6042, 0
        %v6078 = vsel %vm553, %v6043, 0
        %v6081 = vsel %vm553, %v6044, 0
        %v6084 = vsel %vm553, %v6045, 0
        %v6087 = vsel %vm553, %v6046, 0
        %v6090 = vsel %vm553, %v6047, 0
        %v6093 = vsel %vm553, %v6048, 0
        %v6096 = vsel %vm553, %v6049, 0
        %v6099 = vsel %vm602, %v6001, 0
        %6101 = vmatprep.subr.bf16.mxu0 0
        %6102 = vmatpush1.bf16.msra.mxu0 0
        %6103 = vmatprep.subr.bf16.mxu0 0
        %6104 = vmatpush1.bf16.msra.mxu0 0
        %6105 = vmatprep.subr.bf16.mxu0 0
        %6106 = vmatpush1.bf16.msra.mxu0 0
        %6107 = vmatprep.subr.bf16.mxu0 0
        %6108 = vmatpush1.bf16.msra.mxu0 0
        %6109 = vmatprep.subr.bf16.mxu0 0
        %6110 = vmatpush1.bf16.msra.mxu0 0
        %6111 = vmatprep.subr.bf16.mxu0 0
        %6112 = vmatpush1.bf16.msra.mxu0 0
        %6113 = vmatprep.subr.bf16.mxu0 0
        %6114 = vmatpush1.bf16.msra.mxu0 0
        %6115 = vmatprep.subr.bf16.mxu0 0
        %6116 = vmatpush1.bf16.msra.mxu0 %v6099
        %6117 = vmatprep.subr.bf16.mxu0 0
        %6118 = vmatpush2.bf16.msra.mxu0 0
        %6119 = vmatprep.subr.bf16.mxu0 0
        %6120 = vmatpush2.bf16.msra.mxu0 0
        %6121 = vmatprep.subr.bf16.mxu0 0
        %6122 = vmatpush2.bf16.msra.mxu0 0
        %6123 = vmatprep.subr.bf16.mxu0 0
        %6124 = vmatpush2.bf16.msra.mxu0 0
        %6125 = vmatprep.subr.bf16.mxu0 0
        %6126 = vmatpush2.bf16.msra.mxu0 0
        %6127 = vmatprep.subr.bf16.mxu0 0
        %6128 = vmatpush2.bf16.msra.mxu0 0
        %6129 = vmatprep.subr.bf16.mxu0 0
        %6130 = vmatpush2.bf16.msra.mxu0 0
        %6131 = vmatprep.subr.bf16.mxu0 0
        %6132 = vmatpush2.bf16.msra.mxu0 0
        %6133 = vmatprep.mubr.bf16.mxu0 0
        %6134 = vmatmul.mubr.bf16.gmra.mxu0 %v6051
        %v6135 = vpop.f32.mrf.mxu0
        %v6136 = vadd.f32 0.0, %v6135
        %v6137 = vpop.f32.mrf.mxu0
        %v6138 = vpop.f32.mrf.mxu0
        %v6139 = vadd.f32 0.0, %v6138
        %v6140 = vpop.f32.mrf.mxu0
        %6141 = vmatprep.mubr.bf16.mxu0 0
        %6142 = vmatmul.mubr.bf16.gmra.mxu0 %v6054
        %v6143 = vpop.f32.mrf.mxu0
        %v6144 = vadd.f32 0.0, %v6143
        %v6145 = vpop.f32.mrf.mxu0
        %v6146 = vpop.f32.mrf.mxu0
        %v6147 = vadd.f32 0.0, %v6146
        %v6148 = vpop.f32.mrf.mxu0
        %6149 = vmatprep.mubr.bf16.mxu0 0
        %6150 = vmatmul.mubr.bf16.gmra.mxu0 %v6057
        %v6151 = vpop.f32.mrf.mxu0
        %v6152 = vadd.f32 0.0, %v6151
        %v6153 = vpop.f32.mrf.mxu0
        %v6154 = vpop.f32.mrf.mxu0
        %v6155 = vadd.f32 0.0, %v6154
        %v6156 = vpop.f32.mrf.mxu0
        %6157 = vmatprep.mubr.bf16.mxu0 0
        %6158 = vmatmul.mubr.bf16.gmra.mxu0 %v6060
        %v6159 = vpop.f32.mrf.mxu0
        %v6160 = vadd.f32 0.0, %v6159
        %v6161 = vpop.f32.mrf.mxu0
        %v6162 = vpop.f32.mrf.mxu0
        %v6163 = vadd.f32 0.0, %v6162
        %v6164 = vpop.f32.mrf.mxu0
        %6165 = vmatprep.mubr.bf16.mxu0 0
        %6166 = vmatmul.mubr.bf16.gmra.mxu0 %v6063
        %v6167 = vpop.f32.mrf.mxu0
        %v6168 = vadd.f32 0.0, %v6167
        %v6169 = vpop.f32.mrf.mxu0
        %v6170 = vpop.f32.mrf.mxu0
        %v6171 = vadd.f32 0.0, %v6170
        %v6172 = vpop.f32.mrf.mxu0
        %6173 = vmatprep.mubr.bf16.mxu0 0
        %6174 = vmatmul.mubr.bf16.gmra.mxu0 %v6066
        %v6175 = vpop.f32.mrf.mxu0
        %v6176 = vadd.f32 0.0, %v6175
        %v6177 = vpop.f32.mrf.mxu0
        %v6178 = vpop.f32.mrf.mxu0
        %v6179 = vadd.f32 0.0, %v6178
        %v6180 = vpop.f32.mrf.mxu0
        %6181 = vmatprep.mubr.bf16.mxu0 0
        %6182 = vmatmul.mubr.bf16.gmra.mxu0 %v6069
        %v6183 = vpop.f32.mrf.mxu0
        %v6184 = vadd.f32 0.0, %v6183
        %v6185 = vpop.f32.mrf.mxu0
        %v6186 = vpop.f32.mrf.mxu0
        %v6187 = vadd.f32 0.0, %v6186
        %v6188 = vpop.f32.mrf.mxu0
        %6189 = vmatprep.mubr.bf16.mxu0 0
        %6190 = vmatmul.mubr.bf16.gmra.mxu0 %v6072
        %v6191 = vpop.f32.mrf.mxu0
        %v6192 = vadd.f32 0.0, %v6191
        %v6193 = vpop.f32.mrf.mxu0
        %v6194 = vpop.f32.mrf.mxu0
        %v6195 = vadd.f32 0.0, %v6194
        %v6196 = vpop.f32.mrf.mxu0
        %6197 = vmatprep.mubr.bf16.mxu0 0
        %6198 = vmatmul.mubr.bf16.gmra.mxu0 %v6075
        %v6199 = vpop.f32.mrf.mxu0
        %v6200 = vadd.f32 0.0, %v6199
        %v6201 = vpop.f32.mrf.mxu0
        %v6202 = vpop.f32.mrf.mxu0
        %v6203 = vadd.f32 0.0, %v6202
        %v6204 = vpop.f32.mrf.mxu0
        %6205 = vmatprep.mubr.bf16.mxu0 0
        %6206 = vmatmul.mubr.bf16.gmra.mxu0 %v6078
        %v6207 = vpop.f32.mrf.mxu0
        %v6208 = vadd.f32 0.0, %v6207
        %v6209 = vpop.f32.mrf.mxu0
        %v6210 = vpop.f32.mrf.mxu0
        %v6211 = vadd.f32 0.0, %v6210
        %v6212 = vpop.f32.mrf.mxu0
        %6213 = vmatprep.mubr.bf16.mxu0 0
        %6214 = vmatmul.mubr.bf16.gmra.mxu0 %v6081
        %v6215 = vpop.f32.mrf.mxu0
        %v6216 = vadd.f32 0.0, %v6215
        %v6217 = vpop.f32.mrf.mxu0
        %v6218 = vpop.f32.mrf.mxu0
        %v6219 = vadd.f32 0.0, %v6218
        %v6220 = vpop.f32.mrf.mxu0
        %6221 = vmatprep.mubr.bf16.mxu0 0
        %6222 = vmatmul.mubr.bf16.gmra.mxu0 %v6084
        %v6223 = vpop.f32.mrf.mxu0
        %v6224 = vadd.f32 0.0, %v6223
        %v6225 = vpop.f32.mrf.mxu0
        %v6226 = vpop.f32.mrf.mxu0
        %v6227 = vadd.f32 0.0, %v6226
        %v6228 = vpop.f32.mrf.mxu0
        %6229 = vmatprep.mubr.bf16.mxu0 0
        %6230 = vmatmul.mubr.bf16.gmra.mxu0 %v6087
        %v6231 = vpop.f32.mrf.mxu0
        %v6232 = vadd.f32 0.0, %v6231
        %v6233 = vpop.f32.mrf.mxu0
        %v6234 = vpop.f32.mrf.mxu0
        %v6235 = vadd.f32 0.0, %v6234
        %v6236 = vpop.f32.mrf.mxu0
        %6237 = vmatprep.mubr.bf16.mxu0 0
        %6238 = vmatmul.mubr.bf16.gmra.mxu0 %v6090
        %v6239 = vpop.f32.mrf.mxu0
        %v6240 = vadd.f32 0.0, %v6239
        %v6241 = vpop.f32.mrf.mxu0
        %v6242 = vpop.f32.mrf.mxu0
        %v6243 = vadd.f32 0.0, %v6242
        %v6244 = vpop.f32.mrf.mxu0
        %6245 = vmatprep.mubr.bf16.mxu0 0
        %6246 = vmatmul.mubr.bf16.gmra.mxu0 %v6093
        %v6247 = vpop.f32.mrf.mxu0
        %v6248 = vadd.f32 0.0, %v6247
        %v6249 = vpop.f32.mrf.mxu0
        %v6250 = vpop.f32.mrf.mxu0
        %v6251 = vadd.f32 0.0, %v6250
        %v6252 = vpop.f32.mrf.mxu0
        %6253 = vmatprep.mubr.bf16.mxu0 0
        %6254 = vmatmul.mubr.bf16.gmra.mxu0 %v6096
        %v6255 = vpop.f32.mrf.mxu0
        %v6256 = vadd.f32 0.0, %v6255
        %v6257 = vpop.f32.mrf.mxu0
        %v6258 = vpop.f32.mrf.mxu0
        %v6259 = vadd.f32 0.0, %v6258
        %v6260 = vpop.f32.mrf.mxu0
        %6261 = vdwg.mxu0
        %v6262 = vadd.f32 %v5793, %v6136
        %v6263 = vadd.f32 %v5794, %v6139
        %v6264 = vadd.f32 %v5795, %v6144
        %v6265 = vadd.f32 %v5796, %v6147
        %v6266 = vadd.f32 %v5797, %v6152
        %v6267 = vadd.f32 %v5798, %v6155
        %v6268 = vadd.f32 %v5799, %v6160
        %v6269 = vadd.f32 %v5800, %v6163
        %v6270 = vadd.f32 %v5801, %v6168
        %v6271 = vadd.f32 %v5802, %v6171
        %v6272 = vadd.f32 %v5803, %v6176
        %v6273 = vadd.f32 %v5804, %v6179
        %v6274 = vadd.f32 %v5805, %v6184
        %v6275 = vadd.f32 %v5806, %v6187
        %v6276 = vadd.f32 %v5807, %v6192
        %v6277 = vadd.f32 %v5808, %v6195
        %v6278 = vadd.f32 %v5809, %v6200
        %v6279 = vadd.f32 %v5810, %v6203
        %v6280 = vadd.f32 %v5811, %v6208
        %v6281 = vadd.f32 %v5812, %v6211
        %v6282 = vadd.f32 %v5813, %v6216
        %v6283 = vadd.f32 %v5814, %v6219
        %v6284 = vadd.f32 %v5815, %v6224
        %v6285 = vadd.f32 %v5816, %v6227
        %v6286 = vadd.f32 %v5817, %v6232
        %v6287 = vadd.f32 %v5818, %v6235
        %v6288 = vadd.f32 %v5819, %v6240
        %v6289 = vadd.f32 %v5820, %v6243
        %v6290 = vadd.f32 %v5821, %v6248
        %v6291 = vadd.f32 %v5822, %v6251
        %v6292 = vadd.f32 %v5823, %v6256
        %v6293 = vadd.f32 %v5824, %v6259
        %v6294 = vld [vmem:[%s5] sm:$0x1]
        %v6295 = vld [vmem:[%s6] sm:$0x1]
        %v6296 = vsel %vm553, %v6262, 0.0
        %v6297 = vsel %vm553, %v6263, 0.0
        %v6298 = vadd.f32 %v6296, %v6297
        %v6299 = vsel %vm553, %v6264, 0.0
        %v6300 = vadd.f32 %v6298, %v6299
        %v6301 = vsel %vm553, %v6265, 0.0
        %v6302 = vadd.f32 %v6300, %v6301
        %v6303 = vsel %vm553, %v6266, 0.0
        %v6304 = vadd.f32 %v6302, %v6303
        %v6305 = vsel %vm553, %v6267, 0.0
        %v6306 = vadd.f32 %v6304, %v6305
        %v6307 = vsel %vm553, %v6268, 0.0
        %v6308 = vadd.f32 %v6306, %v6307
        %v6309 = vsel %vm553, %v6269, 0.0
        %v6310 = vadd.f32 %v6308, %v6309
        %v6311 = vsel %vm553, %v6270, 0.0
        %v6312 = vadd.f32 %v6310, %v6311
        %v6313 = vsel %vm553, %v6271, 0.0
        %v6314 = vadd.f32 %v6312, %v6313
        %v6315 = vsel %vm553, %v6272, 0.0
        %v6316 = vadd.f32 %v6314, %v6315
        %v6317 = vsel %vm553, %v6273, 0.0
        %v6318 = vadd.f32 %v6316, %v6317
        %v6319 = vsel %vm553, %v6274, 0.0
        %v6320 = vadd.f32 %v6318, %v6319
        %v6321 = vsel %vm553, %v6275, 0.0
        %v6322 = vadd.f32 %v6320, %v6321
        %v6323 = vsel %vm553, %v6276, 0.0
        %v6324 = vadd.f32 %v6322, %v6323
        %v6325 = vsel %vm553, %v6277, 0.0
        %v6326 = vadd.f32 %v6324, %v6325
        %v6327 = vsel %vm553, %v6278, 0.0
        %v6328 = vadd.f32 %v6326, %v6327
        %v6329 = vsel %vm553, %v6279, 0.0
        %v6330 = vadd.f32 %v6328, %v6329
        %v6331 = vsel %vm553, %v6280, 0.0
        %v6332 = vadd.f32 %v6330, %v6331
        %v6333 = vsel %vm553, %v6281, 0.0
        %v6334 = vadd.f32 %v6332, %v6333
        %v6335 = vsel %vm553, %v6282, 0.0
        %v6336 = vadd.f32 %v6334, %v6335
        %v6337 = vsel %vm553, %v6283, 0.0
        %v6338 = vadd.f32 %v6336, %v6337
        %v6339 = vsel %vm553, %v6284, 0.0
        %v6340 = vadd.f32 %v6338, %v6339
        %v6341 = vsel %vm553, %v6285, 0.0
        %v6342 = vadd.f32 %v6340, %v6341
        %v6343 = vsel %vm553, %v6286, 0.0
        %v6344 = vadd.f32 %v6342, %v6343
        %v6345 = vsel %vm553, %v6287, 0.0
        %v6346 = vadd.f32 %v6344, %v6345
        %v6347 = vsel %vm553, %v6288, 0.0
        %v6348 = vadd.f32 %v6346, %v6347
        %v6349 = vsel %vm553, %v6289, 0.0
        %v6350 = vadd.f32 %v6348, %v6349
        %v6351 = vsel %vm553, %v6290, 0.0
        %v6352 = vadd.f32 %v6350, %v6351
        %v6353 = vsel %vm553, %v6291, 0.0
        %v6354 = vadd.f32 %v6352, %v6353
        %v6355 = vsel %vm553, %v6292, 0.0
        %v6356 = vadd.f32 %v6354, %v6355
        %v6357 = vsel %vm553, %v6293, 0.0
        %v6358 = vadd.f32 %v6356, %v6357
        %v6359 = vrot.slane %v6358, 4
        %v6360 = vadd.f32 %v6358, %v6359
        %v6361 = vrot.slane %v6360, 2
        %v6362 = vadd.f32 %v6360, %v6361
        %v6363 = vrot.slane %v6362, 1
        %v6364 = vadd.f32 %v6362, %v6363
        %v6365 = vmul.f32 %v6364, %v838
        %v6366 = vsub.f32 %v6262, %v6365
        %v6367 = vsub.f32 %v6263, %v6365
        %v6368 = vsub.f32 %v6264, %v6365
        %v6369 = vsub.f32 %v6265, %v6365
        %v6370 = vsub.f32 %v6266, %v6365
        %v6371 = vsub.f32 %v6267, %v6365
        %v6372 = vsub.f32 %v6268, %v6365
        %v6373 = vsub.f32 %v6269, %v6365
        %v6374 = vsub.f32 %v6270, %v6365
        %v6375 = vsub.f32 %v6271, %v6365
        %v6376 = vsub.f32 %v6272, %v6365
        %v6377 = vsub.f32 %v6273, %v6365
        %v6378 = vsub.f32 %v6274, %v6365
        %v6379 = vsub.f32 %v6275, %v6365
        %v6380 = vsub.f32 %v6276, %v6365
        %v6381 = vsub.f32 %v6277, %v6365
        %v6382 = vsub.f32 %v6278, %v6365
        %v6383 = vsub.f32 %v6279, %v6365
        %v6384 = vsub.f32 %v6280, %v6365
        %v6385 = vsub.f32 %v6281, %v6365
        %v6386 = vsub.f32 %v6282, %v6365
        %v6387 = vsub.f32 %v6283, %v6365
        %v6388 = vsub.f32 %v6284, %v6365
        %v6389 = vsub.f32 %v6285, %v6365
        %v6390 = vsub.f32 %v6286, %v6365
        %v6391 = vsub.f32 %v6287, %v6365
        %v6392 = vsub.f32 %v6288, %v6365
        %v6393 = vsub.f32 %v6289, %v6365
        %v6394 = vsub.f32 %v6290, %v6365
        %v6395 = vsub.f32 %v6291, %v6365
        %v6396 = vsub.f32 %v6292, %v6365
        %v6397 = vsub.f32 %v6293, %v6365
        %v6398 = vmul.f32 %v6366, %v6366
        %v6399 = vmul.f32 %v6367, %v6367
        %v6400 = vmul.f32 %v6368, %v6368
        %v6401 = vmul.f32 %v6369, %v6369
        %v6402 = vmul.f32 %v6370, %v6370
        %v6403 = vmul.f32 %v6371, %v6371
        %v6404 = vmul.f32 %v6372, %v6372
        %v6405 = vmul.f32 %v6373, %v6373
        %v6406 = vmul.f32 %v6374, %v6374
        %v6407 = vmul.f32 %v6375, %v6375
        %v6408 = vmul.f32 %v6376, %v6376
        %v6409 = vmul.f32 %v6377, %v6377
        %v6410 = vmul.f32 %v6378, %v6378
        %v6411 = vmul.f32 %v6379, %v6379
        %v6412 = vmul.f32 %v6380, %v6380
        %v6413 = vmul.f32 %v6381, %v6381
        %v6414 = vmul.f32 %v6382, %v6382
        %v6415 = vmul.f32 %v6383, %v6383
        %v6416 = vmul.f32 %v6384, %v6384
        %v6417 = vmul.f32 %v6385, %v6385
        %v6418 = vmul.f32 %v6386, %v6386
        %v6419 = vmul.f32 %v6387, %v6387
        %v6420 = vmul.f32 %v6388, %v6388
        %v6421 = vmul.f32 %v6389, %v6389
        %v6422 = vmul.f32 %v6390, %v6390
        %v6423 = vmul.f32 %v6391, %v6391
        %v6424 = vmul.f32 %v6392, %v6392
        %v6425 = vmul.f32 %v6393, %v6393
        %v6426 = vmul.f32 %v6394, %v6394
        %v6427 = vmul.f32 %v6395, %v6395
        %v6428 = vmul.f32 %v6396, %v6396
        %v6429 = vmul.f32 %v6397, %v6397
        %v6430 = vsel %vm553, %v6398, 0.0
        %v6431 = vsel %vm553, %v6399, 0.0
        %v6432 = vadd.f32 %v6430, %v6431
        %v6433 = vsel %vm553, %v6400, 0.0
        %v6434 = vadd.f32 %v6432, %v6433
        %v6435 = vsel %vm553, %v6401, 0.0
        %v6436 = vadd.f32 %v6434, %v6435
        %v6437 = vsel %vm553, %v6402, 0.0
        %v6438 = vadd.f32 %v6436, %v6437
        %v6439 = vsel %vm553, %v6403, 0.0
        %v6440 = vadd.f32 %v6438, %v6439
        %v6441 = vsel %vm553, %v6404, 0.0
        %v6442 = vadd.f32 %v6440, %v6441
        %v6443 = vsel %vm553, %v6405, 0.0
        %v6444 = vadd.f32 %v6442, %v6443
        %v6445 = vsel %vm553, %v6406, 0.0
        %v6446 = vadd.f32 %v6444, %v6445
        %v6447 = vsel %vm553, %v6407, 0.0
        %v6448 = vadd.f32 %v6446, %v6447
        %v6449 = vsel %vm553, %v6408, 0.0
        %v6450 = vadd.f32 %v6448, %v6449
        %v6451 = vsel %vm553, %v6409, 0.0
        %v6452 = vadd.f32 %v6450, %v6451
        %v6453 = vsel %vm553, %v6410, 0.0
        %v6454 = vadd.f32 %v6452, %v6453
        %v6455 = vsel %vm553, %v6411, 0.0
        %v6456 = vadd.f32 %v6454, %v6455
        %v6457 = vsel %vm553, %v6412, 0.0
        %v6458 = vadd.f32 %v6456, %v6457
        %v6459 = vsel %vm553, %v6413, 0.0
        %v6460 = vadd.f32 %v6458, %v6459
        %v6461 = vsel %vm553, %v6414, 0.0
        %v6462 = vadd.f32 %v6460, %v6461
        %v6463 = vsel %vm553, %v6415, 0.0
        %v6464 = vadd.f32 %v6462, %v6463
        %v6465 = vsel %vm553, %v6416, 0.0
        %v6466 = vadd.f32 %v6464, %v6465
        %v6467 = vsel %vm553, %v6417, 0.0
        %v6468 = vadd.f32 %v6466, %v6467
        %v6469 = vsel %vm553, %v6418, 0.0
        %v6470 = vadd.f32 %v6468, %v6469
        %v6471 = vsel %vm553, %v6419, 0.0
        %v6472 = vadd.f32 %v6470, %v6471
        %v6473 = vsel %vm553, %v6420, 0.0
        %v6474 = vadd.f32 %v6472, %v6473
        %v6475 = vsel %vm553, %v6421, 0.0
        %v6476 = vadd.f32 %v6474, %v6475
        %v6477 = vsel %vm553, %v6422, 0.0
        %v6478 = vadd.f32 %v6476, %v6477
        %v6479 = vsel %vm553, %v6423, 0.0
        %v6480 = vadd.f32 %v6478, %v6479
        %v6481 = vsel %vm553, %v6424, 0.0
        %v6482 = vadd.f32 %v6480, %v6481
        %v6483 = vsel %vm553, %v6425, 0.0
        %v6484 = vadd.f32 %v6482, %v6483
        %v6485 = vsel %vm553, %v6426, 0.0
        %v6486 = vadd.f32 %v6484, %v6485
        %v6487 = vsel %vm553, %v6427, 0.0
        %v6488 = vadd.f32 %v6486, %v6487
        %v6489 = vsel %vm553, %v6428, 0.0
        %v6490 = vadd.f32 %v6488, %v6489
        %v6491 = vsel %vm553, %v6429, 0.0
        %v6492 = vadd.f32 %v6490, %v6491
        %v6493 = vrot.slane %v6492, 4
        %v6494 = vadd.f32 %v6492, %v6493
        %v6495 = vrot.slane %v6494, 2
        %v6496 = vadd.f32 %v6494, %v6495
        %v6497 = vrot.slane %v6496, 1
        %v6498 = vadd.f32 %v6496, %v6497
        %v6499 = vmul.f32 %v6498, %v838
        %v6500 = vadd.f32 %v6499, 1e-05
        %v6501 = vrsqrt.pop %v6500
        %v6502 = vmul.f32 %v6294, %v6501
        %v6503 = vmul.f32 %v6365, %v6502
        %v6504 = vsub.f32 %v6295, %v6503
        %v6506 = vlaneseq
        %v6507 = vshrl.u32 %v6506, 7
        %v6508 = vsub.s32 0, %v6507
        %v6509 = vrot.slane %v6502, %v6508
        %v6511 = vmul.f32 %v6262, %v6509
        %v6512 = vmul.f32 %v6263, %v6509
        %v6513 = vmul.f32 %v6264, %v6509
        %v6514 = vmul.f32 %v6265, %v6509
        %v6515 = vmul.f32 %v6266, %v6509
        %v6516 = vmul.f32 %v6267, %v6509
        %v6517 = vmul.f32 %v6268, %v6509
        %v6518 = vmul.f32 %v6269, %v6509
        %v6519 = vmul.f32 %v6270, %v6509
        %v6520 = vmul.f32 %v6271, %v6509
        %v6521 = vmul.f32 %v6272, %v6509
        %v6522 = vmul.f32 %v6273, %v6509
        %v6523 = vmul.f32 %v6274, %v6509
        %v6524 = vmul.f32 %v6275, %v6509
        %v6525 = vmul.f32 %v6276, %v6509
        %v6526 = vmul.f32 %v6277, %v6509
        %v6527 = vmul.f32 %v6278, %v6509
        %v6528 = vmul.f32 %v6279, %v6509
        %v6529 = vmul.f32 %v6280, %v6509
        %v6530 = vmul.f32 %v6281, %v6509
        %v6531 = vmul.f32 %v6282, %v6509
        %v6532 = vmul.f32 %v6283, %v6509
        %v6533 = vmul.f32 %v6284, %v6509
        %v6534 = vmul.f32 %v6285, %v6509
        %v6535 = vmul.f32 %v6286, %v6509
        %v6536 = vmul.f32 %v6287, %v6509
        %v6537 = vmul.f32 %v6288, %v6509
        %v6538 = vmul.f32 %v6289, %v6509
        %v6539 = vmul.f32 %v6290, %v6509
        %v6540 = vmul.f32 %v6291, %v6509
        %v6541 = vmul.f32 %v6292, %v6509
        %v6542 = vmul.f32 %v6293, %v6509
        %v6544 = vlaneseq
        %v6545 = vshrl.u32 %v6544, 7
        %v6546 = vsub.s32 0, %v6545
        %v6547 = vrot.slane %v6504, %v6546
        %v6549 = vadd.f32 %v6511, %v6547
        %v6550 = vadd.f32 %v6512, %v6547
        %v6551 = vadd.f32 %v6513, %v6547
        %v6552 = vadd.f32 %v6514, %v6547
        %v6553 = vadd.f32 %v6515, %v6547
        %v6554 = vadd.f32 %v6516, %v6547
        %v6555 = vadd.f32 %v6517, %v6547
        %v6556 = vadd.f32 %v6518, %v6547
        %v6557 = vadd.f32 %v6519, %v6547
        %v6558 = vadd.f32 %v6520, %v6547
        %v6559 = vadd.f32 %v6521, %v6547
        %v6560 = vadd.f32 %v6522, %v6547
        %v6561 = vadd.f32 %v6523, %v6547
        %v6562 = vadd.f32 %v6524, %v6547
        %v6563 = vadd.f32 %v6525, %v6547
        %v6564 = vadd.f32 %v6526, %v6547
        %v6565 = vadd.f32 %v6527, %v6547
        %v6566 = vadd.f32 %v6528, %v6547
        %v6567 = vadd.f32 %v6529, %v6547
        %v6568 = vadd.f32 %v6530, %v6547
        %v6569 = vadd.f32 %v6531, %v6547
        %v6570 = vadd.f32 %v6532, %v6547
        %v6571 = vadd.f32 %v6533, %v6547
        %v6572 = vadd.f32 %v6534, %v6547
        %v6573 = vadd.f32 %v6535, %v6547
        %v6574 = vadd.f32 %v6536, %v6547
        %v6575 = vadd.f32 %v6537, %v6547
        %v6576 = vadd.f32 %v6538, %v6547
        %v6577 = vadd.f32 %v6539, %v6547
        %v6578 = vadd.f32 %v6540, %v6547
        %v6579 = vadd.f32 %v6541, %v6547
        %v6580 = vadd.f32 %v6542, %v6547
        %v6581 = vmax.f32 %v6549, 0.0
        %v6582 = vmax.f32 %v6550, 0.0
        %v6583 = vmax.f32 %v6551, 0.0
        %v6584 = vmax.f32 %v6552, 0.0
        %v6585 = vmax.f32 %v6553, 0.0
        %v6586 = vmax.f32 %v6554, 0.0
        %v6587 = vmax.f32 %v6555, 0.0
        %v6588 = vmax.f32 %v6556, 0.0
        %v6589 = vmax.f32 %v6557, 0.0
        %v6590 = vmax.f32 %v6558, 0.0
        %v6591 = vmax.f32 %v6559, 0.0
        %v6592 = vmax.f32 %v6560, 0.0
        %v6593 = vmax.f32 %v6561, 0.0
        %v6594 = vmax.f32 %v6562, 0.0
        %v6595 = vmax.f32 %v6563, 0.0
        %v6596 = vmax.f32 %v6564, 0.0
        %v6597 = vmax.f32 %v6565, 0.0
        %v6598 = vmax.f32 %v6566, 0.0
        %v6599 = vmax.f32 %v6567, 0.0
        %v6600 = vmax.f32 %v6568, 0.0
        %v6601 = vmax.f32 %v6569, 0.0
        %v6602 = vmax.f32 %v6570, 0.0
        %v6603 = vmax.f32 %v6571, 0.0
        %v6604 = vmax.f32 %v6572, 0.0
        %v6605 = vmax.f32 %v6573, 0.0
        %v6606 = vmax.f32 %v6574, 0.0
        %v6607 = vmax.f32 %v6575, 0.0
        %v6608 = vmax.f32 %v6576, 0.0
        %v6609 = vmax.f32 %v6577, 0.0
        %v6610 = vmax.f32 %v6578, 0.0
        %v6611 = vmax.f32 %v6579, 0.0
        %v6612 = vmax.f32 %v6580, 0.0
        %v6613 = vpack.c.bf16 %v6582, %v6581
        %v6614 = vpack.c.bf16 %v6584, %v6583
        %v6615 = vpack.c.bf16 %v6586, %v6585
        %v6616 = vpack.c.bf16 %v6588, %v6587
        %v6617 = vpack.c.bf16 %v6590, %v6589
        %v6618 = vpack.c.bf16 %v6592, %v6591
        %v6619 = vpack.c.bf16 %v6594, %v6593
        %v6620 = vpack.c.bf16 %v6596, %v6595
        %v6621 = vpack.c.bf16 %v6598, %v6597
        %v6622 = vpack.c.bf16 %v6600, %v6599
        %v6623 = vpack.c.bf16 %v6602, %v6601
        %v6624 = vpack.c.bf16 %v6604, %v6603
        %v6625 = vpack.c.bf16 %v6606, %v6605
        %v6626 = vpack.c.bf16 %v6608, %v6607
        %v6627 = vpack.c.bf16 %v6610, %v6609
        %v6628 = vpack.c.bf16 %v6612, %v6611
        %v6629 = vld [vmem:[%s7] sm:$0x3]
        %v6631 = vsel %vm553, %v6613, 0
        %v6634 = vsel %vm553, %v6614, 0
        %v6637 = vsel %vm553, %v6615, 0
        %v6640 = vsel %vm553, %v6616, 0
        %v6643 = vsel %vm553, %v6617, 0
        %v6646 = vsel %vm553, %v6618, 0
        %v6649 = vsel %vm553, %v6619, 0
        %v6652 = vsel %vm553, %v6620, 0
        %v6655 = vsel %vm553, %v6621, 0
        %v6658 = vsel %vm553, %v6622, 0
        %v6661 = vsel %vm553, %v6623, 0
        %v6664 = vsel %vm553, %v6624, 0
        %v6667 = vsel %vm553, %v6625, 0
        %v6670 = vsel %vm553, %v6626, 0
        %v6673 = vsel %vm553, %v6627, 0
        %v6676 = vsel %vm553, %v6628, 0
        %v6679 = vsel %vm602, %v6629, 0
        %6681 = vmatprep.subr.bf16.mxu0 0
        %6682 = vmatpush1.bf16.msra.mxu0 0
        %6683 = vmatprep.subr.bf16.mxu0 0
        %6684 = vmatpush1.bf16.msra.mxu0 0
        %6685 = vmatprep.subr.bf16.mxu0 0
        %6686 = vmatpush1.bf16.msra.mxu0 0
        %6687 = vmatprep.subr.bf16.mxu0 0
        %6688 = vmatpush1.bf16.msra.mxu0 0
        %6689 = vmatprep.subr.bf16.mxu0 0
        %6690 = vmatpush1.bf16.msra.mxu0 0
        %6691 = vmatprep.subr.bf16.mxu0 0
        %6692 = vmatpush1.bf16.msra.mxu0 0
        %6693 = vmatprep.subr.bf16.mxu0 0
        %6694 = vmatpush1.bf16.msra.mxu0 0
        %6695 = vmatprep.subr.bf16.mxu0 0
        %6696 = vmatpush1.bf16.msra.mxu0 %v6679
        %6697 = vmatprep.subr.bf16.mxu0 0
        %6698 = vmatpush2.bf16.msra.mxu0 0
        %6699 = vmatprep.subr.bf16.mxu0 0
        %6700 = vmatpush2.bf16.msra.mxu0 0
        %6701 = vmatprep.subr.bf16.mxu0 0
        %6702 = vmatpush2.bf16.msra.mxu0 0
        %6703 = vmatprep.subr.bf16.mxu0 0
        %6704 = vmatpush2.bf16.msra.mxu0 0
        %6705 = vmatprep.subr.bf16.mxu0 0
        %6706 = vmatpush2.bf16.msra.mxu0 0
        %6707 = vmatprep.subr.bf16.mxu0 0
        %6708 = vmatpush2.bf16.msra.mxu0 0
        %6709 = vmatprep.subr.bf16.mxu0 0
        %6710 = vmatpush2.bf16.msra.mxu0 0
        %6711 = vmatprep.subr.bf16.mxu0 0
        %6712 = vmatpush2.bf16.msra.mxu0 0
        %6713 = vmatprep.mubr.bf16.mxu0 0
        %6714 = vmatmul.mubr.bf16.gmra.mxu0 %v6631
        %v6715 = vpop.f32.mrf.mxu0
        %v6716 = vadd.f32 0.0, %v6715
        %v6717 = vpop.f32.mrf.mxu0
        %v6718 = vpop.f32.mrf.mxu0
        %v6719 = vadd.f32 0.0, %v6718
        %v6720 = vpop.f32.mrf.mxu0
        %6721 = vmatprep.mubr.bf16.mxu0 0
        %6722 = vmatmul.mubr.bf16.gmra.mxu0 %v6634
        %v6723 = vpop.f32.mrf.mxu0
        %v6724 = vadd.f32 0.0, %v6723
        %v6725 = vpop.f32.mrf.mxu0
        %v6726 = vpop.f32.mrf.mxu0
        %v6727 = vadd.f32 0.0, %v6726
        %v6728 = vpop.f32.mrf.mxu0
        %6729 = vmatprep.mubr.bf16.mxu0 0
        %6730 = vmatmul.mubr.bf16.gmra.mxu0 %v6637
        %v6731 = vpop.f32.mrf.mxu0
        %v6732 = vadd.f32 0.0, %v6731
        %v6733 = vpop.f32.mrf.mxu0
        %v6734 = vpop.f32.mrf.mxu0
        %v6735 = vadd.f32 0.0, %v6734
        %v6736 = vpop.f32.mrf.mxu0
        %6737 = vmatprep.mubr.bf16.mxu0 0
        %6738 = vmatmul.mubr.bf16.gmra.mxu0 %v6640
        %v6739 = vpop.f32.mrf.mxu0
        %v6740 = vadd.f32 0.0, %v6739
        %v6741 = vpop.f32.mrf.mxu0
        %v6742 = vpop.f32.mrf.mxu0
        %v6743 = vadd.f32 0.0, %v6742
        %v6744 = vpop.f32.mrf.mxu0
        %6745 = vmatprep.mubr.bf16.mxu0 0
        %6746 = vmatmul.mubr.bf16.gmra.mxu0 %v6643
        %v6747 = vpop.f32.mrf.mxu0
        %v6748 = vadd.f32 0.0, %v6747
        %v6749 = vpop.f32.mrf.mxu0
        %v6750 = vpop.f32.mrf.mxu0
        %v6751 = vadd.f32 0.0, %v6750
        %v6752 = vpop.f32.mrf.mxu0
        %6753 = vmatprep.mubr.bf16.mxu0 0
        %6754 = vmatmul.mubr.bf16.gmra.mxu0 %v6646
        %v6755 = vpop.f32.mrf.mxu0
        %v6756 = vadd.f32 0.0, %v6755
        %v6757 = vpop.f32.mrf.mxu0
        %v6758 = vpop.f32.mrf.mxu0
        %v6759 = vadd.f32 0.0, %v6758
        %v6760 = vpop.f32.mrf.mxu0
        %6761 = vmatprep.mubr.bf16.mxu0 0
        %6762 = vmatmul.mubr.bf16.gmra.mxu0 %v6649
        %v6763 = vpop.f32.mrf.mxu0
        %v6764 = vadd.f32 0.0, %v6763
        %v6765 = vpop.f32.mrf.mxu0
        %v6766 = vpop.f32.mrf.mxu0
        %v6767 = vadd.f32 0.0, %v6766
        %v6768 = vpop.f32.mrf.mxu0
        %6769 = vmatprep.mubr.bf16.mxu0 0
        %6770 = vmatmul.mubr.bf16.gmra.mxu0 %v6652
        %v6771 = vpop.f32.mrf.mxu0
        %v6772 = vadd.f32 0.0, %v6771
        %v6773 = vpop.f32.mrf.mxu0
        %v6774 = vpop.f32.mrf.mxu0
        %v6775 = vadd.f32 0.0, %v6774
        %v6776 = vpop.f32.mrf.mxu0
        %6777 = vmatprep.mubr.bf16.mxu0 0
        %6778 = vmatmul.mubr.bf16.gmra.mxu0 %v6655
        %v6779 = vpop.f32.mrf.mxu0
        %v6780 = vadd.f32 0.0, %v6779
        %v6781 = vpop.f32.mrf.mxu0
        %v6782 = vpop.f32.mrf.mxu0
        %v6783 = vadd.f32 0.0, %v6782
        %v6784 = vpop.f32.mrf.mxu0
        %6785 = vmatprep.mubr.bf16.mxu0 0
        %6786 = vmatmul.mubr.bf16.gmra.mxu0 %v6658
        %v6787 = vpop.f32.mrf.mxu0
        %v6788 = vadd.f32 0.0, %v6787
        %v6789 = vpop.f32.mrf.mxu0
        %v6790 = vpop.f32.mrf.mxu0
        %v6791 = vadd.f32 0.0, %v6790
        %v6792 = vpop.f32.mrf.mxu0
        %6793 = vmatprep.mubr.bf16.mxu0 0
        %6794 = vmatmul.mubr.bf16.gmra.mxu0 %v6661
        %v6795 = vpop.f32.mrf.mxu0
        %v6796 = vadd.f32 0.0, %v6795
        %v6797 = vpop.f32.mrf.mxu0
        %v6798 = vpop.f32.mrf.mxu0
        %v6799 = vadd.f32 0.0, %v6798
        %v6800 = vpop.f32.mrf.mxu0
        %6801 = vmatprep.mubr.bf16.mxu0 0
        %6802 = vmatmul.mubr.bf16.gmra.mxu0 %v6664
        %v6803 = vpop.f32.mrf.mxu0
        %v6804 = vadd.f32 0.0, %v6803
        %v6805 = vpop.f32.mrf.mxu0
        %v6806 = vpop.f32.mrf.mxu0
        %v6807 = vadd.f32 0.0, %v6806
        %v6808 = vpop.f32.mrf.mxu0
        %6809 = vmatprep.mubr.bf16.mxu0 0
        %6810 = vmatmul.mubr.bf16.gmra.mxu0 %v6667
        %v6811 = vpop.f32.mrf.mxu0
        %v6812 = vadd.f32 0.0, %v6811
        %v6813 = vpop.f32.mrf.mxu0
        %v6814 = vpop.f32.mrf.mxu0
        %v6815 = vadd.f32 0.0, %v6814
        %v6816 = vpop.f32.mrf.mxu0
        %6817 = vmatprep.mubr.bf16.mxu0 0
        %6818 = vmatmul.mubr.bf16.gmra.mxu0 %v6670
        %v6819 = vpop.f32.mrf.mxu0
        %v6820 = vadd.f32 0.0, %v6819
        %v6821 = vpop.f32.mrf.mxu0
        %v6822 = vpop.f32.mrf.mxu0
        %v6823 = vadd.f32 0.0, %v6822
        %v6824 = vpop.f32.mrf.mxu0
        %6825 = vmatprep.mubr.bf16.mxu0 0
        %6826 = vmatmul.mubr.bf16.gmra.mxu0 %v6673
        %v6827 = vpop.f32.mrf.mxu0
        %v6828 = vadd.f32 0.0, %v6827
        %v6829 = vpop.f32.mrf.mxu0
        %v6830 = vpop.f32.mrf.mxu0
        %v6831 = vadd.f32 0.0, %v6830
        %v6832 = vpop.f32.mrf.mxu0
        %6833 = vmatprep.mubr.bf16.mxu0 0
        %6834 = vmatmul.mubr.bf16.gmra.mxu0 %v6676
        %v6835 = vpop.f32.mrf.mxu0
        %v6836 = vadd.f32 0.0, %v6835
        %v6837 = vpop.f32.mrf.mxu0
        %v6838 = vpop.f32.mrf.mxu0
        %v6839 = vadd.f32 0.0, %v6838
        %v6840 = vpop.f32.mrf.mxu0
        %6841 = vdwg.mxu0
        %v6842 = vld [vmem:[%s8] sm:$0x1]
        %v6843 = vld [vmem:[%s9] sm:$0x1]
        %vm6844 = vcmask 130048
        %v6845 = vsel %vm6844, %v6716, 0.0
        %v6846 = vsel %vm6844, %v6719, 0.0
        %v6847 = vadd.f32 %v6845, %v6846
        %v6848 = vsel %vm6844, %v6724, 0.0
        %v6849 = vadd.f32 %v6847, %v6848
        %v6850 = vsel %vm6844, %v6727, 0.0
        %v6851 = vadd.f32 %v6849, %v6850
        %v6852 = vsel %vm6844, %v6732, 0.0
        %v6853 = vadd.f32 %v6851, %v6852
        %v6854 = vsel %vm6844, %v6735, 0.0
        %v6855 = vadd.f32 %v6853, %v6854
        %v6856 = vsel %vm6844, %v6740, 0.0
        %v6857 = vadd.f32 %v6855, %v6856
        %v6858 = vsel %vm6844, %v6743, 0.0
        %v6859 = vadd.f32 %v6857, %v6858
        %v6860 = vsel %vm6844, %v6748, 0.0
        %v6861 = vadd.f32 %v6859, %v6860
        %v6862 = vsel %vm6844, %v6751, 0.0
        %v6863 = vadd.f32 %v6861, %v6862
        %v6864 = vsel %vm6844, %v6756, 0.0
        %v6865 = vadd.f32 %v6863, %v6864
        %v6866 = vsel %vm6844, %v6759, 0.0
        %v6867 = vadd.f32 %v6865, %v6866
        %v6868 = vsel %vm6844, %v6764, 0.0
        %v6869 = vadd.f32 %v6867, %v6868
        %v6870 = vsel %vm6844, %v6767, 0.0
        %v6871 = vadd.f32 %v6869, %v6870
        %v6872 = vsel %vm6844, %v6772, 0.0
        %v6873 = vadd.f32 %v6871, %v6872
        %v6874 = vsel %vm6844, %v6775, 0.0
        %v6875 = vadd.f32 %v6873, %v6874
        %v6876 = vsel %vm6844, %v6780, 0.0
        %v6877 = vadd.f32 %v6875, %v6876
        %v6878 = vsel %vm6844, %v6783, 0.0
        %v6879 = vadd.f32 %v6877, %v6878
        %v6880 = vsel %vm6844, %v6788, 0.0
        %v6881 = vadd.f32 %v6879, %v6880
        %v6882 = vsel %vm6844, %v6791, 0.0
        %v6883 = vadd.f32 %v6881, %v6882
        %v6884 = vsel %vm6844, %v6796, 0.0
        %v6885 = vadd.f32 %v6883, %v6884
        %v6886 = vsel %vm6844, %v6799, 0.0
        %v6887 = vadd.f32 %v6885, %v6886
        %v6888 = vsel %vm6844, %v6804, 0.0
        %v6889 = vadd.f32 %v6887, %v6888
        %v6890 = vsel %vm6844, %v6807, 0.0
        %v6891 = vadd.f32 %v6889, %v6890
        %v6892 = vsel %vm6844, %v6812, 0.0
        %v6893 = vadd.f32 %v6891, %v6892
        %v6894 = vsel %vm6844, %v6815, 0.0
        %v6895 = vadd.f32 %v6893, %v6894
        %v6896 = vsel %vm6844, %v6820, 0.0
        %v6897 = vadd.f32 %v6895, %v6896
        %v6898 = vsel %vm6844, %v6823, 0.0
        %v6899 = vadd.f32 %v6897, %v6898
        %v6900 = vsel %vm6844, %v6828, 0.0
        %v6901 = vadd.f32 %v6899, %v6900
        %v6902 = vsel %vm6844, %v6831, 0.0
        %v6903 = vadd.f32 %v6901, %v6902
        %v6904 = vsel %vm6844, %v6836, 0.0
        %v6905 = vadd.f32 %v6903, %v6904
        %v6906 = vsel %vm6844, %v6839, 0.0
        %v6907 = vadd.f32 %v6905, %v6906
        %v6908 = vrot.slane %v6907, 4
        %v6909 = vadd.f32 %v6907, %v6908
        %v6910 = vrot.slane %v6909, 2
        %v6911 = vadd.f32 %v6909, %v6910
        %v6912 = vrot.slane %v6911, 1
        %v6913 = vadd.f32 %v6911, %v6912
        %v6914 = vmul.f32 %v6913, %v838
        %v6915 = vsub.f32 %v6716, %v6914
        %v6916 = vsub.f32 %v6719, %v6914
        %v6917 = vsub.f32 %v6724, %v6914
        %v6918 = vsub.f32 %v6727, %v6914
        %v6919 = vsub.f32 %v6732, %v6914
        %v6920 = vsub.f32 %v6735, %v6914
        %v6921 = vsub.f32 %v6740, %v6914
        %v6922 = vsub.f32 %v6743, %v6914
        %v6923 = vsub.f32 %v6748, %v6914
        %v6924 = vsub.f32 %v6751, %v6914
        %v6925 = vsub.f32 %v6756, %v6914
        %v6926 = vsub.f32 %v6759, %v6914
        %v6927 = vsub.f32 %v6764, %v6914
        %v6928 = vsub.f32 %v6767, %v6914
        %v6929 = vsub.f32 %v6772, %v6914
        %v6930 = vsub.f32 %v6775, %v6914
        %v6931 = vsub.f32 %v6780, %v6914
        %v6932 = vsub.f32 %v6783, %v6914
        %v6933 = vsub.f32 %v6788, %v6914
        %v6934 = vsub.f32 %v6791, %v6914
        %v6935 = vsub.f32 %v6796, %v6914
        %v6936 = vsub.f32 %v6799, %v6914
        %v6937 = vsub.f32 %v6804, %v6914
        %v6938 = vsub.f32 %v6807, %v6914
        %v6939 = vsub.f32 %v6812, %v6914
        %v6940 = vsub.f32 %v6815, %v6914
        %v6941 = vsub.f32 %v6820, %v6914
        %v6942 = vsub.f32 %v6823, %v6914
        %v6943 = vsub.f32 %v6828, %v6914
        %v6944 = vsub.f32 %v6831, %v6914
        %v6945 = vsub.f32 %v6836, %v6914
        %v6946 = vsub.f32 %v6839, %v6914
        %v6947 = vmul.f32 %v6915, %v6915
        %v6948 = vmul.f32 %v6916, %v6916
        %v6949 = vmul.f32 %v6917, %v6917
        %v6950 = vmul.f32 %v6918, %v6918
        %v6951 = vmul.f32 %v6919, %v6919
        %v6952 = vmul.f32 %v6920, %v6920
        %v6953 = vmul.f32 %v6921, %v6921
        %v6954 = vmul.f32 %v6922, %v6922
        %v6955 = vmul.f32 %v6923, %v6923
        %v6956 = vmul.f32 %v6924, %v6924
        %v6957 = vmul.f32 %v6925, %v6925
        %v6958 = vmul.f32 %v6926, %v6926
        %v6959 = vmul.f32 %v6927, %v6927
        %v6960 = vmul.f32 %v6928, %v6928
        %v6961 = vmul.f32 %v6929, %v6929
        %v6962 = vmul.f32 %v6930, %v6930
        %v6963 = vmul.f32 %v6931, %v6931
        %v6964 = vmul.f32 %v6932, %v6932
        %v6965 = vmul.f32 %v6933, %v6933
        %v6966 = vmul.f32 %v6934, %v6934
        %v6967 = vmul.f32 %v6935, %v6935
        %v6968 = vmul.f32 %v6936, %v6936
        %v6969 = vmul.f32 %v6937, %v6937
        %v6970 = vmul.f32 %v6938, %v6938
        %v6971 = vmul.f32 %v6939, %v6939
        %v6972 = vmul.f32 %v6940, %v6940
        %v6973 = vmul.f32 %v6941, %v6941
        %v6974 = vmul.f32 %v6942, %v6942
        %v6975 = vmul.f32 %v6943, %v6943
        %v6976 = vmul.f32 %v6944, %v6944
        %v6977 = vmul.f32 %v6945, %v6945
        %v6978 = vmul.f32 %v6946, %v6946
        %v6979 = vsel %vm6844, %v6947, 0.0
        %v6980 = vsel %vm6844, %v6948, 0.0
        %v6981 = vadd.f32 %v6979, %v6980
        %v6982 = vsel %vm6844, %v6949, 0.0
        %v6983 = vadd.f32 %v6981, %v6982
        %v6984 = vsel %vm6844, %v6950, 0.0
        %v6985 = vadd.f32 %v6983, %v6984
        %v6986 = vsel %vm6844, %v6951, 0.0
        %v6987 = vadd.f32 %v6985, %v6986
        %v6988 = vsel %vm6844, %v6952, 0.0
        %v6989 = vadd.f32 %v6987, %v6988
        %v6990 = vsel %vm6844, %v6953, 0.0
        %v6991 = vadd.f32 %v6989, %v6990
        %v6992 = vsel %vm6844, %v6954, 0.0
        %v6993 = vadd.f32 %v6991, %v6992
        %v6994 = vsel %vm6844, %v6955, 0.0
        %v6995 = vadd.f32 %v6993, %v6994
        %v6996 = vsel %vm6844, %v6956, 0.0
        %v6997 = vadd.f32 %v6995, %v6996
        %v6998 = vsel %vm6844, %v6957, 0.0
        %v6999 = vadd.f32 %v6997, %v6998
        %v7000 = vsel %vm6844, %v6958, 0.0
        %v7001 = vadd.f32 %v6999, %v7000
        %v7002 = vsel %vm6844, %v6959, 0.0
        %v7003 = vadd.f32 %v7001, %v7002
        %v7004 = vsel %vm6844, %v6960, 0.0
        %v7005 = vadd.f32 %v7003, %v7004
        %v7006 = vsel %vm6844, %v6961, 0.0
        %v7007 = vadd.f32 %v7005, %v7006
        %v7008 = vsel %vm6844, %v6962, 0.0
        %v7009 = vadd.f32 %v7007, %v7008
        %v7010 = vsel %vm6844, %v6963, 0.0
        %v7011 = vadd.f32 %v7009, %v7010
        %v7012 = vsel %vm6844, %v6964, 0.0
        %v7013 = vadd.f32 %v7011, %v7012
        %v7014 = vsel %vm6844, %v6965, 0.0
        %v7015 = vadd.f32 %v7013, %v7014
        %v7016 = vsel %vm6844, %v6966, 0.0
        %v7017 = vadd.f32 %v7015, %v7016
        %v7018 = vsel %vm6844, %v6967, 0.0
        %v7019 = vadd.f32 %v7017, %v7018
        %v7020 = vsel %vm6844, %v6968, 0.0
        %v7021 = vadd.f32 %v7019, %v7020
        %v7022 = vsel %vm6844, %v6969, 0.0
        %v7023 = vadd.f32 %v7021, %v7022
        %v7024 = vsel %vm6844, %v6970, 0.0
        %v7025 = vadd.f32 %v7023, %v7024
        %v7026 = vsel %vm6844, %v6971, 0.0
        %v7027 = vadd.f32 %v7025, %v7026
        %v7028 = vsel %vm6844, %v6972, 0.0
        %v7029 = vadd.f32 %v7027, %v7028
        %v7030 = vsel %vm6844, %v6973, 0.0
        %v7031 = vadd.f32 %v7029, %v7030
        %v7032 = vsel %vm6844, %v6974, 0.0
        %v7033 = vadd.f32 %v7031, %v7032
        %v7034 = vsel %vm6844, %v6975, 0.0
        %v7035 = vadd.f32 %v7033, %v7034
        %v7036 = vsel %vm6844, %v6976, 0.0
        %v7037 = vadd.f32 %v7035, %v7036
        %v7038 = vsel %vm6844, %v6977, 0.0
        %v7039 = vadd.f32 %v7037, %v7038
        %v7040 = vsel %vm6844, %v6978, 0.0
        %v7041 = vadd.f32 %v7039, %v7040
        %v7042 = vrot.slane %v7041, 4
        %v7043 = vadd.f32 %v7041, %v7042
        %v7044 = vrot.slane %v7043, 2
        %v7045 = vadd.f32 %v7043, %v7044
        %v7046 = vrot.slane %v7045, 1
        %v7047 = vadd.f32 %v7045, %v7046
        %v7048 = vmul.f32 %v7047, %v838
        %v7049 = vadd.f32 %v7048, 1e-05
        %v7050 = vrsqrt.pop %v7049
        %v7051 = vmul.f32 %v6842, %v7050
        %v7052 = vmul.f32 %v6914, %v7051
        %v7053 = vsub.f32 %v6843, %v7052
        %v7055 = vlaneseq
        %v7056 = vshrl.u32 %v7055, 7
        %v7057 = vsub.s32 0, %v7056
        %v7058 = vrot.slane %v7051, %v7057
        %v7060 = vmul.f32 %v6716, %v7058
        %v7061 = vmul.f32 %v6719, %v7058
        %v7062 = vmul.f32 %v6724, %v7058
        %v7063 = vmul.f32 %v6727, %v7058
        %v7064 = vmul.f32 %v6732, %v7058
        %v7065 = vmul.f32 %v6735, %v7058
        %v7066 = vmul.f32 %v6740, %v7058
        %v7067 = vmul.f32 %v6743, %v7058
        %v7068 = vmul.f32 %v6748, %v7058
        %v7069 = vmul.f32 %v6751, %v7058
        %v7070 = vmul.f32 %v6756, %v7058
        %v7071 = vmul.f32 %v6759, %v7058
        %v7072 = vmul.f32 %v6764, %v7058
        %v7073 = vmul.f32 %v6767, %v7058
        %v7074 = vmul.f32 %v6772, %v7058
        %v7075 = vmul.f32 %v6775, %v7058
        %v7076 = vmul.f32 %v6780, %v7058
        %v7077 = vmul.f32 %v6783, %v7058
        %v7078 = vmul.f32 %v6788, %v7058
        %v7079 = vmul.f32 %v6791, %v7058
        %v7080 = vmul.f32 %v6796, %v7058
        %v7081 = vmul.f32 %v6799, %v7058
        %v7082 = vmul.f32 %v6804, %v7058
        %v7083 = vmul.f32 %v6807, %v7058
        %v7084 = vmul.f32 %v6812, %v7058
        %v7085 = vmul.f32 %v6815, %v7058
        %v7086 = vmul.f32 %v6820, %v7058
        %v7087 = vmul.f32 %v6823, %v7058
        %v7088 = vmul.f32 %v6828, %v7058
        %v7089 = vmul.f32 %v6831, %v7058
        %v7090 = vmul.f32 %v6836, %v7058
        %v7091 = vmul.f32 %v6839, %v7058
        %v7093 = vlaneseq
        %v7094 = vshrl.u32 %v7093, 7
        %v7095 = vsub.s32 0, %v7094
        %v7096 = vrot.slane %v7053, %v7095
        %v7098 = vadd.f32 %v7060, %v7096
        %v7099 = vadd.f32 %v7061, %v7096
        %v7100 = vadd.f32 %v7062, %v7096
        %v7101 = vadd.f32 %v7063, %v7096
        %v7102 = vadd.f32 %v7064, %v7096
        %v7103 = vadd.f32 %v7065, %v7096
        %v7104 = vadd.f32 %v7066, %v7096
        %v7105 = vadd.f32 %v7067, %v7096
        %v7106 = vadd.f32 %v7068, %v7096
        %v7107 = vadd.f32 %v7069, %v7096
        %v7108 = vadd.f32 %v7070, %v7096
        %v7109 = vadd.f32 %v7071, %v7096
        %v7110 = vadd.f32 %v7072, %v7096
        %v7111 = vadd.f32 %v7073, %v7096
        %v7112 = vadd.f32 %v7074, %v7096
        %v7113 = vadd.f32 %v7075, %v7096
        %v7114 = vadd.f32 %v7076, %v7096
        %v7115 = vadd.f32 %v7077, %v7096
        %v7116 = vadd.f32 %v7078, %v7096
        %v7117 = vadd.f32 %v7079, %v7096
        %v7118 = vadd.f32 %v7080, %v7096
        %v7119 = vadd.f32 %v7081, %v7096
        %v7120 = vadd.f32 %v7082, %v7096
        %v7121 = vadd.f32 %v7083, %v7096
        %v7122 = vadd.f32 %v7084, %v7096
        %v7123 = vadd.f32 %v7085, %v7096
        %v7124 = vadd.f32 %v7086, %v7096
        %v7125 = vadd.f32 %v7087, %v7096
        %v7126 = vadd.f32 %v7088, %v7096
        %v7127 = vadd.f32 %v7089, %v7096
        %v7128 = vadd.f32 %v7090, %v7096
        %v7129 = vadd.f32 %v7091, %v7096
        %v7130 = vld [vmem:[%s10] sm:$0x3]
        %v7132 = vsel %vm602, %v7130, 0
        %7134 = vmatprep.subr.bf16.mxu0 0
        %7135 = vmatpush1.bf16.msra.mxu0 0
        %7136 = vmatprep.subr.bf16.mxu0 0
        %7137 = vmatpush1.bf16.msra.mxu0 0
        %7138 = vmatprep.subr.bf16.mxu0 0
        %7139 = vmatpush1.bf16.msra.mxu0 0
        %7140 = vmatprep.subr.bf16.mxu0 0
        %7141 = vmatpush1.bf16.msra.mxu0 0
        %7142 = vmatprep.subr.bf16.mxu0 0
        %7143 = vmatpush1.bf16.msra.mxu0 0
        %7144 = vmatprep.subr.bf16.mxu0 0
        %7145 = vmatpush1.bf16.msra.mxu0 0
        %7146 = vmatprep.subr.bf16.mxu0 0
        %7147 = vmatpush1.bf16.msra.mxu0 0
        %7148 = vmatprep.subr.bf16.mxu0 0
        %7149 = vmatpush1.bf16.msra.mxu0 %v7132
        %7150 = vmatprep.subr.bf16.mxu0 0
        %7151 = vmatpush2.bf16.msra.mxu0 0
        %7152 = vmatprep.subr.bf16.mxu0 0
        %7153 = vmatpush2.bf16.msra.mxu0 0
        %7154 = vmatprep.subr.bf16.mxu0 0
        %7155 = vmatpush2.bf16.msra.mxu0 0
        %7156 = vmatprep.subr.bf16.mxu0 0
        %7157 = vmatpush2.bf16.msra.mxu0 0
        %7158 = vmatprep.subr.bf16.mxu0 0
        %7159 = vmatpush2.bf16.msra.mxu0 0
        %7160 = vmatprep.subr.bf16.mxu0 0
        %7161 = vmatpush2.bf16.msra.mxu0 0
        %7162 = vmatprep.subr.bf16.mxu0 0
        %7163 = vmatpush2.bf16.msra.mxu0 0
        %7164 = vmatprep.subr.bf16.mxu0 0
        %7165 = vmatpush2.bf16.msra.mxu0 0
        %7166 = vmatprep.mubr.bf16.mxu0 0
        %7167 = vmatmul.mubr.bf16.gmra.mxu0 %v555
        %v7168 = vpop.f32.mrf.mxu0
        %v7169 = vadd.f32 0.0, %v7168
        %v7170 = vpop.f32.mrf.mxu0
        %v7171 = vpop.f32.mrf.mxu0
        %v7172 = vadd.f32 0.0, %v7171
        %v7173 = vpop.f32.mrf.mxu0
        %7174 = vmatprep.mubr.bf16.mxu0 0
        %7175 = vmatmul.mubr.bf16.gmra.mxu0 %v558
        %v7176 = vpop.f32.mrf.mxu0
        %v7177 = vadd.f32 0.0, %v7176
        %v7178 = vpop.f32.mrf.mxu0
        %v7179 = vpop.f32.mrf.mxu0
        %v7180 = vadd.f32 0.0, %v7179
        %v7181 = vpop.f32.mrf.mxu0
        %7182 = vmatprep.mubr.bf16.mxu0 0
        %7183 = vmatmul.mubr.bf16.gmra.mxu0 %v561
        %v7184 = vpop.f32.mrf.mxu0
        %v7185 = vadd.f32 0.0, %v7184
        %v7186 = vpop.f32.mrf.mxu0
        %v7187 = vpop.f32.mrf.mxu0
        %v7188 = vadd.f32 0.0, %v7187
        %v7189 = vpop.f32.mrf.mxu0
        %7190 = vmatprep.mubr.bf16.mxu0 0
        %7191 = vmatmul.mubr.bf16.gmra.mxu0 %v564
        %v7192 = vpop.f32.mrf.mxu0
        %v7193 = vadd.f32 0.0, %v7192
        %v7194 = vpop.f32.mrf.mxu0
        %v7195 = vpop.f32.mrf.mxu0
        %v7196 = vadd.f32 0.0, %v7195
        %v7197 = vpop.f32.mrf.mxu0
        %7198 = vmatprep.mubr.bf16.mxu0 0
        %7199 = vmatmul.mubr.bf16.gmra.mxu0 %v567
        %v7200 = vpop.f32.mrf.mxu0
        %v7201 = vadd.f32 0.0, %v7200
        %v7202 = vpop.f32.mrf.mxu0
        %v7203 = vpop.f32.mrf.mxu0
        %v7204 = vadd.f32 0.0, %v7203
        %v7205 = vpop.f32.mrf.mxu0
        %7206 = vmatprep.mubr.bf16.mxu0 0
        %7207 = vmatmul.mubr.bf16.gmra.mxu0 %v570
        %v7208 = vpop.f32.mrf.mxu0
        %v7209 = vadd.f32 0.0, %v7208
        %v7210 = vpop.f32.mrf.mxu0
        %v7211 = vpop.f32.mrf.mxu0
        %v7212 = vadd.f32 0.0, %v7211
        %v7213 = vpop.f32.mrf.mxu0
        %7214 = vmatprep.mubr.bf16.mxu0 0
        %7215 = vmatmul.mubr.bf16.gmra.mxu0 %v573
        %v7216 = vpop.f32.mrf.mxu0
        %v7217 = vadd.f32 0.0, %v7216
        %v7218 = vpop.f32.mrf.mxu0
        %v7219 = vpop.f32.mrf.mxu0
        %v7220 = vadd.f32 0.0, %v7219
        %v7221 = vpop.f32.mrf.mxu0
        %7222 = vmatprep.mubr.bf16.mxu0 0
        %7223 = vmatmul.mubr.bf16.gmra.mxu0 %v576
        %v7224 = vpop.f32.mrf.mxu0
        %v7225 = vadd.f32 0.0, %v7224
        %v7226 = vpop.f32.mrf.mxu0
        %v7227 = vpop.f32.mrf.mxu0
        %v7228 = vadd.f32 0.0, %v7227
        %v7229 = vpop.f32.mrf.mxu0
        %7230 = vmatprep.mubr.bf16.mxu0 0
        %7231 = vmatmul.mubr.bf16.gmra.mxu0 %v579
        %v7232 = vpop.f32.mrf.mxu0
        %v7233 = vadd.f32 0.0, %v7232
        %v7234 = vpop.f32.mrf.mxu0
        %v7235 = vpop.f32.mrf.mxu0
        %v7236 = vadd.f32 0.0, %v7235
        %v7237 = vpop.f32.mrf.mxu0
        %7238 = vmatprep.mubr.bf16.mxu0 0
        %7239 = vmatmul.mubr.bf16.gmra.mxu0 %v582
        %v7240 = vpop.f32.mrf.mxu0
        %v7241 = vadd.f32 0.0, %v7240
        %v7242 = vpop.f32.mrf.mxu0
        %v7243 = vpop.f32.mrf.mxu0
        %v7244 = vadd.f32 0.0, %v7243
        %v7245 = vpop.f32.mrf.mxu0
        %7246 = vmatprep.mubr.bf16.mxu0 0
        %7247 = vmatmul.mubr.bf16.gmra.mxu0 %v585
        %v7248 = vpop.f32.mrf.mxu0
        %v7249 = vadd.f32 0.0, %v7248
        %v7250 = vpop.f32.mrf.mxu0
        %v7251 = vpop.f32.mrf.mxu0
        %v7252 = vadd.f32 0.0, %v7251
        %v7253 = vpop.f32.mrf.mxu0
        %7254 = vmatprep.mubr.bf16.mxu0 0
        %7255 = vmatmul.mubr.bf16.gmra.mxu0 %v588
        %v7256 = vpop.f32.mrf.mxu0
        %v7257 = vadd.f32 0.0, %v7256
        %v7258 = vpop.f32.mrf.mxu0
        %v7259 = vpop.f32.mrf.mxu0
        %v7260 = vadd.f32 0.0, %v7259
        %v7261 = vpop.f32.mrf.mxu0
        %7262 = vmatprep.mubr.bf16.mxu0 0
        %7263 = vmatmul.mubr.bf16.gmra.mxu0 %v591
        %v7264 = vpop.f32.mrf.mxu0
        %v7265 = vadd.f32 0.0, %v7264
        %v7266 = vpop.f32.mrf.mxu0
        %v7267 = vpop.f32.mrf.mxu0
        %v7268 = vadd.f32 0.0, %v7267
        %v7269 = vpop.f32.mrf.mxu0
        %7270 = vmatprep.mubr.bf16.mxu0 0
        %7271 = vmatmul.mubr.bf16.gmra.mxu0 %v594
        %v7272 = vpop.f32.mrf.mxu0
        %v7273 = vadd.f32 0.0, %v7272
        %v7274 = vpop.f32.mrf.mxu0
        %v7275 = vpop.f32.mrf.mxu0
        %v7276 = vadd.f32 0.0, %v7275
        %v7277 = vpop.f32.mrf.mxu0
        %7278 = vmatprep.mubr.bf16.mxu0 0
        %7279 = vmatmul.mubr.bf16.gmra.mxu0 %v597
        %v7280 = vpop.f32.mrf.mxu0
        %v7281 = vadd.f32 0.0, %v7280
        %v7282 = vpop.f32.mrf.mxu0
        %v7283 = vpop.f32.mrf.mxu0
        %v7284 = vadd.f32 0.0, %v7283
        %v7285 = vpop.f32.mrf.mxu0
        %7286 = vmatprep.mubr.bf16.mxu0 0
        %7287 = vmatmul.mubr.bf16.gmra.mxu0 %v600
        %v7288 = vpop.f32.mrf.mxu0
        %v7289 = vadd.f32 0.0, %v7288
        %v7290 = vpop.f32.mrf.mxu0
        %v7291 = vpop.f32.mrf.mxu0
        %v7292 = vadd.f32 0.0, %v7291
        %v7293 = vpop.f32.mrf.mxu0
        %7294 = vdwg.mxu0
        %v7295 = vld [vmem:[%s11] sm:$0x1]
        %v7296 = vld [vmem:[%s12] sm:$0x1]
        %v7297 = vsel %vm6844, %v7169, 0.0
        %v7298 = vsel %vm6844, %v7172, 0.0
        %v7299 = vadd.f32 %v7297, %v7298
        %v7300 = vsel %vm6844, %v7177, 0.0
        %v7301 = vadd.f32 %v7299, %v7300
        %v7302 = vsel %vm6844, %v7180, 0.0
        %v7303 = vadd.f32 %v7301, %v7302
        %v7304 = vsel %vm6844, %v7185, 0.0
        %v7305 = vadd.f32 %v7303, %v7304
        %v7306 = vsel %vm6844, %v7188, 0.0
        %v7307 = vadd.f32 %v7305, %v7306
        %v7308 = vsel %vm6844, %v7193, 0.0
        %v7309 = vadd.f32 %v7307, %v7308
        %v7310 = vsel %vm6844, %v7196, 0.0
        %v7311 = vadd.f32 %v7309, %v7310
        %v7312 = vsel %vm6844, %v7201, 0.0
        %v7313 = vadd.f32 %v7311, %v7312
        %v7314 = vsel %vm6844, %v7204, 0.0
        %v7315 = vadd.f32 %v7313, %v7314
        %v7316 = vsel %vm6844, %v7209, 0.0
        %v7317 = vadd.f32 %v7315, %v7316
        %v7318 = vsel %vm6844, %v7212, 0.0
        %v7319 = vadd.f32 %v7317, %v7318
        %v7320 = vsel %vm6844, %v7217, 0.0
        %v7321 = vadd.f32 %v7319, %v7320
        %v7322 = vsel %vm6844, %v7220, 0.0
        %v7323 = vadd.f32 %v7321, %v7322
        %v7324 = vsel %vm6844, %v7225, 0.0
        %v7325 = vadd.f32 %v7323, %v7324
        %v7326 = vsel %vm6844, %v7228, 0.0
        %v7327 = vadd.f32 %v7325, %v7326
        %v7328 = vsel %vm6844, %v7233, 0.0
        %v7329 = vadd.f32 %v7327, %v7328
        %v7330 = vsel %vm6844, %v7236, 0.0
        %v7331 = vadd.f32 %v7329, %v7330
        %v7332 = vsel %vm6844, %v7241, 0.0
        %v7333 = vadd.f32 %v7331, %v7332
        %v7334 = vsel %vm6844, %v7244, 0.0
        %v7335 = vadd.f32 %v7333, %v7334
        %v7336 = vsel %vm6844, %v7249, 0.0
        %v7337 = vadd.f32 %v7335, %v7336
        %v7338 = vsel %vm6844, %v7252, 0.0
        %v7339 = vadd.f32 %v7337, %v7338
        %v7340 = vsel %vm6844, %v7257, 0.0
        %v7341 = vadd.f32 %v7339, %v7340
        %v7342 = vsel %vm6844, %v7260, 0.0
        %v7343 = vadd.f32 %v7341, %v7342
        %v7344 = vsel %vm6844, %v7265, 0.0
        %v7345 = vadd.f32 %v7343, %v7344
        %v7346 = vsel %vm6844, %v7268, 0.0
        %v7347 = vadd.f32 %v7345, %v7346
        %v7348 = vsel %vm6844, %v7273, 0.0
        %v7349 = vadd.f32 %v7347, %v7348
        %v7350 = vsel %vm6844, %v7276, 0.0
        %v7351 = vadd.f32 %v7349, %v7350
        %v7352 = vsel %vm6844, %v7281, 0.0
        %v7353 = vadd.f32 %v7351, %v7352
        %v7354 = vsel %vm6844, %v7284, 0.0
        %v7355 = vadd.f32 %v7353, %v7354
        %v7356 = vsel %vm6844, %v7289, 0.0
        %v7357 = vadd.f32 %v7355, %v7356
        %v7358 = vsel %vm6844, %v7292, 0.0
        %v7359 = vadd.f32 %v7357, %v7358
        %v7360 = vrot.slane %v7359, 4
        %v7361 = vadd.f32 %v7359, %v7360
        %v7362 = vrot.slane %v7361, 2
        %v7363 = vadd.f32 %v7361, %v7362
        %v7364 = vrot.slane %v7363, 1
        %v7365 = vadd.f32 %v7363, %v7364
        %v7366 = vmul.f32 %v7365, %v838
        %v7367 = vsub.f32 %v7169, %v7366
        %v7368 = vsub.f32 %v7172, %v7366
        %v7369 = vsub.f32 %v7177, %v7366
        %v7370 = vsub.f32 %v7180, %v7366
        %v7371 = vsub.f32 %v7185, %v7366
        %v7372 = vsub.f32 %v7188, %v7366
        %v7373 = vsub.f32 %v7193, %v7366
        %v7374 = vsub.f32 %v7196, %v7366
        %v7375 = vsub.f32 %v7201, %v7366
        %v7376 = vsub.f32 %v7204, %v7366
        %v7377 = vsub.f32 %v7209, %v7366
        %v7378 = vsub.f32 %v7212, %v7366
        %v7379 = vsub.f32 %v7217, %v7366
        %v7380 = vsub.f32 %v7220, %v7366
        %v7381 = vsub.f32 %v7225, %v7366
        %v7382 = vsub.f32 %v7228, %v7366
        %v7383 = vsub.f32 %v7233, %v7366
        %v7384 = vsub.f32 %v7236, %v7366
        %v7385 = vsub.f32 %v7241, %v7366
        %v7386 = vsub.f32 %v7244, %v7366
        %v7387 = vsub.f32 %v7249, %v7366
        %v7388 = vsub.f32 %v7252, %v7366
        %v7389 = vsub.f32 %v7257, %v7366
        %v7390 = vsub.f32 %v7260, %v7366
        %v7391 = vsub.f32 %v7265, %v7366
        %v7392 = vsub.f32 %v7268, %v7366
        %v7393 = vsub.f32 %v7273, %v7366
        %v7394 = vsub.f32 %v7276, %v7366
        %v7395 = vsub.f32 %v7281, %v7366
        %v7396 = vsub.f32 %v7284, %v7366
        %v7397 = vsub.f32 %v7289, %v7366
        %v7398 = vsub.f32 %v7292, %v7366
        %v7399 = vmul.f32 %v7367, %v7367
        %v7400 = vmul.f32 %v7368, %v7368
        %v7401 = vmul.f32 %v7369, %v7369
        %v7402 = vmul.f32 %v7370, %v7370
        %v7403 = vmul.f32 %v7371, %v7371
        %v7404 = vmul.f32 %v7372, %v7372
        %v7405 = vmul.f32 %v7373, %v7373
        %v7406 = vmul.f32 %v7374, %v7374
        %v7407 = vmul.f32 %v7375, %v7375
        %v7408 = vmul.f32 %v7376, %v7376
        %v7409 = vmul.f32 %v7377, %v7377
        %v7410 = vmul.f32 %v7378, %v7378
        %v7411 = vmul.f32 %v7379, %v7379
        %v7412 = vmul.f32 %v7380, %v7380
        %v7413 = vmul.f32 %v7381, %v7381
        %v7414 = vmul.f32 %v7382, %v7382
        %v7415 = vmul.f32 %v7383, %v7383
        %v7416 = vmul.f32 %v7384, %v7384
        %v7417 = vmul.f32 %v7385, %v7385
        %v7418 = vmul.f32 %v7386, %v7386
        %v7419 = vmul.f32 %v7387, %v7387
        %v7420 = vmul.f32 %v7388, %v7388
        %v7421 = vmul.f32 %v7389, %v7389
        %v7422 = vmul.f32 %v7390, %v7390
        %v7423 = vmul.f32 %v7391, %v7391
        %v7424 = vmul.f32 %v7392, %v7392
        %v7425 = vmul.f32 %v7393, %v7393
        %v7426 = vmul.f32 %v7394, %v7394
        %v7427 = vmul.f32 %v7395, %v7395
        %v7428 = vmul.f32 %v7396, %v7396
        %v7429 = vmul.f32 %v7397, %v7397
        %v7430 = vmul.f32 %v7398, %v7398
        %v7431 = vsel %vm6844, %v7399, 0.0
        %v7432 = vsel %vm6844, %v7400, 0.0
        %v7433 = vadd.f32 %v7431, %v7432
        %v7434 = vsel %vm6844, %v7401, 0.0
        %v7435 = vadd.f32 %v7433, %v7434
        %v7436 = vsel %vm6844, %v7402, 0.0
        %v7437 = vadd.f32 %v7435, %v7436
        %v7438 = vsel %vm6844, %v7403, 0.0
        %v7439 = vadd.f32 %v7437, %v7438
        %v7440 = vsel %vm6844, %v7404, 0.0
        %v7441 = vadd.f32 %v7439, %v7440
        %v7442 = vsel %vm6844, %v7405, 0.0
        %v7443 = vadd.f32 %v7441, %v7442
        %v7444 = vsel %vm6844, %v7406, 0.0
        %v7445 = vadd.f32 %v7443, %v7444
        %v7446 = vsel %vm6844, %v7407, 0.0
        %v7447 = vadd.f32 %v7445, %v7446
        %v7448 = vsel %vm6844, %v7408, 0.0
        %v7449 = vadd.f32 %v7447, %v7448
        %v7450 = vsel %vm6844, %v7409, 0.0
        %v7451 = vadd.f32 %v7449, %v7450
        %v7452 = vsel %vm6844, %v7410, 0.0
        %v7453 = vadd.f32 %v7451, %v7452
        %v7454 = vsel %vm6844, %v7411, 0.0
        %v7455 = vadd.f32 %v7453, %v7454
        %v7456 = vsel %vm6844, %v7412, 0.0
        %v7457 = vadd.f32 %v7455, %v7456
        %v7458 = vsel %vm6844, %v7413, 0.0
        %v7459 = vadd.f32 %v7457, %v7458
        %v7460 = vsel %vm6844, %v7414, 0.0
        %v7461 = vadd.f32 %v7459, %v7460
        %v7462 = vsel %vm6844, %v7415, 0.0
        %v7463 = vadd.f32 %v7461, %v7462
        %v7464 = vsel %vm6844, %v7416, 0.0
        %v7465 = vadd.f32 %v7463, %v7464
        %v7466 = vsel %vm6844, %v7417, 0.0
        %v7467 = vadd.f32 %v7465, %v7466
        %v7468 = vsel %vm6844, %v7418, 0.0
        %v7469 = vadd.f32 %v7467, %v7468
        %v7470 = vsel %vm6844, %v7419, 0.0
        %v7471 = vadd.f32 %v7469, %v7470
        %v7472 = vsel %vm6844, %v7420, 0.0
        %v7473 = vadd.f32 %v7471, %v7472
        %v7474 = vsel %vm6844, %v7421, 0.0
        %v7475 = vadd.f32 %v7473, %v7474
        %v7476 = vsel %vm6844, %v7422, 0.0
        %v7477 = vadd.f32 %v7475, %v7476
        %v7478 = vsel %vm6844, %v7423, 0.0
        %v7479 = vadd.f32 %v7477, %v7478
        %v7480 = vsel %vm6844, %v7424, 0.0
        %v7481 = vadd.f32 %v7479, %v7480
        %v7482 = vsel %vm6844, %v7425, 0.0
        %v7483 = vadd.f32 %v7481, %v7482
        %v7484 = vsel %vm6844, %v7426, 0.0
        %v7485 = vadd.f32 %v7483, %v7484
        %v7486 = vsel %vm6844, %v7427, 0.0
        %v7487 = vadd.f32 %v7485, %v7486
        %v7488 = vsel %vm6844, %v7428, 0.0
        %v7489 = vadd.f32 %v7487, %v7488
        %v7490 = vsel %vm6844, %v7429, 0.0
        %v7491 = vadd.f32 %v7489, %v7490
        %v7492 = vsel %vm6844, %v7430, 0.0
        %v7493 = vadd.f32 %v7491, %v7492
        %v7494 = vrot.slane %v7493, 4
        %v7495 = vadd.f32 %v7493, %v7494
        %v7496 = vrot.slane %v7495, 2
        %v7497 = vadd.f32 %v7495, %v7496
        %v7498 = vrot.slane %v7497, 1
        %v7499 = vadd.f32 %v7497, %v7498
        %v7500 = vmul.f32 %v7499, %v838
        %v7501 = vadd.f32 %v7500, 1e-05
        %v7502 = vrsqrt.pop %v7501
        %v7503 = vmul.f32 %v7295, %v7502
        %v7504 = vmul.f32 %v7366, %v7503
        %v7505 = vsub.f32 %v7296, %v7504
        %v7507 = vlaneseq
        %v7508 = vshrl.u32 %v7507, 7
        %v7509 = vsub.s32 0, %v7508
        %v7510 = vrot.slane %v7503, %v7509
        %v7512 = vmul.f32 %v7169, %v7510
        %v7513 = vmul.f32 %v7172, %v7510
        %v7514 = vmul.f32 %v7177, %v7510
        %v7515 = vmul.f32 %v7180, %v7510
        %v7516 = vmul.f32 %v7185, %v7510
        %v7517 = vmul.f32 %v7188, %v7510
        %v7518 = vmul.f32 %v7193, %v7510
        %v7519 = vmul.f32 %v7196, %v7510
        %v7520 = vmul.f32 %v7201, %v7510
        %v7521 = vmul.f32 %v7204, %v7510
        %v7522 = vmul.f32 %v7209, %v7510
        %v7523 = vmul.f32 %v7212, %v7510
        %v7524 = vmul.f32 %v7217, %v7510
        %v7525 = vmul.f32 %v7220, %v7510
        %v7526 = vmul.f32 %v7225, %v7510
        %v7527 = vmul.f32 %v7228, %v7510
        %v7528 = vmul.f32 %v7233, %v7510
        %v7529 = vmul.f32 %v7236, %v7510
        %v7530 = vmul.f32 %v7241, %v7510
        %v7531 = vmul.f32 %v7244, %v7510
        %v7532 = vmul.f32 %v7249, %v7510
        %v7533 = vmul.f32 %v7252, %v7510
        %v7534 = vmul.f32 %v7257, %v7510
        %v7535 = vmul.f32 %v7260, %v7510
        %v7536 = vmul.f32 %v7265, %v7510
        %v7537 = vmul.f32 %v7268, %v7510
        %v7538 = vmul.f32 %v7273, %v7510
        %v7539 = vmul.f32 %v7276, %v7510
        %v7540 = vmul.f32 %v7281, %v7510
        %v7541 = vmul.f32 %v7284, %v7510
        %v7542 = vmul.f32 %v7289, %v7510
        %v7543 = vmul.f32 %v7292, %v7510
        %v7545 = vlaneseq
        %v7546 = vshrl.u32 %v7545, 7
        %v7547 = vsub.s32 0, %v7546
        %v7548 = vrot.slane %v7505, %v7547
        %v7550 = vadd.f32 %v7512, %v7548
        %v7551 = vadd.f32 %v7513, %v7548
        %v7552 = vadd.f32 %v7514, %v7548
        %v7553 = vadd.f32 %v7515, %v7548
        %v7554 = vadd.f32 %v7516, %v7548
        %v7555 = vadd.f32 %v7517, %v7548
        %v7556 = vadd.f32 %v7518, %v7548
        %v7557 = vadd.f32 %v7519, %v7548
        %v7558 = vadd.f32 %v7520, %v7548
        %v7559 = vadd.f32 %v7521, %v7548
        %v7560 = vadd.f32 %v7522, %v7548
        %v7561 = vadd.f32 %v7523, %v7548
        %v7562 = vadd.f32 %v7524, %v7548
        %v7563 = vadd.f32 %v7525, %v7548
        %v7564 = vadd.f32 %v7526, %v7548
        %v7565 = vadd.f32 %v7527, %v7548
        %v7566 = vadd.f32 %v7528, %v7548
        %v7567 = vadd.f32 %v7529, %v7548
        %v7568 = vadd.f32 %v7530, %v7548
        %v7569 = vadd.f32 %v7531, %v7548
        %v7570 = vadd.f32 %v7532, %v7548
        %v7571 = vadd.f32 %v7533, %v7548
        %v7572 = vadd.f32 %v7534, %v7548
        %v7573 = vadd.f32 %v7535, %v7548
        %v7574 = vadd.f32 %v7536, %v7548
        %v7575 = vadd.f32 %v7537, %v7548
        %v7576 = vadd.f32 %v7538, %v7548
        %v7577 = vadd.f32 %v7539, %v7548
        %v7578 = vadd.f32 %v7540, %v7548
        %v7579 = vadd.f32 %v7541, %v7548
        %v7580 = vadd.f32 %v7542, %v7548
        %v7581 = vadd.f32 %v7543, %v7548
        %v7582 = vadd.f32 %v7098, %v7550
        %v7583 = vadd.f32 %v7099, %v7551
        %v7584 = vadd.f32 %v7100, %v7552
        %v7585 = vadd.f32 %v7101, %v7553
        %v7586 = vadd.f32 %v7102, %v7554
        %v7587 = vadd.f32 %v7103, %v7555
        %v7588 = vadd.f32 %v7104, %v7556
        %v7589 = vadd.f32 %v7105, %v7557
        %v7590 = vadd.f32 %v7106, %v7558
        %v7591 = vadd.f32 %v7107, %v7559
        %v7592 = vadd.f32 %v7108, %v7560
        %v7593 = vadd.f32 %v7109, %v7561
        %v7594 = vadd.f32 %v7110, %v7562
        %v7595 = vadd.f32 %v7111, %v7563
        %v7596 = vadd.f32 %v7112, %v7564
        %v7597 = vadd.f32 %v7113, %v7565
        %v7598 = vadd.f32 %v7114, %v7566
        %v7599 = vadd.f32 %v7115, %v7567
        %v7600 = vadd.f32 %v7116, %v7568
        %v7601 = vadd.f32 %v7117, %v7569
        %v7602 = vadd.f32 %v7118, %v7570
        %v7603 = vadd.f32 %v7119, %v7571
        %v7604 = vadd.f32 %v7120, %v7572
        %v7605 = vadd.f32 %v7121, %v7573
        %v7606 = vadd.f32 %v7122, %v7574
        %v7607 = vadd.f32 %v7123, %v7575
        %v7608 = vadd.f32 %v7124, %v7576
        %v7609 = vadd.f32 %v7125, %v7577
        %v7610 = vadd.f32 %v7126, %v7578
        %v7611 = vadd.f32 %v7127, %v7579
        %v7612 = vadd.f32 %v7128, %v7580
        %v7613 = vadd.f32 %v7129, %v7581
        %v7614 = vmax.f32 %v7582, 0.0
        %v7615 = vmax.f32 %v7583, 0.0
        %v7616 = vmax.f32 %v7584, 0.0
        %v7617 = vmax.f32 %v7585, 0.0
        %v7618 = vmax.f32 %v7586, 0.0
        %v7619 = vmax.f32 %v7587, 0.0
        %v7620 = vmax.f32 %v7588, 0.0
        %v7621 = vmax.f32 %v7589, 0.0
        %v7622 = vmax.f32 %v7590, 0.0
        %v7623 = vmax.f32 %v7591, 0.0
        %v7624 = vmax.f32 %v7592, 0.0
        %v7625 = vmax.f32 %v7593, 0.0
        %v7626 = vmax.f32 %v7594, 0.0
        %v7627 = vmax.f32 %v7595, 0.0
        %v7628 = vmax.f32 %v7596, 0.0
        %v7629 = vmax.f32 %v7597, 0.0
        %v7630 = vmax.f32 %v7598, 0.0
        %v7631 = vmax.f32 %v7599, 0.0
        %v7632 = vmax.f32 %v7600, 0.0
        %v7633 = vmax.f32 %v7601, 0.0
        %v7634 = vmax.f32 %v7602, 0.0
        %v7635 = vmax.f32 %v7603, 0.0
        %v7636 = vmax.f32 %v7604, 0.0
        %v7637 = vmax.f32 %v7605, 0.0
        %v7638 = vmax.f32 %v7606, 0.0
        %v7639 = vmax.f32 %v7607, 0.0
        %v7640 = vmax.f32 %v7608, 0.0
        %v7641 = vmax.f32 %v7609, 0.0
        %v7642 = vmax.f32 %v7610, 0.0
        %v7643 = vmax.f32 %v7611, 0.0
        %v7644 = vmax.f32 %v7612, 0.0
        %v7645 = vmax.f32 %v7613, 0.0
        %v7646 = vpack.c.bf16 %v7615, %v7614
        %v7647 = vpack.c.bf16 %v7617, %v7616
        %v7648 = vpack.c.bf16 %v7619, %v7618
        %v7649 = vpack.c.bf16 %v7621, %v7620
        %v7650 = vpack.c.bf16 %v7623, %v7622
        %v7651 = vpack.c.bf16 %v7625, %v7624
        %v7652 = vpack.c.bf16 %v7627, %v7626
        %v7653 = vpack.c.bf16 %v7629, %v7628
        %v7654 = vpack.c.bf16 %v7631, %v7630
        %v7655 = vpack.c.bf16 %v7633, %v7632
        %v7656 = vpack.c.bf16 %v7635, %v7634
        %v7657 = vpack.c.bf16 %v7637, %v7636
        %v7658 = vpack.c.bf16 %v7639, %v7638
        %v7659 = vpack.c.bf16 %v7641, %v7640
        %v7660 = vpack.c.bf16 %v7643, %v7642
        %v7661 = vpack.c.bf16 %v7645, %v7644
        %v7678 = vunpack.c.l.b16 %v7646
        %v7679 = vunpack.c.h.b16 %v7646
        %v7680 = vunpack.c.l.b16 %v7647
        %v7681 = vunpack.c.h.b16 %v7647
        %v7682 = vunpack.c.l.b16 %v7648
        %v7683 = vunpack.c.h.b16 %v7648
        %v7684 = vunpack.c.l.b16 %v7649
        %v7685 = vunpack.c.h.b16 %v7649
        %v7686 = vunpack.c.l.b16 %v7650
        %v7687 = vunpack.c.h.b16 %v7650
        %v7688 = vunpack.c.l.b16 %v7651
        %v7689 = vunpack.c.h.b16 %v7651
        %v7690 = vunpack.c.l.b16 %v7652
        %v7691 = vunpack.c.h.b16 %v7652
        %v7692 = vunpack.c.l.b16 %v7653
        %v7693 = vunpack.c.h.b16 %v7653
        %v7694 = vunpack.c.l.b16 %v7654
        %v7695 = vunpack.c.h.b16 %v7654
        %v7696 = vunpack.c.l.b16 %v7655
        %v7697 = vunpack.c.h.b16 %v7655
        %v7698 = vunpack.c.l.b16 %v7656
        %v7699 = vunpack.c.h.b16 %v7656
        %v7700 = vunpack.c.l.b16 %v7657
        %v7701 = vunpack.c.h.b16 %v7657
        %v7702 = vunpack.c.l.b16 %v7658
        %v7703 = vunpack.c.h.b16 %v7658
        %v7704 = vunpack.c.l.b16 %v7659
        %v7705 = vunpack.c.h.b16 %v7659
        %v7706 = vunpack.c.l.b16 %v7660
        %v7707 = vunpack.c.h.b16 %v7660
        %v7708 = vunpack.c.l.b16 %v7661
        %v7709 = vunpack.c.h.b16 %v7661
        %v7710 = vpack.c.b16 %v7678, %v7678
        %v7711 = vpack.c.b16 %v7679, %v7679
        %v7712 = vpack.c.b16 %v7680, %v7680
        %v7713 = vpack.c.b16 %v7681, %v7681
        %v7714 = vpack.c.b16 %v7682, %v7682
        %v7715 = vpack.c.b16 %v7683, %v7683
        %v7716 = vpack.c.b16 %v7684, %v7684
        %v7717 = vpack.c.b16 %v7685, %v7685
        %v7718 = vpack.c.b16 %v7686, %v7686
        %v7719 = vpack.c.b16 %v7687, %v7687
        %v7720 = vpack.c.b16 %v7688, %v7688
        %v7721 = vpack.c.b16 %v7689, %v7689
        %v7722 = vpack.c.b16 %v7690, %v7690
        %v7723 = vpack.c.b16 %v7691, %v7691
        %v7724 = vpack.c.b16 %v7692, %v7692
        %v7725 = vpack.c.b16 %v7693, %v7693
        %v7726 = vpack.c.b16 %v7694, %v7694
        %v7727 = vpack.c.b16 %v7695, %v7695
        %v7728 = vpack.c.b16 %v7696, %v7696
        %v7729 = vpack.c.b16 %v7697, %v7697
        %v7730 = vpack.c.b16 %v7698, %v7698
        %v7731 = vpack.c.b16 %v7699, %v7699
        %v7732 = vpack.c.b16 %v7700, %v7700
        %v7733 = vpack.c.b16 %v7701, %v7701
        %v7734 = vpack.c.b16 %v7702, %v7702
        %v7735 = vpack.c.b16 %v7703, %v7703
        %v7736 = vpack.c.b16 %v7704, %v7704
        %v7737 = vpack.c.b16 %v7705, %v7705
        %v7738 = vpack.c.b16 %v7706, %v7706
        %v7739 = vpack.c.b16 %v7707, %v7707
        %v7740 = vpack.c.b16 %v7708, %v7708
        %v7741 = vpack.c.b16 %v7709, %v7709
        %vm7774 = vcmask 125952
        %7775 = vst.msk [vmem:[%s433] sm:$0xf] %vm7774, %v7710
        %7776 = vst.msk [vmem:[%s433 + $0x4] sm:$0xf] %vm7774, %v7711
        %7777 = vst.msk [vmem:[%s433 + $0x8] sm:$0xf] %vm7774, %v7712
        %7778 = vst.msk [vmem:[%s433 + $0xc] sm:$0xf] %vm7774, %v7713
        %7779 = vst.msk [vmem:[%s433 + $0x10] sm:$0xf] %vm7774, %v7714
        %7780 = vst.msk [vmem:[%s433 + $0x14] sm:$0xf] %vm7774, %v7715
        %7781 = vst.msk [vmem:[%s433 + $0x18] sm:$0xf] %vm7774, %v7716
        %7782 = vst.msk [vmem:[%s433 + $0x1c] sm:$0xf] %vm7774, %v7717
        %7783 = vst.msk [vmem:[%s433 + $0x20] sm:$0xf] %vm7774, %v7718
        %7784 = vst.msk [vmem:[%s433 + $0x24] sm:$0xf] %vm7774, %v7719
        %7785 = vst.msk [vmem:[%s433 + $0x28] sm:$0xf] %vm7774, %v7720
        %7786 = vst.msk [vmem:[%s433 + $0x2c] sm:$0xf] %vm7774, %v7721
        %7787 = vst.msk [vmem:[%s433 + $0x30] sm:$0xf] %vm7774, %v7722
        %7788 = vst.msk [vmem:[%s433 + $0x34] sm:$0xf] %vm7774, %v7723
        %7789 = vst.msk [vmem:[%s433 + $0x38] sm:$0xf] %vm7774, %v7724
        %7790 = vst.msk [vmem:[%s433 + $0x3c] sm:$0xf] %vm7774, %v7725
        %7791 = vst.msk [vmem:[%s433 + $0x40] sm:$0xf] %vm7774, %v7726
        %7792 = vst.msk [vmem:[%s433 + $0x44] sm:$0xf] %vm7774, %v7727
        %7793 = vst.msk [vmem:[%s433 + $0x48] sm:$0xf] %vm7774, %v7728
        %7794 = vst.msk [vmem:[%s433 + $0x4c] sm:$0xf] %vm7774, %v7729
        %7795 = vst.msk [vmem:[%s433 + $0x50] sm:$0xf] %vm7774, %v7730
        %7796 = vst.msk [vmem:[%s433 + $0x54] sm:$0xf] %vm7774, %v7731
        %7797 = vst.msk [vmem:[%s433 + $0x58] sm:$0xf] %vm7774, %v7732
        %7798 = vst.msk [vmem:[%s433 + $0x5c] sm:$0xf] %vm7774, %v7733
        %7799 = vst.msk [vmem:[%s433 + $0x60] sm:$0xf] %vm7774, %v7734
        %7800 = vst.msk [vmem:[%s433 + $0x64] sm:$0xf] %vm7774, %v7735
        %7801 = vst.msk [vmem:[%s433 + $0x68] sm:$0xf] %vm7774, %v7736
        %7802 = vst.msk [vmem:[%s433 + $0x6c] sm:$0xf] %vm7774, %v7737
        %7803 = vst.msk [vmem:[%s433 + $0x70] sm:$0xf] %vm7774, %v7738
        %7804 = vst.msk [vmem:[%s433 + $0x74] sm:$0xf] %vm7774, %v7739
        %7805 = vst.msk [vmem:[%s433 + $0x78] sm:$0xf] %vm7774, %v7740
        %7806 = vst.msk [vmem:[%s433 + $0x7c] sm:$0xf] %vm7774, %v7741
        %s7807 = sand.u32 %s313, 1
        %s7808 = scalar_lea.sflag [#allocation4], %s7807
        %s7809 = sand.u32 %s313, 1
        %s7810 = smul.addr %s7809, 128
        %s7811 = scalar_lea.vmem [#allocation3], %s7810
        // Predicated region
        $region73: #{tpu_custom_call.1} parent=71 // pred_check
          %p7812 = pneg %p323
        $region74: #{tpu_custom_call.1} parent=71 // pred_check_branch
          %7814 = sbr.rel (%p7812) target = $region76
        $region75: #{tpu_custom_call.1} parent=71 // pred_region
          %s7816 = ssub.s32 2048, 2048
          %7817 = vsyncadd %s7808, %s7816
          %s7818 = smul.addr %s27, 32
          %s7819 = smul.addr %s7818, 64
          %s7820 = scalar_lea.hbm %s13, %s7819
          %s7821 = sshll.u32 %s7811, 4
          %s7822 = int_to_ptr.vmem [resolvable:$true] %s7821
          %7827 = dma.vmem_to_hbm [thread:$0]  %s7822, 2048, %s7820, %s7808, 64, 64, 4
        $region76: #{tpu_custom_call.1} parent=71 // pred_fallthru
          _
      $region72: #{tpu_custom_call.1} parent=5 // pred_fallthru
        _
      %p7828 = scmp.le.s32.totalorder 2, %s22
      // Predicated region
      $region77: #{tpu_custom_call.1} parent=5 // pred_check
        %p7829 = pneg %p7828
      $region78: #{tpu_custom_call.1} parent=5 // pred_check_branch
        %7831 = sbr.rel (%p7829) target = $region80
      $region79: #{tpu_custom_call.1} parent=5 // pred_region
        %s7832 = ssub.s32 %s22, 2
        // Predicated region
        $region81: #{tpu_custom_call.1} parent=79 // pred_check
          %p7833 = pneg %p329
        $region82: #{tpu_custom_call.1} parent=79 // pred_check_branch
          %7835 = sbr.rel (%p7833) target = $region84
        $region83: #{tpu_custom_call.1} parent=79 // pred_region
          %s7836 = sand.u32 %s314, 1
          %s7837 = scalar_lea.sflag [#allocation4], %s7836
          %s7838 = sand.u32 %s314, 1
          %s7839 = smul.addr %s7838, 128
          %s7840 = scalar_lea.vmem [#allocation3], %s7839
          %7841 = dma.done %s7837, 2048
        $region84: #{tpu_custom_call.1} parent=79 // pred_fallthru
          _
      $region80: #{tpu_custom_call.1} parent=5 // pred_fallthru
        _
    $region6: #{tpu_custom_call.1} parent=1 // loop_footer
      %s26 = sadd.s32 1, %s22
    $region7: #{tpu_custom_call.1} parent=1 // loop_footer_branch
      %21 = sbr.rel target = $region3
    $region8: #{tpu_custom_call.1} parent=1 // loop_exit
      _
    %7842 = vsyncpa [#allocation4], 1
    %s7843 = scalar_lea.sflag [#allocation4], 1
    %7844 = vsyncpa %s7843, 1

</llo_original>
